<compile_context>
chip_gen: v7x
topology: tpu7x:2x2x1
jax: 0.10.0
libtpu: 0.0.40
codegen_flags: <defaults>
</compile_context>

<pallas_src>
import functools

import numpy as np
import jax
import jax.numpy as jnp
from jax.experimental import pallas as pl
from jax.experimental.pallas import tpu as pltpu


# ----------------------------------------------------------------------------- VMEM budget
@functools.lru_cache(maxsize=None)
def _vmem_limit_bytes():
    cap = 128 * 1024 * 1024
    try:
        cap = int(pltpu.get_tpu_info().vmem_capacity_bytes)
    except Exception:
        pass
    # leave headroom for compiler temporaries; v7x (64MiB) -> 48MB, v5e/v6e (128MiB) -> 96MB
    return int(min(cap * 3 // 4, 96 * 1024 * 1024))


# ----------------------------------------------------------------------------- tiled matmul kernels
def _matmul_kernel_acc(a_ref, w_ref, b_ref, o_ref, acc_ref, *, activation):
    k = pl.program_id(2)

    @pl.when(k == 0)
    def _():
        acc_ref[...] = jnp.zeros_like(acc_ref)

    acc_ref[...] += jnp.dot(a_ref[0], w_ref[0], preferred_element_type=jnp.float32)

    @pl.when(k == pl.num_programs(2) - 1)
    def _():
        r = acc_ref[...] + b_ref[0]
        if activation == "relu":
            r = jnp.maximum(r, 0.0)
        elif activation == "sigmoid":
            r = jax.nn.sigmoid(r)
        o_ref[0] = r.astype(o_ref.dtype)


def _matmul_kernel_direct(a_ref, w_ref, b_ref, o_ref, *, activation):
    # single K tile: no accumulator scratch round trip
    r = jnp.dot(a_ref[0], w_ref[0], preferred_element_type=jnp.float32) + b_ref[0]
    if activation == "relu":
        r = jnp.maximum(r, 0.0)
    elif activation == "sigmoid":
        r = jax.nn.sigmoid(r)
    o_ref[0] = r.astype(o_ref.dtype)


def _pick_tile(dim, candidates):
    for c in candidates:
        if c <= dim and dim % c == 0:
            return c
    return dim


def batched_linear_pallas(a, w, b, activation="none", out_dtype=jnp.float32):
    """out[bb] = act(a[bb] @ w[bb or 0] + b[bb or 0]).

    a: (B, M, K); w: (Bw, K, N) with Bw in {1, B}; b: (Bw, 1, N). Returns (B, M, N) out_dtype.
    f32 accumulation regardless of input dtype (bf16 inputs hit the MXU at bf16 rate).
    """
    B, M, K = a.shape
    Bw, _, N = w.shape
    tk = _pick_tile(K, (2048, 1792, 1024, 512, 256, 128))
    tn = _pick_tile(N, (2048, 1024, 512, 256, 128))
    # generation-aware cap on the double-buffered weight tile (v7x has half the VMEM of v5e/v6e)
    cap = max(_vmem_limit_bytes() // 3, 8 * 1024 * 1024)
    while tk * tn * w.dtype.itemsize * 2 > cap and tn > 256 and N % (tn // 2) == 0:
        tn //= 2

    w_batched = (Bw == B and B > 1)
    vmem = _vmem_limit_bytes()
    nk = K // tk

    if nk == 1:
        w_map = (lambda bb, j: (bb, 0, j)) if w_batched else (lambda bb, j: (0, 0, j))
        b_map = (lambda bb, j: (bb, 0, j)) if w_batched else (lambda bb, j: (0, 0, j))
        return pl.pallas_call(
            functools.partial(_matmul_kernel_direct, activation=activation),
            out_shape=jax.ShapeDtypeStruct((B, M, N), out_dtype),
            grid_spec=pltpu.PrefetchScalarGridSpec(
                num_scalar_prefetch=0,
                grid=(B, N // tn),
                in_specs=[
                    pl.BlockSpec((1, M, tk), lambda bb, j: (bb, 0, 0)),
                    pl.BlockSpec((1, tk, tn), w_map),
                    pl.BlockSpec((1, 1, tn), b_map),
                ],
                out_specs=pl.BlockSpec((1, M, tn), lambda bb, j: (bb, 0, j)),
            ),
            compiler_params=pltpu.CompilerParams(
                dimension_semantics=("parallel", "parallel"),
                vmem_limit_bytes=vmem,
            ),
        )(a, w, b)

    w_map = (lambda bb, j, k: (bb, k, j)) if w_batched else (lambda bb, j, k: (0, k, j))
    b_map = (lambda bb, j, k: (bb, 0, j)) if w_batched else (lambda bb, j, k: (0, 0, j))
    return pl.pallas_call(
        functools.partial(_matmul_kernel_acc, activation=activation),
        out_shape=jax.ShapeDtypeStruct((B, M, N), out_dtype),
        grid_spec=pltpu.PrefetchScalarGridSpec(
            num_scalar_prefetch=0,
            grid=(B, N // tn, nk),
            in_specs=[
                pl.BlockSpec((1, M, tk), lambda bb, j, k: (bb, 0, k)),
                pl.BlockSpec((1, tk, tn), w_map),
                pl.BlockSpec((1, 1, tn), b_map),
            ],
            out_specs=pl.BlockSpec((1, M, tn), lambda bb, j, k: (bb, 0, j)),
            scratch_shapes=[pltpu.VMEM((M, tn), jnp.float32)],
        ),
        compiler_params=pltpu.CompilerParams(
            dimension_semantics=("parallel", "parallel", "arbitrary"),
            vmem_limit_bytes=vmem,
        ),
    )(a, w, b)


# ----------------------------------------------------------------------------- 3x3 conv (halo path)
def _conv3x3_halo_kernel(x_ref, w_ref, b_ref, o_ref, *,
                         br, W, Cin, Cout, relu, fuse_pool, fold_k):
    # x_ref holds the full padded image (revisited across the spatial grid axis, so it is only
    # DMA'd once per batch image).  For narrow channels (Cin<=128) the 9 taps are folded into a
    # single K=9*Cin matmul (temp is tiny); for wide channels the 9 taps are accumulated as
    # per-tap matmuls into a local f32 accumulator (no multi-MB lane-concat temp).
    r = pl.program_id(1)
    row0 = pl.multiple_of(r * br, br)

    if fold_k:
        taps = [x_ref[0, pl.ds(row0 + dy, br), dx:dx + W, :]
                for dy in range(3) for dx in range(3)]                       # each (br, W, Cin)
        patches = jnp.concatenate(taps, axis=-1).reshape(br * W, 9 * Cin)
        acc = jnp.dot(patches, w_ref[...], preferred_element_type=jnp.float32)
    else:
        acc = None
        t = 0
        for dy in range(3):
            for dx in range(3):
                tap = x_ref[0, pl.ds(row0 + dy, br), dx:dx + W, :].reshape(br * W, Cin)
                p = jnp.dot(tap, w_ref[t * Cin:(t + 1) * Cin, :],
                            preferred_element_type=jnp.float32)
                acc = p if acc is None else acc + p
                t += 1

    acc = acc + b_ref[...]
    if relu:
        acc = jnp.maximum(acc, 0.0)

    if fuse_pool:
        h2, w2 = br // 2, W // 2
        # row-pair max: free contiguous-half split of the (row-major) position axis
        y = acc.reshape(h2, 2 * W, Cout)
        y = jnp.maximum(y[:, :W, :], y[:, W:, :])          # (h2, W, Cout)
        # column-pair max: pack (even col | odd col) channels along lanes
        y = y.reshape(h2, w2, 2 * Cout)
        y = jnp.maximum(y[:, :, :Cout], y[:, :, Cout:])    # (h2, w2, Cout)
        o_ref[0] = y.astype(o_ref.dtype)
    else:
        o_ref[0] = acc.reshape(br, W, Cout).astype(o_ref.dtype)


def _pick_rows(H, W, N, fuse_pool, max_positions=1024):
    cands = [d for d in range(1, H + 1)
             if H % d == 0 and d * W <= max_positions and (not fuse_pool or d % 2 == 0)]
    if not cands:
        return None
    br = max(cands)
    if N * (H // br) < 2:
        # give a second TensorCore (v7x) at least one more parallel block to chew on
        two = [d for d in cands if H // d >= 2]
        if two:
            br = max(two)
    return br


def _conv3x3_halo(x, w, b, relu, fuse_pool, br):
    N, H, W, Cin = x.shape
    Cout = w.shape[-1]
    xp = jnp.pad(x, ((0, 0), (1, 1), (1, 1), (0, 0)))          # (N, H+2, W+2, Cin)
    fold_k = Cin <= 128

    if fuse_pool:
        Ho, Wo = H // 2, W // 2
        out_shape = jax.ShapeDtypeStruct((N, Ho, Wo, Cout), x.dtype)
        out_spec = pl.BlockSpec((1, br // 2, Wo, Cout), lambda n, r: (n, r, 0, 0))
    else:
        out_shape = jax.ShapeDtypeStruct((N, H, W, Cout), x.dtype)
        out_spec = pl.BlockSpec((1, br, W, Cout), lambda n, r: (n, r, 0, 0))

    # the whole padded image is resident across the spatial grid axis; only single-buffer it
    # when double buffering would eat too much of the generation's VMEM budget (v7x, big maps)
    img_bytes = (H + 2) * (W + 2) * Cin * x.dtype.itemsize
    img_kwargs = {}
    if 2 * img_bytes > _vmem_limit_bytes() // 3:
        img_kwargs = dict(pipeline_mode=pl.Buffered(1))
    x_spec = pl.BlockSpec((1, H + 2, W + 2, Cin), lambda n, r: (n, 0, 0, 0), **img_kwargs)

    out = pl.pallas_call(
        functools.partial(_conv3x3_halo_kernel, br=br, W=W, Cin=Cin, Cout=Cout,
                          relu=relu, fuse_pool=fuse_pool, fold_k=fold_k),
        out_shape=out_shape,
        grid_spec=pltpu.PrefetchScalarGridSpec(
            num_scalar_prefetch=0,
            grid=(N, H // br),
            in_specs=[
                x_spec,
                pl.BlockSpec((9 * Cin, Cout), lambda n, r: (0, 0)),
                pl.BlockSpec((1, Cout), lambda n, r: (0, 0)),
            ],
            out_specs=out_spec,
        ),
        compiler_params=pltpu.CompilerParams(
            dimension_semantics=("parallel", "parallel"),
            vmem_limit_bytes=_vmem_limit_bytes(),
        ),
    )(xp, w.reshape(9 * Cin, Cout), b.reshape(1, Cout).astype(jnp.float32))
    return out


# ----------------------------------------------------------------------------- 3x3 conv (small-map GEMM path)
def _conv3x3_gemm(x, w, b, relu):
    """Folded-K im2col in XLA + tiled matmul kernel.  Used where the halo path does not apply
    (Cin=3 first layer, tiny 4x4 / 2x2 maps), so the im2col HBM cost is negligible."""
    N, H, W, Cin = x.shape
    Cout = w.shape[-1]
    xp = jnp.pad(x, ((0, 0), (1, 1), (1, 1), (0, 0)))
    taps = [xp[:, dy:dy + H, dx:dx + W, :] for dy in range(3) for dx in range(3)]
    patches = jnp.concatenate(taps, axis=-1).reshape(N, H * W, 9 * Cin)
    out = batched_linear_pallas(
        patches,
        w.reshape(1, 9 * Cin, Cout),
        b.reshape(1, 1, Cout).astype(jnp.float32),
        activation="relu" if relu else "none",
        out_dtype=x.dtype,
    )
    return out.reshape(N, H, W, Cout)


def conv_block_pallas(x, w, b, *, relu=True, pool=False):
    """3x3 conv (pad=1, stride=1) + optional ReLU + optional fused 2x2/2 max-pool.

    x: (N,H,W,Cin) NHWC, w: (3,3,Cin,Cout), b: (Cout,).
    """
    N, H, W, Cin = x.shape
    br = None
    if Cin % 64 == 0 and H * W >= 64 and (not pool or (H % 2 == 0 and W % 2 == 0)):
        br = _pick_rows(H, W, N, pool)
    if br is not None:
        try:
            return _conv3x3_halo(x, w, b, relu, pool, br)
        except Exception:
            # conservative fallback: XLA im2col + tiled matmul (+ separate pool kernel)
            pass
    y = _conv3x3_gemm(x, w, b, relu)
    return maxpool2x2_pallas(y) if pool else y


# ----------------------------------------------------------------------------- 2x2 max-pool kernel
def _maxpool_kernel(x_ref, o_ref, *, C):
    # block is (1, Ho, 2, Wo, 2C): dim 2 = row parity, last dim packs (even col | odd col) chans
    top = x_ref[0, :, 0, :, :]          # rows 2i
    bot = x_ref[0, :, 1, :, :]          # rows 2i+1
    v = jnp.maximum(top, bot)           # (Ho, Wo, 2C)
    o_ref[0] = jnp.maximum(v[:, :, :C], v[:, :, C:])


def maxpool2x2_pallas(x):
    """x: (N,H,W,C) -> (N,H//2,W//2,C)  (kernel=2, stride=2).  The (N, Ho, 2, Wo, 2C) view is a
    free reshape of the contiguous NHWC tensor (no extra HBM round trip)."""
    N, H, W, C = x.shape
    Ho, Wo = H // 2, W // 2
    xr = x.reshape(N, Ho, 2, Wo, 2 * C)
    return pl.pallas_call(
        functools.partial(_maxpool_kernel, C=C),
        out_shape=jax.ShapeDtypeStruct((N, Ho, Wo, C), x.dtype),
        grid_spec=pltpu.PrefetchScalarGridSpec(
            num_scalar_prefetch=0,
            grid=(N,),
            in_specs=[pl.BlockSpec((1, Ho, 2, Wo, 2 * C), lambda n: (n, 0, 0, 0, 0))],
            out_specs=pl.BlockSpec((1, Ho, Wo, C), lambda n: (n, 0, 0, 0)),
        ),
        compiler_params=pltpu.CompilerParams(
            dimension_semantics=("parallel",),
            vmem_limit_bytes=_vmem_limit_bytes(),
        ),
    )(xr)


# ----------------------------------------------------------------------------- adaptive avg pool matrix
def adaptive_pool_matrix(in_size, out_size):
    """PyTorch AdaptiveAvgPool1d semantics as a (out_size, in_size) averaging matrix."""
    P = np.zeros((out_size, in_size), np.float32)
    for i in range(out_size):
        start = (i * in_size) // out_size
        end = -((-(i + 1) * in_size) // out_size)  # ceil
        P[i, start:end] = 1.0 / (end - start)
    return P


# ----------------------------------------------------------------------------- parameters
VGG16_CFG = [64, 64, "M", 128, 128, "M", 256, 256, 256, "M",
             512, 512, 512, "M", 512, 512, 512, "M"]


def init_params(key, num_classes):
    params = {"backbone": []}
    cin = 3
    for v in VGG16_CFG:
        if v == "M":
            params["backbone"].append(("pool",))
        else:
            key, k1 = jax.random.split(key)
            w = (jax.random.normal(k1, (3, 3, cin, v), jnp.float32)
                 * np.sqrt(2.0 / (9 * cin))).astype(jnp.bfloat16)
            params["backbone"].append(("conv", w, jnp.zeros((v,), jnp.float32)))
            cin = v

    # detector head
    key, k1, k2 = jax.random.split(key, 3)
    params["det_w1"] = (jax.random.normal(k1, (3, 3, 512, 256), jnp.float32)
                        * np.sqrt(2.0 / (9 * 512))).astype(jnp.bfloat16)
    params["det_b1"] = jnp.zeros((256,), jnp.float32)
    params["det_w2"] = jax.random.normal(k2, (256, num_classes + 1), jnp.float32) * np.sqrt(2.0 / 256)
    params["det_b2"] = jnp.zeros((num_classes + 1,), jnp.float32)

    fin = 512 * 7 * 7
    key, k1, k2, k3, k4 = jax.random.split(key, 5)
    # layer 1 of both heads fused along the output dim (shared input); bf16 weights, f32 bias
    params["head_w1"] = (jax.random.normal(k1, (1, fin, 2 * 4096), jnp.float32)
                         * np.sqrt(2.0 / fin)).astype(jnp.bfloat16)          # (1, 25088, 8192)
    params["head_b1"] = jnp.zeros((1, 1, 2 * 4096), jnp.float32)
    # layer 2: one matrix per head, run as a batched matmul
    params["head_w2"] = (jax.random.normal(k2, (2, 4096, 4096), jnp.float32)
                         * np.sqrt(2.0 / 4096)).astype(jnp.bfloat16)         # (2, 4096, 4096)
    params["head_b2"] = jnp.zeros((2, 1, 4096), jnp.float32)
    # tiny final layers (lane-sparse) stay f32 and run through XLA
    params["cls_w3"] = jax.random.normal(k3, (4096, num_classes), jnp.float32) * np.sqrt(2.0 / 4096)
    params["cls_b3"] = jnp.zeros((num_classes,), jnp.float32)
    params["bin_w3"] = jax.random.normal(k4, (4096, 1), jnp.float32) * np.sqrt(2.0 / 4096)
    params["bin_b3"] = jnp.zeros((1,), jnp.float32)
    return params


# ----------------------------------------------------------------------------- forward
def multitask_vgg_forward(x_nchw, params, num_classes):
    x = jnp.transpose(x_nchw, (0, 2, 3, 1)).astype(jnp.bfloat16)  # -> NHWC, bf16 activations

    # backbone: VGG16 "features"; conv layers immediately followed by 'M' fuse ReLU + maxpool
    layers = params["backbone"]
    i = 0
    while i < len(layers):
        layer = layers[i]
        if layer[0] == "conv":
            _, w, b = layer
            pool = (i + 1 < len(layers) and layers[i + 1][0] == "pool")
            x = conv_block_pallas(x, w, b, relu=True, pool=pool)
            i += 2 if pool else 1
        else:
            x = maxpool2x2_pallas(x)
            i += 1
    features = x
    N, Hf, Wf, C = features.shape

    # detector head: conv3x3(512->256)+ReLU (Pallas), conv1x1(256->num_classes+1) tiny -> XLA
    d = conv_block_pallas(features, params["det_w1"], params["det_b1"], relu=True, pool=False)
    det = jnp.einsum("nhwc,co->nhwo", d.astype(jnp.float32), params["det_w2"]) + params["det_b2"]
    detections = jnp.transpose(det, (0, 3, 1, 2))  # NCHW, matches PyTorch

    # AdaptiveAvgPool2d((7,7)) + NCHW flatten, computed ONCE and shared by both heads.
    # Tiny lane-sparse contraction -> plain XLA einsum.
    Ph = jnp.asarray(adaptive_pool_matrix(Hf, 7))
    Pw = jnp.asarray(adaptive_pool_matrix(Wf, 7))
    pooled = jnp.einsum("nhwc,ih,jw->ncij", features.astype(jnp.float32), Ph, Pw).reshape(N, C * 49)

    # classifier + binary heads, layers 1 & 2 in Pallas (bf16 weights, f32 accumulation)
    h0 = pooled.astype(jnp.bfloat16)[None]                                   # (1, N, 25088)
    h1 = batched_linear_pallas(h0, params["head_w1"], params["head_b1"],
                               "relu", out_dtype=jnp.bfloat16)[0]            # (N, 8192) bf16
    a2 = jnp.stack([h1[:, :4096], h1[:, 4096:]], axis=0)                     # (2, N, 4096) bf16
    h2 = batched_linear_pallas(a2, params["head_w2"], params["head_b2"], "relu")  # (2, N, 4096) f32

    class_preds = h2[0] @ params["cls_w3"] + params["cls_b3"]
    binary_preds = jax.nn.sigmoid(h2[1] @ params["bin_w3"] + params["bin_b3"])

    return detections, class_preds, binary_preds


# ----------------------------------------------------------------------------- main
if __name__ == "__main__":
    num_classes = 4
    key = jax.random.PRNGKey(0)
    key, kx, kp = jax.random.split(key, 3)

    # NCHW input, small spatial so the VGG16 feature map is 2x2
    x = jax.random.normal(kx, (2, 3, 64, 64), jnp.float32)
    params = init_params(kp, num_classes)

    detections, class_preds, binary_preds = multitask_vgg_forward(x, params, num_classes)
    jax.block_until_ready((detections, class_preds, binary_preds))

    assert detections.shape == (2, num_classes + 1, 2, 2)
    assert class_preds.shape == (2, num_classes)
    assert binary_preds.shape == (2, 1)
    print("KERNEL_OK")
</pallas_src>

<mosaic_0001>
module attributes {stable_mosaic.version = 11 : i64} {
  func.func @_matmul_kernel_direct(%arg0: i32, %arg1: i32, %arg2: memref<1x4096x27xbf16, #tpu.memory_space<vmem>>, %arg3: memref<1x27x64xbf16, #tpu.memory_space<vmem>>, %arg4: memref<1x1x64xf32, #tpu.memory_space<vmem>>, %arg5: memref<1x4096x64xbf16, #tpu.memory_space<vmem>>) attributes {dimension_semantics = [#tpu.dimension_semantics<parallel>, #tpu.dimension_semantics<parallel>], iteration_bounds = array<i64: 2, 1>, scalar_prefetch = 0 : i64, scratch_operands = 0 : i64, tpu.core_type = #tpu.core_type<tc>, window_params = [{transform_indices = @transform_0, window_bounds = array<i64: 1, 4096, 27>}, {transform_indices = @transform_1, window_bounds = array<i64: 1, 27, 64>}, {transform_indices = @transform_2, window_bounds = array<i64: 1, 1, 64>}, {transform_indices = @transform_3, window_bounds = array<i64: 1, 4096, 64>}]} {
    %c0 = arith.constant 0 : index
    %c0_0 = arith.constant 0 : index
    %c0_1 = arith.constant 0 : index
    %0 = vector.load %arg2[%c0, %c0_0, %c0_1] : memref<1x4096x27xbf16, #tpu.memory_space<vmem>>, vector<1x4096x27xbf16>
    %1 = vector.shape_cast %0 : vector<1x4096x27xbf16> to vector<4096x27xbf16>
    %c0_2 = arith.constant 0 : index
    %c0_3 = arith.constant 0 : index
    %c0_4 = arith.constant 0 : index
    %2 = vector.load %arg3[%c0_2, %c0_3, %c0_4] : memref<1x27x64xbf16, #tpu.memory_space<vmem>>, vector<1x27x64xbf16>
    %3 = vector.shape_cast %2 : vector<1x27x64xbf16> to vector<27x64xbf16>
    %cst = arith.constant dense<0.000000e+00> : vector<4096x64xf32>
    %4 = tpu.matmul %1, %3, %cst {dimension_numbers = #tpu.dot_dimension_numbers<[1], [0], [0], [1], [0, 0, 1, 1], [], []>} : vector<4096x27xbf16>, vector<27x64xbf16>, vector<4096x64xf32> -> vector<4096x64xf32>
    %c0_5 = arith.constant 0 : index
    %c0_6 = arith.constant 0 : index
    %c0_7 = arith.constant 0 : index
    %5 = vector.load %arg4[%c0_5, %c0_6, %c0_7] : memref<1x1x64xf32, #tpu.memory_space<vmem>>, vector<1x1x64xf32>
    %6 = vector.shape_cast %5 : vector<1x1x64xf32> to vector<1x64xf32>
    %7 = vector.broadcast %6 : vector<1x64xf32> to vector<4096x64xf32>
    %8 = arith.addf %4, %7 : vector<4096x64xf32>
    %cst_8 = arith.constant 0.000000e+00 : f32
    %9 = vector.broadcast %cst_8 : f32 to vector<4096x64xf32>
    %10 = arith.maximumf %8, %9 : vector<4096x64xf32>
    %11 = arith.truncf %10 : vector<4096x64xf32> to vector<4096x64xbf16>
    %c0_9 = arith.constant 0 : index
    %c0_10 = arith.constant 0 : index
    %c0_11 = arith.constant 0 : index
    %12 = vector.load %arg5[%c0_9, %c0_10, %c0_11] : memref<1x4096x64xbf16, #tpu.memory_space<vmem>>, vector<1x4096x64xbf16>
    %13 = vector.shape_cast %12 : vector<1x4096x64xbf16> to vector<4096x64xbf16>
    %14 = vector.shape_cast %11 : vector<4096x64xbf16> to vector<1x4096x64xbf16>
    tpu.vector_store %arg5[%c0_9, %c0_10, %c0_11], %14 {strides = array<i32>} : memref<1x4096x64xbf16, #tpu.memory_space<vmem>>, vector<1x4096x64xbf16>,
    return
  }
  func.func @transform_0(%arg0: i32, %arg1: i32) -> (i32, i32, i32) {
    %c0_i32 = arith.constant 0 : i32
    %c0_i32_0 = arith.constant 0 : i32
    %c0_i32_1 = arith.constant 0 : i32
    return %arg0, %c0_i32, %c0_i32_0 : i32, i32, i32
  }
  func.func @transform_1(%arg0: i32, %arg1: i32) -> (i32, i32, i32) {
    %c0_i32 = arith.constant 0 : i32
    %c0_i32_0 = arith.constant 0 : i32
    %c0_i32_1 = arith.constant 0 : i32
    return %c0_i32, %c0_i32_0, %arg1 : i32, i32, i32
  }
  func.func @transform_2(%arg0: i32, %arg1: i32) -> (i32, i32, i32) {
    %c0_i32 = arith.constant 0 : i32
    %c0_i32_0 = arith.constant 0 : i32
    %c0_i32_1 = arith.constant 0 : i32
    return %c0_i32, %c0_i32_0, %arg1 : i32, i32, i32
  }
  func.func @transform_3(%arg0: i32, %arg1: i32) -> (i32, i32, i32) {
    %c0_i32 = arith.constant 0 : i32
    %c0_i32_0 = arith.constant 0 : i32
    return %arg0, %c0_i32, %arg1 : i32, i32, i32
  }
}

</mosaic_0001>

<llo_original>
// kernel: tpu_custom_call.1
$region0: #{tpu_custom_call.1}
  #allocation0 [shape = 'u32[]', space=smem, size = 0x4, offset = 0x4, fixed_abs, tag = 'smem constant byte address 0x4 - core index']
  #allocation1 [shape = 'u32[144,128]{1,0:T(1,128)}', space=vmem, size = 0x12000, scoped, tag = 'internal scratch']
  %s0 = inlined_call_operand.hbm [shape: bf16[2,4096,27], index: 0, kind: input, shape index: {}]
  %s1 = inlined_call_operand.hbm [shape: bf16[1,27,64], index: 1, kind: input, shape index: {}]
  %s2 = inlined_call_operand.hbm [shape: f32[1,1,64], index: 2, kind: input, shape index: {}]
  %s3 = inlined_call_operand.hbm [shape: bf16[2,4096,64], index: 3, kind: output, shape index: {}]
  %s4 = sld [smem:[#allocation0]]
  $region57: #{tpu_custom_call.1} parent=0
    _
  %s6 = ssub.s32 1, %s4
  %s7 = scalar_select 0, %s6, %s4
  $region1: #{tpu_custom_call.1} parent=0
    #allocation2 [shape = 'u8[2097152]{0}', space=vmem, size = 0x200000, scoped, tag = 'input window, operand 0']
    #allocation3 [shape = 's32[2]{0}', space=sflag, size = 0x8, scoped, tag = 'scoped memory for tpu_custom_call.1']
    #allocation4 [shape = 's32[2]{0}', space=sflag, size = 0x8, scoped, tag = 'scoped memory for tpu_custom_call.1']
    #allocation5 [shape = 'u8[8192]{0}', space=vmem, size = 0x2000, scoped, tag = 'input window, operand 1, single buffered']
    #allocation6 [shape = 's32[1]{0}', space=sflag, size = 0x4, scoped, tag = 'scoped memory for tpu_custom_call.1']
    #allocation7 [shape = 'u8[512]{0}', space=vmem, size = 0x400, scoped, tag = 'input window, operand 2, single buffered']
    #allocation8 [shape = 'u8[2097152]{0}', space=vmem, size = 0x200000, scoped, tag = 'output window, operand 0']
    %8 = vsyncpa [#allocation3], 0
    %s9 = scalar_lea.sflag [#allocation3], 1
    %10 = vsyncpa %s9, 0
    %11 = vsyncpa [#allocation6], 0
    %12 = vsyncpa [#allocation4], 0
    %s13 = scalar_lea.sflag [#allocation4], 1
    %14 = vsyncpa %s13, 0
    loop: start=0, step=1, limit=4
    $region2: #{tpu_custom_call.1} parent=1 // loop_pre_header
      _
    $region3: #{tpu_custom_call.1} parent=1 // loop_header
      %s16 = sphi 0, %s20
      %p17 = scmp.ge.s32.totalorder %s16, 4
      %s23 = sphi 0, %s35
      %s24 = sphi 0, %s31
      %s25 = sphi 0, %s23
      %s26 = sphi 0, %s24
      %s27 = sphi 0, %s25
      %s28 = sphi 0, %s26
      %s38 = sphi 0, %s40
      %s41 = sphi 0, %s38
      %s42 = sphi 0, %s41
      %s58 = sphi 0, %s42
      %s64 = sphi 0, %s66
      %s67 = sphi 0, %s64
      %s68 = sphi 0, %s67
      %s84 = sphi 0, %s68
      %s90 = sphi 0, %s92
      %s93 = sphi 0, %s90
      %s94 = sphi 0, %s93
      %s110 = sphi 0, %s94
      %s118 = sphi 0, %s120
      %s121 = sphi 0, %s118
      %s122 = sphi 0, %s121
      %s138 = sphi 0, %s122
    $region4: #{tpu_custom_call.1} parent=1 // loop_header_branch
      %19 = sbr.rel (%p17) target = $region8
    $region5: #{tpu_custom_call.1} parent=1 // loop_body
      %s21 = ssub.s32 %s16, 1
      %s22 = ssub.s32 %s16, 2
      %s29 = sadd.s32 1, %s24
      %p30 = scmp.ge.s32.totalorder %s29, 1
      %s31 = scalar_select %p30, 0, %s29
      %s32 = sadd.s32 1, %s23
      %s33 = scalar_select %p30, %s32, %s23
      %p34 = scmp.ge.s32.totalorder %s33, 2
      %s35 = scalar_select %p34, 0, %s33
      %s36 = ssub.s32 %s23, %s35
      %p37 = scmp.eq.s32.totalorder %s36, 0
      %s39 = sadd.s32 %s38, 1
      %s40 = scalar_select %p37, %s38, %s39
      %p43 = pneg %p37
      %p44 = scmp.eq.s32.totalorder %s16, 1
      %p45 = por %p43, %p44
      %p46 = scmp.ne.s32.totalorder %s38, %s41
      %p47 = scmp.eq.s32.totalorder %s16, 0
      %p48 = por %p46, %p47
      %p49 = scmp.ne.s32.totalorder %s38, %s41
      %p50 = scmp.eq.s32.totalorder %s21, 1
      %p51 = por %p49, %p50
      %p52 = scmp.ne.s32.totalorder %s41, %s42
      %p53 = scmp.eq.s32.totalorder %s21, 0
      %p54 = por %p52, %p53
      %p55 = scmp.ne.s32.totalorder %s41, %s42
      %p56 = scmp.eq.s32.totalorder %s22, 1
      %p57 = por %p55, %p56
      %p59 = scmp.ne.s32.totalorder %s42, %s58
      %p60 = scmp.eq.s32.totalorder %s22, 0
      %p61 = por %p59, %p60
      %s62 = ssub.s32 %s24, %s31
      %p63 = scmp.eq.s32.totalorder %s62, 0
      %s65 = sadd.s32 %s64, 1
      %s66 = scalar_select %p63, %s64, %s65
      %p69 = pneg %p63
      %p70 = scmp.eq.s32.totalorder %s16, 1
      %p71 = por %p69, %p70
      %p72 = scmp.ne.s32.totalorder %s64, %s67
      %p73 = scmp.eq.s32.totalorder %s16, 0
      %p74 = por %p72, %p73
      %p75 = scmp.ne.s32.totalorder %s64, %s67
      %p76 = scmp.eq.s32.totalorder %s21, 1
      %p77 = por %p75, %p76
      %p78 = scmp.ne.s32.totalorder %s67, %s68
      %p79 = scmp.eq.s32.totalorder %s21, 0
      %p80 = por %p78, %p79
      %p81 = scmp.ne.s32.totalorder %s67, %s68
      %p82 = scmp.eq.s32.totalorder %s22, 1
      %p83 = por %p81, %p82
      %p85 = scmp.ne.s32.totalorder %s68, %s84
      %p86 = scmp.eq.s32.totalorder %s22, 0
      %p87 = por %p85, %p86
      %s88 = ssub.s32 %s24, %s31
      %p89 = scmp.eq.s32.totalorder %s88, 0
      %s91 = sadd.s32 %s90, 1
      %s92 = scalar_select %p89, %s90, %s91
      %p95 = pneg %p89
      %p96 = scmp.eq.s32.totalorder %s16, 1
      %p97 = por %p95, %p96
      %p98 = scmp.ne.s32.totalorder %s90, %s93
      %p99 = scmp.eq.s32.totalorder %s16, 0
      %p100 = por %p98, %p99
      %p101 = scmp.ne.s32.totalorder %s90, %s93
      %p102 = scmp.eq.s32.totalorder %s21, 1
      %p103 = por %p101, %p102
      %p104 = scmp.ne.s32.totalorder %s93, %s94
      %p105 = scmp.eq.s32.totalorder %s21, 0
      %p106 = por %p104, %p105
      %p107 = scmp.ne.s32.totalorder %s93, %s94
      %p108 = scmp.eq.s32.totalorder %s22, 1
      %p109 = por %p107, %p108
      %p111 = scmp.ne.s32.totalorder %s94, %s110
      %p112 = scmp.eq.s32.totalorder %s22, 0
      %p113 = por %p111, %p112
      %s114 = ssub.s32 %s23, %s35
      %s115 = ssub.s32 %s24, %s31
      %s116 = sor.u32 %s114, %s115
      %p117 = scmp.eq.s32.totalorder %s116, 0
      %s119 = sadd.s32 %s118, 1
      %s120 = scalar_select %p117, %s118, %s119
      %p123 = pneg %p117
      %p124 = scmp.eq.s32.totalorder %s16, 1
      %p125 = por %p123, %p124
      %p126 = scmp.ne.s32.totalorder %s118, %s121
      %p127 = scmp.eq.s32.totalorder %s16, 0
      %p128 = por %p126, %p127
      %p129 = scmp.ne.s32.totalorder %s118, %s121
      %p130 = scmp.eq.s32.totalorder %s21, 1
      %p131 = por %p129, %p130
      %p132 = scmp.ne.s32.totalorder %s121, %s122
      %p133 = scmp.eq.s32.totalorder %s21, 0
      %p134 = por %p132, %p133
      %p135 = scmp.ne.s32.totalorder %s121, %s122
      %p136 = scmp.eq.s32.totalorder %s22, 1
      %p137 = por %p135, %p136
      %p139 = scmp.ne.s32.totalorder %s122, %s138
      %p140 = scmp.eq.s32.totalorder %s22, 0
      %p141 = por %p139, %p140
      %p142 = scmp.le.s32.totalorder 1, %s16
      %p143 = scmp.lt.s32.totalorder %s16, 3
      %p144 = pnand %p142, %p143
      %p145 = pneg %p144
      // Predicated region
      $region9: #{tpu_custom_call.1} parent=5 // pred_check
        _
      $region10: #{tpu_custom_call.1} parent=5 // pred_check_branch
        %147 = sbr.rel (%p144) target = $region12
      $region11: #{tpu_custom_call.1} parent=5 // pred_region
        %s148 = ssub.s32 %s16, 1
        // Predicated region
        $region13: #{tpu_custom_call.1} parent=11 // pred_check
          %p149 = pneg %p80
        $region14: #{tpu_custom_call.1} parent=11 // pred_check_branch
          %151 = sbr.rel (%p149) target = $region16
        $region15: #{tpu_custom_call.1} parent=11 // pred_region
          %s153 = ssub.s32 256, 256
          %154 = vsyncadd [#allocation6], %s153
          %s155 = smul.addr %s26, 64
          %s156 = scalar_lea.hbm %s1, %s155
          %s157 = sshll.u32 [#allocation5], 4
          %s158 = int_to_ptr.vmem [resolvable:$true] %s157
          %163 = dma.hbm_to_vmem [thread:$0]  %s156, 256, %s158, [#allocation6], 64, 64, 4
        $region16: #{tpu_custom_call.1} parent=11 // pred_fallthru
          _
        // Predicated region
        $region17: #{tpu_custom_call.1} parent=11 // pred_check
          %p164 = pneg %p106
        $region18: #{tpu_custom_call.1} parent=11 // pred_check_branch
          %166 = sbr.rel (%p164) target = $region20
        $region19: #{tpu_custom_call.1} parent=11 // pred_region
          %s168 = ssub.s32 16, 16
          %169 = vsyncadd [#allocation6], %s168
          %s170 = smul.addr %s26, 16
          %s171 = scalar_lea.hbm %s2, %s170
          %s173 = sshll.u32 [#allocation7], 4
          %s174 = int_to_ptr.vmem [resolvable:$true] %s173
          %176 = dma.hbm_to_vmem [thread:$0]  %s171, 16, %s174, [#allocation6]
        $region20: #{tpu_custom_call.1} parent=11 // pred_fallthru
          _
      $region12: #{tpu_custom_call.1} parent=5 // pred_fallthru
        _
      %p177 = scmp.lt.s32.totalorder %s16, 2
      // Predicated region
      $region21: #{tpu_custom_call.1} parent=5 // pred_check
        %p178 = pneg %p177
      $region22: #{tpu_custom_call.1} parent=5 // pred_check_branch
        %180 = sbr.rel (%p178) target = $region24
      $region23: #{tpu_custom_call.1} parent=5 // pred_region
        // Predicated region
        $region25: #{tpu_custom_call.1} parent=23 // pred_check
          %p181 = pneg %p48
        $region26: #{tpu_custom_call.1} parent=23 // pred_check_branch
          %183 = sbr.rel (%p181) target = $region28
        $region27: #{tpu_custom_call.1} parent=23 // pred_region
          %s184 = sand.u32 %s38, 1
          %s185 = scalar_lea.sflag [#allocation3], %s184
          %s186 = sand.u32 %s38, 1
          %s187 = smul.addr %s186, 2048
          %s188 = scalar_lea.vmem [#allocation2], %s187
          %s190 = ssub.s32 32768, 32768
          %191 = vsyncadd %s185, %s190
          %s192 = smul.addr %s23, 512
          %s193 = smul.addr %s192, 64
          %s194 = scalar_lea.hbm %s0, %s193
          %s195 = sshll.u32 %s188, 4
          %s196 = int_to_ptr.vmem [resolvable:$true] %s195
          %201 = dma.hbm_to_vmem [thread:$0]  %s194, 32768, %s196, %s185, 64, 64, 4
        $region28: #{tpu_custom_call.1} parent=23 // pred_fallthru
          _
      $region24: #{tpu_custom_call.1} parent=5 // pred_fallthru
        _
      %p202 = scmp.le.s32.totalorder 1, %s16
      %p203 = scmp.lt.s32.totalorder %s16, 3
      %p204 = pnand %p202, %p203
      %p205 = pneg %p204
      // Predicated region
      $region29: #{tpu_custom_call.1} parent=5 // pred_check
        _
      $region30: #{tpu_custom_call.1} parent=5 // pred_check_branch
        %207 = sbr.rel (%p204) target = $region32
      $region31: #{tpu_custom_call.1} parent=5 // pred_region
        %s208 = ssub.s32 %s16, 1
        %s209 = sand.u32 %s41, 1
        %s210 = scalar_lea.sflag [#allocation3], %s209
        %s211 = sand.u32 %s41, 1
        %s212 = smul.addr %s211, 2048
        %s213 = scalar_lea.vmem [#allocation2], %s212
        // Predicated region
        $region33: #{tpu_custom_call.1} parent=31 // pred_check
          %p214 = pneg %p54
        $region34: #{tpu_custom_call.1} parent=31 // pred_check_branch
          %216 = sbr.rel (%p214) target = $region36
        $region35: #{tpu_custom_call.1} parent=31 // pred_region
          %217 = dma.done %s210, 32768
        $region36: #{tpu_custom_call.1} parent=31 // pred_fallthru
          _
        // Predicated region
        $region37: #{tpu_custom_call.1} parent=31 // pred_check
          %p218 = pneg %p80
        $region38: #{tpu_custom_call.1} parent=31 // pred_check_branch
          %220 = sbr.rel (%p218) target = $region40
        $region39: #{tpu_custom_call.1} parent=31 // pred_region
          %221 = dma.done [#allocation6], 256
        $region40: #{tpu_custom_call.1} parent=31 // pred_fallthru
          _
        // Predicated region
        $region41: #{tpu_custom_call.1} parent=31 // pred_check
          %p222 = pneg %p106
        $region42: #{tpu_custom_call.1} parent=31 // pred_check_branch
          %224 = sbr.rel (%p222) target = $region44
        $region43: #{tpu_custom_call.1} parent=31 // pred_region
          %225 = dma.done [#allocation6], 16
        $region44: #{tpu_custom_call.1} parent=31 // pred_fallthru
          _
        %s226 = sand.u32 %s41, 1
        %s227 = scalar_lea.sflag [#allocation3], %s226
        %s228 = sand.u32 %s41, 1
        %s229 = smul.addr %s228, 2048
        %s230 = scalar_lea.vmem [#allocation2], %s229
        %p231 = pneg %p54
        %p232 = pneg %p51
        %p233 = pneg %p80
        %p234 = pneg %p77
        %p235 = pneg %p106
        %p236 = pneg %p103
        %p237 = pneg %p134
        %p238 = pneg %p131
        %s239 = sand.u32 %s121, 1
        %s240 = scalar_lea.sflag [#allocation4], %s239
        %s241 = sand.u32 %s121, 1
        %s242 = smul.addr %s241, 2048
        %s243 = scalar_lea.vmem [#allocation8], %s242
        %v245 = vld [vmem:[%s213] sm:$0xf]
        %v246 = vld [vmem:[%s213 + $0x4] sm:$0xf]
        %v247 = vld [vmem:[%s213 + $0x8] sm:$0xf]
        %v248 = vld [vmem:[%s213 + $0xc] sm:$0xf]
        %v249 = vld [vmem:[%s213 + $0x10] sm:$0xf]
        %v250 = vld [vmem:[%s213 + $0x14] sm:$0xf]
        %v251 = vld [vmem:[%s213 + $0x18] sm:$0xf]
        %v252 = vld [vmem:[%s213 + $0x1c] sm:$0xf]
        %v253 = vld [vmem:[%s213 + $0x20] sm:$0xf]
        %v254 = vld [vmem:[%s213 + $0x24] sm:$0xf]
        %v255 = vld [vmem:[%s213 + $0x28] sm:$0xf]
        %v256 = vld [vmem:[%s213 + $0x2c] sm:$0xf]
        %v257 = vld [vmem:[%s213 + $0x30] sm:$0xf]
        %v258 = vld [vmem:[%s213 + $0x34] sm:$0xf]
        %v259 = vld [vmem:[%s213 + $0x38] sm:$0xf]
        %v260 = vld [vmem:[%s213 + $0x3c] sm:$0xf]
        %v261 = vld [vmem:[%s213 + $0x40] sm:$0xf]
        %v262 = vld [vmem:[%s213 + $0x44] sm:$0xf]
        %v263 = vld [vmem:[%s213 + $0x48] sm:$0xf]
        %v264 = vld [vmem:[%s213 + $0x4c] sm:$0xf]
        %v265 = vld [vmem:[%s213 + $0x50] sm:$0xf]
        %v266 = vld [vmem:[%s213 + $0x54] sm:$0xf]
        %v267 = vld [vmem:[%s213 + $0x58] sm:$0xf]
        %v268 = vld [vmem:[%s213 + $0x5c] sm:$0xf]
        %v269 = vld [vmem:[%s213 + $0x60] sm:$0xf]
        %v270 = vld [vmem:[%s213 + $0x64] sm:$0xf]
        %v271 = vld [vmem:[%s213 + $0x68] sm:$0xf]
        %v272 = vld [vmem:[%s213 + $0x6c] sm:$0xf]
        %v273 = vld [vmem:[%s213 + $0x70] sm:$0xf]
        %v274 = vld [vmem:[%s213 + $0x74] sm:$0xf]
        %v275 = vld [vmem:[%s213 + $0x78] sm:$0xf]
        %v276 = vld [vmem:[%s213 + $0x7c] sm:$0xf]
        %v277 = vld [vmem:[%s213 + $0x80] sm:$0xf]
        %v278 = vld [vmem:[%s213 + $0x84] sm:$0xf]
        %v279 = vld [vmem:[%s213 + $0x88] sm:$0xf]
        %v280 = vld [vmem:[%s213 + $0x8c] sm:$0xf]
        %v281 = vld [vmem:[%s213 + $0x90] sm:$0xf]
        %v282 = vld [vmem:[%s213 + $0x94] sm:$0xf]
        %v283 = vld [vmem:[%s213 + $0x98] sm:$0xf]
        %v284 = vld [vmem:[%s213 + $0x9c] sm:$0xf]
        %v285 = vld [vmem:[%s213 + $0xa0] sm:$0xf]
        %v286 = vld [vmem:[%s213 + $0xa4] sm:$0xf]
        %v287 = vld [vmem:[%s213 + $0xa8] sm:$0xf]
        %v288 = vld [vmem:[%s213 + $0xac] sm:$0xf]
        %v289 = vld [vmem:[%s213 + $0xb0] sm:$0xf]
        %v290 = vld [vmem:[%s213 + $0xb4] sm:$0xf]
        %v291 = vld [vmem:[%s213 + $0xb8] sm:$0xf]
        %v292 = vld [vmem:[%s213 + $0xbc] sm:$0xf]
        %v293 = vld [vmem:[%s213 + $0xc0] sm:$0xf]
        %v294 = vld [vmem:[%s213 + $0xc4] sm:$0xf]
        %v295 = vld [vmem:[%s213 + $0xc8] sm:$0xf]
        %v296 = vld [vmem:[%s213 + $0xcc] sm:$0xf]
        %v297 = vld [vmem:[%s213 + $0xd0] sm:$0xf]
        %v298 = vld [vmem:[%s213 + $0xd4] sm:$0xf]
        %v299 = vld [vmem:[%s213 + $0xd8] sm:$0xf]
        %v300 = vld [vmem:[%s213 + $0xdc] sm:$0xf]
        %v301 = vld [vmem:[%s213 + $0xe0] sm:$0xf]
        %v302 = vld [vmem:[%s213 + $0xe4] sm:$0xf]
        %v303 = vld [vmem:[%s213 + $0xe8] sm:$0xf]
        %v304 = vld [vmem:[%s213 + $0xec] sm:$0xf]
        %v305 = vld [vmem:[%s213 + $0xf0] sm:$0xf]
        %v306 = vld [vmem:[%s213 + $0xf4] sm:$0xf]
        %v307 = vld [vmem:[%s213 + $0xf8] sm:$0xf]
        %v308 = vld [vmem:[%s213 + $0xfc] sm:$0xf]
        %v309 = vld [vmem:[%s213 + $0x100] sm:$0xf]
        %v310 = vld [vmem:[%s213 + $0x104] sm:$0xf]
        %v311 = vld [vmem:[%s213 + $0x108] sm:$0xf]
        %v312 = vld [vmem:[%s213 + $0x10c] sm:$0xf]
        %v313 = vld [vmem:[%s213 + $0x110] sm:$0xf]
        %v314 = vld [vmem:[%s213 + $0x114] sm:$0xf]
        %v315 = vld [vmem:[%s213 + $0x118] sm:$0xf]
        %v316 = vld [vmem:[%s213 + $0x11c] sm:$0xf]
        %v317 = vld [vmem:[%s213 + $0x120] sm:$0xf]
        %v318 = vld [vmem:[%s213 + $0x124] sm:$0xf]
        %v319 = vld [vmem:[%s213 + $0x128] sm:$0xf]
        %v320 = vld [vmem:[%s213 + $0x12c] sm:$0xf]
        %v321 = vld [vmem:[%s213 + $0x130] sm:$0xf]
        %v322 = vld [vmem:[%s213 + $0x134] sm:$0xf]
        %v323 = vld [vmem:[%s213 + $0x138] sm:$0xf]
        %v324 = vld [vmem:[%s213 + $0x13c] sm:$0xf]
        %v325 = vld [vmem:[%s213 + $0x140] sm:$0xf]
        %v326 = vld [vmem:[%s213 + $0x144] sm:$0xf]
        %v327 = vld [vmem:[%s213 + $0x148] sm:$0xf]
        %v328 = vld [vmem:[%s213 + $0x14c] sm:$0xf]
        %v329 = vld [vmem:[%s213 + $0x150] sm:$0xf]
        %v330 = vld [vmem:[%s213 + $0x154] sm:$0xf]
        %v331 = vld [vmem:[%s213 + $0x158] sm:$0xf]
        %v332 = vld [vmem:[%s213 + $0x15c] sm:$0xf]
        %v333 = vld [vmem:[%s213 + $0x160] sm:$0xf]
        %v334 = vld [vmem:[%s213 + $0x164] sm:$0xf]
        %v335 = vld [vmem:[%s213 + $0x168] sm:$0xf]
        %v336 = vld [vmem:[%s213 + $0x16c] sm:$0xf]
        %v337 = vld [vmem:[%s213 + $0x170] sm:$0xf]
        %v338 = vld [vmem:[%s213 + $0x174] sm:$0xf]
        %v339 = vld [vmem:[%s213 + $0x178] sm:$0xf]
        %v340 = vld [vmem:[%s213 + $0x17c] sm:$0xf]
        %v341 = vld [vmem:[%s213 + $0x180] sm:$0xf]
        %v342 = vld [vmem:[%s213 + $0x184] sm:$0xf]
        %v343 = vld [vmem:[%s213 + $0x188] sm:$0xf]
        %v344 = vld [vmem:[%s213 + $0x18c] sm:$0xf]
        %v345 = vld [vmem:[%s213 + $0x190] sm:$0xf]
        %v346 = vld [vmem:[%s213 + $0x194] sm:$0xf]
        %v347 = vld [vmem:[%s213 + $0x198] sm:$0xf]
        %v348 = vld [vmem:[%s213 + $0x19c] sm:$0xf]
        %v349 = vld [vmem:[%s213 + $0x1a0] sm:$0xf]
        %v350 = vld [vmem:[%s213 + $0x1a4] sm:$0xf]
        %v351 = vld [vmem:[%s213 + $0x1a8] sm:$0xf]
        %v352 = vld [vmem:[%s213 + $0x1ac] sm:$0xf]
        %v353 = vld [vmem:[%s213 + $0x1b0] sm:$0xf]
        %v354 = vld [vmem:[%s213 + $0x1b4] sm:$0xf]
        %v355 = vld [vmem:[%s213 + $0x1b8] sm:$0xf]
        %v356 = vld [vmem:[%s213 + $0x1bc] sm:$0xf]
        %v357 = vld [vmem:[%s213 + $0x1c0] sm:$0xf]
        %v358 = vld [vmem:[%s213 + $0x1c4] sm:$0xf]
        %v359 = vld [vmem:[%s213 + $0x1c8] sm:$0xf]
        %v360 = vld [vmem:[%s213 + $0x1cc] sm:$0xf]
        %v361 = vld [vmem:[%s213 + $0x1d0] sm:$0xf]
        %v362 = vld [vmem:[%s213 + $0x1d4] sm:$0xf]
        %v363 = vld [vmem:[%s213 + $0x1d8] sm:$0xf]
        %v364 = vld [vmem:[%s213 + $0x1dc] sm:$0xf]
        %v365 = vld [vmem:[%s213 + $0x1e0] sm:$0xf]
        %v366 = vld [vmem:[%s213 + $0x1e4] sm:$0xf]
        %v367 = vld [vmem:[%s213 + $0x1e8] sm:$0xf]
        %v368 = vld [vmem:[%s213 + $0x1ec] sm:$0xf]
        %v369 = vld [vmem:[%s213 + $0x1f0] sm:$0xf]
        %v370 = vld [vmem:[%s213 + $0x1f4] sm:$0xf]
        %v371 = vld [vmem:[%s213 + $0x1f8] sm:$0xf]
        %v372 = vld [vmem:[%s213 + $0x1fc] sm:$0xf]
        %v373 = vld [vmem:[%s213 + $0x200] sm:$0xf]
        %v374 = vld [vmem:[%s213 + $0x204] sm:$0xf]
        %v375 = vld [vmem:[%s213 + $0x208] sm:$0xf]
        %v376 = vld [vmem:[%s213 + $0x20c] sm:$0xf]
        %v377 = vld [vmem:[%s213 + $0x210] sm:$0xf]
        %v378 = vld [vmem:[%s213 + $0x214] sm:$0xf]
        %v379 = vld [vmem:[%s213 + $0x218] sm:$0xf]
        %v380 = vld [vmem:[%s213 + $0x21c] sm:$0xf]
        %v381 = vld [vmem:[%s213 + $0x220] sm:$0xf]
        %v382 = vld [vmem:[%s213 + $0x224] sm:$0xf]
        %v383 = vld [vmem:[%s213 + $0x228] sm:$0xf]
        %v384 = vld [vmem:[%s213 + $0x22c] sm:$0xf]
        %v385 = vld [vmem:[%s213 + $0x230] sm:$0xf]
        %v386 = vld [vmem:[%s213 + $0x234] sm:$0xf]
        %v387 = vld [vmem:[%s213 + $0x238] sm:$0xf]
        %v388 = vld [vmem:[%s213 + $0x23c] sm:$0xf]
        %v389 = vld [vmem:[%s213 + $0x240] sm:$0xf]
        %v390 = vld [vmem:[%s213 + $0x244] sm:$0xf]
        %v391 = vld [vmem:[%s213 + $0x248] sm:$0xf]
        %v392 = vld [vmem:[%s213 + $0x24c] sm:$0xf]
        %v393 = vld [vmem:[%s213 + $0x250] sm:$0xf]
        %v394 = vld [vmem:[%s213 + $0x254] sm:$0xf]
        %v395 = vld [vmem:[%s213 + $0x258] sm:$0xf]
        %v396 = vld [vmem:[%s213 + $0x25c] sm:$0xf]
        %v397 = vld [vmem:[%s213 + $0x260] sm:$0xf]
        %v398 = vld [vmem:[%s213 + $0x264] sm:$0xf]
        %v399 = vld [vmem:[%s213 + $0x268] sm:$0xf]
        %v400 = vld [vmem:[%s213 + $0x26c] sm:$0xf]
        %v401 = vld [vmem:[%s213 + $0x270] sm:$0xf]
        %v402 = vld [vmem:[%s213 + $0x274] sm:$0xf]
        %v403 = vld [vmem:[%s213 + $0x278] sm:$0xf]
        %v404 = vld [vmem:[%s213 + $0x27c] sm:$0xf]
        %v405 = vld [vmem:[%s213 + $0x280] sm:$0xf]
        %v406 = vld [vmem:[%s213 + $0x284] sm:$0xf]
        %v407 = vld [vmem:[%s213 + $0x288] sm:$0xf]
        %v408 = vld [vmem:[%s213 + $0x28c] sm:$0xf]
        %v409 = vld [vmem:[%s213 + $0x290] sm:$0xf]
        %v410 = vld [vmem:[%s213 + $0x294] sm:$0xf]
        %v411 = vld [vmem:[%s213 + $0x298] sm:$0xf]
        %v412 = vld [vmem:[%s213 + $0x29c] sm:$0xf]
        %v413 = vld [vmem:[%s213 + $0x2a0] sm:$0xf]
        %v414 = vld [vmem:[%s213 + $0x2a4] sm:$0xf]
        %v415 = vld [vmem:[%s213 + $0x2a8] sm:$0xf]
        %v416 = vld [vmem:[%s213 + $0x2ac] sm:$0xf]
        %v417 = vld [vmem:[%s213 + $0x2b0] sm:$0xf]
        %v418 = vld [vmem:[%s213 + $0x2b4] sm:$0xf]
        %v419 = vld [vmem:[%s213 + $0x2b8] sm:$0xf]
        %v420 = vld [vmem:[%s213 + $0x2bc] sm:$0xf]
        %v421 = vld [vmem:[%s213 + $0x2c0] sm:$0xf]
        %v422 = vld [vmem:[%s213 + $0x2c4] sm:$0xf]
        %v423 = vld [vmem:[%s213 + $0x2c8] sm:$0xf]
        %v424 = vld [vmem:[%s213 + $0x2cc] sm:$0xf]
        %v425 = vld [vmem:[%s213 + $0x2d0] sm:$0xf]
        %v426 = vld [vmem:[%s213 + $0x2d4] sm:$0xf]
        %v427 = vld [vmem:[%s213 + $0x2d8] sm:$0xf]
        %v428 = vld [vmem:[%s213 + $0x2dc] sm:$0xf]
        %v429 = vld [vmem:[%s213 + $0x2e0] sm:$0xf]
        %v430 = vld [vmem:[%s213 + $0x2e4] sm:$0xf]
        %v431 = vld [vmem:[%s213 + $0x2e8] sm:$0xf]
        %v432 = vld [vmem:[%s213 + $0x2ec] sm:$0xf]
        %v433 = vld [vmem:[%s213 + $0x2f0] sm:$0xf]
        %v434 = vld [vmem:[%s213 + $0x2f4] sm:$0xf]
        %v435 = vld [vmem:[%s213 + $0x2f8] sm:$0xf]
        %v436 = vld [vmem:[%s213 + $0x2fc] sm:$0xf]
        %v437 = vld [vmem:[%s213 + $0x300] sm:$0xf]
        %v438 = vld [vmem:[%s213 + $0x304] sm:$0xf]
        %v439 = vld [vmem:[%s213 + $0x308] sm:$0xf]
        %v440 = vld [vmem:[%s213 + $0x30c] sm:$0xf]
        %v441 = vld [vmem:[%s213 + $0x310] sm:$0xf]
        %v442 = vld [vmem:[%s213 + $0x314] sm:$0xf]
        %v443 = vld [vmem:[%s213 + $0x318] sm:$0xf]
        %v444 = vld [vmem:[%s213 + $0x31c] sm:$0xf]
        %v445 = vld [vmem:[%s213 + $0x320] sm:$0xf]
        %v446 = vld [vmem:[%s213 + $0x324] sm:$0xf]
        %v447 = vld [vmem:[%s213 + $0x328] sm:$0xf]
        %v448 = vld [vmem:[%s213 + $0x32c] sm:$0xf]
        %v449 = vld [vmem:[%s213 + $0x330] sm:$0xf]
        %v450 = vld [vmem:[%s213 + $0x334] sm:$0xf]
        %v451 = vld [vmem:[%s213 + $0x338] sm:$0xf]
        %v452 = vld [vmem:[%s213 + $0x33c] sm:$0xf]
        %v453 = vld [vmem:[%s213 + $0x340] sm:$0xf]
        %v454 = vld [vmem:[%s213 + $0x344] sm:$0xf]
        %v455 = vld [vmem:[%s213 + $0x348] sm:$0xf]
        %v456 = vld [vmem:[%s213 + $0x34c] sm:$0xf]
        %v457 = vld [vmem:[%s213 + $0x350] sm:$0xf]
        %v458 = vld [vmem:[%s213 + $0x354] sm:$0xf]
        %v459 = vld [vmem:[%s213 + $0x358] sm:$0xf]
        %v460 = vld [vmem:[%s213 + $0x35c] sm:$0xf]
        %v461 = vld [vmem:[%s213 + $0x360] sm:$0xf]
        %v462 = vld [vmem:[%s213 + $0x364] sm:$0xf]
        %v463 = vld [vmem:[%s213 + $0x368] sm:$0xf]
        %v464 = vld [vmem:[%s213 + $0x36c] sm:$0xf]
        %v465 = vld [vmem:[%s213 + $0x370] sm:$0xf]
        %v466 = vld [vmem:[%s213 + $0x374] sm:$0xf]
        %v467 = vld [vmem:[%s213 + $0x378] sm:$0xf]
        %v468 = vld [vmem:[%s213 + $0x37c] sm:$0xf]
        %v469 = vld [vmem:[%s213 + $0x380] sm:$0xf]
        %v470 = vld [vmem:[%s213 + $0x384] sm:$0xf]
        %v471 = vld [vmem:[%s213 + $0x388] sm:$0xf]
        %v472 = vld [vmem:[%s213 + $0x38c] sm:$0xf]
        %v473 = vld [vmem:[%s213 + $0x390] sm:$0xf]
        %v474 = vld [vmem:[%s213 + $0x394] sm:$0xf]
        %v475 = vld [vmem:[%s213 + $0x398] sm:$0xf]
        %v476 = vld [vmem:[%s213 + $0x39c] sm:$0xf]
        %v477 = vld [vmem:[%s213 + $0x3a0] sm:$0xf]
        %v478 = vld [vmem:[%s213 + $0x3a4] sm:$0xf]
        %v479 = vld [vmem:[%s213 + $0x3a8] sm:$0xf]
        %v480 = vld [vmem:[%s213 + $0x3ac] sm:$0xf]
        %v481 = vld [vmem:[%s213 + $0x3b0] sm:$0xf]
        %v482 = vld [vmem:[%s213 + $0x3b4] sm:$0xf]
        %v483 = vld [vmem:[%s213 + $0x3b8] sm:$0xf]
        %v484 = vld [vmem:[%s213 + $0x3bc] sm:$0xf]
        %v485 = vld [vmem:[%s213 + $0x3c0] sm:$0xf]
        %v486 = vld [vmem:[%s213 + $0x3c4] sm:$0xf]
        %v487 = vld [vmem:[%s213 + $0x3c8] sm:$0xf]
        %v488 = vld [vmem:[%s213 + $0x3cc] sm:$0xf]
        %v489 = vld [vmem:[%s213 + $0x3d0] sm:$0xf]
        %v490 = vld [vmem:[%s213 + $0x3d4] sm:$0xf]
        %v491 = vld [vmem:[%s213 + $0x3d8] sm:$0xf]
        %v492 = vld [vmem:[%s213 + $0x3dc] sm:$0xf]
        %v493 = vld [vmem:[%s213 + $0x3e0] sm:$0xf]
        %v494 = vld [vmem:[%s213 + $0x3e4] sm:$0xf]
        %v495 = vld [vmem:[%s213 + $0x3e8] sm:$0xf]
        %v496 = vld [vmem:[%s213 + $0x3ec] sm:$0xf]
        %v497 = vld [vmem:[%s213 + $0x3f0] sm:$0xf]
        %v498 = vld [vmem:[%s213 + $0x3f4] sm:$0xf]
        %v499 = vld [vmem:[%s213 + $0x3f8] sm:$0xf]
        %v500 = vld [vmem:[%s213 + $0x3fc] sm:$0xf]
        %v501 = vld [vmem:[%s213 + $0x400] sm:$0xf]
        %v502 = vld [vmem:[%s213 + $0x404] sm:$0xf]
        %v503 = vld [vmem:[%s213 + $0x408] sm:$0xf]
        %v504 = vld [vmem:[%s213 + $0x40c] sm:$0xf]
        %v505 = vld [vmem:[%s213 + $0x410] sm:$0xf]
        %v506 = vld [vmem:[%s213 + $0x414] sm:$0xf]
        %v507 = vld [vmem:[%s213 + $0x418] sm:$0xf]
        %v508 = vld [vmem:[%s213 + $0x41c] sm:$0xf]
        %v509 = vld [vmem:[%s213 + $0x420] sm:$0xf]
        %v510 = vld [vmem:[%s213 + $0x424] sm:$0xf]
        %v511 = vld [vmem:[%s213 + $0x428] sm:$0xf]
        %v512 = vld [vmem:[%s213 + $0x42c] sm:$0xf]
        %v513 = vld [vmem:[%s213 + $0x430] sm:$0xf]
        %v514 = vld [vmem:[%s213 + $0x434] sm:$0xf]
        %v515 = vld [vmem:[%s213 + $0x438] sm:$0xf]
        %v516 = vld [vmem:[%s213 + $0x43c] sm:$0xf]
        %v517 = vld [vmem:[%s213 + $0x440] sm:$0xf]
        %v518 = vld [vmem:[%s213 + $0x444] sm:$0xf]
        %v519 = vld [vmem:[%s213 + $0x448] sm:$0xf]
        %v520 = vld [vmem:[%s213 + $0x44c] sm:$0xf]
        %v521 = vld [vmem:[%s213 + $0x450] sm:$0xf]
        %v522 = vld [vmem:[%s213 + $0x454] sm:$0xf]
        %v523 = vld [vmem:[%s213 + $0x458] sm:$0xf]
        %v524 = vld [vmem:[%s213 + $0x45c] sm:$0xf]
        %v525 = vld [vmem:[%s213 + $0x460] sm:$0xf]
        %v526 = vld [vmem:[%s213 + $0x464] sm:$0xf]
        %v527 = vld [vmem:[%s213 + $0x468] sm:$0xf]
        %v528 = vld [vmem:[%s213 + $0x46c] sm:$0xf]
        %v529 = vld [vmem:[%s213 + $0x470] sm:$0xf]
        %v530 = vld [vmem:[%s213 + $0x474] sm:$0xf]
        %v531 = vld [vmem:[%s213 + $0x478] sm:$0xf]
        %v532 = vld [vmem:[%s213 + $0x47c] sm:$0xf]
        %v533 = vld [vmem:[%s213 + $0x480] sm:$0xf]
        %v534 = vld [vmem:[%s213 + $0x484] sm:$0xf]
        %v535 = vld [vmem:[%s213 + $0x488] sm:$0xf]
        %v536 = vld [vmem:[%s213 + $0x48c] sm:$0xf]
        %v537 = vld [vmem:[%s213 + $0x490] sm:$0xf]
        %v538 = vld [vmem:[%s213 + $0x494] sm:$0xf]
        %v539 = vld [vmem:[%s213 + $0x498] sm:$0xf]
        %v540 = vld [vmem:[%s213 + $0x49c] sm:$0xf]
        %v541 = vld [vmem:[%s213 + $0x4a0] sm:$0xf]
        %v542 = vld [vmem:[%s213 + $0x4a4] sm:$0xf]
        %v543 = vld [vmem:[%s213 + $0x4a8] sm:$0xf]
        %v544 = vld [vmem:[%s213 + $0x4ac] sm:$0xf]
        %v545 = vld [vmem:[%s213 + $0x4b0] sm:$0xf]
        %v546 = vld [vmem:[%s213 + $0x4b4] sm:$0xf]
        %v547 = vld [vmem:[%s213 + $0x4b8] sm:$0xf]
        %v548 = vld [vmem:[%s213 + $0x4bc] sm:$0xf]
        %v549 = vld [vmem:[%s213 + $0x4c0] sm:$0xf]
        %v550 = vld [vmem:[%s213 + $0x4c4] sm:$0xf]
        %v551 = vld [vmem:[%s213 + $0x4c8] sm:$0xf]
        %v552 = vld [vmem:[%s213 + $0x4cc] sm:$0xf]
        %v553 = vld [vmem:[%s213 + $0x4d0] sm:$0xf]
        %v554 = vld [vmem:[%s213 + $0x4d4] sm:$0xf]
        %v555 = vld [vmem:[%s213 + $0x4d8] sm:$0xf]
        %v556 = vld [vmem:[%s213 + $0x4dc] sm:$0xf]
        %v557 = vld [vmem:[%s213 + $0x4e0] sm:$0xf]
        %v558 = vld [vmem:[%s213 + $0x4e4] sm:$0xf]
        %v559 = vld [vmem:[%s213 + $0x4e8] sm:$0xf]
        %v560 = vld [vmem:[%s213 + $0x4ec] sm:$0xf]
        %v561 = vld [vmem:[%s213 + $0x4f0] sm:$0xf]
        %v562 = vld [vmem:[%s213 + $0x4f4] sm:$0xf]
        %v563 = vld [vmem:[%s213 + $0x4f8] sm:$0xf]
        %v564 = vld [vmem:[%s213 + $0x4fc] sm:$0xf]
        %v565 = vld [vmem:[%s213 + $0x500] sm:$0xf]
        %v566 = vld [vmem:[%s213 + $0x504] sm:$0xf]
        %v567 = vld [vmem:[%s213 + $0x508] sm:$0xf]
        %v568 = vld [vmem:[%s213 + $0x50c] sm:$0xf]
        %v569 = vld [vmem:[%s213 + $0x510] sm:$0xf]
        %v570 = vld [vmem:[%s213 + $0x514] sm:$0xf]
        %v571 = vld [vmem:[%s213 + $0x518] sm:$0xf]
        %v572 = vld [vmem:[%s213 + $0x51c] sm:$0xf]
        %v573 = vld [vmem:[%s213 + $0x520] sm:$0xf]
        %v574 = vld [vmem:[%s213 + $0x524] sm:$0xf]
        %v575 = vld [vmem:[%s213 + $0x528] sm:$0xf]
        %v576 = vld [vmem:[%s213 + $0x52c] sm:$0xf]
        %v577 = vld [vmem:[%s213 + $0x530] sm:$0xf]
        %v578 = vld [vmem:[%s213 + $0x534] sm:$0xf]
        %v579 = vld [vmem:[%s213 + $0x538] sm:$0xf]
        %v580 = vld [vmem:[%s213 + $0x53c] sm:$0xf]
        %v581 = vld [vmem:[%s213 + $0x540] sm:$0xf]
        %v582 = vld [vmem:[%s213 + $0x544] sm:$0xf]
        %v583 = vld [vmem:[%s213 + $0x548] sm:$0xf]
        %v584 = vld [vmem:[%s213 + $0x54c] sm:$0xf]
        %v585 = vld [vmem:[%s213 + $0x550] sm:$0xf]
        %v586 = vld [vmem:[%s213 + $0x554] sm:$0xf]
        %v587 = vld [vmem:[%s213 + $0x558] sm:$0xf]
        %v588 = vld [vmem:[%s213 + $0x55c] sm:$0xf]
        %v589 = vld [vmem:[%s213 + $0x560] sm:$0xf]
        %v590 = vld [vmem:[%s213 + $0x564] sm:$0xf]
        %v591 = vld [vmem:[%s213 + $0x568] sm:$0xf]
        %v592 = vld [vmem:[%s213 + $0x56c] sm:$0xf]
        %v593 = vld [vmem:[%s213 + $0x570] sm:$0xf]
        %v594 = vld [vmem:[%s213 + $0x574] sm:$0xf]
        %v595 = vld [vmem:[%s213 + $0x578] sm:$0xf]
        %v596 = vld [vmem:[%s213 + $0x57c] sm:$0xf]
        %v597 = vld [vmem:[%s213 + $0x580] sm:$0xf]
        %v598 = vld [vmem:[%s213 + $0x584] sm:$0xf]
        %v599 = vld [vmem:[%s213 + $0x588] sm:$0xf]
        %v600 = vld [vmem:[%s213 + $0x58c] sm:$0xf]
        %v601 = vld [vmem:[%s213 + $0x590] sm:$0xf]
        %v602 = vld [vmem:[%s213 + $0x594] sm:$0xf]
        %v603 = vld [vmem:[%s213 + $0x598] sm:$0xf]
        %v604 = vld [vmem:[%s213 + $0x59c] sm:$0xf]
        %v605 = vld [vmem:[%s213 + $0x5a0] sm:$0xf]
        %v606 = vld [vmem:[%s213 + $0x5a4] sm:$0xf]
        %v607 = vld [vmem:[%s213 + $0x5a8] sm:$0xf]
        %v608 = vld [vmem:[%s213 + $0x5ac] sm:$0xf]
        %v609 = vld [vmem:[%s213 + $0x5b0] sm:$0xf]
        %v610 = vld [vmem:[%s213 + $0x5b4] sm:$0xf]
        %v611 = vld [vmem:[%s213 + $0x5b8] sm:$0xf]
        %v612 = vld [vmem:[%s213 + $0x5bc] sm:$0xf]
        %v613 = vld [vmem:[%s213 + $0x5c0] sm:$0xf]
        %v614 = vld [vmem:[%s213 + $0x5c4] sm:$0xf]
        %v615 = vld [vmem:[%s213 + $0x5c8] sm:$0xf]
        %v616 = vld [vmem:[%s213 + $0x5cc] sm:$0xf]
        %v617 = vld [vmem:[%s213 + $0x5d0] sm:$0xf]
        %v618 = vld [vmem:[%s213 + $0x5d4] sm:$0xf]
        %v619 = vld [vmem:[%s213 + $0x5d8] sm:$0xf]
        %v620 = vld [vmem:[%s213 + $0x5dc] sm:$0xf]
        %v621 = vld [vmem:[%s213 + $0x5e0] sm:$0xf]
        %v622 = vld [vmem:[%s213 + $0x5e4] sm:$0xf]
        %v623 = vld [vmem:[%s213 + $0x5e8] sm:$0xf]
        %v624 = vld [vmem:[%s213 + $0x5ec] sm:$0xf]
        %v625 = vld [vmem:[%s213 + $0x5f0] sm:$0xf]
        %v626 = vld [vmem:[%s213 + $0x5f4] sm:$0xf]
        %v627 = vld [vmem:[%s213 + $0x5f8] sm:$0xf]
        %v628 = vld [vmem:[%s213 + $0x5fc] sm:$0xf]
        %v629 = vld [vmem:[%s213 + $0x600] sm:$0xf]
        %v630 = vld [vmem:[%s213 + $0x604] sm:$0xf]
        %v631 = vld [vmem:[%s213 + $0x608] sm:$0xf]
        %v632 = vld [vmem:[%s213 + $0x60c] sm:$0xf]
        %v633 = vld [vmem:[%s213 + $0x610] sm:$0xf]
        %v634 = vld [vmem:[%s213 + $0x614] sm:$0xf]
        %v635 = vld [vmem:[%s213 + $0x618] sm:$0xf]
        %v636 = vld [vmem:[%s213 + $0x61c] sm:$0xf]
        %v637 = vld [vmem:[%s213 + $0x620] sm:$0xf]
        %v638 = vld [vmem:[%s213 + $0x624] sm:$0xf]
        %v639 = vld [vmem:[%s213 + $0x628] sm:$0xf]
        %v640 = vld [vmem:[%s213 + $0x62c] sm:$0xf]
        %v641 = vld [vmem:[%s213 + $0x630] sm:$0xf]
        %v642 = vld [vmem:[%s213 + $0x634] sm:$0xf]
        %v643 = vld [vmem:[%s213 + $0x638] sm:$0xf]
        %v644 = vld [vmem:[%s213 + $0x63c] sm:$0xf]
        %v645 = vld [vmem:[%s213 + $0x640] sm:$0xf]
        %v646 = vld [vmem:[%s213 + $0x644] sm:$0xf]
        %v647 = vld [vmem:[%s213 + $0x648] sm:$0xf]
        %v648 = vld [vmem:[%s213 + $0x64c] sm:$0xf]
        %v649 = vld [vmem:[%s213 + $0x650] sm:$0xf]
        %v650 = vld [vmem:[%s213 + $0x654] sm:$0xf]
        %v651 = vld [vmem:[%s213 + $0x658] sm:$0xf]
        %v652 = vld [vmem:[%s213 + $0x65c] sm:$0xf]
        %v653 = vld [vmem:[%s213 + $0x660] sm:$0xf]
        %v654 = vld [vmem:[%s213 + $0x664] sm:$0xf]
        %v655 = vld [vmem:[%s213 + $0x668] sm:$0xf]
        %v656 = vld [vmem:[%s213 + $0x66c] sm:$0xf]
        %v657 = vld [vmem:[%s213 + $0x670] sm:$0xf]
        %v658 = vld [vmem:[%s213 + $0x674] sm:$0xf]
        %v659 = vld [vmem:[%s213 + $0x678] sm:$0xf]
        %v660 = vld [vmem:[%s213 + $0x67c] sm:$0xf]
        %v661 = vld [vmem:[%s213 + $0x680] sm:$0xf]
        %v662 = vld [vmem:[%s213 + $0x684] sm:$0xf]
        %v663 = vld [vmem:[%s213 + $0x688] sm:$0xf]
        %v664 = vld [vmem:[%s213 + $0x68c] sm:$0xf]
        %v665 = vld [vmem:[%s213 + $0x690] sm:$0xf]
        %v666 = vld [vmem:[%s213 + $0x694] sm:$0xf]
        %v667 = vld [vmem:[%s213 + $0x698] sm:$0xf]
        %v668 = vld [vmem:[%s213 + $0x69c] sm:$0xf]
        %v669 = vld [vmem:[%s213 + $0x6a0] sm:$0xf]
        %v670 = vld [vmem:[%s213 + $0x6a4] sm:$0xf]
        %v671 = vld [vmem:[%s213 + $0x6a8] sm:$0xf]
        %v672 = vld [vmem:[%s213 + $0x6ac] sm:$0xf]
        %v673 = vld [vmem:[%s213 + $0x6b0] sm:$0xf]
        %v674 = vld [vmem:[%s213 + $0x6b4] sm:$0xf]
        %v675 = vld [vmem:[%s213 + $0x6b8] sm:$0xf]
        %v676 = vld [vmem:[%s213 + $0x6bc] sm:$0xf]
        %v677 = vld [vmem:[%s213 + $0x6c0] sm:$0xf]
        %v678 = vld [vmem:[%s213 + $0x6c4] sm:$0xf]
        %v679 = vld [vmem:[%s213 + $0x6c8] sm:$0xf]
        %v680 = vld [vmem:[%s213 + $0x6cc] sm:$0xf]
        %v681 = vld [vmem:[%s213 + $0x6d0] sm:$0xf]
        %v682 = vld [vmem:[%s213 + $0x6d4] sm:$0xf]
        %v683 = vld [vmem:[%s213 + $0x6d8] sm:$0xf]
        %v684 = vld [vmem:[%s213 + $0x6dc] sm:$0xf]
        %v685 = vld [vmem:[%s213 + $0x6e0] sm:$0xf]
        %v686 = vld [vmem:[%s213 + $0x6e4] sm:$0xf]
        %v687 = vld [vmem:[%s213 + $0x6e8] sm:$0xf]
        %v688 = vld [vmem:[%s213 + $0x6ec] sm:$0xf]
        %v689 = vld [vmem:[%s213 + $0x6f0] sm:$0xf]
        %v690 = vld [vmem:[%s213 + $0x6f4] sm:$0xf]
        %v691 = vld [vmem:[%s213 + $0x6f8] sm:$0xf]
        %v692 = vld [vmem:[%s213 + $0x6fc] sm:$0xf]
        %v693 = vld [vmem:[%s213 + $0x700] sm:$0xf]
        %v694 = vld [vmem:[%s213 + $0x704] sm:$0xf]
        %v695 = vld [vmem:[%s213 + $0x708] sm:$0xf]
        %v696 = vld [vmem:[%s213 + $0x70c] sm:$0xf]
        %v697 = vld [vmem:[%s213 + $0x710] sm:$0xf]
        %v698 = vld [vmem:[%s213 + $0x714] sm:$0xf]
        %v699 = vld [vmem:[%s213 + $0x718] sm:$0xf]
        %v700 = vld [vmem:[%s213 + $0x71c] sm:$0xf]
        %v701 = vld [vmem:[%s213 + $0x720] sm:$0xf]
        %v702 = vld [vmem:[%s213 + $0x724] sm:$0xf]
        %v703 = vld [vmem:[%s213 + $0x728] sm:$0xf]
        %v704 = vld [vmem:[%s213 + $0x72c] sm:$0xf]
        %v705 = vld [vmem:[%s213 + $0x730] sm:$0xf]
        %v706 = vld [vmem:[%s213 + $0x734] sm:$0xf]
        %v707 = vld [vmem:[%s213 + $0x738] sm:$0xf]
        %v708 = vld [vmem:[%s213 + $0x73c] sm:$0xf]
        %v709 = vld [vmem:[%s213 + $0x740] sm:$0xf]
        %v710 = vld [vmem:[%s213 + $0x744] sm:$0xf]
        %v711 = vld [vmem:[%s213 + $0x748] sm:$0xf]
        %v712 = vld [vmem:[%s213 + $0x74c] sm:$0xf]
        %v713 = vld [vmem:[%s213 + $0x750] sm:$0xf]
        %v714 = vld [vmem:[%s213 + $0x754] sm:$0xf]
        %v715 = vld [vmem:[%s213 + $0x758] sm:$0xf]
        %v716 = vld [vmem:[%s213 + $0x75c] sm:$0xf]
        %v717 = vld [vmem:[%s213 + $0x760] sm:$0xf]
        %v718 = vld [vmem:[%s213 + $0x764] sm:$0xf]
        %v719 = vld [vmem:[%s213 + $0x768] sm:$0xf]
        %v720 = vld [vmem:[%s213 + $0x76c] sm:$0xf]
        %v721 = vld [vmem:[%s213 + $0x770] sm:$0xf]
        %v722 = vld [vmem:[%s213 + $0x774] sm:$0xf]
        %v723 = vld [vmem:[%s213 + $0x778] sm:$0xf]
        %v724 = vld [vmem:[%s213 + $0x77c] sm:$0xf]
        %v725 = vld [vmem:[%s213 + $0x780] sm:$0xf]
        %v726 = vld [vmem:[%s213 + $0x784] sm:$0xf]
        %v727 = vld [vmem:[%s213 + $0x788] sm:$0xf]
        %v728 = vld [vmem:[%s213 + $0x78c] sm:$0xf]
        %v729 = vld [vmem:[%s213 + $0x790] sm:$0xf]
        %v730 = vld [vmem:[%s213 + $0x794] sm:$0xf]
        %v731 = vld [vmem:[%s213 + $0x798] sm:$0xf]
        %v732 = vld [vmem:[%s213 + $0x79c] sm:$0xf]
        %v733 = vld [vmem:[%s213 + $0x7a0] sm:$0xf]
        %v734 = vld [vmem:[%s213 + $0x7a4] sm:$0xf]
        %v735 = vld [vmem:[%s213 + $0x7a8] sm:$0xf]
        %v736 = vld [vmem:[%s213 + $0x7ac] sm:$0xf]
        %v737 = vld [vmem:[%s213 + $0x7b0] sm:$0xf]
        %v738 = vld [vmem:[%s213 + $0x7b4] sm:$0xf]
        %v739 = vld [vmem:[%s213 + $0x7b8] sm:$0xf]
        %v740 = vld [vmem:[%s213 + $0x7bc] sm:$0xf]
        %v741 = vld [vmem:[%s213 + $0x7c0] sm:$0xf]
        %v742 = vld [vmem:[%s213 + $0x7c4] sm:$0xf]
        %v743 = vld [vmem:[%s213 + $0x7c8] sm:$0xf]
        %v744 = vld [vmem:[%s213 + $0x7cc] sm:$0xf]
        %v745 = vld [vmem:[%s213 + $0x7d0] sm:$0xf]
        %v746 = vld [vmem:[%s213 + $0x7d4] sm:$0xf]
        %v747 = vld [vmem:[%s213 + $0x7d8] sm:$0xf]
        %v748 = vld [vmem:[%s213 + $0x7dc] sm:$0xf]
        %v749 = vld [vmem:[%s213 + $0x7e0] sm:$0xf]
        %v750 = vld [vmem:[%s213 + $0x7e4] sm:$0xf]
        %v751 = vld [vmem:[%s213 + $0x7e8] sm:$0xf]
        %v752 = vld [vmem:[%s213 + $0x7ec] sm:$0xf]
        %v753 = vld [vmem:[%s213 + $0x7f0] sm:$0xf]
        %v754 = vld [vmem:[%s213 + $0x7f4] sm:$0xf]
        %v755 = vld [vmem:[%s213 + $0x7f8] sm:$0xf]
        %v756 = vld [vmem:[%s213 + $0x7fc] sm:$0xf]
        %v757 = vld [vmem:[#allocation5] sm:$0xf]
        %v758 = vld [vmem:[#allocation5 + $0x4] sm:$0xf]
        %v759 = vld [vmem:[#allocation5 + $0x8] sm:$0xf]
        %v760 = vld [vmem:[#allocation5 + $0xc] sm:$0x3]
        %v761 = vld [vmem:[#allocation7] sm:$0x1]
        %v763 = vlaneseq
        %v764 = vshrl.u32 %v763, 7
        %v765 = vsub.s32 0, %v764
        %v766 = vrot.slane %v761, %v765
        %v1280 = vunpack.c.l.b16 %v245
        %v1281 = vunpack.c.l.b16 %v246
        %v1282 = vunpack.c.l.b16 %v247
        %v1283 = vunpack.c.l.b16 %v248
        %v1284 = vunpack.c.l.b16 %v249
        %v1285 = vunpack.c.l.b16 %v250
        %v1286 = vunpack.c.l.b16 %v251
        %v1287 = vunpack.c.l.b16 %v252
        %v1288 = vunpack.c.l.b16 %v253
        %v1289 = vunpack.c.l.b16 %v254
        %v1290 = vunpack.c.l.b16 %v255
        %v1291 = vunpack.c.l.b16 %v256
        %v1292 = vunpack.c.l.b16 %v257
        %v1293 = vunpack.c.l.b16 %v258
        %v1294 = vunpack.c.l.b16 %v259
        %v1295 = vunpack.c.l.b16 %v260
        %v1296 = vunpack.c.l.b16 %v261
        %v1297 = vunpack.c.l.b16 %v262
        %v1298 = vunpack.c.l.b16 %v263
        %v1299 = vunpack.c.l.b16 %v264
        %v1300 = vunpack.c.l.b16 %v265
        %v1301 = vunpack.c.l.b16 %v266
        %v1302 = vunpack.c.l.b16 %v267
        %v1303 = vunpack.c.l.b16 %v268
        %v1304 = vunpack.c.l.b16 %v269
        %v1305 = vunpack.c.l.b16 %v270
        %v1306 = vunpack.c.l.b16 %v271
        %v1307 = vunpack.c.l.b16 %v272
        %v1308 = vunpack.c.l.b16 %v273
        %v1309 = vunpack.c.l.b16 %v274
        %v1310 = vunpack.c.l.b16 %v275
        %v1311 = vunpack.c.l.b16 %v276
        %v1312 = vunpack.c.l.b16 %v277
        %v1313 = vunpack.c.l.b16 %v278
        %v1314 = vunpack.c.l.b16 %v279
        %v1315 = vunpack.c.l.b16 %v280
        %v1316 = vunpack.c.l.b16 %v281
        %v1317 = vunpack.c.l.b16 %v282
        %v1318 = vunpack.c.l.b16 %v283
        %v1319 = vunpack.c.l.b16 %v284
        %v1320 = vunpack.c.l.b16 %v285
        %v1321 = vunpack.c.l.b16 %v286
        %v1322 = vunpack.c.l.b16 %v287
        %v1323 = vunpack.c.l.b16 %v288
        %v1324 = vunpack.c.l.b16 %v289
        %v1325 = vunpack.c.l.b16 %v290
        %v1326 = vunpack.c.l.b16 %v291
        %v1327 = vunpack.c.l.b16 %v292
        %v1328 = vunpack.c.l.b16 %v293
        %v1329 = vunpack.c.l.b16 %v294
        %v1330 = vunpack.c.l.b16 %v295
        %v1331 = vunpack.c.l.b16 %v296
        %v1332 = vunpack.c.l.b16 %v297
        %v1333 = vunpack.c.l.b16 %v298
        %v1334 = vunpack.c.l.b16 %v299
        %v1335 = vunpack.c.l.b16 %v300
        %v1336 = vunpack.c.l.b16 %v301
        %v1337 = vunpack.c.l.b16 %v302
        %v1338 = vunpack.c.l.b16 %v303
        %v1339 = vunpack.c.l.b16 %v304
        %v1340 = vunpack.c.l.b16 %v305
        %v1341 = vunpack.c.l.b16 %v306
        %v1342 = vunpack.c.l.b16 %v307
        %v1343 = vunpack.c.l.b16 %v308
        %v1344 = vunpack.c.l.b16 %v309
        %v1345 = vunpack.c.l.b16 %v310
        %v1346 = vunpack.c.l.b16 %v311
        %v1347 = vunpack.c.l.b16 %v312
        %v1348 = vunpack.c.l.b16 %v313
        %v1349 = vunpack.c.l.b16 %v314
        %v1350 = vunpack.c.l.b16 %v315
        %v1351 = vunpack.c.l.b16 %v316
        %v1352 = vunpack.c.l.b16 %v317
        %v1353 = vunpack.c.l.b16 %v318
        %v1354 = vunpack.c.l.b16 %v319
        %v1355 = vunpack.c.l.b16 %v320
        %v1356 = vunpack.c.l.b16 %v321
        %v1357 = vunpack.c.l.b16 %v322
        %v1358 = vunpack.c.l.b16 %v323
        %v1359 = vunpack.c.l.b16 %v324
        %v1360 = vunpack.c.l.b16 %v325
        %v1361 = vunpack.c.l.b16 %v326
        %v1362 = vunpack.c.l.b16 %v327
        %v1363 = vunpack.c.l.b16 %v328
        %v1364 = vunpack.c.l.b16 %v329
        %v1365 = vunpack.c.l.b16 %v330
        %v1366 = vunpack.c.l.b16 %v331
        %v1367 = vunpack.c.l.b16 %v332
        %v1368 = vunpack.c.l.b16 %v333
        %v1369 = vunpack.c.l.b16 %v334
        %v1370 = vunpack.c.l.b16 %v335
        %v1371 = vunpack.c.l.b16 %v336
        %v1372 = vunpack.c.l.b16 %v337
        %v1373 = vunpack.c.l.b16 %v338
        %v1374 = vunpack.c.l.b16 %v339
        %v1375 = vunpack.c.l.b16 %v340
        %v1376 = vunpack.c.l.b16 %v341
        %v1377 = vunpack.c.l.b16 %v342
        %v1378 = vunpack.c.l.b16 %v343
        %v1379 = vunpack.c.l.b16 %v344
        %v1380 = vunpack.c.l.b16 %v345
        %v1381 = vunpack.c.l.b16 %v346
        %v1382 = vunpack.c.l.b16 %v347
        %v1383 = vunpack.c.l.b16 %v348
        %v1384 = vunpack.c.l.b16 %v349
        %v1385 = vunpack.c.l.b16 %v350
        %v1386 = vunpack.c.l.b16 %v351
        %v1387 = vunpack.c.l.b16 %v352
        %v1388 = vunpack.c.l.b16 %v353
        %v1389 = vunpack.c.l.b16 %v354
        %v1390 = vunpack.c.l.b16 %v355
        %v1391 = vunpack.c.l.b16 %v356
        %v1392 = vunpack.c.l.b16 %v357
        %v1393 = vunpack.c.l.b16 %v358
        %v1394 = vunpack.c.l.b16 %v359
        %v1395 = vunpack.c.l.b16 %v360
        %v1396 = vunpack.c.l.b16 %v361
        %v1397 = vunpack.c.l.b16 %v362
        %v1398 = vunpack.c.l.b16 %v363
        %v1399 = vunpack.c.l.b16 %v364
        %v1400 = vunpack.c.l.b16 %v365
        %v1401 = vunpack.c.l.b16 %v366
        %v1402 = vunpack.c.l.b16 %v367
        %v1403 = vunpack.c.l.b16 %v368
        %v1404 = vunpack.c.l.b16 %v369
        %v1405 = vunpack.c.l.b16 %v370
        %v1406 = vunpack.c.l.b16 %v371
        %v1407 = vunpack.c.l.b16 %v372
        %v1408 = vunpack.c.l.b16 %v373
        %v1409 = vunpack.c.l.b16 %v374
        %v1410 = vunpack.c.l.b16 %v375
        %v1411 = vunpack.c.l.b16 %v376
        %v1412 = vunpack.c.l.b16 %v377
        %v1413 = vunpack.c.l.b16 %v378
        %v1414 = vunpack.c.l.b16 %v379
        %v1415 = vunpack.c.l.b16 %v380
        %v1416 = vunpack.c.l.b16 %v381
        %v1417 = vunpack.c.l.b16 %v382
        %v1418 = vunpack.c.l.b16 %v383
        %v1419 = vunpack.c.l.b16 %v384
        %v1420 = vunpack.c.l.b16 %v385
        %v1421 = vunpack.c.l.b16 %v386
        %v1422 = vunpack.c.l.b16 %v387
        %v1423 = vunpack.c.l.b16 %v388
        %v1424 = vunpack.c.l.b16 %v389
        %v1425 = vunpack.c.l.b16 %v390
        %v1426 = vunpack.c.l.b16 %v391
        %v1427 = vunpack.c.l.b16 %v392
        %v1428 = vunpack.c.l.b16 %v393
        %v1429 = vunpack.c.l.b16 %v394
        %v1430 = vunpack.c.l.b16 %v395
        %v1431 = vunpack.c.l.b16 %v396
        %v1432 = vunpack.c.l.b16 %v397
        %v1433 = vunpack.c.l.b16 %v398
        %v1434 = vunpack.c.l.b16 %v399
        %v1435 = vunpack.c.l.b16 %v400
        %v1436 = vunpack.c.l.b16 %v401
        %v1437 = vunpack.c.l.b16 %v402
        %v1438 = vunpack.c.l.b16 %v403
        %v1439 = vunpack.c.l.b16 %v404
        %v1440 = vunpack.c.l.b16 %v405
        %v1441 = vunpack.c.l.b16 %v406
        %v1442 = vunpack.c.l.b16 %v407
        %v1443 = vunpack.c.l.b16 %v408
        %v1444 = vunpack.c.l.b16 %v409
        %v1445 = vunpack.c.l.b16 %v410
        %v1446 = vunpack.c.l.b16 %v411
        %v1447 = vunpack.c.l.b16 %v412
        %v1448 = vunpack.c.l.b16 %v413
        %v1449 = vunpack.c.l.b16 %v414
        %v1450 = vunpack.c.l.b16 %v415
        %v1451 = vunpack.c.l.b16 %v416
        %v1452 = vunpack.c.l.b16 %v417
        %v1453 = vunpack.c.l.b16 %v418
        %v1454 = vunpack.c.l.b16 %v419
        %v1455 = vunpack.c.l.b16 %v420
        %v1456 = vunpack.c.l.b16 %v421
        %v1457 = vunpack.c.l.b16 %v422
        %v1458 = vunpack.c.l.b16 %v423
        %v1459 = vunpack.c.l.b16 %v424
        %v1460 = vunpack.c.l.b16 %v425
        %v1461 = vunpack.c.l.b16 %v426
        %v1462 = vunpack.c.l.b16 %v427
        %v1463 = vunpack.c.l.b16 %v428
        %v1464 = vunpack.c.l.b16 %v429
        %v1465 = vunpack.c.l.b16 %v430
        %v1466 = vunpack.c.l.b16 %v431
        %v1467 = vunpack.c.l.b16 %v432
        %v1468 = vunpack.c.l.b16 %v433
        %v1469 = vunpack.c.l.b16 %v434
        %v1470 = vunpack.c.l.b16 %v435
        %v1471 = vunpack.c.l.b16 %v436
        %v1472 = vunpack.c.l.b16 %v437
        %v1473 = vunpack.c.l.b16 %v438
        %v1474 = vunpack.c.l.b16 %v439
        %v1475 = vunpack.c.l.b16 %v440
        %v1476 = vunpack.c.l.b16 %v441
        %v1477 = vunpack.c.l.b16 %v442
        %v1478 = vunpack.c.l.b16 %v443
        %v1479 = vunpack.c.l.b16 %v444
        %v1480 = vunpack.c.l.b16 %v445
        %v1481 = vunpack.c.l.b16 %v446
        %v1482 = vunpack.c.l.b16 %v447
        %v1483 = vunpack.c.l.b16 %v448
        %v1484 = vunpack.c.l.b16 %v449
        %v1485 = vunpack.c.l.b16 %v450
        %v1486 = vunpack.c.l.b16 %v451
        %v1487 = vunpack.c.l.b16 %v452
        %v1488 = vunpack.c.l.b16 %v453
        %v1489 = vunpack.c.l.b16 %v454
        %v1490 = vunpack.c.l.b16 %v455
        %v1491 = vunpack.c.l.b16 %v456
        %v1492 = vunpack.c.l.b16 %v457
        %v1493 = vunpack.c.l.b16 %v458
        %v1494 = vunpack.c.l.b16 %v459
        %v1495 = vunpack.c.l.b16 %v460
        %v1496 = vunpack.c.l.b16 %v461
        %v1497 = vunpack.c.l.b16 %v462
        %v1498 = vunpack.c.l.b16 %v463
        %v1499 = vunpack.c.l.b16 %v464
        %v1500 = vunpack.c.l.b16 %v465
        %v1501 = vunpack.c.l.b16 %v466
        %v1502 = vunpack.c.l.b16 %v467
        %v1503 = vunpack.c.l.b16 %v468
        %v1504 = vunpack.c.l.b16 %v469
        %v1505 = vunpack.c.l.b16 %v470
        %v1506 = vunpack.c.l.b16 %v471
        %v1507 = vunpack.c.l.b16 %v472
        %v1508 = vunpack.c.l.b16 %v473
        %v1509 = vunpack.c.l.b16 %v474
        %v1510 = vunpack.c.l.b16 %v475
        %v1511 = vunpack.c.l.b16 %v476
        %v1512 = vunpack.c.l.b16 %v477
        %v1513 = vunpack.c.l.b16 %v478
        %v1514 = vunpack.c.l.b16 %v479
        %v1515 = vunpack.c.l.b16 %v480
        %v1516 = vunpack.c.l.b16 %v481
        %v1517 = vunpack.c.l.b16 %v482
        %v1518 = vunpack.c.l.b16 %v483
        %v1519 = vunpack.c.l.b16 %v484
        %v1520 = vunpack.c.l.b16 %v485
        %v1521 = vunpack.c.l.b16 %v486
        %v1522 = vunpack.c.l.b16 %v487
        %v1523 = vunpack.c.l.b16 %v488
        %v1524 = vunpack.c.l.b16 %v489
        %v1525 = vunpack.c.l.b16 %v490
        %v1526 = vunpack.c.l.b16 %v491
        %v1527 = vunpack.c.l.b16 %v492
        %v1528 = vunpack.c.l.b16 %v493
        %v1529 = vunpack.c.l.b16 %v494
        %v1530 = vunpack.c.l.b16 %v495
        %v1531 = vunpack.c.l.b16 %v496
        %v1532 = vunpack.c.l.b16 %v497
        %v1533 = vunpack.c.l.b16 %v498
        %v1534 = vunpack.c.l.b16 %v499
        %v1535 = vunpack.c.l.b16 %v500
        %v1536 = vunpack.c.l.b16 %v501
        %v1537 = vunpack.c.l.b16 %v502
        %v1538 = vunpack.c.l.b16 %v503
        %v1539 = vunpack.c.l.b16 %v504
        %v1540 = vunpack.c.l.b16 %v505
        %v1541 = vunpack.c.l.b16 %v506
        %v1542 = vunpack.c.l.b16 %v507
        %v1543 = vunpack.c.l.b16 %v508
        %v1544 = vunpack.c.l.b16 %v509
        %v1545 = vunpack.c.l.b16 %v510
        %v1546 = vunpack.c.l.b16 %v511
        %v1547 = vunpack.c.l.b16 %v512
        %v1548 = vunpack.c.l.b16 %v513
        %v1549 = vunpack.c.l.b16 %v514
        %v1550 = vunpack.c.l.b16 %v515
        %v1551 = vunpack.c.l.b16 %v516
        %v1552 = vunpack.c.l.b16 %v517
        %v1553 = vunpack.c.l.b16 %v518
        %v1554 = vunpack.c.l.b16 %v519
        %v1555 = vunpack.c.l.b16 %v520
        %v1556 = vunpack.c.l.b16 %v521
        %v1557 = vunpack.c.l.b16 %v522
        %v1558 = vunpack.c.l.b16 %v523
        %v1559 = vunpack.c.l.b16 %v524
        %v1560 = vunpack.c.l.b16 %v525
        %v1561 = vunpack.c.l.b16 %v526
        %v1562 = vunpack.c.l.b16 %v527
        %v1563 = vunpack.c.l.b16 %v528
        %v1564 = vunpack.c.l.b16 %v529
        %v1565 = vunpack.c.l.b16 %v530
        %v1566 = vunpack.c.l.b16 %v531
        %v1567 = vunpack.c.l.b16 %v532
        %v1568 = vunpack.c.l.b16 %v533
        %v1569 = vunpack.c.l.b16 %v534
        %v1570 = vunpack.c.l.b16 %v535
        %v1571 = vunpack.c.l.b16 %v536
        %v1572 = vunpack.c.l.b16 %v537
        %v1573 = vunpack.c.l.b16 %v538
        %v1574 = vunpack.c.l.b16 %v539
        %v1575 = vunpack.c.l.b16 %v540
        %v1576 = vunpack.c.l.b16 %v541
        %v1577 = vunpack.c.l.b16 %v542
        %v1578 = vunpack.c.l.b16 %v543
        %v1579 = vunpack.c.l.b16 %v544
        %v1580 = vunpack.c.l.b16 %v545
        %v1581 = vunpack.c.l.b16 %v546
        %v1582 = vunpack.c.l.b16 %v547
        %v1583 = vunpack.c.l.b16 %v548
        %v1584 = vunpack.c.l.b16 %v549
        %v1585 = vunpack.c.l.b16 %v550
        %v1586 = vunpack.c.l.b16 %v551
        %v1587 = vunpack.c.l.b16 %v552
        %v1588 = vunpack.c.l.b16 %v553
        %v1589 = vunpack.c.l.b16 %v554
        %v1590 = vunpack.c.l.b16 %v555
        %v1591 = vunpack.c.l.b16 %v556
        %v1592 = vunpack.c.l.b16 %v557
        %v1593 = vunpack.c.l.b16 %v558
        %v1594 = vunpack.c.l.b16 %v559
        %v1595 = vunpack.c.l.b16 %v560
        %v1596 = vunpack.c.l.b16 %v561
        %v1597 = vunpack.c.l.b16 %v562
        %v1598 = vunpack.c.l.b16 %v563
        %v1599 = vunpack.c.l.b16 %v564
        %v1600 = vunpack.c.l.b16 %v565
        %v1601 = vunpack.c.l.b16 %v566
        %v1602 = vunpack.c.l.b16 %v567
        %v1603 = vunpack.c.l.b16 %v568
        %v1604 = vunpack.c.l.b16 %v569
        %v1605 = vunpack.c.l.b16 %v570
        %v1606 = vunpack.c.l.b16 %v571
        %v1607 = vunpack.c.l.b16 %v572
        %v1608 = vunpack.c.l.b16 %v573
        %v1609 = vunpack.c.l.b16 %v574
        %v1610 = vunpack.c.l.b16 %v575
        %v1611 = vunpack.c.l.b16 %v576
        %v1612 = vunpack.c.l.b16 %v577
        %v1613 = vunpack.c.l.b16 %v578
        %v1614 = vunpack.c.l.b16 %v579
        %v1615 = vunpack.c.l.b16 %v580
        %v1616 = vunpack.c.l.b16 %v581
        %v1617 = vunpack.c.l.b16 %v582
        %v1618 = vunpack.c.l.b16 %v583
        %v1619 = vunpack.c.l.b16 %v584
        %v1620 = vunpack.c.l.b16 %v585
        %v1621 = vunpack.c.l.b16 %v586
        %v1622 = vunpack.c.l.b16 %v587
        %v1623 = vunpack.c.l.b16 %v588
        %v1624 = vunpack.c.l.b16 %v589
        %v1625 = vunpack.c.l.b16 %v590
        %v1626 = vunpack.c.l.b16 %v591
        %v1627 = vunpack.c.l.b16 %v592
        %v1628 = vunpack.c.l.b16 %v593
        %v1629 = vunpack.c.l.b16 %v594
        %v1630 = vunpack.c.l.b16 %v595
        %v1631 = vunpack.c.l.b16 %v596
        %v1632 = vunpack.c.l.b16 %v597
        %v1633 = vunpack.c.l.b16 %v598
        %v1634 = vunpack.c.l.b16 %v599
        %v1635 = vunpack.c.l.b16 %v600
        %v1636 = vunpack.c.l.b16 %v601
        %v1637 = vunpack.c.l.b16 %v602
        %v1638 = vunpack.c.l.b16 %v603
        %v1639 = vunpack.c.l.b16 %v604
        %v1640 = vunpack.c.l.b16 %v605
        %v1641 = vunpack.c.l.b16 %v606
        %v1642 = vunpack.c.l.b16 %v607
        %v1643 = vunpack.c.l.b16 %v608
        %v1644 = vunpack.c.l.b16 %v609
        %v1645 = vunpack.c.l.b16 %v610
        %v1646 = vunpack.c.l.b16 %v611
        %v1647 = vunpack.c.l.b16 %v612
        %v1648 = vunpack.c.l.b16 %v613
        %v1649 = vunpack.c.l.b16 %v614
        %v1650 = vunpack.c.l.b16 %v615
        %v1651 = vunpack.c.l.b16 %v616
        %v1652 = vunpack.c.l.b16 %v617
        %v1653 = vunpack.c.l.b16 %v618
        %v1654 = vunpack.c.l.b16 %v619
        %v1655 = vunpack.c.l.b16 %v620
        %v1656 = vunpack.c.l.b16 %v621
        %v1657 = vunpack.c.l.b16 %v622
        %v1658 = vunpack.c.l.b16 %v623
        %v1659 = vunpack.c.l.b16 %v624
        %v1660 = vunpack.c.l.b16 %v625
        %v1661 = vunpack.c.l.b16 %v626
        %v1662 = vunpack.c.l.b16 %v627
        %v1663 = vunpack.c.l.b16 %v628
        %v1664 = vunpack.c.l.b16 %v629
        %v1665 = vunpack.c.l.b16 %v630
        %v1666 = vunpack.c.l.b16 %v631
        %v1667 = vunpack.c.l.b16 %v632
        %v1668 = vunpack.c.l.b16 %v633
        %v1669 = vunpack.c.l.b16 %v634
        %v1670 = vunpack.c.l.b16 %v635
        %v1671 = vunpack.c.l.b16 %v636
        %v1672 = vunpack.c.l.b16 %v637
        %v1673 = vunpack.c.l.b16 %v638
        %v1674 = vunpack.c.l.b16 %v639
        %v1675 = vunpack.c.l.b16 %v640
        %v1676 = vunpack.c.l.b16 %v641
        %v1677 = vunpack.c.l.b16 %v642
        %v1678 = vunpack.c.l.b16 %v643
        %v1679 = vunpack.c.l.b16 %v644
        %v1680 = vunpack.c.l.b16 %v645
        %v1681 = vunpack.c.l.b16 %v646
        %v1682 = vunpack.c.l.b16 %v647
        %v1683 = vunpack.c.l.b16 %v648
        %v1684 = vunpack.c.l.b16 %v649
        %v1685 = vunpack.c.l.b16 %v650
        %v1686 = vunpack.c.l.b16 %v651
        %v1687 = vunpack.c.l.b16 %v652
        %v1688 = vunpack.c.l.b16 %v653
        %v1689 = vunpack.c.l.b16 %v654
        %v1690 = vunpack.c.l.b16 %v655
        %v1691 = vunpack.c.l.b16 %v656
        %v1692 = vunpack.c.l.b16 %v657
        %v1693 = vunpack.c.l.b16 %v658
        %v1694 = vunpack.c.l.b16 %v659
        %v1695 = vunpack.c.l.b16 %v660
        %v1696 = vunpack.c.l.b16 %v661
        %v1697 = vunpack.c.l.b16 %v662
        %v1698 = vunpack.c.l.b16 %v663
        %v1699 = vunpack.c.l.b16 %v664
        %v1700 = vunpack.c.l.b16 %v665
        %v1701 = vunpack.c.l.b16 %v666
        %v1702 = vunpack.c.l.b16 %v667
        %v1703 = vunpack.c.l.b16 %v668
        %v1704 = vunpack.c.l.b16 %v669
        %v1705 = vunpack.c.l.b16 %v670
        %v1706 = vunpack.c.l.b16 %v671
        %v1707 = vunpack.c.l.b16 %v672
        %v1708 = vunpack.c.l.b16 %v673
        %v1709 = vunpack.c.l.b16 %v674
        %v1710 = vunpack.c.l.b16 %v675
        %v1711 = vunpack.c.l.b16 %v676
        %v1712 = vunpack.c.l.b16 %v677
        %v1713 = vunpack.c.l.b16 %v678
        %v1714 = vunpack.c.l.b16 %v679
        %v1715 = vunpack.c.l.b16 %v680
        %v1716 = vunpack.c.l.b16 %v681
        %v1717 = vunpack.c.l.b16 %v682
        %v1718 = vunpack.c.l.b16 %v683
        %v1719 = vunpack.c.l.b16 %v684
        %v1720 = vunpack.c.l.b16 %v685
        %v1721 = vunpack.c.l.b16 %v686
        %v1722 = vunpack.c.l.b16 %v687
        %v1723 = vunpack.c.l.b16 %v688
        %v1724 = vunpack.c.l.b16 %v689
        %v1725 = vunpack.c.l.b16 %v690
        %v1726 = vunpack.c.l.b16 %v691
        %v1727 = vunpack.c.l.b16 %v692
        %v1728 = vunpack.c.l.b16 %v693
        %v1729 = vunpack.c.l.b16 %v694
        %v1730 = vunpack.c.l.b16 %v695
        %v1731 = vunpack.c.l.b16 %v696
        %v1732 = vunpack.c.l.b16 %v697
        %v1733 = vunpack.c.l.b16 %v698
        %v1734 = vunpack.c.l.b16 %v699
        %v1735 = vunpack.c.l.b16 %v700
        %v1736 = vunpack.c.l.b16 %v701
        %v1737 = vunpack.c.l.b16 %v702
        %v1738 = vunpack.c.l.b16 %v703
        %v1739 = vunpack.c.l.b16 %v704
        %v1740 = vunpack.c.l.b16 %v705
        %v1741 = vunpack.c.l.b16 %v706
        %v1742 = vunpack.c.l.b16 %v707
        %v1743 = vunpack.c.l.b16 %v708
        %v1744 = vunpack.c.l.b16 %v709
        %v1745 = vunpack.c.l.b16 %v710
        %v1746 = vunpack.c.l.b16 %v711
        %v1747 = vunpack.c.l.b16 %v712
        %v1748 = vunpack.c.l.b16 %v713
        %v1749 = vunpack.c.l.b16 %v714
        %v1750 = vunpack.c.l.b16 %v715
        %v1751 = vunpack.c.l.b16 %v716
        %v1752 = vunpack.c.l.b16 %v717
        %v1753 = vunpack.c.l.b16 %v718
        %v1754 = vunpack.c.l.b16 %v719
        %v1755 = vunpack.c.l.b16 %v720
        %v1756 = vunpack.c.l.b16 %v721
        %v1757 = vunpack.c.l.b16 %v722
        %v1758 = vunpack.c.l.b16 %v723
        %v1759 = vunpack.c.l.b16 %v724
        %v1760 = vunpack.c.l.b16 %v725
        %v1761 = vunpack.c.l.b16 %v726
        %v1762 = vunpack.c.l.b16 %v727
        %v1763 = vunpack.c.l.b16 %v728
        %v1764 = vunpack.c.l.b16 %v729
        %v1765 = vunpack.c.l.b16 %v730
        %v1766 = vunpack.c.l.b16 %v731
        %v1767 = vunpack.c.l.b16 %v732
        %v1768 = vunpack.c.l.b16 %v733
        %v1769 = vunpack.c.l.b16 %v734
        %v1770 = vunpack.c.l.b16 %v735
        %v1771 = vunpack.c.l.b16 %v736
        %v1772 = vunpack.c.l.b16 %v737
        %v1773 = vunpack.c.l.b16 %v738
        %v1774 = vunpack.c.l.b16 %v739
        %v1775 = vunpack.c.l.b16 %v740
        %v1776 = vunpack.c.l.b16 %v741
        %v1777 = vunpack.c.l.b16 %v742
        %v1778 = vunpack.c.l.b16 %v743
        %v1779 = vunpack.c.l.b16 %v744
        %v1780 = vunpack.c.l.b16 %v745
        %v1781 = vunpack.c.l.b16 %v746
        %v1782 = vunpack.c.l.b16 %v747
        %v1783 = vunpack.c.l.b16 %v748
        %v1784 = vunpack.c.l.b16 %v749
        %v1785 = vunpack.c.l.b16 %v750
        %v1786 = vunpack.c.l.b16 %v751
        %v1787 = vunpack.c.l.b16 %v752
        %v1788 = vunpack.c.l.b16 %v753
        %v1789 = vunpack.c.l.b16 %v754
        %v1790 = vunpack.c.l.b16 %v755
        %v1791 = vunpack.c.l.b16 %v756
        %v1792 = vpack.c.b16 %v1281, %v1280
        %v1793 = vpack.c.b16 %v1283, %v1282
        %v1794 = vpack.c.b16 %v1285, %v1284
        %v1795 = vpack.c.b16 %v1287, %v1286
        %v1796 = vpack.c.b16 %v1289, %v1288
        %v1797 = vpack.c.b16 %v1291, %v1290
        %v1798 = vpack.c.b16 %v1293, %v1292
        %v1799 = vpack.c.b16 %v1295, %v1294
        %v1800 = vpack.c.b16 %v1297, %v1296
        %v1801 = vpack.c.b16 %v1299, %v1298
        %v1802 = vpack.c.b16 %v1301, %v1300
        %v1803 = vpack.c.b16 %v1303, %v1302
        %v1804 = vpack.c.b16 %v1305, %v1304
        %v1805 = vpack.c.b16 %v1307, %v1306
        %v1806 = vpack.c.b16 %v1309, %v1308
        %v1807 = vpack.c.b16 %v1311, %v1310
        %v1808 = vpack.c.b16 %v1313, %v1312
        %v1809 = vpack.c.b16 %v1315, %v1314
        %v1810 = vpack.c.b16 %v1317, %v1316
        %v1811 = vpack.c.b16 %v1319, %v1318
        %v1812 = vpack.c.b16 %v1321, %v1320
        %v1813 = vpack.c.b16 %v1323, %v1322
        %v1814 = vpack.c.b16 %v1325, %v1324
        %v1815 = vpack.c.b16 %v1327, %v1326
        %v1816 = vpack.c.b16 %v1329, %v1328
        %v1817 = vpack.c.b16 %v1331, %v1330
        %v1818 = vpack.c.b16 %v1333, %v1332
        %v1819 = vpack.c.b16 %v1335, %v1334
        %v1820 = vpack.c.b16 %v1337, %v1336
        %v1821 = vpack.c.b16 %v1339, %v1338
        %v1822 = vpack.c.b16 %v1341, %v1340
        %v1823 = vpack.c.b16 %v1343, %v1342
        %v1824 = vpack.c.b16 %v1345, %v1344
        %v1825 = vpack.c.b16 %v1347, %v1346
        %v1826 = vpack.c.b16 %v1349, %v1348
        %v1827 = vpack.c.b16 %v1351, %v1350
        %v1828 = vpack.c.b16 %v1353, %v1352
        %v1829 = vpack.c.b16 %v1355, %v1354
        %v1830 = vpack.c.b16 %v1357, %v1356
        %v1831 = vpack.c.b16 %v1359, %v1358
        %v1832 = vpack.c.b16 %v1361, %v1360
        %v1833 = vpack.c.b16 %v1363, %v1362
        %v1834 = vpack.c.b16 %v1365, %v1364
        %v1835 = vpack.c.b16 %v1367, %v1366
        %v1836 = vpack.c.b16 %v1369, %v1368
        %v1837 = vpack.c.b16 %v1371, %v1370
        %v1838 = vpack.c.b16 %v1373, %v1372
        %v1839 = vpack.c.b16 %v1375, %v1374
        %v1840 = vpack.c.b16 %v1377, %v1376
        %v1841 = vpack.c.b16 %v1379, %v1378
        %v1842 = vpack.c.b16 %v1381, %v1380
        %v1843 = vpack.c.b16 %v1383, %v1382
        %v1844 = vpack.c.b16 %v1385, %v1384
        %v1845 = vpack.c.b16 %v1387, %v1386
        %v1846 = vpack.c.b16 %v1389, %v1388
        %v1847 = vpack.c.b16 %v1391, %v1390
        %v1848 = vpack.c.b16 %v1393, %v1392
        %v1849 = vpack.c.b16 %v1395, %v1394
        %v1850 = vpack.c.b16 %v1397, %v1396
        %v1851 = vpack.c.b16 %v1399, %v1398
        %v1852 = vpack.c.b16 %v1401, %v1400
        %v1853 = vpack.c.b16 %v1403, %v1402
        %v1854 = vpack.c.b16 %v1405, %v1404
        %v1855 = vpack.c.b16 %v1407, %v1406
        %v1856 = vpack.c.b16 %v1409, %v1408
        %v1857 = vpack.c.b16 %v1411, %v1410
        %v1858 = vpack.c.b16 %v1413, %v1412
        %v1859 = vpack.c.b16 %v1415, %v1414
        %v1860 = vpack.c.b16 %v1417, %v1416
        %v1861 = vpack.c.b16 %v1419, %v1418
        %v1862 = vpack.c.b16 %v1421, %v1420
        %v1863 = vpack.c.b16 %v1423, %v1422
        %v1864 = vpack.c.b16 %v1425, %v1424
        %v1865 = vpack.c.b16 %v1427, %v1426
        %v1866 = vpack.c.b16 %v1429, %v1428
        %v1867 = vpack.c.b16 %v1431, %v1430
        %v1868 = vpack.c.b16 %v1433, %v1432
        %v1869 = vpack.c.b16 %v1435, %v1434
        %v1870 = vpack.c.b16 %v1437, %v1436
        %v1871 = vpack.c.b16 %v1439, %v1438
        %v1872 = vpack.c.b16 %v1441, %v1440
        %v1873 = vpack.c.b16 %v1443, %v1442
        %v1874 = vpack.c.b16 %v1445, %v1444
        %v1875 = vpack.c.b16 %v1447, %v1446
        %v1876 = vpack.c.b16 %v1449, %v1448
        %v1877 = vpack.c.b16 %v1451, %v1450
        %v1878 = vpack.c.b16 %v1453, %v1452
        %v1879 = vpack.c.b16 %v1455, %v1454
        %v1880 = vpack.c.b16 %v1457, %v1456
        %v1881 = vpack.c.b16 %v1459, %v1458
        %v1882 = vpack.c.b16 %v1461, %v1460
        %v1883 = vpack.c.b16 %v1463, %v1462
        %v1884 = vpack.c.b16 %v1465, %v1464
        %v1885 = vpack.c.b16 %v1467, %v1466
        %v1886 = vpack.c.b16 %v1469, %v1468
        %v1887 = vpack.c.b16 %v1471, %v1470
        %v1888 = vpack.c.b16 %v1473, %v1472
        %v1889 = vpack.c.b16 %v1475, %v1474
        %v1890 = vpack.c.b16 %v1477, %v1476
        %v1891 = vpack.c.b16 %v1479, %v1478
        %v1892 = vpack.c.b16 %v1481, %v1480
        %v1893 = vpack.c.b16 %v1483, %v1482
        %v1894 = vpack.c.b16 %v1485, %v1484
        %v1895 = vpack.c.b16 %v1487, %v1486
        %v1896 = vpack.c.b16 %v1489, %v1488
        %v1897 = vpack.c.b16 %v1491, %v1490
        %v1898 = vpack.c.b16 %v1493, %v1492
        %v1899 = vpack.c.b16 %v1495, %v1494
        %v1900 = vpack.c.b16 %v1497, %v1496
        %v1901 = vpack.c.b16 %v1499, %v1498
        %v1902 = vpack.c.b16 %v1501, %v1500
        %v1903 = vpack.c.b16 %v1503, %v1502
        %v1904 = vpack.c.b16 %v1505, %v1504
        %v1905 = vpack.c.b16 %v1507, %v1506
        %v1906 = vpack.c.b16 %v1509, %v1508
        %v1907 = vpack.c.b16 %v1511, %v1510
        %v1908 = vpack.c.b16 %v1513, %v1512
        %v1909 = vpack.c.b16 %v1515, %v1514
        %v1910 = vpack.c.b16 %v1517, %v1516
        %v1911 = vpack.c.b16 %v1519, %v1518
        %v1912 = vpack.c.b16 %v1521, %v1520
        %v1913 = vpack.c.b16 %v1523, %v1522
        %v1914 = vpack.c.b16 %v1525, %v1524
        %v1915 = vpack.c.b16 %v1527, %v1526
        %v1916 = vpack.c.b16 %v1529, %v1528
        %v1917 = vpack.c.b16 %v1531, %v1530
        %v1918 = vpack.c.b16 %v1533, %v1532
        %v1919 = vpack.c.b16 %v1535, %v1534
        %v1920 = vpack.c.b16 %v1537, %v1536
        %v1921 = vpack.c.b16 %v1539, %v1538
        %v1922 = vpack.c.b16 %v1541, %v1540
        %v1923 = vpack.c.b16 %v1543, %v1542
        %v1924 = vpack.c.b16 %v1545, %v1544
        %v1925 = vpack.c.b16 %v1547, %v1546
        %v1926 = vpack.c.b16 %v1549, %v1548
        %v1927 = vpack.c.b16 %v1551, %v1550
        %v1928 = vpack.c.b16 %v1553, %v1552
        %v1929 = vpack.c.b16 %v1555, %v1554
        %v1930 = vpack.c.b16 %v1557, %v1556
        %v1931 = vpack.c.b16 %v1559, %v1558
        %v1932 = vpack.c.b16 %v1561, %v1560
        %v1933 = vpack.c.b16 %v1563, %v1562
        %v1934 = vpack.c.b16 %v1565, %v1564
        %v1935 = vpack.c.b16 %v1567, %v1566
        %v1936 = vpack.c.b16 %v1569, %v1568
        %v1937 = vpack.c.b16 %v1571, %v1570
        %v1938 = vpack.c.b16 %v1573, %v1572
        %v1939 = vpack.c.b16 %v1575, %v1574
        %v1940 = vpack.c.b16 %v1577, %v1576
        %v1941 = vpack.c.b16 %v1579, %v1578
        %v1942 = vpack.c.b16 %v1581, %v1580
        %v1943 = vpack.c.b16 %v1583, %v1582
        %v1944 = vpack.c.b16 %v1585, %v1584
        %v1945 = vpack.c.b16 %v1587, %v1586
        %v1946 = vpack.c.b16 %v1589, %v1588
        %v1947 = vpack.c.b16 %v1591, %v1590
        %v1948 = vpack.c.b16 %v1593, %v1592
        %v1949 = vpack.c.b16 %v1595, %v1594
        %v1950 = vpack.c.b16 %v1597, %v1596
        %v1951 = vpack.c.b16 %v1599, %v1598
        %v1952 = vpack.c.b16 %v1601, %v1600
        %v1953 = vpack.c.b16 %v1603, %v1602
        %v1954 = vpack.c.b16 %v1605, %v1604
        %v1955 = vpack.c.b16 %v1607, %v1606
        %v1956 = vpack.c.b16 %v1609, %v1608
        %v1957 = vpack.c.b16 %v1611, %v1610
        %v1958 = vpack.c.b16 %v1613, %v1612
        %v1959 = vpack.c.b16 %v1615, %v1614
        %v1960 = vpack.c.b16 %v1617, %v1616
        %v1961 = vpack.c.b16 %v1619, %v1618
        %v1962 = vpack.c.b16 %v1621, %v1620
        %v1963 = vpack.c.b16 %v1623, %v1622
        %v1964 = vpack.c.b16 %v1625, %v1624
        %v1965 = vpack.c.b16 %v1627, %v1626
        %v1966 = vpack.c.b16 %v1629, %v1628
        %v1967 = vpack.c.b16 %v1631, %v1630
        %v1968 = vpack.c.b16 %v1633, %v1632
        %v1969 = vpack.c.b16 %v1635, %v1634
        %v1970 = vpack.c.b16 %v1637, %v1636
        %v1971 = vpack.c.b16 %v1639, %v1638
        %v1972 = vpack.c.b16 %v1641, %v1640
        %v1973 = vpack.c.b16 %v1643, %v1642
        %v1974 = vpack.c.b16 %v1645, %v1644
        %v1975 = vpack.c.b16 %v1647, %v1646
        %v1976 = vpack.c.b16 %v1649, %v1648
        %v1977 = vpack.c.b16 %v1651, %v1650
        %v1978 = vpack.c.b16 %v1653, %v1652
        %v1979 = vpack.c.b16 %v1655, %v1654
        %v1980 = vpack.c.b16 %v1657, %v1656
        %v1981 = vpack.c.b16 %v1659, %v1658
        %v1982 = vpack.c.b16 %v1661, %v1660
        %v1983 = vpack.c.b16 %v1663, %v1662
        %v1984 = vpack.c.b16 %v1665, %v1664
        %v1985 = vpack.c.b16 %v1667, %v1666
        %v1986 = vpack.c.b16 %v1669, %v1668
        %v1987 = vpack.c.b16 %v1671, %v1670
        %v1988 = vpack.c.b16 %v1673, %v1672
        %v1989 = vpack.c.b16 %v1675, %v1674
        %v1990 = vpack.c.b16 %v1677, %v1676
        %v1991 = vpack.c.b16 %v1679, %v1678
        %v1992 = vpack.c.b16 %v1681, %v1680
        %v1993 = vpack.c.b16 %v1683, %v1682
        %v1994 = vpack.c.b16 %v1685, %v1684
        %v1995 = vpack.c.b16 %v1687, %v1686
        %v1996 = vpack.c.b16 %v1689, %v1688
        %v1997 = vpack.c.b16 %v1691, %v1690
        %v1998 = vpack.c.b16 %v1693, %v1692
        %v1999 = vpack.c.b16 %v1695, %v1694
        %v2000 = vpack.c.b16 %v1697, %v1696
        %v2001 = vpack.c.b16 %v1699, %v1698
        %v2002 = vpack.c.b16 %v1701, %v1700
        %v2003 = vpack.c.b16 %v1703, %v1702
        %v2004 = vpack.c.b16 %v1705, %v1704
        %v2005 = vpack.c.b16 %v1707, %v1706
        %v2006 = vpack.c.b16 %v1709, %v1708
        %v2007 = vpack.c.b16 %v1711, %v1710
        %v2008 = vpack.c.b16 %v1713, %v1712
        %v2009 = vpack.c.b16 %v1715, %v1714
        %v2010 = vpack.c.b16 %v1717, %v1716
        %v2011 = vpack.c.b16 %v1719, %v1718
        %v2012 = vpack.c.b16 %v1721, %v1720
        %v2013 = vpack.c.b16 %v1723, %v1722
        %v2014 = vpack.c.b16 %v1725, %v1724
        %v2015 = vpack.c.b16 %v1727, %v1726
        %v2016 = vpack.c.b16 %v1729, %v1728
        %v2017 = vpack.c.b16 %v1731, %v1730
        %v2018 = vpack.c.b16 %v1733, %v1732
        %v2019 = vpack.c.b16 %v1735, %v1734
        %v2020 = vpack.c.b16 %v1737, %v1736
        %v2021 = vpack.c.b16 %v1739, %v1738
        %v2022 = vpack.c.b16 %v1741, %v1740
        %v2023 = vpack.c.b16 %v1743, %v1742
        %v2024 = vpack.c.b16 %v1745, %v1744
        %v2025 = vpack.c.b16 %v1747, %v1746
        %v2026 = vpack.c.b16 %v1749, %v1748
        %v2027 = vpack.c.b16 %v1751, %v1750
        %v2028 = vpack.c.b16 %v1753, %v1752
        %v2029 = vpack.c.b16 %v1755, %v1754
        %v2030 = vpack.c.b16 %v1757, %v1756
        %v2031 = vpack.c.b16 %v1759, %v1758
        %v2032 = vpack.c.b16 %v1761, %v1760
        %v2033 = vpack.c.b16 %v1763, %v1762
        %v2034 = vpack.c.b16 %v1765, %v1764
        %v2035 = vpack.c.b16 %v1767, %v1766
        %v2036 = vpack.c.b16 %v1769, %v1768
        %v2037 = vpack.c.b16 %v1771, %v1770
        %v2038 = vpack.c.b16 %v1773, %v1772
        %v2039 = vpack.c.b16 %v1775, %v1774
        %v2040 = vpack.c.b16 %v1777, %v1776
        %v2041 = vpack.c.b16 %v1779, %v1778
        %v2042 = vpack.c.b16 %v1781, %v1780
        %v2043 = vpack.c.b16 %v1783, %v1782
        %v2044 = vpack.c.b16 %v1785, %v1784
        %v2045 = vpack.c.b16 %v1787, %v1786
        %v2046 = vpack.c.b16 %v1789, %v1788
        %v2047 = vpack.c.b16 %v1791, %v1790
        %v2052 = vunpack.c.l.b16 %v757
        %v2053 = vunpack.c.l.b16 %v758
        %v2054 = vunpack.c.l.b16 %v759
        %v2055 = vunpack.c.l.b16 %v760
        %v2056 = vpack.c.b16 %v2053, %v2052
        %v2057 = vpack.c.b16 %v2055, %v2054
        %vm2059 = vcmask 220160
        %v2061 = vsel %vm2059, %v1792, 0
        %v2064 = vsel %vm2059, %v1793, 0
        %v2067 = vsel %vm2059, %v1794, 0
        %v2070 = vsel %vm2059, %v1795, 0
        %v2073 = vsel %vm2059, %v1796, 0
        %v2076 = vsel %vm2059, %v1797, 0
        %v2079 = vsel %vm2059, %v1798, 0
        %v2082 = vsel %vm2059, %v1799, 0
        %v2085 = vsel %vm2059, %v1800, 0
        %v2088 = vsel %vm2059, %v1801, 0
        %v2091 = vsel %vm2059, %v1802, 0
        %v2094 = vsel %vm2059, %v1803, 0
        %v2097 = vsel %vm2059, %v1804, 0
        %v2100 = vsel %vm2059, %v1805, 0
        %v2103 = vsel %vm2059, %v1806, 0
        %v2106 = vsel %vm2059, %v1807, 0
        %v2109 = vsel %vm2059, %v1808, 0
        %v2112 = vsel %vm2059, %v1809, 0
        %v2115 = vsel %vm2059, %v1810, 0
        %v2118 = vsel %vm2059, %v1811, 0
        %v2121 = vsel %vm2059, %v1812, 0
        %v2124 = vsel %vm2059, %v1813, 0
        %v2127 = vsel %vm2059, %v1814, 0
        %v2130 = vsel %vm2059, %v1815, 0
        %v2133 = vsel %vm2059, %v1816, 0
        %v2136 = vsel %vm2059, %v1817, 0
        %v2139 = vsel %vm2059, %v1818, 0
        %v2142 = vsel %vm2059, %v1819, 0
        %v2145 = vsel %vm2059, %v1820, 0
        %v2148 = vsel %vm2059, %v1821, 0
        %v2151 = vsel %vm2059, %v1822, 0
        %v2154 = vsel %vm2059, %v1823, 0
        %v2157 = vsel %vm2059, %v1824, 0
        %v2160 = vsel %vm2059, %v1825, 0
        %v2163 = vsel %vm2059, %v1826, 0
        %v2166 = vsel %vm2059, %v1827, 0
        %v2169 = vsel %vm2059, %v1828, 0
        %v2172 = vsel %vm2059, %v1829, 0
        %v2175 = vsel %vm2059, %v1830, 0
        %v2178 = vsel %vm2059, %v1831, 0
        %v2181 = vsel %vm2059, %v1832, 0
        %v2184 = vsel %vm2059, %v1833, 0
        %v2187 = vsel %vm2059, %v1834, 0
        %v2190 = vsel %vm2059, %v1835, 0
        %v2193 = vsel %vm2059, %v1836, 0
        %v2196 = vsel %vm2059, %v1837, 0
        %v2199 = vsel %vm2059, %v1838, 0
        %v2202 = vsel %vm2059, %v1839, 0
        %v2205 = vsel %vm2059, %v1840, 0
        %v2208 = vsel %vm2059, %v1841, 0
        %v2211 = vsel %vm2059, %v1842, 0
        %v2214 = vsel %vm2059, %v1843, 0
        %v2217 = vsel %vm2059, %v1844, 0
        %v2220 = vsel %vm2059, %v1845, 0
        %v2223 = vsel %vm2059, %v1846, 0
        %v2226 = vsel %vm2059, %v1847, 0
        %v2229 = vsel %vm2059, %v1848, 0
        %v2232 = vsel %vm2059, %v1849, 0
        %v2235 = vsel %vm2059, %v1850, 0
        %v2238 = vsel %vm2059, %v1851, 0
        %v2241 = vsel %vm2059, %v1852, 0
        %v2244 = vsel %vm2059, %v1853, 0
        %v2247 = vsel %vm2059, %v1854, 0
        %v2250 = vsel %vm2059, %v1855, 0
        %v2253 = vsel %vm2059, %v1856, 0
        %v2256 = vsel %vm2059, %v1857, 0
        %v2259 = vsel %vm2059, %v1858, 0
        %v2262 = vsel %vm2059, %v1859, 0
        %v2265 = vsel %vm2059, %v1860, 0
        %v2268 = vsel %vm2059, %v1861, 0
        %v2271 = vsel %vm2059, %v1862, 0
        %v2274 = vsel %vm2059, %v1863, 0
        %v2277 = vsel %vm2059, %v1864, 0
        %v2280 = vsel %vm2059, %v1865, 0
        %v2283 = vsel %vm2059, %v1866, 0
        %v2286 = vsel %vm2059, %v1867, 0
        %v2289 = vsel %vm2059, %v1868, 0
        %v2292 = vsel %vm2059, %v1869, 0
        %v2295 = vsel %vm2059, %v1870, 0
        %v2298 = vsel %vm2059, %v1871, 0
        %v2301 = vsel %vm2059, %v1872, 0
        %v2304 = vsel %vm2059, %v1873, 0
        %v2307 = vsel %vm2059, %v1874, 0
        %v2310 = vsel %vm2059, %v1875, 0
        %v2313 = vsel %vm2059, %v1876, 0
        %v2316 = vsel %vm2059, %v1877, 0
        %v2319 = vsel %vm2059, %v1878, 0
        %v2322 = vsel %vm2059, %v1879, 0
        %v2325 = vsel %vm2059, %v1880, 0
        %v2328 = vsel %vm2059, %v1881, 0
        %v2331 = vsel %vm2059, %v1882, 0
        %v2334 = vsel %vm2059, %v1883, 0
        %v2337 = vsel %vm2059, %v1884, 0
        %v2340 = vsel %vm2059, %v1885, 0
        %v2343 = vsel %vm2059, %v1886, 0
        %v2346 = vsel %vm2059, %v1887, 0
        %v2349 = vsel %vm2059, %v1888, 0
        %v2352 = vsel %vm2059, %v1889, 0
        %v2355 = vsel %vm2059, %v1890, 0
        %v2358 = vsel %vm2059, %v1891, 0
        %v2361 = vsel %vm2059, %v1892, 0
        %v2364 = vsel %vm2059, %v1893, 0
        %v2367 = vsel %vm2059, %v1894, 0
        %v2370 = vsel %vm2059, %v1895, 0
        %v2373 = vsel %vm2059, %v1896, 0
        %v2376 = vsel %vm2059, %v1897, 0
        %v2379 = vsel %vm2059, %v1898, 0
        %v2382 = vsel %vm2059, %v1899, 0
        %v2385 = vsel %vm2059, %v1900, 0
        %v2388 = vsel %vm2059, %v1901, 0
        %v2391 = vsel %vm2059, %v1902, 0
        %v2394 = vsel %vm2059, %v1903, 0
        %v2397 = vsel %vm2059, %v1904, 0
        %v2400 = vsel %vm2059, %v1905, 0
        %v2403 = vsel %vm2059, %v1906, 0
        %v2406 = vsel %vm2059, %v1907, 0
        %v2409 = vsel %vm2059, %v1908, 0
        %v2412 = vsel %vm2059, %v1909, 0
        %v2415 = vsel %vm2059, %v1910, 0
        %v2418 = vsel %vm2059, %v1911, 0
        %v2421 = vsel %vm2059, %v1912, 0
        %v2424 = vsel %vm2059, %v1913, 0
        %v2427 = vsel %vm2059, %v1914, 0
        %v2430 = vsel %vm2059, %v1915, 0
        %v2433 = vsel %vm2059, %v1916, 0
        %v2436 = vsel %vm2059, %v1917, 0
        %v2439 = vsel %vm2059, %v1918, 0
        %v2442 = vsel %vm2059, %v1919, 0
        %v2445 = vsel %vm2059, %v1920, 0
        %v2448 = vsel %vm2059, %v1921, 0
        %v2451 = vsel %vm2059, %v1922, 0
        %v2454 = vsel %vm2059, %v1923, 0
        %v2457 = vsel %vm2059, %v1924, 0
        %v2460 = vsel %vm2059, %v1925, 0
        %v2463 = vsel %vm2059, %v1926, 0
        %v2466 = vsel %vm2059, %v1927, 0
        %v2469 = vsel %vm2059, %v1928, 0
        %v2472 = vsel %vm2059, %v1929, 0
        %v2475 = vsel %vm2059, %v1930, 0
        %v2478 = vsel %vm2059, %v1931, 0
        %v2481 = vsel %vm2059, %v1932, 0
        %v2484 = vsel %vm2059, %v1933, 0
        %v2487 = vsel %vm2059, %v1934, 0
        %v2490 = vsel %vm2059, %v1935, 0
        %v2493 = vsel %vm2059, %v1936, 0
        %v2496 = vsel %vm2059, %v1937, 0
        %v2499 = vsel %vm2059, %v1938, 0
        %v2502 = vsel %vm2059, %v1939, 0
        %v2505 = vsel %vm2059, %v1940, 0
        %v2508 = vsel %vm2059, %v1941, 0
        %v2511 = vsel %vm2059, %v1942, 0
        %v2514 = vsel %vm2059, %v1943, 0
        %v2517 = vsel %vm2059, %v1944, 0
        %v2520 = vsel %vm2059, %v1945, 0
        %v2523 = vsel %vm2059, %v1946, 0
        %v2526 = vsel %vm2059, %v1947, 0
        %v2529 = vsel %vm2059, %v1948, 0
        %v2532 = vsel %vm2059, %v1949, 0
        %v2535 = vsel %vm2059, %v1950, 0
        %v2538 = vsel %vm2059, %v1951, 0
        %v2541 = vsel %vm2059, %v1952, 0
        %v2544 = vsel %vm2059, %v1953, 0
        %v2547 = vsel %vm2059, %v1954, 0
        %v2550 = vsel %vm2059, %v1955, 0
        %v2553 = vsel %vm2059, %v1956, 0
        %v2556 = vsel %vm2059, %v1957, 0
        %v2559 = vsel %vm2059, %v1958, 0
        %v2562 = vsel %vm2059, %v1959, 0
        %v2565 = vsel %vm2059, %v1960, 0
        %v2568 = vsel %vm2059, %v1961, 0
        %v2571 = vsel %vm2059, %v1962, 0
        %v2574 = vsel %vm2059, %v1963, 0
        %v2577 = vsel %vm2059, %v1964, 0
        %v2580 = vsel %vm2059, %v1965, 0
        %v2583 = vsel %vm2059, %v1966, 0
        %v2586 = vsel %vm2059, %v1967, 0
        %v2589 = vsel %vm2059, %v1968, 0
        %v2592 = vsel %vm2059, %v1969, 0
        %v2595 = vsel %vm2059, %v1970, 0
        %v2598 = vsel %vm2059, %v1971, 0
        %v2601 = vsel %vm2059, %v1972, 0
        %v2604 = vsel %vm2059, %v1973, 0
        %v2607 = vsel %vm2059, %v1974, 0
        %v2610 = vsel %vm2059, %v1975, 0
        %v2613 = vsel %vm2059, %v1976, 0
        %v2616 = vsel %vm2059, %v1977, 0
        %v2619 = vsel %vm2059, %v1978, 0
        %v2622 = vsel %vm2059, %v1979, 0
        %v2625 = vsel %vm2059, %v1980, 0
        %v2628 = vsel %vm2059, %v1981, 0
        %v2631 = vsel %vm2059, %v1982, 0
        %v2634 = vsel %vm2059, %v1983, 0
        %v2637 = vsel %vm2059, %v1984, 0
        %v2640 = vsel %vm2059, %v1985, 0
        %v2643 = vsel %vm2059, %v1986, 0
        %v2646 = vsel %vm2059, %v1987, 0
        %v2649 = vsel %vm2059, %v1988, 0
        %v2652 = vsel %vm2059, %v1989, 0
        %v2655 = vsel %vm2059, %v1990, 0
        %v2658 = vsel %vm2059, %v1991, 0
        %v2661 = vsel %vm2059, %v1992, 0
        %v2664 = vsel %vm2059, %v1993, 0
        %v2667 = vsel %vm2059, %v1994, 0
        %v2670 = vsel %vm2059, %v1995, 0
        %v2673 = vsel %vm2059, %v1996, 0
        %v2676 = vsel %vm2059, %v1997, 0
        %v2679 = vsel %vm2059, %v1998, 0
        %v2682 = vsel %vm2059, %v1999, 0
        %v2685 = vsel %vm2059, %v2000, 0
        %v2688 = vsel %vm2059, %v2001, 0
        %v2691 = vsel %vm2059, %v2002, 0
        %v2694 = vsel %vm2059, %v2003, 0
        %v2697 = vsel %vm2059, %v2004, 0
        %v2700 = vsel %vm2059, %v2005, 0
        %v2703 = vsel %vm2059, %v2006, 0
        %v2706 = vsel %vm2059, %v2007, 0
        %v2709 = vsel %vm2059, %v2008, 0
        %v2712 = vsel %vm2059, %v2009, 0
        %v2715 = vsel %vm2059, %v2010, 0
        %v2718 = vsel %vm2059, %v2011, 0
        %v2721 = vsel %vm2059, %v2012, 0
        %v2724 = vsel %vm2059, %v2013, 0
        %v2727 = vsel %vm2059, %v2014, 0
        %v2730 = vsel %vm2059, %v2015, 0
        %v2733 = vsel %vm2059, %v2016, 0
        %v2736 = vsel %vm2059, %v2017, 0
        %v2739 = vsel %vm2059, %v2018, 0
        %v2742 = vsel %vm2059, %v2019, 0
        %v2745 = vsel %vm2059, %v2020, 0
        %v2748 = vsel %vm2059, %v2021, 0
        %v2751 = vsel %vm2059, %v2022, 0
        %v2754 = vsel %vm2059, %v2023, 0
        %v2757 = vsel %vm2059, %v2024, 0
        %v2760 = vsel %vm2059, %v2025, 0
        %v2763 = vsel %vm2059, %v2026, 0
        %v2766 = vsel %vm2059, %v2027, 0
        %v2769 = vsel %vm2059, %v2028, 0
        %v2772 = vsel %vm2059, %v2029, 0
        %v2775 = vsel %vm2059, %v2030, 0
        %v2778 = vsel %vm2059, %v2031, 0
        %v2781 = vsel %vm2059, %v2032, 0
        %v2784 = vsel %vm2059, %v2033, 0
        %v2787 = vsel %vm2059, %v2034, 0
        %v2790 = vsel %vm2059, %v2035, 0
        %v2793 = vsel %vm2059, %v2036, 0
        %v2796 = vsel %vm2059, %v2037, 0
        %v2799 = vsel %vm2059, %v2038, 0
        %v2802 = vsel %vm2059, %v2039, 0
        %v2805 = vsel %vm2059, %v2040, 0
        %v2808 = vsel %vm2059, %v2041, 0
        %v2811 = vsel %vm2059, %v2042, 0
        %v2814 = vsel %vm2059, %v2043, 0
        %v2817 = vsel %vm2059, %v2044, 0
        %v2820 = vsel %vm2059, %v2045, 0
        %v2823 = vsel %vm2059, %v2046, 0
        %v2826 = vsel %vm2059, %v2047, 0
        %vm2828 = vcmask 1044480
        %vm2829 = vcmask 1045504
        %v2830 = vsel %vm2828, 4294967295, 65535
        %v2831 = vsel %vm2829, %v2830, 0
        %v2833 = vand.u32 %v2057, %v2831
        %2835 = vmatprep.subr.bf16.mxu0 0
        %2836 = vmatpush1.bf16.msra.mxu0 %v2056
        %2837 = vmatprep.subr.bf16.mxu0 0
        %2838 = vmatpush1.bf16.msra.mxu0 %v2833
        %2839 = vmatprep.subr.bf16.mxu0 0
        %2840 = vmatpush1.bf16.msra.mxu0 0
        %2841 = vmatprep.subr.bf16.mxu0 0
        %2842 = vmatpush1.bf16.msra.mxu0 0
        %2843 = vmatprep.subr.bf16.mxu0 0
        %2844 = vmatpush1.bf16.msra.mxu0 0
        %2845 = vmatprep.subr.bf16.mxu0 0
        %2846 = vmatpush1.bf16.msra.mxu0 0
        %2847 = vmatprep.subr.bf16.mxu0 0
        %2848 = vmatpush1.bf16.msra.mxu0 0
        %2849 = vmatprep.subr.bf16.mxu0 0
        %2850 = vmatpush1.bf16.msra.mxu0 0
        %2851 = vmatprep.subr.bf16.mxu0 0
        %2852 = vmatpush1.bf16.msra.mxu0 0
        %2853 = vmatprep.subr.bf16.mxu0 0
        %2854 = vmatpush1.bf16.msra.mxu0 0
        %2855 = vmatprep.subr.bf16.mxu0 0
        %2856 = vmatpush1.bf16.msra.mxu0 0
        %2857 = vmatprep.subr.bf16.mxu0 0
        %2858 = vmatpush1.bf16.msra.mxu0 0
        %2859 = vmatprep.subr.bf16.mxu0 0
        %2860 = vmatpush1.bf16.msra.mxu0 0
        %2861 = vmatprep.subr.bf16.mxu0 0
        %2862 = vmatpush1.bf16.msra.mxu0 0
        %2863 = vmatprep.subr.bf16.mxu0 0
        %2864 = vmatpush1.bf16.msra.mxu0 0
        %2865 = vmatprep.subr.bf16.mxu0 0
        %2866 = vmatpush1.bf16.msra.mxu0 0
        %2867 = vmatprep.mubr.bf16.mxu0 0
        %2868 = vmatmul.mubr.bf16.gmra.mrb[0].mxu0 %v2061
        %v2869 = vpop.f32.mrb[0].mxu0
        %v2870 = vadd.f32 %v766, %v2869
        %v2871 = vpop.f32.mrb[0].mxu0
        %v2872 = vpop.f32.mrb[0].mxu0
        %v2873 = vadd.f32 %v766, %v2872
        %v2874 = vpop.f32.mrb[0].mxu0
        %2875 = vmatprep.mubr.bf16.mxu0 0
        %2876 = vmatmul.mubr.bf16.gmra.mrb[0].mxu0 %v2064
        %v2877 = vpop.f32.mrb[0].mxu0
        %v2878 = vadd.f32 %v766, %v2877
        %v2879 = vpop.f32.mrb[0].mxu0
        %v2880 = vpop.f32.mrb[0].mxu0
        %v2881 = vadd.f32 %v766, %v2880
        %v2882 = vpop.f32.mrb[0].mxu0
        %2883 = vmatprep.mubr.bf16.mxu0 0
        %2884 = vmatmul.mubr.bf16.gmra.mrb[0].mxu0 %v2067
        %v2885 = vpop.f32.mrb[0].mxu0
        %v2886 = vadd.f32 %v766, %v2885
        %v2887 = vpop.f32.mrb[0].mxu0
        %v2888 = vpop.f32.mrb[0].mxu0
        %v2889 = vadd.f32 %v766, %v2888
        %v2890 = vpop.f32.mrb[0].mxu0
        %2891 = vmatprep.mubr.bf16.mxu0 0
        %2892 = vmatmul.mubr.bf16.gmra.mrb[0].mxu0 %v2070
        %v2893 = vpop.f32.mrb[0].mxu0
        %v2894 = vadd.f32 %v766, %v2893
        %v2895 = vpop.f32.mrb[0].mxu0
        %v2896 = vpop.f32.mrb[0].mxu0
        %v2897 = vadd.f32 %v766, %v2896
        %v2898 = vpop.f32.mrb[0].mxu0
        %2899 = vmatprep.mubr.bf16.mxu0 0
        %2900 = vmatmul.mubr.bf16.gmra.mrb[0].mxu0 %v2073
        %v2901 = vpop.f32.mrb[0].mxu0
        %v2902 = vadd.f32 %v766, %v2901
        %v2903 = vpop.f32.mrb[0].mxu0
        %v2904 = vpop.f32.mrb[0].mxu0
        %v2905 = vadd.f32 %v766, %v2904
        %v2906 = vpop.f32.mrb[0].mxu0
        %2907 = vmatprep.mubr.bf16.mxu0 0
        %2908 = vmatmul.mubr.bf16.gmra.mrb[0].mxu0 %v2076
        %v2909 = vpop.f32.mrb[0].mxu0
        %v2910 = vadd.f32 %v766, %v2909
        %v2911 = vpop.f32.mrb[0].mxu0
        %v2912 = vpop.f32.mrb[0].mxu0
        %v2913 = vadd.f32 %v766, %v2912
        %v2914 = vpop.f32.mrb[0].mxu0
        %2915 = vmatprep.mubr.bf16.mxu0 0
        %2916 = vmatmul.mubr.bf16.gmra.mrb[0].mxu0 %v2079
        %v2917 = vpop.f32.mrb[0].mxu0
        %v2918 = vadd.f32 %v766, %v2917
        %v2919 = vpop.f32.mrb[0].mxu0
        %v2920 = vpop.f32.mrb[0].mxu0
        %v2921 = vadd.f32 %v766, %v2920
        %v2922 = vpop.f32.mrb[0].mxu0
        %2923 = vmatprep.mubr.bf16.mxu0 0
        %2924 = vmatmul.mubr.bf16.gmra.mrb[0].mxu0 %v2082
        %v2925 = vpop.f32.mrb[0].mxu0
        %v2926 = vadd.f32 %v766, %v2925
        %v2927 = vpop.f32.mrb[0].mxu0
        %v2928 = vpop.f32.mrb[0].mxu0
        %v2929 = vadd.f32 %v766, %v2928
        %v2930 = vpop.f32.mrb[0].mxu0
        %2931 = vmatprep.mubr.bf16.mxu0 0
        %2932 = vmatmul.mubr.bf16.gmra.mrb[0].mxu0 %v2085
        %v2933 = vpop.f32.mrb[0].mxu0
        %v2934 = vadd.f32 %v766, %v2933
        %v2935 = vpop.f32.mrb[0].mxu0
        %v2936 = vpop.f32.mrb[0].mxu0
        %v2937 = vadd.f32 %v766, %v2936
        %v2938 = vpop.f32.mrb[0].mxu0
        %2939 = vmatprep.mubr.bf16.mxu0 0
        %2940 = vmatmul.mubr.bf16.gmra.mrb[0].mxu0 %v2088
        %v2941 = vpop.f32.mrb[0].mxu0
        %v2942 = vadd.f32 %v766, %v2941
        %v2943 = vpop.f32.mrb[0].mxu0
        %v2944 = vpop.f32.mrb[0].mxu0
        %v2945 = vadd.f32 %v766, %v2944
        %v2946 = vpop.f32.mrb[0].mxu0
        %2947 = vmatprep.mubr.bf16.mxu0 0
        %2948 = vmatmul.mubr.bf16.gmra.mrb[0].mxu0 %v2091
        %v2949 = vpop.f32.mrb[0].mxu0
        %v2950 = vadd.f32 %v766, %v2949
        %v2951 = vpop.f32.mrb[0].mxu0
        %v2952 = vpop.f32.mrb[0].mxu0
        %v2953 = vadd.f32 %v766, %v2952
        %v2954 = vpop.f32.mrb[0].mxu0
        %2955 = vmatprep.mubr.bf16.mxu0 0
        %2956 = vmatmul.mubr.bf16.gmra.mrb[0].mxu0 %v2094
        %v2957 = vpop.f32.mrb[0].mxu0
        %v2958 = vadd.f32 %v766, %v2957
        %v2959 = vpop.f32.mrb[0].mxu0
        %v2960 = vpop.f32.mrb[0].mxu0
        %v2961 = vadd.f32 %v766, %v2960
        %v2962 = vpop.f32.mrb[0].mxu0
        %2963 = vmatprep.mubr.bf16.mxu0 0
        %2964 = vmatmul.mubr.bf16.gmra.mrb[0].mxu0 %v2097
        %v2965 = vpop.f32.mrb[0].mxu0
        %v2966 = vadd.f32 %v766, %v2965
        %v2967 = vpop.f32.mrb[0].mxu0
        %v2968 = vpop.f32.mrb[0].mxu0
        %v2969 = vadd.f32 %v766, %v2968
        %v2970 = vpop.f32.mrb[0].mxu0
        %2971 = vmatprep.mubr.bf16.mxu0 0
        %2972 = vmatmul.mubr.bf16.gmra.mrb[0].mxu0 %v2100
        %v2973 = vpop.f32.mrb[0].mxu0
        %v2974 = vadd.f32 %v766, %v2973
        %v2975 = vpop.f32.mrb[0].mxu0
        %v2976 = vpop.f32.mrb[0].mxu0
        %v2977 = vadd.f32 %v766, %v2976
        %v2978 = vpop.f32.mrb[0].mxu0
        %2979 = vmatprep.mubr.bf16.mxu0 0
        %2980 = vmatmul.mubr.bf16.gmra.mrb[0].mxu0 %v2103
        %v2981 = vpop.f32.mrb[0].mxu0
        %v2982 = vadd.f32 %v766, %v2981
        %v2983 = vpop.f32.mrb[0].mxu0
        %v2984 = vpop.f32.mrb[0].mxu0
        %v2985 = vadd.f32 %v766, %v2984
        %v2986 = vpop.f32.mrb[0].mxu0
        %2987 = vmatprep.mubr.bf16.mxu0 0
        %2988 = vmatmul.mubr.bf16.gmra.mrb[0].mxu0 %v2106
        %v2989 = vpop.f32.mrb[0].mxu0
        %v2990 = vadd.f32 %v766, %v2989
        %v2991 = vpop.f32.mrb[0].mxu0
        %v2992 = vpop.f32.mrb[0].mxu0
        %v2993 = vadd.f32 %v766, %v2992
        %v2994 = vpop.f32.mrb[0].mxu0
        %2995 = vmatprep.mubr.bf16.mxu0 0
        %2996 = vmatmul.mubr.bf16.gmra.mrb[0].mxu0 %v2109
        %v2997 = vpop.f32.mrb[0].mxu0
        %v2998 = vadd.f32 %v766, %v2997
        %v2999 = vpop.f32.mrb[0].mxu0
        %v3000 = vpop.f32.mrb[0].mxu0
        %v3001 = vadd.f32 %v766, %v3000
        %v3002 = vpop.f32.mrb[0].mxu0
        %3003 = vmatprep.mubr.bf16.mxu0 0
        %3004 = vmatmul.mubr.bf16.gmra.mrb[0].mxu0 %v2112
        %v3005 = vpop.f32.mrb[0].mxu0
        %v3006 = vadd.f32 %v766, %v3005
        %v3007 = vpop.f32.mrb[0].mxu0
        %v3008 = vpop.f32.mrb[0].mxu0
        %v3009 = vadd.f32 %v766, %v3008
        %v3010 = vpop.f32.mrb[0].mxu0
        %3011 = vmatprep.mubr.bf16.mxu0 0
        %3012 = vmatmul.mubr.bf16.gmra.mrb[0].mxu0 %v2115
        %v3013 = vpop.f32.mrb[0].mxu0
        %v3014 = vadd.f32 %v766, %v3013
        %v3015 = vpop.f32.mrb[0].mxu0
        %v3016 = vpop.f32.mrb[0].mxu0
        %v3017 = vadd.f32 %v766, %v3016
        %v3018 = vpop.f32.mrb[0].mxu0
        %3019 = vmatprep.mubr.bf16.mxu0 0
        %3020 = vmatmul.mubr.bf16.gmra.mrb[0].mxu0 %v2118
        %v3021 = vpop.f32.mrb[0].mxu0
        %v3022 = vadd.f32 %v766, %v3021
        %v3023 = vpop.f32.mrb[0].mxu0
        %v3024 = vpop.f32.mrb[0].mxu0
        %v3025 = vadd.f32 %v766, %v3024
        %v3026 = vpop.f32.mrb[0].mxu0
        %3027 = vmatprep.mubr.bf16.mxu0 0
        %3028 = vmatmul.mubr.bf16.gmra.mrb[0].mxu0 %v2121
        %v3029 = vpop.f32.mrb[0].mxu0
        %v3030 = vadd.f32 %v766, %v3029
        %v3031 = vpop.f32.mrb[0].mxu0
        %v3032 = vpop.f32.mrb[0].mxu0
        %v3033 = vadd.f32 %v766, %v3032
        %v3034 = vpop.f32.mrb[0].mxu0
        %3035 = vmatprep.mubr.bf16.mxu0 0
        %3036 = vmatmul.mubr.bf16.gmra.mrb[0].mxu0 %v2124
        %v3037 = vpop.f32.mrb[0].mxu0
        %v3038 = vadd.f32 %v766, %v3037
        %v3039 = vpop.f32.mrb[0].mxu0
        %v3040 = vpop.f32.mrb[0].mxu0
        %v3041 = vadd.f32 %v766, %v3040
        %v3042 = vpop.f32.mrb[0].mxu0
        %3043 = vmatprep.mubr.bf16.mxu0 0
        %3044 = vmatmul.mubr.bf16.gmra.mrb[0].mxu0 %v2127
        %v3045 = vpop.f32.mrb[0].mxu0
        %v3046 = vadd.f32 %v766, %v3045
        %v3047 = vpop.f32.mrb[0].mxu0
        %v3048 = vpop.f32.mrb[0].mxu0
        %v3049 = vadd.f32 %v766, %v3048
        %v3050 = vpop.f32.mrb[0].mxu0
        %3051 = vmatprep.mubr.bf16.mxu0 0
        %3052 = vmatmul.mubr.bf16.gmra.mrb[0].mxu0 %v2130
        %v3053 = vpop.f32.mrb[0].mxu0
        %v3054 = vadd.f32 %v766, %v3053
        %v3055 = vpop.f32.mrb[0].mxu0
        %v3056 = vpop.f32.mrb[0].mxu0
        %v3057 = vadd.f32 %v766, %v3056
        %v3058 = vpop.f32.mrb[0].mxu0
        %3059 = vmatprep.mubr.bf16.mxu0 0
        %3060 = vmatmul.mubr.bf16.gmra.mrb[0].mxu0 %v2133
        %v3061 = vpop.f32.mrb[0].mxu0
        %v3062 = vadd.f32 %v766, %v3061
        %v3063 = vpop.f32.mrb[0].mxu0
        %v3064 = vpop.f32.mrb[0].mxu0
        %v3065 = vadd.f32 %v766, %v3064
        %v3066 = vpop.f32.mrb[0].mxu0
        %3067 = vmatprep.mubr.bf16.mxu0 0
        %3068 = vmatmul.mubr.bf16.gmra.mrb[0].mxu0 %v2136
        %v3069 = vpop.f32.mrb[0].mxu0
        %v3070 = vadd.f32 %v766, %v3069
        %v3071 = vpop.f32.mrb[0].mxu0
        %v3072 = vpop.f32.mrb[0].mxu0
        %v3073 = vadd.f32 %v766, %v3072
        %v3074 = vpop.f32.mrb[0].mxu0
        %3075 = vmatprep.mubr.bf16.mxu0 0
        %3076 = vmatmul.mubr.bf16.gmra.mrb[0].mxu0 %v2139
        %v3077 = vpop.f32.mrb[0].mxu0
        %v3078 = vadd.f32 %v766, %v3077
        %v3079 = vpop.f32.mrb[0].mxu0
        %v3080 = vpop.f32.mrb[0].mxu0
        %v3081 = vadd.f32 %v766, %v3080
        %v3082 = vpop.f32.mrb[0].mxu0
        %3083 = vmatprep.mubr.bf16.mxu0 0
        %3084 = vmatmul.mubr.bf16.gmra.mrb[0].mxu0 %v2142
        %v3085 = vpop.f32.mrb[0].mxu0
        %v3086 = vadd.f32 %v766, %v3085
        %v3087 = vpop.f32.mrb[0].mxu0
        %v3088 = vpop.f32.mrb[0].mxu0
        %v3089 = vadd.f32 %v766, %v3088
        %v3090 = vpop.f32.mrb[0].mxu0
        %3091 = vmatprep.mubr.bf16.mxu0 0
        %3092 = vmatmul.mubr.bf16.gmra.mrb[0].mxu0 %v2145
        %v3093 = vpop.f32.mrb[0].mxu0
        %v3094 = vadd.f32 %v766, %v3093
        %v3095 = vpop.f32.mrb[0].mxu0
        %v3096 = vpop.f32.mrb[0].mxu0
        %v3097 = vadd.f32 %v766, %v3096
        %v3098 = vpop.f32.mrb[0].mxu0
        %3099 = vmatprep.mubr.bf16.mxu0 0
        %3100 = vmatmul.mubr.bf16.gmra.mrb[0].mxu0 %v2148
        %v3101 = vpop.f32.mrb[0].mxu0
        %v3102 = vadd.f32 %v766, %v3101
        %v3103 = vpop.f32.mrb[0].mxu0
        %v3104 = vpop.f32.mrb[0].mxu0
        %v3105 = vadd.f32 %v766, %v3104
        %v3106 = vpop.f32.mrb[0].mxu0
        %3107 = vmatprep.mubr.bf16.mxu0 0
        %3108 = vmatmul.mubr.bf16.gmra.mrb[0].mxu0 %v2151
        %v3109 = vpop.f32.mrb[0].mxu0
        %v3110 = vadd.f32 %v766, %v3109
        %v3111 = vpop.f32.mrb[0].mxu0
        %v3112 = vpop.f32.mrb[0].mxu0
        %v3113 = vadd.f32 %v766, %v3112
        %v3114 = vpop.f32.mrb[0].mxu0
        %3115 = vmatprep.mubr.bf16.mxu0 0
        %3116 = vmatmul.mubr.bf16.gmra.mrb[0].mxu0 %v2154
        %v3117 = vpop.f32.mrb[0].mxu0
        %v3118 = vadd.f32 %v766, %v3117
        %v3119 = vpop.f32.mrb[0].mxu0
        %v3120 = vpop.f32.mrb[0].mxu0
        %v3121 = vadd.f32 %v766, %v3120
        %v3122 = vpop.f32.mrb[0].mxu0
        %3123 = vmatprep.mubr.bf16.mxu0 0
        %3124 = vmatmul.mubr.bf16.gmra.mrb[0].mxu0 %v2157
        %v3125 = vpop.f32.mrb[0].mxu0
        %v3126 = vadd.f32 %v766, %v3125
        %v3127 = vpop.f32.mrb[0].mxu0
        %v3128 = vpop.f32.mrb[0].mxu0
        %v3129 = vadd.f32 %v766, %v3128
        %v3130 = vpop.f32.mrb[0].mxu0
        %3131 = vmatprep.mubr.bf16.mxu0 0
        %3132 = vmatmul.mubr.bf16.gmra.mrb[0].mxu0 %v2160
        %v3133 = vpop.f32.mrb[0].mxu0
        %v3134 = vadd.f32 %v766, %v3133
        %v3135 = vpop.f32.mrb[0].mxu0
        %v3136 = vpop.f32.mrb[0].mxu0
        %v3137 = vadd.f32 %v766, %v3136
        %v3138 = vpop.f32.mrb[0].mxu0
        %3139 = vmatprep.mubr.bf16.mxu0 0
        %3140 = vmatmul.mubr.bf16.gmra.mrb[0].mxu0 %v2163
        %v3141 = vpop.f32.mrb[0].mxu0
        %v3142 = vadd.f32 %v766, %v3141
        %v3143 = vpop.f32.mrb[0].mxu0
        %v3144 = vpop.f32.mrb[0].mxu0
        %v3145 = vadd.f32 %v766, %v3144
        %v3146 = vpop.f32.mrb[0].mxu0
        %3147 = vmatprep.mubr.bf16.mxu0 0
        %3148 = vmatmul.mubr.bf16.gmra.mrb[0].mxu0 %v2166
        %v3149 = vpop.f32.mrb[0].mxu0
        %v3150 = vadd.f32 %v766, %v3149
        %v3151 = vpop.f32.mrb[0].mxu0
        %v3152 = vpop.f32.mrb[0].mxu0
        %v3153 = vadd.f32 %v766, %v3152
        %v3154 = vpop.f32.mrb[0].mxu0
        %3155 = vmatprep.mubr.bf16.mxu0 0
        %3156 = vmatmul.mubr.bf16.gmra.mrb[0].mxu0 %v2169
        %v3157 = vpop.f32.mrb[0].mxu0
        %v3158 = vadd.f32 %v766, %v3157
        %v3159 = vpop.f32.mrb[0].mxu0
        %v3160 = vpop.f32.mrb[0].mxu0
        %v3161 = vadd.f32 %v766, %v3160
        %v3162 = vpop.f32.mrb[0].mxu0
        %3163 = vmatprep.mubr.bf16.mxu0 0
        %3164 = vmatmul.mubr.bf16.gmra.mrb[0].mxu0 %v2172
        %v3165 = vpop.f32.mrb[0].mxu0
        %v3166 = vadd.f32 %v766, %v3165
        %v3167 = vpop.f32.mrb[0].mxu0
        %v3168 = vpop.f32.mrb[0].mxu0
        %v3169 = vadd.f32 %v766, %v3168
        %v3170 = vpop.f32.mrb[0].mxu0
        %3171 = vmatprep.mubr.bf16.mxu0 0
        %3172 = vmatmul.mubr.bf16.gmra.mrb[0].mxu0 %v2175
        %v3173 = vpop.f32.mrb[0].mxu0
        %v3174 = vadd.f32 %v766, %v3173
        %v3175 = vpop.f32.mrb[0].mxu0
        %v3176 = vpop.f32.mrb[0].mxu0
        %v3177 = vadd.f32 %v766, %v3176
        %v3178 = vpop.f32.mrb[0].mxu0
        %3179 = vmatprep.mubr.bf16.mxu0 0
        %3180 = vmatmul.mubr.bf16.gmra.mrb[0].mxu0 %v2178
        %v3181 = vpop.f32.mrb[0].mxu0
        %v3182 = vadd.f32 %v766, %v3181
        %v3183 = vpop.f32.mrb[0].mxu0
        %v3184 = vpop.f32.mrb[0].mxu0
        %v3185 = vadd.f32 %v766, %v3184
        %v3186 = vpop.f32.mrb[0].mxu0
        %3187 = vmatprep.mubr.bf16.mxu0 0
        %3188 = vmatmul.mubr.bf16.gmra.mrb[0].mxu0 %v2181
        %v3189 = vpop.f32.mrb[0].mxu0
        %v3190 = vadd.f32 %v766, %v3189
        %v3191 = vpop.f32.mrb[0].mxu0
        %v3192 = vpop.f32.mrb[0].mxu0
        %v3193 = vadd.f32 %v766, %v3192
        %v3194 = vpop.f32.mrb[0].mxu0
        %3195 = vmatprep.mubr.bf16.mxu0 0
        %3196 = vmatmul.mubr.bf16.gmra.mrb[0].mxu0 %v2184
        %v3197 = vpop.f32.mrb[0].mxu0
        %v3198 = vadd.f32 %v766, %v3197
        %v3199 = vpop.f32.mrb[0].mxu0
        %v3200 = vpop.f32.mrb[0].mxu0
        %v3201 = vadd.f32 %v766, %v3200
        %v3202 = vpop.f32.mrb[0].mxu0
        %3203 = vmatprep.mubr.bf16.mxu0 0
        %3204 = vmatmul.mubr.bf16.gmra.mrb[0].mxu0 %v2187
        %v3205 = vpop.f32.mrb[0].mxu0
        %v3206 = vadd.f32 %v766, %v3205
        %v3207 = vpop.f32.mrb[0].mxu0
        %v3208 = vpop.f32.mrb[0].mxu0
        %v3209 = vadd.f32 %v766, %v3208
        %v3210 = vpop.f32.mrb[0].mxu0
        %3211 = vmatprep.mubr.bf16.mxu0 0
        %3212 = vmatmul.mubr.bf16.gmra.mrb[0].mxu0 %v2190
        %v3213 = vpop.f32.mrb[0].mxu0
        %v3214 = vadd.f32 %v766, %v3213
        %v3215 = vpop.f32.mrb[0].mxu0
        %v3216 = vpop.f32.mrb[0].mxu0
        %v3217 = vadd.f32 %v766, %v3216
        %v3218 = vpop.f32.mrb[0].mxu0
        %3219 = vmatprep.mubr.bf16.mxu0 0
        %3220 = vmatmul.mubr.bf16.gmra.mrb[0].mxu0 %v2193
        %v3221 = vpop.f32.mrb[0].mxu0
        %v3222 = vadd.f32 %v766, %v3221
        %v3223 = vpop.f32.mrb[0].mxu0
        %v3224 = vpop.f32.mrb[0].mxu0
        %v3225 = vadd.f32 %v766, %v3224
        %v3226 = vpop.f32.mrb[0].mxu0
        %3227 = vmatprep.mubr.bf16.mxu0 0
        %3228 = vmatmul.mubr.bf16.gmra.mrb[0].mxu0 %v2196
        %v3229 = vpop.f32.mrb[0].mxu0
        %v3230 = vadd.f32 %v766, %v3229
        %v3231 = vpop.f32.mrb[0].mxu0
        %v3232 = vpop.f32.mrb[0].mxu0
        %v3233 = vadd.f32 %v766, %v3232
        %v3234 = vpop.f32.mrb[0].mxu0
        %3235 = vmatprep.mubr.bf16.mxu0 0
        %3236 = vmatmul.mubr.bf16.gmra.mrb[0].mxu0 %v2199
        %v3237 = vpop.f32.mrb[0].mxu0
        %v3238 = vadd.f32 %v766, %v3237
        %v3239 = vpop.f32.mrb[0].mxu0
        %v3240 = vpop.f32.mrb[0].mxu0
        %v3241 = vadd.f32 %v766, %v3240
        %v3242 = vpop.f32.mrb[0].mxu0
        %3243 = vmatprep.mubr.bf16.mxu0 0
        %3244 = vmatmul.mubr.bf16.gmra.mrb[0].mxu0 %v2202
        %v3245 = vpop.f32.mrb[0].mxu0
        %v3246 = vadd.f32 %v766, %v3245
        %v3247 = vpop.f32.mrb[0].mxu0
        %v3248 = vpop.f32.mrb[0].mxu0
        %v3249 = vadd.f32 %v766, %v3248
        %v3250 = vpop.f32.mrb[0].mxu0
        %3251 = vmatprep.mubr.bf16.mxu0 0
        %3252 = vmatmul.mubr.bf16.gmra.mrb[0].mxu0 %v2205
        %v3253 = vpop.f32.mrb[0].mxu0
        %v3254 = vadd.f32 %v766, %v3253
        %v3255 = vpop.f32.mrb[0].mxu0
        %v3256 = vpop.f32.mrb[0].mxu0
        %v3257 = vadd.f32 %v766, %v3256
        %v3258 = vpop.f32.mrb[0].mxu0
        %3259 = vmatprep.mubr.bf16.mxu0 0
        %3260 = vmatmul.mubr.bf16.gmra.mrb[0].mxu0 %v2208
        %v3261 = vpop.f32.mrb[0].mxu0
        %v3262 = vadd.f32 %v766, %v3261
        %v3263 = vpop.f32.mrb[0].mxu0
        %v3264 = vpop.f32.mrb[0].mxu0
        %v3265 = vadd.f32 %v766, %v3264
        %v3266 = vpop.f32.mrb[0].mxu0
        %3267 = vmatprep.mubr.bf16.mxu0 0
        %3268 = vmatmul.mubr.bf16.gmra.mrb[0].mxu0 %v2211
        %v3269 = vpop.f32.mrb[0].mxu0
        %v3270 = vadd.f32 %v766, %v3269
        %v3271 = vpop.f32.mrb[0].mxu0
        %v3272 = vpop.f32.mrb[0].mxu0
        %v3273 = vadd.f32 %v766, %v3272
        %v3274 = vpop.f32.mrb[0].mxu0
        %3275 = vmatprep.mubr.bf16.mxu0 0
        %3276 = vmatmul.mubr.bf16.gmra.mrb[0].mxu0 %v2214
        %v3277 = vpop.f32.mrb[0].mxu0
        %v3278 = vadd.f32 %v766, %v3277
        %v3279 = vpop.f32.mrb[0].mxu0
        %v3280 = vpop.f32.mrb[0].mxu0
        %v3281 = vadd.f32 %v766, %v3280
        %v3282 = vpop.f32.mrb[0].mxu0
        %3283 = vmatprep.mubr.bf16.mxu0 0
        %3284 = vmatmul.mubr.bf16.gmra.mrb[0].mxu0 %v2217
        %v3285 = vpop.f32.mrb[0].mxu0
        %v3286 = vadd.f32 %v766, %v3285
        %v3287 = vpop.f32.mrb[0].mxu0
        %v3288 = vpop.f32.mrb[0].mxu0
        %v3289 = vadd.f32 %v766, %v3288
        %v3290 = vpop.f32.mrb[0].mxu0
        %3291 = vmatprep.mubr.bf16.mxu0 0
        %3292 = vmatmul.mubr.bf16.gmra.mrb[0].mxu0 %v2220
        %v3293 = vpop.f32.mrb[0].mxu0
        %v3294 = vadd.f32 %v766, %v3293
        %v3295 = vpop.f32.mrb[0].mxu0
        %v3296 = vpop.f32.mrb[0].mxu0
        %v3297 = vadd.f32 %v766, %v3296
        %v3298 = vpop.f32.mrb[0].mxu0
        %3299 = vmatprep.mubr.bf16.mxu0 0
        %3300 = vmatmul.mubr.bf16.gmra.mrb[0].mxu0 %v2223
        %v3301 = vpop.f32.mrb[0].mxu0
        %v3302 = vadd.f32 %v766, %v3301
        %v3303 = vpop.f32.mrb[0].mxu0
        %v3304 = vpop.f32.mrb[0].mxu0
        %v3305 = vadd.f32 %v766, %v3304
        %v3306 = vpop.f32.mrb[0].mxu0
        %3307 = vmatprep.mubr.bf16.mxu0 0
        %3308 = vmatmul.mubr.bf16.gmra.mrb[0].mxu0 %v2226
        %v3309 = vpop.f32.mrb[0].mxu0
        %v3310 = vadd.f32 %v766, %v3309
        %v3311 = vpop.f32.mrb[0].mxu0
        %v3312 = vpop.f32.mrb[0].mxu0
        %v3313 = vadd.f32 %v766, %v3312
        %v3314 = vpop.f32.mrb[0].mxu0
        %3315 = vmatprep.mubr.bf16.mxu0 0
        %3316 = vmatmul.mubr.bf16.gmra.mrb[0].mxu0 %v2229
        %v3317 = vpop.f32.mrb[0].mxu0
        %v3318 = vadd.f32 %v766, %v3317
        %v3319 = vpop.f32.mrb[0].mxu0
        %v3320 = vpop.f32.mrb[0].mxu0
        %v3321 = vadd.f32 %v766, %v3320
        %v3322 = vpop.f32.mrb[0].mxu0
        %3323 = vmatprep.mubr.bf16.mxu0 0
        %3324 = vmatmul.mubr.bf16.gmra.mrb[0].mxu0 %v2232
        %v3325 = vpop.f32.mrb[0].mxu0
        %v3326 = vadd.f32 %v766, %v3325
        %v3327 = vpop.f32.mrb[0].mxu0
        %v3328 = vpop.f32.mrb[0].mxu0
        %v3329 = vadd.f32 %v766, %v3328
        %v3330 = vpop.f32.mrb[0].mxu0
        %3331 = vmatprep.mubr.bf16.mxu0 0
        %3332 = vmatmul.mubr.bf16.gmra.mrb[0].mxu0 %v2235
        %v3333 = vpop.f32.mrb[0].mxu0
        %v3334 = vadd.f32 %v766, %v3333
        %v3335 = vpop.f32.mrb[0].mxu0
        %v3336 = vpop.f32.mrb[0].mxu0
        %v3337 = vadd.f32 %v766, %v3336
        %v3338 = vpop.f32.mrb[0].mxu0
        %3339 = vmatprep.mubr.bf16.mxu0 0
        %3340 = vmatmul.mubr.bf16.gmra.mrb[0].mxu0 %v2238
        %v3341 = vpop.f32.mrb[0].mxu0
        %v3342 = vadd.f32 %v766, %v3341
        %v3343 = vpop.f32.mrb[0].mxu0
        %v3344 = vpop.f32.mrb[0].mxu0
        %v3345 = vadd.f32 %v766, %v3344
        %v3346 = vpop.f32.mrb[0].mxu0
        %3347 = vmatprep.mubr.bf16.mxu0 0
        %3348 = vmatmul.mubr.bf16.gmra.mrb[0].mxu0 %v2241
        %v3349 = vpop.f32.mrb[0].mxu0
        %v3350 = vadd.f32 %v766, %v3349
        %v3351 = vpop.f32.mrb[0].mxu0
        %v3352 = vpop.f32.mrb[0].mxu0
        %v3353 = vadd.f32 %v766, %v3352
        %v3354 = vpop.f32.mrb[0].mxu0
        %3355 = vmatprep.mubr.bf16.mxu0 0
        %3356 = vmatmul.mubr.bf16.gmra.mrb[0].mxu0 %v2244
        %v3357 = vpop.f32.mrb[0].mxu0
        %v3358 = vadd.f32 %v766, %v3357
        %v3359 = vpop.f32.mrb[0].mxu0
        %v3360 = vpop.f32.mrb[0].mxu0
        %v3361 = vadd.f32 %v766, %v3360
        %v3362 = vpop.f32.mrb[0].mxu0
        %3363 = vmatprep.mubr.bf16.mxu0 0
        %3364 = vmatmul.mubr.bf16.gmra.mrb[0].mxu0 %v2247
        %v3365 = vpop.f32.mrb[0].mxu0
        %v3366 = vadd.f32 %v766, %v3365
        %v3367 = vpop.f32.mrb[0].mxu0
        %v3368 = vpop.f32.mrb[0].mxu0
        %v3369 = vadd.f32 %v766, %v3368
        %v3370 = vpop.f32.mrb[0].mxu0
        %3371 = vmatprep.mubr.bf16.mxu0 0
        %3372 = vmatmul.mubr.bf16.gmra.mrb[0].mxu0 %v2250
        %v3373 = vpop.f32.mrb[0].mxu0
        %v3374 = vadd.f32 %v766, %v3373
        %v3375 = vpop.f32.mrb[0].mxu0
        %v3376 = vpop.f32.mrb[0].mxu0
        %v3377 = vadd.f32 %v766, %v3376
        %v3378 = vpop.f32.mrb[0].mxu0
        %3379 = vmatprep.mubr.bf16.mxu0 0
        %3380 = vmatmul.mubr.bf16.gmra.mrb[0].mxu0 %v2253
        %v3381 = vpop.f32.mrb[0].mxu0
        %v3382 = vadd.f32 %v766, %v3381
        %v3383 = vpop.f32.mrb[0].mxu0
        %v3384 = vpop.f32.mrb[0].mxu0
        %v3385 = vadd.f32 %v766, %v3384
        %v3386 = vpop.f32.mrb[0].mxu0
        %3387 = vmatprep.mubr.bf16.mxu0 0
        %3388 = vmatmul.mubr.bf16.gmra.mrb[0].mxu0 %v2256
        %v3389 = vpop.f32.mrb[0].mxu0
        %v3390 = vadd.f32 %v766, %v3389
        %v3391 = vpop.f32.mrb[0].mxu0
        %v3392 = vpop.f32.mrb[0].mxu0
        %v3393 = vadd.f32 %v766, %v3392
        %v3394 = vpop.f32.mrb[0].mxu0
        %3395 = vmatprep.mubr.bf16.mxu0 0
        %3396 = vmatmul.mubr.bf16.gmra.mrb[0].mxu0 %v2259
        %v3397 = vpop.f32.mrb[0].mxu0
        %v3398 = vadd.f32 %v766, %v3397
        %v3399 = vpop.f32.mrb[0].mxu0
        %v3400 = vpop.f32.mrb[0].mxu0
        %v3401 = vadd.f32 %v766, %v3400
        %v3402 = vpop.f32.mrb[0].mxu0
        %3403 = vmatprep.mubr.bf16.mxu0 0
        %3404 = vmatmul.mubr.bf16.gmra.mrb[0].mxu0 %v2262
        %v3405 = vpop.f32.mrb[0].mxu0
        %v3406 = vadd.f32 %v766, %v3405
        %v3407 = vpop.f32.mrb[0].mxu0
        %v3408 = vpop.f32.mrb[0].mxu0
        %v3409 = vadd.f32 %v766, %v3408
        %v3410 = vpop.f32.mrb[0].mxu0
        %3411 = vmatprep.mubr.bf16.mxu0 0
        %3412 = vmatmul.mubr.bf16.gmra.mrb[0].mxu0 %v2265
        %v3413 = vpop.f32.mrb[0].mxu0
        %v3414 = vadd.f32 %v766, %v3413
        %v3415 = vpop.f32.mrb[0].mxu0
        %v3416 = vpop.f32.mrb[0].mxu0
        %v3417 = vadd.f32 %v766, %v3416
        %v3418 = vpop.f32.mrb[0].mxu0
        %3419 = vmatprep.mubr.bf16.mxu0 0
        %3420 = vmatmul.mubr.bf16.gmra.mrb[0].mxu0 %v2268
        %v3421 = vpop.f32.mrb[0].mxu0
        %v3422 = vadd.f32 %v766, %v3421
        %v3423 = vpop.f32.mrb[0].mxu0
        %v3424 = vpop.f32.mrb[0].mxu0
        %v3425 = vadd.f32 %v766, %v3424
        %v3426 = vpop.f32.mrb[0].mxu0
        %3427 = vmatprep.mubr.bf16.mxu0 0
        %3428 = vmatmul.mubr.bf16.gmra.mrb[0].mxu0 %v2271
        %v3429 = vpop.f32.mrb[0].mxu0
        %v3430 = vadd.f32 %v766, %v3429
        %v3431 = vpop.f32.mrb[0].mxu0
        %v3432 = vpop.f32.mrb[0].mxu0
        %v3433 = vadd.f32 %v766, %v3432
        %v3434 = vpop.f32.mrb[0].mxu0
        %3435 = vmatprep.mubr.bf16.mxu0 0
        %3436 = vmatmul.mubr.bf16.gmra.mrb[0].mxu0 %v2274
        %v3437 = vpop.f32.mrb[0].mxu0
        %v3438 = vadd.f32 %v766, %v3437
        %v3439 = vpop.f32.mrb[0].mxu0
        %v3440 = vpop.f32.mrb[0].mxu0
        %v3441 = vadd.f32 %v766, %v3440
        %v3442 = vpop.f32.mrb[0].mxu0
        %3443 = vmatprep.mubr.bf16.mxu0 0
        %3444 = vmatmul.mubr.bf16.gmra.mrb[0].mxu0 %v2277
        %v3445 = vpop.f32.mrb[0].mxu0
        %v3446 = vadd.f32 %v766, %v3445
        %v3447 = vpop.f32.mrb[0].mxu0
        %v3448 = vpop.f32.mrb[0].mxu0
        %v3449 = vadd.f32 %v766, %v3448
        %v3450 = vpop.f32.mrb[0].mxu0
        %3451 = vmatprep.mubr.bf16.mxu0 0
        %3452 = vmatmul.mubr.bf16.gmra.mrb[0].mxu0 %v2280
        %v3453 = vpop.f32.mrb[0].mxu0
        %v3454 = vadd.f32 %v766, %v3453
        %v3455 = vpop.f32.mrb[0].mxu0
        %v3456 = vpop.f32.mrb[0].mxu0
        %v3457 = vadd.f32 %v766, %v3456
        %v3458 = vpop.f32.mrb[0].mxu0
        %3459 = vmatprep.mubr.bf16.mxu0 0
        %3460 = vmatmul.mubr.bf16.gmra.mrb[0].mxu0 %v2283
        %v3461 = vpop.f32.mrb[0].mxu0
        %v3462 = vadd.f32 %v766, %v3461
        %v3463 = vpop.f32.mrb[0].mxu0
        %v3464 = vpop.f32.mrb[0].mxu0
        %v3465 = vadd.f32 %v766, %v3464
        %v3466 = vpop.f32.mrb[0].mxu0
        %3467 = vmatprep.mubr.bf16.mxu0 0
        %3468 = vmatmul.mubr.bf16.gmra.mrb[0].mxu0 %v2286
        %v3469 = vpop.f32.mrb[0].mxu0
        %v3470 = vadd.f32 %v766, %v3469
        %v3471 = vpop.f32.mrb[0].mxu0
        %v3472 = vpop.f32.mrb[0].mxu0
        %v3473 = vadd.f32 %v766, %v3472
        %v3474 = vpop.f32.mrb[0].mxu0
        %3475 = vmatprep.mubr.bf16.mxu0 0
        %3476 = vmatmul.mubr.bf16.gmra.mrb[0].mxu0 %v2289
        %v3477 = vpop.f32.mrb[0].mxu0
        %v3478 = vadd.f32 %v766, %v3477
        %v3479 = vpop.f32.mrb[0].mxu0
        %v3480 = vpop.f32.mrb[0].mxu0
        %v3481 = vadd.f32 %v766, %v3480
        %v3482 = vpop.f32.mrb[0].mxu0
        %3483 = vmatprep.mubr.bf16.mxu0 0
        %3484 = vmatmul.mubr.bf16.gmra.mrb[0].mxu0 %v2292
        %v3485 = vpop.f32.mrb[0].mxu0
        %v3486 = vadd.f32 %v766, %v3485
        %v3487 = vpop.f32.mrb[0].mxu0
        %v3488 = vpop.f32.mrb[0].mxu0
        %v3489 = vadd.f32 %v766, %v3488
        %v3490 = vpop.f32.mrb[0].mxu0
        %3491 = vmatprep.mubr.bf16.mxu0 0
        %3492 = vmatmul.mubr.bf16.gmra.mrb[0].mxu0 %v2295
        %v3493 = vpop.f32.mrb[0].mxu0
        %v3494 = vadd.f32 %v766, %v3493
        %v3495 = vpop.f32.mrb[0].mxu0
        %v3496 = vpop.f32.mrb[0].mxu0
        %v3497 = vadd.f32 %v766, %v3496
        %v3498 = vpop.f32.mrb[0].mxu0
        %3499 = vmatprep.mubr.bf16.mxu0 0
        %3500 = vmatmul.mubr.bf16.gmra.mrb[0].mxu0 %v2298
        %v3501 = vpop.f32.mrb[0].mxu0
        %v3502 = vadd.f32 %v766, %v3501
        %v3503 = vpop.f32.mrb[0].mxu0
        %v3504 = vpop.f32.mrb[0].mxu0
        %v3505 = vadd.f32 %v766, %v3504
        %v3506 = vpop.f32.mrb[0].mxu0
        %3507 = vmatprep.mubr.bf16.mxu0 0
        %3508 = vmatmul.mubr.bf16.gmra.mrb[0].mxu0 %v2301
        %v3509 = vpop.f32.mrb[0].mxu0
        %v3510 = vadd.f32 %v766, %v3509
        %v3511 = vpop.f32.mrb[0].mxu0
        %v3512 = vpop.f32.mrb[0].mxu0
        %v3513 = vadd.f32 %v766, %v3512
        %v3514 = vpop.f32.mrb[0].mxu0
        %3515 = vmatprep.mubr.bf16.mxu0 0
        %3516 = vmatmul.mubr.bf16.gmra.mrb[0].mxu0 %v2304
        %v3517 = vpop.f32.mrb[0].mxu0
        %v3518 = vadd.f32 %v766, %v3517
        %v3519 = vpop.f32.mrb[0].mxu0
        %v3520 = vpop.f32.mrb[0].mxu0
        %v3521 = vadd.f32 %v766, %v3520
        %v3522 = vpop.f32.mrb[0].mxu0
        %3523 = vmatprep.mubr.bf16.mxu0 0
        %3524 = vmatmul.mubr.bf16.gmra.mrb[0].mxu0 %v2307
        %v3525 = vpop.f32.mrb[0].mxu0
        %v3526 = vadd.f32 %v766, %v3525
        %v3527 = vpop.f32.mrb[0].mxu0
        %v3528 = vpop.f32.mrb[0].mxu0
        %v3529 = vadd.f32 %v766, %v3528
        %v3530 = vpop.f32.mrb[0].mxu0
        %3531 = vmatprep.mubr.bf16.mxu0 0
        %3532 = vmatmul.mubr.bf16.gmra.mrb[0].mxu0 %v2310
        %v3533 = vpop.f32.mrb[0].mxu0
        %v3534 = vadd.f32 %v766, %v3533
        %v3535 = vpop.f32.mrb[0].mxu0
        %v3536 = vpop.f32.mrb[0].mxu0
        %v3537 = vadd.f32 %v766, %v3536
        %v3538 = vpop.f32.mrb[0].mxu0
        %3539 = vmatprep.mubr.bf16.mxu0 0
        %3540 = vmatmul.mubr.bf16.gmra.mrb[0].mxu0 %v2313
        %v3541 = vpop.f32.mrb[0].mxu0
        %v3542 = vadd.f32 %v766, %v3541
        %v3543 = vpop.f32.mrb[0].mxu0
        %v3544 = vpop.f32.mrb[0].mxu0
        %v3545 = vadd.f32 %v766, %v3544
        %v3546 = vpop.f32.mrb[0].mxu0
        %3547 = vmatprep.mubr.bf16.mxu0 0
        %3548 = vmatmul.mubr.bf16.gmra.mrb[0].mxu0 %v2316
        %v3549 = vpop.f32.mrb[0].mxu0
        %v3550 = vadd.f32 %v766, %v3549
        %v3551 = vpop.f32.mrb[0].mxu0
        %v3552 = vpop.f32.mrb[0].mxu0
        %v3553 = vadd.f32 %v766, %v3552
        %v3554 = vpop.f32.mrb[0].mxu0
        %3555 = vmatprep.mubr.bf16.mxu0 0
        %3556 = vmatmul.mubr.bf16.gmra.mrb[0].mxu0 %v2319
        %v3557 = vpop.f32.mrb[0].mxu0
        %v3558 = vadd.f32 %v766, %v3557
        %v3559 = vpop.f32.mrb[0].mxu0
        %v3560 = vpop.f32.mrb[0].mxu0
        %v3561 = vadd.f32 %v766, %v3560
        %v3562 = vpop.f32.mrb[0].mxu0
        %3563 = vmatprep.mubr.bf16.mxu0 0
        %3564 = vmatmul.mubr.bf16.gmra.mrb[0].mxu0 %v2322
        %v3565 = vpop.f32.mrb[0].mxu0
        %v3566 = vadd.f32 %v766, %v3565
        %v3567 = vpop.f32.mrb[0].mxu0
        %v3568 = vpop.f32.mrb[0].mxu0
        %v3569 = vadd.f32 %v766, %v3568
        %v3570 = vpop.f32.mrb[0].mxu0
        %3571 = vmatprep.mubr.bf16.mxu0 0
        %3572 = vmatmul.mubr.bf16.gmra.mrb[0].mxu0 %v2325
        %v3573 = vpop.f32.mrb[0].mxu0
        %v3574 = vadd.f32 %v766, %v3573
        %v3575 = vpop.f32.mrb[0].mxu0
        %v3576 = vpop.f32.mrb[0].mxu0
        %v3577 = vadd.f32 %v766, %v3576
        %v3578 = vpop.f32.mrb[0].mxu0
        %3579 = vmatprep.mubr.bf16.mxu0 0
        %3580 = vmatmul.mubr.bf16.gmra.mrb[0].mxu0 %v2328
        %v3581 = vpop.f32.mrb[0].mxu0
        %v3582 = vadd.f32 %v766, %v3581
        %v3583 = vpop.f32.mrb[0].mxu0
        %v3584 = vpop.f32.mrb[0].mxu0
        %v3585 = vadd.f32 %v766, %v3584
        %v3586 = vpop.f32.mrb[0].mxu0
        %3587 = vmatprep.mubr.bf16.mxu0 0
        %3588 = vmatmul.mubr.bf16.gmra.mrb[0].mxu0 %v2331
        %v3589 = vpop.f32.mrb[0].mxu0
        %v3590 = vadd.f32 %v766, %v3589
        %v3591 = vpop.f32.mrb[0].mxu0
        %v3592 = vpop.f32.mrb[0].mxu0
        %v3593 = vadd.f32 %v766, %v3592
        %v3594 = vpop.f32.mrb[0].mxu0
        %3595 = vmatprep.mubr.bf16.mxu0 0
        %3596 = vmatmul.mubr.bf16.gmra.mrb[0].mxu0 %v2334
        %v3597 = vpop.f32.mrb[0].mxu0
        %v3598 = vadd.f32 %v766, %v3597
        %v3599 = vpop.f32.mrb[0].mxu0
        %v3600 = vpop.f32.mrb[0].mxu0
        %v3601 = vadd.f32 %v766, %v3600
        %v3602 = vpop.f32.mrb[0].mxu0
        %3603 = vmatprep.mubr.bf16.mxu0 0
        %3604 = vmatmul.mubr.bf16.gmra.mrb[0].mxu0 %v2337
        %v3605 = vpop.f32.mrb[0].mxu0
        %v3606 = vadd.f32 %v766, %v3605
        %v3607 = vpop.f32.mrb[0].mxu0
        %v3608 = vpop.f32.mrb[0].mxu0
        %v3609 = vadd.f32 %v766, %v3608
        %v3610 = vpop.f32.mrb[0].mxu0
        %3611 = vmatprep.mubr.bf16.mxu0 0
        %3612 = vmatmul.mubr.bf16.gmra.mrb[0].mxu0 %v2340
        %v3613 = vpop.f32.mrb[0].mxu0
        %v3614 = vadd.f32 %v766, %v3613
        %v3615 = vpop.f32.mrb[0].mxu0
        %v3616 = vpop.f32.mrb[0].mxu0
        %v3617 = vadd.f32 %v766, %v3616
        %v3618 = vpop.f32.mrb[0].mxu0
        %3619 = vmatprep.mubr.bf16.mxu0 0
        %3620 = vmatmul.mubr.bf16.gmra.mrb[0].mxu0 %v2343
        %v3621 = vpop.f32.mrb[0].mxu0
        %v3622 = vadd.f32 %v766, %v3621
        %v3623 = vpop.f32.mrb[0].mxu0
        %v3624 = vpop.f32.mrb[0].mxu0
        %v3625 = vadd.f32 %v766, %v3624
        %v3626 = vpop.f32.mrb[0].mxu0
        %3627 = vmatprep.mubr.bf16.mxu0 0
        %3628 = vmatmul.mubr.bf16.gmra.mrb[0].mxu0 %v2346
        %v3629 = vpop.f32.mrb[0].mxu0
        %v3630 = vadd.f32 %v766, %v3629
        %v3631 = vpop.f32.mrb[0].mxu0
        %v3632 = vpop.f32.mrb[0].mxu0
        %v3633 = vadd.f32 %v766, %v3632
        %v3634 = vpop.f32.mrb[0].mxu0
        %3635 = vmatprep.mubr.bf16.mxu0 0
        %3636 = vmatmul.mubr.bf16.gmra.mrb[0].mxu0 %v2349
        %v3637 = vpop.f32.mrb[0].mxu0
        %v3638 = vadd.f32 %v766, %v3637
        %v3639 = vpop.f32.mrb[0].mxu0
        %v3640 = vpop.f32.mrb[0].mxu0
        %v3641 = vadd.f32 %v766, %v3640
        %v3642 = vpop.f32.mrb[0].mxu0
        %3643 = vmatprep.mubr.bf16.mxu0 0
        %3644 = vmatmul.mubr.bf16.gmra.mrb[0].mxu0 %v2352
        %v3645 = vpop.f32.mrb[0].mxu0
        %v3646 = vadd.f32 %v766, %v3645
        %v3647 = vpop.f32.mrb[0].mxu0
        %v3648 = vpop.f32.mrb[0].mxu0
        %v3649 = vadd.f32 %v766, %v3648
        %v3650 = vpop.f32.mrb[0].mxu0
        %3651 = vmatprep.mubr.bf16.mxu0 0
        %3652 = vmatmul.mubr.bf16.gmra.mrb[0].mxu0 %v2355
        %v3653 = vpop.f32.mrb[0].mxu0
        %v3654 = vadd.f32 %v766, %v3653
        %v3655 = vpop.f32.mrb[0].mxu0
        %v3656 = vpop.f32.mrb[0].mxu0
        %v3657 = vadd.f32 %v766, %v3656
        %v3658 = vpop.f32.mrb[0].mxu0
        %3659 = vmatprep.mubr.bf16.mxu0 0
        %3660 = vmatmul.mubr.bf16.gmra.mrb[0].mxu0 %v2358
        %v3661 = vpop.f32.mrb[0].mxu0
        %v3662 = vadd.f32 %v766, %v3661
        %v3663 = vpop.f32.mrb[0].mxu0
        %v3664 = vpop.f32.mrb[0].mxu0
        %v3665 = vadd.f32 %v766, %v3664
        %v3666 = vpop.f32.mrb[0].mxu0
        %3667 = vmatprep.mubr.bf16.mxu0 0
        %3668 = vmatmul.mubr.bf16.gmra.mrb[0].mxu0 %v2361
        %v3669 = vpop.f32.mrb[0].mxu0
        %v3670 = vadd.f32 %v766, %v3669
        %v3671 = vpop.f32.mrb[0].mxu0
        %v3672 = vpop.f32.mrb[0].mxu0
        %v3673 = vadd.f32 %v766, %v3672
        %v3674 = vpop.f32.mrb[0].mxu0
        %3675 = vmatprep.mubr.bf16.mxu0 0
        %3676 = vmatmul.mubr.bf16.gmra.mrb[0].mxu0 %v2364
        %v3677 = vpop.f32.mrb[0].mxu0
        %v3678 = vadd.f32 %v766, %v3677
        %v3679 = vpop.f32.mrb[0].mxu0
        %v3680 = vpop.f32.mrb[0].mxu0
        %v3681 = vadd.f32 %v766, %v3680
        %v3682 = vpop.f32.mrb[0].mxu0
        %3683 = vmatprep.mubr.bf16.mxu0 0
        %3684 = vmatmul.mubr.bf16.gmra.mrb[0].mxu0 %v2367
        %v3685 = vpop.f32.mrb[0].mxu0
        %v3686 = vadd.f32 %v766, %v3685
        %v3687 = vpop.f32.mrb[0].mxu0
        %v3688 = vpop.f32.mrb[0].mxu0
        %v3689 = vadd.f32 %v766, %v3688
        %v3690 = vpop.f32.mrb[0].mxu0
        %3691 = vmatprep.mubr.bf16.mxu0 0
        %3692 = vmatmul.mubr.bf16.gmra.mrb[0].mxu0 %v2370
        %v3693 = vpop.f32.mrb[0].mxu0
        %v3694 = vadd.f32 %v766, %v3693
        %v3695 = vpop.f32.mrb[0].mxu0
        %v3696 = vpop.f32.mrb[0].mxu0
        %v3697 = vadd.f32 %v766, %v3696
        %v3698 = vpop.f32.mrb[0].mxu0
        %3699 = vmatprep.mubr.bf16.mxu0 0
        %3700 = vmatmul.mubr.bf16.gmra.mrb[0].mxu0 %v2373
        %v3701 = vpop.f32.mrb[0].mxu0
        %v3702 = vadd.f32 %v766, %v3701
        %v3703 = vpop.f32.mrb[0].mxu0
        %v3704 = vpop.f32.mrb[0].mxu0
        %v3705 = vadd.f32 %v766, %v3704
        %v3706 = vpop.f32.mrb[0].mxu0
        %3707 = vmatprep.mubr.bf16.mxu0 0
        %3708 = vmatmul.mubr.bf16.gmra.mrb[0].mxu0 %v2376
        %v3709 = vpop.f32.mrb[0].mxu0
        %v3710 = vadd.f32 %v766, %v3709
        %v3711 = vpop.f32.mrb[0].mxu0
        %v3712 = vpop.f32.mrb[0].mxu0
        %v3713 = vadd.f32 %v766, %v3712
        %v3714 = vpop.f32.mrb[0].mxu0
        %3715 = vmatprep.mubr.bf16.mxu0 0
        %3716 = vmatmul.mubr.bf16.gmra.mrb[0].mxu0 %v2379
        %v3717 = vpop.f32.mrb[0].mxu0
        %v3718 = vadd.f32 %v766, %v3717
        %v3719 = vpop.f32.mrb[0].mxu0
        %v3720 = vpop.f32.mrb[0].mxu0
        %v3721 = vadd.f32 %v766, %v3720
        %v3722 = vpop.f32.mrb[0].mxu0
        %3723 = vmatprep.mubr.bf16.mxu0 0
        %3724 = vmatmul.mubr.bf16.gmra.mrb[0].mxu0 %v2382
        %v3725 = vpop.f32.mrb[0].mxu0
        %v3726 = vadd.f32 %v766, %v3725
        %v3727 = vpop.f32.mrb[0].mxu0
        %v3728 = vpop.f32.mrb[0].mxu0
        %v3729 = vadd.f32 %v766, %v3728
        %v3730 = vpop.f32.mrb[0].mxu0
        %3731 = vmatprep.mubr.bf16.mxu0 0
        %3732 = vmatmul.mubr.bf16.gmra.mrb[0].mxu0 %v2385
        %v3733 = vpop.f32.mrb[0].mxu0
        %v3734 = vadd.f32 %v766, %v3733
        %v3735 = vpop.f32.mrb[0].mxu0
        %v3736 = vpop.f32.mrb[0].mxu0
        %v3737 = vadd.f32 %v766, %v3736
        %v3738 = vpop.f32.mrb[0].mxu0
        %3739 = vmatprep.mubr.bf16.mxu0 0
        %3740 = vmatmul.mubr.bf16.gmra.mrb[0].mxu0 %v2388
        %v3741 = vpop.f32.mrb[0].mxu0
        %v3742 = vadd.f32 %v766, %v3741
        %v3743 = vpop.f32.mrb[0].mxu0
        %v3744 = vpop.f32.mrb[0].mxu0
        %v3745 = vadd.f32 %v766, %v3744
        %v3746 = vpop.f32.mrb[0].mxu0
        %3747 = vmatprep.mubr.bf16.mxu0 0
        %3748 = vmatmul.mubr.bf16.gmra.mrb[0].mxu0 %v2391
        %v3749 = vpop.f32.mrb[0].mxu0
        %v3750 = vadd.f32 %v766, %v3749
        %v3751 = vpop.f32.mrb[0].mxu0
        %v3752 = vpop.f32.mrb[0].mxu0
        %v3753 = vadd.f32 %v766, %v3752
        %v3754 = vpop.f32.mrb[0].mxu0
        %3755 = vmatprep.mubr.bf16.mxu0 0
        %3756 = vmatmul.mubr.bf16.gmra.mrb[0].mxu0 %v2394
        %v3757 = vpop.f32.mrb[0].mxu0
        %v3758 = vadd.f32 %v766, %v3757
        %v3759 = vpop.f32.mrb[0].mxu0
        %v3760 = vpop.f32.mrb[0].mxu0
        %v3761 = vadd.f32 %v766, %v3760
        %v3762 = vpop.f32.mrb[0].mxu0
        %3763 = vmatprep.mubr.bf16.mxu0 0
        %3764 = vmatmul.mubr.bf16.gmra.mrb[0].mxu0 %v2397
        %v3765 = vpop.f32.mrb[0].mxu0
        %v3766 = vadd.f32 %v766, %v3765
        %v3767 = vpop.f32.mrb[0].mxu0
        %v3768 = vpop.f32.mrb[0].mxu0
        %v3769 = vadd.f32 %v766, %v3768
        %v3770 = vpop.f32.mrb[0].mxu0
        %3771 = vmatprep.mubr.bf16.mxu0 0
        %3772 = vmatmul.mubr.bf16.gmra.mrb[0].mxu0 %v2400
        %v3773 = vpop.f32.mrb[0].mxu0
        %v3774 = vadd.f32 %v766, %v3773
        %v3775 = vpop.f32.mrb[0].mxu0
        %v3776 = vpop.f32.mrb[0].mxu0
        %v3777 = vadd.f32 %v766, %v3776
        %v3778 = vpop.f32.mrb[0].mxu0
        %3779 = vmatprep.mubr.bf16.mxu0 0
        %3780 = vmatmul.mubr.bf16.gmra.mrb[0].mxu0 %v2403
        %v3781 = vpop.f32.mrb[0].mxu0
        %v3782 = vadd.f32 %v766, %v3781
        %v3783 = vpop.f32.mrb[0].mxu0
        %v3784 = vpop.f32.mrb[0].mxu0
        %v3785 = vadd.f32 %v766, %v3784
        %v3786 = vpop.f32.mrb[0].mxu0
        %3787 = vmatprep.mubr.bf16.mxu0 0
        %3788 = vmatmul.mubr.bf16.gmra.mrb[0].mxu0 %v2406
        %v3789 = vpop.f32.mrb[0].mxu0
        %v3790 = vadd.f32 %v766, %v3789
        %v3791 = vpop.f32.mrb[0].mxu0
        %v3792 = vpop.f32.mrb[0].mxu0
        %v3793 = vadd.f32 %v766, %v3792
        %v3794 = vpop.f32.mrb[0].mxu0
        %3795 = vmatprep.mubr.bf16.mxu0 0
        %3796 = vmatmul.mubr.bf16.gmra.mrb[0].mxu0 %v2409
        %v3797 = vpop.f32.mrb[0].mxu0
        %v3798 = vadd.f32 %v766, %v3797
        %v3799 = vpop.f32.mrb[0].mxu0
        %v3800 = vpop.f32.mrb[0].mxu0
        %v3801 = vadd.f32 %v766, %v3800
        %v3802 = vpop.f32.mrb[0].mxu0
        %3803 = vmatprep.mubr.bf16.mxu0 0
        %3804 = vmatmul.mubr.bf16.gmra.mrb[0].mxu0 %v2412
        %v3805 = vpop.f32.mrb[0].mxu0
        %v3806 = vadd.f32 %v766, %v3805
        %v3807 = vpop.f32.mrb[0].mxu0
        %v3808 = vpop.f32.mrb[0].mxu0
        %v3809 = vadd.f32 %v766, %v3808
        %v3810 = vpop.f32.mrb[0].mxu0
        %3811 = vmatprep.mubr.bf16.mxu0 0
        %3812 = vmatmul.mubr.bf16.gmra.mrb[0].mxu0 %v2415
        %v3813 = vpop.f32.mrb[0].mxu0
        %v3814 = vadd.f32 %v766, %v3813
        %v3815 = vpop.f32.mrb[0].mxu0
        %v3816 = vpop.f32.mrb[0].mxu0
        %v3817 = vadd.f32 %v766, %v3816
        %v3818 = vpop.f32.mrb[0].mxu0
        %3819 = vmatprep.mubr.bf16.mxu0 0
        %3820 = vmatmul.mubr.bf16.gmra.mrb[0].mxu0 %v2418
        %v3821 = vpop.f32.mrb[0].mxu0
        %v3822 = vadd.f32 %v766, %v3821
        %v3823 = vpop.f32.mrb[0].mxu0
        %v3824 = vpop.f32.mrb[0].mxu0
        %v3825 = vadd.f32 %v766, %v3824
        %v3826 = vpop.f32.mrb[0].mxu0
        %3827 = vmatprep.mubr.bf16.mxu0 0
        %3828 = vmatmul.mubr.bf16.gmra.mrb[0].mxu0 %v2421
        %v3829 = vpop.f32.mrb[0].mxu0
        %v3830 = vadd.f32 %v766, %v3829
        %v3831 = vpop.f32.mrb[0].mxu0
        %v3832 = vpop.f32.mrb[0].mxu0
        %v3833 = vadd.f32 %v766, %v3832
        %v3834 = vpop.f32.mrb[0].mxu0
        %3835 = vmatprep.mubr.bf16.mxu0 0
        %3836 = vmatmul.mubr.bf16.gmra.mrb[0].mxu0 %v2424
        %v3837 = vpop.f32.mrb[0].mxu0
        %v3838 = vadd.f32 %v766, %v3837
        %v3839 = vpop.f32.mrb[0].mxu0
        %v3840 = vpop.f32.mrb[0].mxu0
        %v3841 = vadd.f32 %v766, %v3840
        %v3842 = vpop.f32.mrb[0].mxu0
        %3843 = vmatprep.mubr.bf16.mxu0 0
        %3844 = vmatmul.mubr.bf16.gmra.mrb[0].mxu0 %v2427
        %v3845 = vpop.f32.mrb[0].mxu0
        %v3846 = vadd.f32 %v766, %v3845
        %v3847 = vpop.f32.mrb[0].mxu0
        %v3848 = vpop.f32.mrb[0].mxu0
        %v3849 = vadd.f32 %v766, %v3848
        %v3850 = vpop.f32.mrb[0].mxu0
        %3851 = vmatprep.mubr.bf16.mxu0 0
        %3852 = vmatmul.mubr.bf16.gmra.mrb[0].mxu0 %v2430
        %v3853 = vpop.f32.mrb[0].mxu0
        %v3854 = vadd.f32 %v766, %v3853
        %v3855 = vpop.f32.mrb[0].mxu0
        %v3856 = vpop.f32.mrb[0].mxu0
        %v3857 = vadd.f32 %v766, %v3856
        %v3858 = vpop.f32.mrb[0].mxu0
        %3859 = vmatprep.mubr.bf16.mxu0 0
        %3860 = vmatmul.mubr.bf16.gmra.mrb[0].mxu0 %v2433
        %v3861 = vpop.f32.mrb[0].mxu0
        %v3862 = vadd.f32 %v766, %v3861
        %v3863 = vpop.f32.mrb[0].mxu0
        %v3864 = vpop.f32.mrb[0].mxu0
        %v3865 = vadd.f32 %v766, %v3864
        %v3866 = vpop.f32.mrb[0].mxu0
        %3867 = vmatprep.mubr.bf16.mxu0 0
        %3868 = vmatmul.mubr.bf16.gmra.mrb[0].mxu0 %v2436
        %v3869 = vpop.f32.mrb[0].mxu0
        %v3870 = vadd.f32 %v766, %v3869
        %v3871 = vpop.f32.mrb[0].mxu0
        %v3872 = vpop.f32.mrb[0].mxu0
        %v3873 = vadd.f32 %v766, %v3872
        %v3874 = vpop.f32.mrb[0].mxu0
        %3875 = vmatprep.mubr.bf16.mxu0 0
        %3876 = vmatmul.mubr.bf16.gmra.mrb[0].mxu0 %v2439
        %v3877 = vpop.f32.mrb[0].mxu0
        %v3878 = vadd.f32 %v766, %v3877
        %v3879 = vpop.f32.mrb[0].mxu0
        %v3880 = vpop.f32.mrb[0].mxu0
        %v3881 = vadd.f32 %v766, %v3880
        %v3882 = vpop.f32.mrb[0].mxu0
        %3883 = vmatprep.mubr.bf16.mxu0 0
        %3884 = vmatmul.mubr.bf16.gmra.mrb[0].mxu0 %v2442
        %v3885 = vpop.f32.mrb[0].mxu0
        %v3886 = vadd.f32 %v766, %v3885
        %v3887 = vpop.f32.mrb[0].mxu0
        %v3888 = vpop.f32.mrb[0].mxu0
        %v3889 = vadd.f32 %v766, %v3888
        %v3890 = vpop.f32.mrb[0].mxu0
        %3891 = vmatprep.mubr.bf16.mxu0 0
        %3892 = vmatmul.mubr.bf16.gmra.mrb[0].mxu0 %v2445
        %v3893 = vpop.f32.mrb[0].mxu0
        %v3894 = vadd.f32 %v766, %v3893
        %v3895 = vpop.f32.mrb[0].mxu0
        %v3896 = vpop.f32.mrb[0].mxu0
        %v3897 = vadd.f32 %v766, %v3896
        %v3898 = vpop.f32.mrb[0].mxu0
        %3899 = vmatprep.mubr.bf16.mxu0 0
        %3900 = vmatmul.mubr.bf16.gmra.mrb[0].mxu0 %v2448
        %v3901 = vpop.f32.mrb[0].mxu0
        %v3902 = vadd.f32 %v766, %v3901
        %v3903 = vpop.f32.mrb[0].mxu0
        %v3904 = vpop.f32.mrb[0].mxu0
        %v3905 = vadd.f32 %v766, %v3904
        %v3906 = vpop.f32.mrb[0].mxu0
        %3907 = vmatprep.mubr.bf16.mxu0 0
        %3908 = vmatmul.mubr.bf16.gmra.mrb[0].mxu0 %v2451
        %v3909 = vpop.f32.mrb[0].mxu0
        %v3910 = vadd.f32 %v766, %v3909
        %v3911 = vpop.f32.mrb[0].mxu0
        %v3912 = vpop.f32.mrb[0].mxu0
        %v3913 = vadd.f32 %v766, %v3912
        %v3914 = vpop.f32.mrb[0].mxu0
        %3915 = vmatprep.mubr.bf16.mxu0 0
        %3916 = vmatmul.mubr.bf16.gmra.mrb[0].mxu0 %v2454
        %v3917 = vpop.f32.mrb[0].mxu0
        %v3918 = vadd.f32 %v766, %v3917
        %v3919 = vpop.f32.mrb[0].mxu0
        %v3920 = vpop.f32.mrb[0].mxu0
        %v3921 = vadd.f32 %v766, %v3920
        %v3922 = vpop.f32.mrb[0].mxu0
        %3923 = vmatprep.mubr.bf16.mxu0 0
        %3924 = vmatmul.mubr.bf16.gmra.mrb[0].mxu0 %v2457
        %v3925 = vpop.f32.mrb[0].mxu0
        %v3926 = vadd.f32 %v766, %v3925
        %v3927 = vpop.f32.mrb[0].mxu0
        %v3928 = vpop.f32.mrb[0].mxu0
        %v3929 = vadd.f32 %v766, %v3928
        %v3930 = vpop.f32.mrb[0].mxu0
        %3931 = vmatprep.mubr.bf16.mxu0 0
        %3932 = vmatmul.mubr.bf16.gmra.mrb[0].mxu0 %v2460
        %v3933 = vpop.f32.mrb[0].mxu0
        %v3934 = vadd.f32 %v766, %v3933
        %v3935 = vpop.f32.mrb[0].mxu0
        %v3936 = vpop.f32.mrb[0].mxu0
        %v3937 = vadd.f32 %v766, %v3936
        %v3938 = vpop.f32.mrb[0].mxu0
        %3939 = vmatprep.mubr.bf16.mxu0 0
        %3940 = vmatmul.mubr.bf16.gmra.mrb[0].mxu0 %v2463
        %v3941 = vpop.f32.mrb[0].mxu0
        %v3942 = vadd.f32 %v766, %v3941
        %v3943 = vpop.f32.mrb[0].mxu0
        %v3944 = vpop.f32.mrb[0].mxu0
        %v3945 = vadd.f32 %v766, %v3944
        %v3946 = vpop.f32.mrb[0].mxu0
        %3947 = vmatprep.mubr.bf16.mxu0 0
        %3948 = vmatmul.mubr.bf16.gmra.mrb[0].mxu0 %v2466
        %v3949 = vpop.f32.mrb[0].mxu0
        %v3950 = vadd.f32 %v766, %v3949
        %v3951 = vpop.f32.mrb[0].mxu0
        %v3952 = vpop.f32.mrb[0].mxu0
        %v3953 = vadd.f32 %v766, %v3952
        %v3954 = vpop.f32.mrb[0].mxu0
        %3955 = vmatprep.mubr.bf16.mxu0 0
        %3956 = vmatmul.mubr.bf16.gmra.mrb[0].mxu0 %v2469
        %v3957 = vpop.f32.mrb[0].mxu0
        %v3958 = vadd.f32 %v766, %v3957
        %v3959 = vpop.f32.mrb[0].mxu0
        %v3960 = vpop.f32.mrb[0].mxu0
        %v3961 = vadd.f32 %v766, %v3960
        %v3962 = vpop.f32.mrb[0].mxu0
        %3963 = vmatprep.mubr.bf16.mxu0 0
        %3964 = vmatmul.mubr.bf16.gmra.mrb[0].mxu0 %v2472
        %v3965 = vpop.f32.mrb[0].mxu0
        %v3966 = vadd.f32 %v766, %v3965
        %v3967 = vpop.f32.mrb[0].mxu0
        %v3968 = vpop.f32.mrb[0].mxu0
        %v3969 = vadd.f32 %v766, %v3968
        %v3970 = vpop.f32.mrb[0].mxu0
        %3971 = vmatprep.mubr.bf16.mxu0 0
        %3972 = vmatmul.mubr.bf16.gmra.mrb[0].mxu0 %v2475
        %v3973 = vpop.f32.mrb[0].mxu0
        %v3974 = vadd.f32 %v766, %v3973
        %v3975 = vpop.f32.mrb[0].mxu0
        %v3976 = vpop.f32.mrb[0].mxu0
        %v3977 = vadd.f32 %v766, %v3976
        %v3978 = vpop.f32.mrb[0].mxu0
        %3979 = vmatprep.mubr.bf16.mxu0 0
        %3980 = vmatmul.mubr.bf16.gmra.mrb[0].mxu0 %v2478
        %v3981 = vpop.f32.mrb[0].mxu0
        %v3982 = vadd.f32 %v766, %v3981
        %v3983 = vpop.f32.mrb[0].mxu0
        %v3984 = vpop.f32.mrb[0].mxu0
        %v3985 = vadd.f32 %v766, %v3984
        %v3986 = vpop.f32.mrb[0].mxu0
        %3987 = vmatprep.mubr.bf16.mxu0 0
        %3988 = vmatmul.mubr.bf16.gmra.mrb[0].mxu0 %v2481
        %v3989 = vpop.f32.mrb[0].mxu0
        %v3990 = vadd.f32 %v766, %v3989
        %v3991 = vpop.f32.mrb[0].mxu0
        %v3992 = vpop.f32.mrb[0].mxu0
        %v3993 = vadd.f32 %v766, %v3992
        %v3994 = vpop.f32.mrb[0].mxu0
        %3995 = vmatprep.mubr.bf16.mxu0 0
        %3996 = vmatmul.mubr.bf16.gmra.mrb[0].mxu0 %v2484
        %v3997 = vpop.f32.mrb[0].mxu0
        %v3998 = vadd.f32 %v766, %v3997
        %v3999 = vpop.f32.mrb[0].mxu0
        %v4000 = vpop.f32.mrb[0].mxu0
        %v4001 = vadd.f32 %v766, %v4000
        %v4002 = vpop.f32.mrb[0].mxu0
        %4003 = vmatprep.mubr.bf16.mxu0 0
        %4004 = vmatmul.mubr.bf16.gmra.mrb[0].mxu0 %v2487
        %v4005 = vpop.f32.mrb[0].mxu0
        %v4006 = vadd.f32 %v766, %v4005
        %v4007 = vpop.f32.mrb[0].mxu0
        %v4008 = vpop.f32.mrb[0].mxu0
        %v4009 = vadd.f32 %v766, %v4008
        %v4010 = vpop.f32.mrb[0].mxu0
        %4011 = vmatprep.mubr.bf16.mxu0 0
        %4012 = vmatmul.mubr.bf16.gmra.mrb[0].mxu0 %v2490
        %v4013 = vpop.f32.mrb[0].mxu0
        %v4014 = vadd.f32 %v766, %v4013
        %v4015 = vpop.f32.mrb[0].mxu0
        %v4016 = vpop.f32.mrb[0].mxu0
        %v4017 = vadd.f32 %v766, %v4016
        %v4018 = vpop.f32.mrb[0].mxu0
        %4019 = vmatprep.mubr.bf16.mxu0 0
        %4020 = vmatmul.mubr.bf16.gmra.mrb[0].mxu0 %v2493
        %v4021 = vpop.f32.mrb[0].mxu0
        %v4022 = vadd.f32 %v766, %v4021
        %v4023 = vpop.f32.mrb[0].mxu0
        %v4024 = vpop.f32.mrb[0].mxu0
        %v4025 = vadd.f32 %v766, %v4024
        %v4026 = vpop.f32.mrb[0].mxu0
        %4027 = vmatprep.mubr.bf16.mxu0 0
        %4028 = vmatmul.mubr.bf16.gmra.mrb[0].mxu0 %v2496
        %v4029 = vpop.f32.mrb[0].mxu0
        %v4030 = vadd.f32 %v766, %v4029
        %v4031 = vpop.f32.mrb[0].mxu0
        %v4032 = vpop.f32.mrb[0].mxu0
        %v4033 = vadd.f32 %v766, %v4032
        %v4034 = vpop.f32.mrb[0].mxu0
        %4035 = vmatprep.mubr.bf16.mxu0 0
        %4036 = vmatmul.mubr.bf16.gmra.mrb[0].mxu0 %v2499
        %v4037 = vpop.f32.mrb[0].mxu0
        %v4038 = vadd.f32 %v766, %v4037
        %v4039 = vpop.f32.mrb[0].mxu0
        %v4040 = vpop.f32.mrb[0].mxu0
        %v4041 = vadd.f32 %v766, %v4040
        %v4042 = vpop.f32.mrb[0].mxu0
        %4043 = vmatprep.mubr.bf16.mxu0 0
        %4044 = vmatmul.mubr.bf16.gmra.mrb[0].mxu0 %v2502
        %v4045 = vpop.f32.mrb[0].mxu0
        %v4046 = vadd.f32 %v766, %v4045
        %v4047 = vpop.f32.mrb[0].mxu0
        %v4048 = vpop.f32.mrb[0].mxu0
        %v4049 = vadd.f32 %v766, %v4048
        %v4050 = vpop.f32.mrb[0].mxu0
        %4051 = vmatprep.mubr.bf16.mxu0 0
        %4052 = vmatmul.mubr.bf16.gmra.mrb[0].mxu0 %v2505
        %v4053 = vpop.f32.mrb[0].mxu0
        %v4054 = vadd.f32 %v766, %v4053
        %v4055 = vpop.f32.mrb[0].mxu0
        %v4056 = vpop.f32.mrb[0].mxu0
        %v4057 = vadd.f32 %v766, %v4056
        %v4058 = vpop.f32.mrb[0].mxu0
        %4059 = vmatprep.mubr.bf16.mxu0 0
        %4060 = vmatmul.mubr.bf16.gmra.mrb[0].mxu0 %v2508
        %v4061 = vpop.f32.mrb[0].mxu0
        %v4062 = vadd.f32 %v766, %v4061
        %v4063 = vpop.f32.mrb[0].mxu0
        %v4064 = vpop.f32.mrb[0].mxu0
        %v4065 = vadd.f32 %v766, %v4064
        %v4066 = vpop.f32.mrb[0].mxu0
        %4067 = vmatprep.mubr.bf16.mxu0 0
        %4068 = vmatmul.mubr.bf16.gmra.mrb[0].mxu0 %v2511
        %v4069 = vpop.f32.mrb[0].mxu0
        %v4070 = vadd.f32 %v766, %v4069
        %v4071 = vpop.f32.mrb[0].mxu0
        %v4072 = vpop.f32.mrb[0].mxu0
        %v4073 = vadd.f32 %v766, %v4072
        %v4074 = vpop.f32.mrb[0].mxu0
        %4075 = vmatprep.mubr.bf16.mxu0 0
        %4076 = vmatmul.mubr.bf16.gmra.mrb[0].mxu0 %v2514
        %v4077 = vpop.f32.mrb[0].mxu0
        %v4078 = vadd.f32 %v766, %v4077
        %v4079 = vpop.f32.mrb[0].mxu0
        %v4080 = vpop.f32.mrb[0].mxu0
        %v4081 = vadd.f32 %v766, %v4080
        %v4082 = vpop.f32.mrb[0].mxu0
        %4083 = vmatprep.mubr.bf16.mxu0 0
        %4084 = vmatmul.mubr.bf16.gmra.mrb[0].mxu0 %v2517
        %v4085 = vpop.f32.mrb[0].mxu0
        %v4086 = vadd.f32 %v766, %v4085
        %v4087 = vpop.f32.mrb[0].mxu0
        %v4088 = vpop.f32.mrb[0].mxu0
        %v4089 = vadd.f32 %v766, %v4088
        %v4090 = vpop.f32.mrb[0].mxu0
        %4091 = vmatprep.mubr.bf16.mxu0 0
        %4092 = vmatmul.mubr.bf16.gmra.mrb[0].mxu0 %v2520
        %v4093 = vpop.f32.mrb[0].mxu0
        %v4094 = vadd.f32 %v766, %v4093
        %v4095 = vpop.f32.mrb[0].mxu0
        %v4096 = vpop.f32.mrb[0].mxu0
        %v4097 = vadd.f32 %v766, %v4096
        %v4098 = vpop.f32.mrb[0].mxu0
        %4099 = vmatprep.mubr.bf16.mxu0 0
        %4100 = vmatmul.mubr.bf16.gmra.mrb[0].mxu0 %v2523
        %v4101 = vpop.f32.mrb[0].mxu0
        %v4102 = vadd.f32 %v766, %v4101
        %v4103 = vpop.f32.mrb[0].mxu0
        %v4104 = vpop.f32.mrb[0].mxu0
        %v4105 = vadd.f32 %v766, %v4104
        %v4106 = vpop.f32.mrb[0].mxu0
        %4107 = vmatprep.mubr.bf16.mxu0 0
        %4108 = vmatmul.mubr.bf16.gmra.mrb[0].mxu0 %v2526
        %v4109 = vpop.f32.mrb[0].mxu0
        %v4110 = vadd.f32 %v766, %v4109
        %v4111 = vpop.f32.mrb[0].mxu0
        %v4112 = vpop.f32.mrb[0].mxu0
        %v4113 = vadd.f32 %v766, %v4112
        %v4114 = vpop.f32.mrb[0].mxu0
        %4115 = vmatprep.mubr.bf16.mxu0 0
        %4116 = vmatmul.mubr.bf16.gmra.mrb[0].mxu0 %v2529
        %v4117 = vpop.f32.mrb[0].mxu0
        %v4118 = vadd.f32 %v766, %v4117
        %v4119 = vpop.f32.mrb[0].mxu0
        %v4120 = vpop.f32.mrb[0].mxu0
        %v4121 = vadd.f32 %v766, %v4120
        %v4122 = vpop.f32.mrb[0].mxu0
        %4123 = vmatprep.mubr.bf16.mxu0 0
        %4124 = vmatmul.mubr.bf16.gmra.mrb[0].mxu0 %v2532
        %v4125 = vpop.f32.mrb[0].mxu0
        %v4126 = vadd.f32 %v766, %v4125
        %v4127 = vpop.f32.mrb[0].mxu0
        %v4128 = vpop.f32.mrb[0].mxu0
        %v4129 = vadd.f32 %v766, %v4128
        %v4130 = vpop.f32.mrb[0].mxu0
        %4131 = vmatprep.mubr.bf16.mxu0 0
        %4132 = vmatmul.mubr.bf16.gmra.mrb[0].mxu0 %v2535
        %v4133 = vpop.f32.mrb[0].mxu0
        %v4134 = vadd.f32 %v766, %v4133
        %v4135 = vpop.f32.mrb[0].mxu0
        %v4136 = vpop.f32.mrb[0].mxu0
        %v4137 = vadd.f32 %v766, %v4136
        %v4138 = vpop.f32.mrb[0].mxu0
        %4139 = vmatprep.mubr.bf16.mxu0 0
        %4140 = vmatmul.mubr.bf16.gmra.mrb[0].mxu0 %v2538
        %v4141 = vpop.f32.mrb[0].mxu0
        %v4142 = vadd.f32 %v766, %v4141
        %v4143 = vpop.f32.mrb[0].mxu0
        %v4144 = vpop.f32.mrb[0].mxu0
        %v4145 = vadd.f32 %v766, %v4144
        %v4146 = vpop.f32.mrb[0].mxu0
        %4147 = vmatprep.mubr.bf16.mxu0 0
        %4148 = vmatmul.mubr.bf16.gmra.mrb[0].mxu0 %v2541
        %v4149 = vpop.f32.mrb[0].mxu0
        %v4150 = vadd.f32 %v766, %v4149
        %v4151 = vpop.f32.mrb[0].mxu0
        %v4152 = vpop.f32.mrb[0].mxu0
        %v4153 = vadd.f32 %v766, %v4152
        %v4154 = vpop.f32.mrb[0].mxu0
        %4155 = vmatprep.mubr.bf16.mxu0 0
        %4156 = vmatmul.mubr.bf16.gmra.mrb[0].mxu0 %v2544
        %v4157 = vpop.f32.mrb[0].mxu0
        %v4158 = vadd.f32 %v766, %v4157
        %v4159 = vpop.f32.mrb[0].mxu0
        %v4160 = vpop.f32.mrb[0].mxu0
        %v4161 = vadd.f32 %v766, %v4160
        %v4162 = vpop.f32.mrb[0].mxu0
        %4163 = vmatprep.mubr.bf16.mxu0 0
        %4164 = vmatmul.mubr.bf16.gmra.mrb[0].mxu0 %v2547
        %v4165 = vpop.f32.mrb[0].mxu0
        %v4166 = vadd.f32 %v766, %v4165
        %v4167 = vpop.f32.mrb[0].mxu0
        %v4168 = vpop.f32.mrb[0].mxu0
        %v4169 = vadd.f32 %v766, %v4168
        %v4170 = vpop.f32.mrb[0].mxu0
        %4171 = vmatprep.mubr.bf16.mxu0 0
        %4172 = vmatmul.mubr.bf16.gmra.mrb[0].mxu0 %v2550
        %v4173 = vpop.f32.mrb[0].mxu0
        %v4174 = vadd.f32 %v766, %v4173
        %v4175 = vpop.f32.mrb[0].mxu0
        %v4176 = vpop.f32.mrb[0].mxu0
        %v4177 = vadd.f32 %v766, %v4176
        %v4178 = vpop.f32.mrb[0].mxu0
        %4179 = vmatprep.mubr.bf16.mxu0 0
        %4180 = vmatmul.mubr.bf16.gmra.mrb[0].mxu0 %v2553
        %v4181 = vpop.f32.mrb[0].mxu0
        %v4182 = vadd.f32 %v766, %v4181
        %v4183 = vpop.f32.mrb[0].mxu0
        %v4184 = vpop.f32.mrb[0].mxu0
        %v4185 = vadd.f32 %v766, %v4184
        %v4186 = vpop.f32.mrb[0].mxu0
        %4187 = vmatprep.mubr.bf16.mxu0 0
        %4188 = vmatmul.mubr.bf16.gmra.mrb[0].mxu0 %v2556
        %v4189 = vpop.f32.mrb[0].mxu0
        %v4190 = vadd.f32 %v766, %v4189
        %v4191 = vpop.f32.mrb[0].mxu0
        %v4192 = vpop.f32.mrb[0].mxu0
        %v4193 = vadd.f32 %v766, %v4192
        %v4194 = vpop.f32.mrb[0].mxu0
        %4195 = vmatprep.mubr.bf16.mxu0 0
        %4196 = vmatmul.mubr.bf16.gmra.mrb[0].mxu0 %v2559
        %v4197 = vpop.f32.mrb[0].mxu0
        %v4198 = vadd.f32 %v766, %v4197
        %v4199 = vpop.f32.mrb[0].mxu0
        %v4200 = vpop.f32.mrb[0].mxu0
        %v4201 = vadd.f32 %v766, %v4200
        %v4202 = vpop.f32.mrb[0].mxu0
        %4203 = vmatprep.mubr.bf16.mxu0 0
        %4204 = vmatmul.mubr.bf16.gmra.mrb[0].mxu0 %v2562
        %v4205 = vpop.f32.mrb[0].mxu0
        %v4206 = vadd.f32 %v766, %v4205
        %v4207 = vpop.f32.mrb[0].mxu0
        %v4208 = vpop.f32.mrb[0].mxu0
        %v4209 = vadd.f32 %v766, %v4208
        %v4210 = vpop.f32.mrb[0].mxu0
        %4211 = vmatprep.mubr.bf16.mxu0 0
        %4212 = vmatmul.mubr.bf16.gmra.mrb[0].mxu0 %v2565
        %v4213 = vpop.f32.mrb[0].mxu0
        %v4214 = vadd.f32 %v766, %v4213
        %v4215 = vpop.f32.mrb[0].mxu0
        %v4216 = vpop.f32.mrb[0].mxu0
        %v4217 = vadd.f32 %v766, %v4216
        %v4218 = vpop.f32.mrb[0].mxu0
        %4219 = vmatprep.mubr.bf16.mxu0 0
        %4220 = vmatmul.mubr.bf16.gmra.mrb[0].mxu0 %v2568
        %v4221 = vpop.f32.mrb[0].mxu0
        %v4222 = vadd.f32 %v766, %v4221
        %v4223 = vpop.f32.mrb[0].mxu0
        %v4224 = vpop.f32.mrb[0].mxu0
        %v4225 = vadd.f32 %v766, %v4224
        %v4226 = vpop.f32.mrb[0].mxu0
        %4227 = vmatprep.mubr.bf16.mxu0 0
        %4228 = vmatmul.mubr.bf16.gmra.mrb[0].mxu0 %v2571
        %v4229 = vpop.f32.mrb[0].mxu0
        %v4230 = vadd.f32 %v766, %v4229
        %v4231 = vpop.f32.mrb[0].mxu0
        %v4232 = vpop.f32.mrb[0].mxu0
        %v4233 = vadd.f32 %v766, %v4232
        %v4234 = vpop.f32.mrb[0].mxu0
        %4235 = vmatprep.mubr.bf16.mxu0 0
        %4236 = vmatmul.mubr.bf16.gmra.mrb[0].mxu0 %v2574
        %v4237 = vpop.f32.mrb[0].mxu0
        %v4238 = vadd.f32 %v766, %v4237
        %v4239 = vpop.f32.mrb[0].mxu0
        %v4240 = vpop.f32.mrb[0].mxu0
        %v4241 = vadd.f32 %v766, %v4240
        %v4242 = vpop.f32.mrb[0].mxu0
        %4243 = vmatprep.mubr.bf16.mxu0 0
        %4244 = vmatmul.mubr.bf16.gmra.mrb[0].mxu0 %v2577
        %v4245 = vpop.f32.mrb[0].mxu0
        %v4246 = vadd.f32 %v766, %v4245
        %v4247 = vpop.f32.mrb[0].mxu0
        %v4248 = vpop.f32.mrb[0].mxu0
        %v4249 = vadd.f32 %v766, %v4248
        %v4250 = vpop.f32.mrb[0].mxu0
        %4251 = vmatprep.mubr.bf16.mxu0 0
        %4252 = vmatmul.mubr.bf16.gmra.mrb[0].mxu0 %v2580
        %v4253 = vpop.f32.mrb[0].mxu0
        %v4254 = vadd.f32 %v766, %v4253
        %v4255 = vpop.f32.mrb[0].mxu0
        %v4256 = vpop.f32.mrb[0].mxu0
        %v4257 = vadd.f32 %v766, %v4256
        %v4258 = vpop.f32.mrb[0].mxu0
        %4259 = vmatprep.mubr.bf16.mxu0 0
        %4260 = vmatmul.mubr.bf16.gmra.mrb[0].mxu0 %v2583
        %v4261 = vpop.f32.mrb[0].mxu0
        %v4262 = vadd.f32 %v766, %v4261
        %v4263 = vpop.f32.mrb[0].mxu0
        %v4264 = vpop.f32.mrb[0].mxu0
        %v4265 = vadd.f32 %v766, %v4264
        %v4266 = vpop.f32.mrb[0].mxu0
        %4267 = vmatprep.mubr.bf16.mxu0 0
        %4268 = vmatmul.mubr.bf16.gmra.mrb[0].mxu0 %v2586
        %v4269 = vpop.f32.mrb[0].mxu0
        %v4270 = vadd.f32 %v766, %v4269
        %v4271 = vpop.f32.mrb[0].mxu0
        %v4272 = vpop.f32.mrb[0].mxu0
        %v4273 = vadd.f32 %v766, %v4272
        %v4274 = vpop.f32.mrb[0].mxu0
        %4275 = vmatprep.mubr.bf16.mxu0 0
        %4276 = vmatmul.mubr.bf16.gmra.mrb[0].mxu0 %v2589
        %v4277 = vpop.f32.mrb[0].mxu0
        %v4278 = vadd.f32 %v766, %v4277
        %v4279 = vpop.f32.mrb[0].mxu0
        %v4280 = vpop.f32.mrb[0].mxu0
        %v4281 = vadd.f32 %v766, %v4280
        %v4282 = vpop.f32.mrb[0].mxu0
        %4283 = vmatprep.mubr.bf16.mxu0 0
        %4284 = vmatmul.mubr.bf16.gmra.mrb[0].mxu0 %v2592
        %v4285 = vpop.f32.mrb[0].mxu0
        %v4286 = vadd.f32 %v766, %v4285
        %v4287 = vpop.f32.mrb[0].mxu0
        %v4288 = vpop.f32.mrb[0].mxu0
        %v4289 = vadd.f32 %v766, %v4288
        %v4290 = vpop.f32.mrb[0].mxu0
        %4291 = vmatprep.mubr.bf16.mxu0 0
        %4292 = vmatmul.mubr.bf16.gmra.mrb[0].mxu0 %v2595
        %v4293 = vpop.f32.mrb[0].mxu0
        %v4294 = vadd.f32 %v766, %v4293
        %v4295 = vpop.f32.mrb[0].mxu0
        %v4296 = vpop.f32.mrb[0].mxu0
        %v4297 = vadd.f32 %v766, %v4296
        %v4298 = vpop.f32.mrb[0].mxu0
        %4299 = vmatprep.mubr.bf16.mxu0 0
        %4300 = vmatmul.mubr.bf16.gmra.mrb[0].mxu0 %v2598
        %v4301 = vpop.f32.mrb[0].mxu0
        %v4302 = vadd.f32 %v766, %v4301
        %v4303 = vpop.f32.mrb[0].mxu0
        %v4304 = vpop.f32.mrb[0].mxu0
        %v4305 = vadd.f32 %v766, %v4304
        %v4306 = vpop.f32.mrb[0].mxu0
        %4307 = vmatprep.mubr.bf16.mxu0 0
        %4308 = vmatmul.mubr.bf16.gmra.mrb[0].mxu0 %v2601
        %v4309 = vpop.f32.mrb[0].mxu0
        %v4310 = vadd.f32 %v766, %v4309
        %v4311 = vpop.f32.mrb[0].mxu0
        %v4312 = vpop.f32.mrb[0].mxu0
        %v4313 = vadd.f32 %v766, %v4312
        %v4314 = vpop.f32.mrb[0].mxu0
        %4315 = vmatprep.mubr.bf16.mxu0 0
        %4316 = vmatmul.mubr.bf16.gmra.mrb[0].mxu0 %v2604
        %v4317 = vpop.f32.mrb[0].mxu0
        %v4318 = vadd.f32 %v766, %v4317
        %v4319 = vpop.f32.mrb[0].mxu0
        %v4320 = vpop.f32.mrb[0].mxu0
        %v4321 = vadd.f32 %v766, %v4320
        %v4322 = vpop.f32.mrb[0].mxu0
        %4323 = vmatprep.mubr.bf16.mxu0 0
        %4324 = vmatmul.mubr.bf16.gmra.mrb[0].mxu0 %v2607
        %v4325 = vpop.f32.mrb[0].mxu0
        %v4326 = vadd.f32 %v766, %v4325
        %v4327 = vpop.f32.mrb[0].mxu0
        %v4328 = vpop.f32.mrb[0].mxu0
        %v4329 = vadd.f32 %v766, %v4328
        %v4330 = vpop.f32.mrb[0].mxu0
        %4331 = vmatprep.mubr.bf16.mxu0 0
        %4332 = vmatmul.mubr.bf16.gmra.mrb[0].mxu0 %v2610
        %v4333 = vpop.f32.mrb[0].mxu0
        %v4334 = vadd.f32 %v766, %v4333
        %v4335 = vpop.f32.mrb[0].mxu0
        %v4336 = vpop.f32.mrb[0].mxu0
        %v4337 = vadd.f32 %v766, %v4336
        %v4338 = vpop.f32.mrb[0].mxu0
        %4339 = vmatprep.mubr.bf16.mxu0 0
        %4340 = vmatmul.mubr.bf16.gmra.mrb[0].mxu0 %v2613
        %v4341 = vpop.f32.mrb[0].mxu0
        %v4342 = vadd.f32 %v766, %v4341
        %v4343 = vpop.f32.mrb[0].mxu0
        %v4344 = vpop.f32.mrb[0].mxu0
        %v4345 = vadd.f32 %v766, %v4344
        %v4346 = vpop.f32.mrb[0].mxu0
        %4347 = vmatprep.mubr.bf16.mxu0 0
        %4348 = vmatmul.mubr.bf16.gmra.mrb[0].mxu0 %v2616
        %v4349 = vpop.f32.mrb[0].mxu0
        %v4350 = vadd.f32 %v766, %v4349
        %v4351 = vpop.f32.mrb[0].mxu0
        %v4352 = vpop.f32.mrb[0].mxu0
        %v4353 = vadd.f32 %v766, %v4352
        %v4354 = vpop.f32.mrb[0].mxu0
        %4355 = vmatprep.mubr.bf16.mxu0 0
        %4356 = vmatmul.mubr.bf16.gmra.mrb[0].mxu0 %v2619
        %v4357 = vpop.f32.mrb[0].mxu0
        %v4358 = vadd.f32 %v766, %v4357
        %v4359 = vpop.f32.mrb[0].mxu0
        %v4360 = vpop.f32.mrb[0].mxu0
        %v4361 = vadd.f32 %v766, %v4360
        %v4362 = vpop.f32.mrb[0].mxu0
        %4363 = vmatprep.mubr.bf16.mxu0 0
        %4364 = vmatmul.mubr.bf16.gmra.mrb[0].mxu0 %v2622
        %v4365 = vpop.f32.mrb[0].mxu0
        %v4366 = vadd.f32 %v766, %v4365
        %v4367 = vpop.f32.mrb[0].mxu0
        %v4368 = vpop.f32.mrb[0].mxu0
        %v4369 = vadd.f32 %v766, %v4368
        %v4370 = vpop.f32.mrb[0].mxu0
        %4371 = vmatprep.mubr.bf16.mxu0 0
        %4372 = vmatmul.mubr.bf16.gmra.mrb[0].mxu0 %v2625
        %v4373 = vpop.f32.mrb[0].mxu0
        %v4374 = vadd.f32 %v766, %v4373
        %v4375 = vpop.f32.mrb[0].mxu0
        %v4376 = vpop.f32.mrb[0].mxu0
        %v4377 = vadd.f32 %v766, %v4376
        %v4378 = vpop.f32.mrb[0].mxu0
        %4379 = vmatprep.mubr.bf16.mxu0 0
        %4380 = vmatmul.mubr.bf16.gmra.mrb[0].mxu0 %v2628
        %v4381 = vpop.f32.mrb[0].mxu0
        %v4382 = vadd.f32 %v766, %v4381
        %v4383 = vpop.f32.mrb[0].mxu0
        %v4384 = vpop.f32.mrb[0].mxu0
        %v4385 = vadd.f32 %v766, %v4384
        %v4386 = vpop.f32.mrb[0].mxu0
        %4387 = vmatprep.mubr.bf16.mxu0 0
        %4388 = vmatmul.mubr.bf16.gmra.mrb[0].mxu0 %v2631
        %v4389 = vpop.f32.mrb[0].mxu0
        %v4390 = vadd.f32 %v766, %v4389
        %v4391 = vpop.f32.mrb[0].mxu0
        %v4392 = vpop.f32.mrb[0].mxu0
        %v4393 = vadd.f32 %v766, %v4392
        %v4394 = vpop.f32.mrb[0].mxu0
        %4395 = vmatprep.mubr.bf16.mxu0 0
        %4396 = vmatmul.mubr.bf16.gmra.mrb[0].mxu0 %v2634
        %v4397 = vpop.f32.mrb[0].mxu0
        %v4398 = vadd.f32 %v766, %v4397
        %v4399 = vpop.f32.mrb[0].mxu0
        %v4400 = vpop.f32.mrb[0].mxu0
        %v4401 = vadd.f32 %v766, %v4400
        %v4402 = vpop.f32.mrb[0].mxu0
        %4403 = vmatprep.mubr.bf16.mxu0 0
        %4404 = vmatmul.mubr.bf16.gmra.mrb[0].mxu0 %v2637
        %v4405 = vpop.f32.mrb[0].mxu0
        %v4406 = vadd.f32 %v766, %v4405
        %v4407 = vpop.f32.mrb[0].mxu0
        %v4408 = vpop.f32.mrb[0].mxu0
        %v4409 = vadd.f32 %v766, %v4408
        %v4410 = vpop.f32.mrb[0].mxu0
        %4411 = vmatprep.mubr.bf16.mxu0 0
        %4412 = vmatmul.mubr.bf16.gmra.mrb[0].mxu0 %v2640
        %v4413 = vpop.f32.mrb[0].mxu0
        %v4414 = vadd.f32 %v766, %v4413
        %v4415 = vpop.f32.mrb[0].mxu0
        %v4416 = vpop.f32.mrb[0].mxu0
        %v4417 = vadd.f32 %v766, %v4416
        %v4418 = vpop.f32.mrb[0].mxu0
        %4419 = vmatprep.mubr.bf16.mxu0 0
        %4420 = vmatmul.mubr.bf16.gmra.mrb[0].mxu0 %v2643
        %v4421 = vpop.f32.mrb[0].mxu0
        %v4422 = vadd.f32 %v766, %v4421
        %v4423 = vpop.f32.mrb[0].mxu0
        %v4424 = vpop.f32.mrb[0].mxu0
        %v4425 = vadd.f32 %v766, %v4424
        %v4426 = vpop.f32.mrb[0].mxu0
        %4427 = vmatprep.mubr.bf16.mxu0 0
        %4428 = vmatmul.mubr.bf16.gmra.mrb[0].mxu0 %v2646
        %v4429 = vpop.f32.mrb[0].mxu0
        %v4430 = vadd.f32 %v766, %v4429
        %v4431 = vpop.f32.mrb[0].mxu0
        %v4432 = vpop.f32.mrb[0].mxu0
        %v4433 = vadd.f32 %v766, %v4432
        %v4434 = vpop.f32.mrb[0].mxu0
        %4435 = vmatprep.mubr.bf16.mxu0 0
        %4436 = vmatmul.mubr.bf16.gmra.mrb[0].mxu0 %v2649
        %v4437 = vpop.f32.mrb[0].mxu0
        %v4438 = vadd.f32 %v766, %v4437
        %v4439 = vpop.f32.mrb[0].mxu0
        %v4440 = vpop.f32.mrb[0].mxu0
        %v4441 = vadd.f32 %v766, %v4440
        %v4442 = vpop.f32.mrb[0].mxu0
        %4443 = vmatprep.mubr.bf16.mxu0 0
        %4444 = vmatmul.mubr.bf16.gmra.mrb[0].mxu0 %v2652
        %v4445 = vpop.f32.mrb[0].mxu0
        %v4446 = vadd.f32 %v766, %v4445
        %v4447 = vpop.f32.mrb[0].mxu0
        %v4448 = vpop.f32.mrb[0].mxu0
        %v4449 = vadd.f32 %v766, %v4448
        %v4450 = vpop.f32.mrb[0].mxu0
        %4451 = vmatprep.mubr.bf16.mxu0 0
        %4452 = vmatmul.mubr.bf16.gmra.mrb[0].mxu0 %v2655
        %v4453 = vpop.f32.mrb[0].mxu0
        %v4454 = vadd.f32 %v766, %v4453
        %v4455 = vpop.f32.mrb[0].mxu0
        %v4456 = vpop.f32.mrb[0].mxu0
        %v4457 = vadd.f32 %v766, %v4456
        %v4458 = vpop.f32.mrb[0].mxu0
        %4459 = vmatprep.mubr.bf16.mxu0 0
        %4460 = vmatmul.mubr.bf16.gmra.mrb[0].mxu0 %v2658
        %v4461 = vpop.f32.mrb[0].mxu0
        %v4462 = vadd.f32 %v766, %v4461
        %v4463 = vpop.f32.mrb[0].mxu0
        %v4464 = vpop.f32.mrb[0].mxu0
        %v4465 = vadd.f32 %v766, %v4464
        %v4466 = vpop.f32.mrb[0].mxu0
        %4467 = vmatprep.mubr.bf16.mxu0 0
        %4468 = vmatmul.mubr.bf16.gmra.mrb[0].mxu0 %v2661
        %v4469 = vpop.f32.mrb[0].mxu0
        %v4470 = vadd.f32 %v766, %v4469
        %v4471 = vpop.f32.mrb[0].mxu0
        %v4472 = vpop.f32.mrb[0].mxu0
        %v4473 = vadd.f32 %v766, %v4472
        %v4474 = vpop.f32.mrb[0].mxu0
        %4475 = vmatprep.mubr.bf16.mxu0 0
        %4476 = vmatmul.mubr.bf16.gmra.mrb[0].mxu0 %v2664
        %v4477 = vpop.f32.mrb[0].mxu0
        %v4478 = vadd.f32 %v766, %v4477
        %v4479 = vpop.f32.mrb[0].mxu0
        %v4480 = vpop.f32.mrb[0].mxu0
        %v4481 = vadd.f32 %v766, %v4480
        %v4482 = vpop.f32.mrb[0].mxu0
        %4483 = vmatprep.mubr.bf16.mxu0 0
        %4484 = vmatmul.mubr.bf16.gmra.mrb[0].mxu0 %v2667
        %v4485 = vpop.f32.mrb[0].mxu0
        %v4486 = vadd.f32 %v766, %v4485
        %v4487 = vpop.f32.mrb[0].mxu0
        %v4488 = vpop.f32.mrb[0].mxu0
        %v4489 = vadd.f32 %v766, %v4488
        %v4490 = vpop.f32.mrb[0].mxu0
        %4491 = vmatprep.mubr.bf16.mxu0 0
        %4492 = vmatmul.mubr.bf16.gmra.mrb[0].mxu0 %v2670
        %v4493 = vpop.f32.mrb[0].mxu0
        %v4494 = vadd.f32 %v766, %v4493
        %v4495 = vpop.f32.mrb[0].mxu0
        %v4496 = vpop.f32.mrb[0].mxu0
        %v4497 = vadd.f32 %v766, %v4496
        %v4498 = vpop.f32.mrb[0].mxu0
        %4499 = vmatprep.mubr.bf16.mxu0 0
        %4500 = vmatmul.mubr.bf16.gmra.mrb[0].mxu0 %v2673
        %v4501 = vpop.f32.mrb[0].mxu0
        %v4502 = vadd.f32 %v766, %v4501
        %v4503 = vpop.f32.mrb[0].mxu0
        %v4504 = vpop.f32.mrb[0].mxu0
        %v4505 = vadd.f32 %v766, %v4504
        %v4506 = vpop.f32.mrb[0].mxu0
        %4507 = vmatprep.mubr.bf16.mxu0 0
        %4508 = vmatmul.mubr.bf16.gmra.mrb[0].mxu0 %v2676
        %v4509 = vpop.f32.mrb[0].mxu0
        %v4510 = vadd.f32 %v766, %v4509
        %v4511 = vpop.f32.mrb[0].mxu0
        %v4512 = vpop.f32.mrb[0].mxu0
        %v4513 = vadd.f32 %v766, %v4512
        %v4514 = vpop.f32.mrb[0].mxu0
        %4515 = vmatprep.mubr.bf16.mxu0 0
        %4516 = vmatmul.mubr.bf16.gmra.mrb[0].mxu0 %v2679
        %v4517 = vpop.f32.mrb[0].mxu0
        %v4518 = vadd.f32 %v766, %v4517
        %v4519 = vpop.f32.mrb[0].mxu0
        %v4520 = vpop.f32.mrb[0].mxu0
        %v4521 = vadd.f32 %v766, %v4520
        %v4522 = vpop.f32.mrb[0].mxu0
        %4523 = vmatprep.mubr.bf16.mxu0 0
        %4524 = vmatmul.mubr.bf16.gmra.mrb[0].mxu0 %v2682
        %v4525 = vpop.f32.mrb[0].mxu0
        %v4526 = vadd.f32 %v766, %v4525
        %v4527 = vpop.f32.mrb[0].mxu0
        %v4528 = vpop.f32.mrb[0].mxu0
        %v4529 = vadd.f32 %v766, %v4528
        %v4530 = vpop.f32.mrb[0].mxu0
        %4531 = vmatprep.mubr.bf16.mxu0 0
        %4532 = vmatmul.mubr.bf16.gmra.mrb[0].mxu0 %v2685
        %v4533 = vpop.f32.mrb[0].mxu0
        %v4534 = vadd.f32 %v766, %v4533
        %v4535 = vpop.f32.mrb[0].mxu0
        %v4536 = vpop.f32.mrb[0].mxu0
        %v4537 = vadd.f32 %v766, %v4536
        %v4538 = vpop.f32.mrb[0].mxu0
        %4539 = vmatprep.mubr.bf16.mxu0 0
        %4540 = vmatmul.mubr.bf16.gmra.mrb[0].mxu0 %v2688
        %v4541 = vpop.f32.mrb[0].mxu0
        %v4542 = vadd.f32 %v766, %v4541
        %v4543 = vpop.f32.mrb[0].mxu0
        %v4544 = vpop.f32.mrb[0].mxu0
        %v4545 = vadd.f32 %v766, %v4544
        %v4546 = vpop.f32.mrb[0].mxu0
        %4547 = vmatprep.mubr.bf16.mxu0 0
        %4548 = vmatmul.mubr.bf16.gmra.mrb[0].mxu0 %v2691
        %v4549 = vpop.f32.mrb[0].mxu0
        %v4550 = vadd.f32 %v766, %v4549
        %v4551 = vpop.f32.mrb[0].mxu0
        %v4552 = vpop.f32.mrb[0].mxu0
        %v4553 = vadd.f32 %v766, %v4552
        %v4554 = vpop.f32.mrb[0].mxu0
        %4555 = vmatprep.mubr.bf16.mxu0 0
        %4556 = vmatmul.mubr.bf16.gmra.mrb[0].mxu0 %v2694
        %v4557 = vpop.f32.mrb[0].mxu0
        %v4558 = vadd.f32 %v766, %v4557
        %v4559 = vpop.f32.mrb[0].mxu0
        %v4560 = vpop.f32.mrb[0].mxu0
        %v4561 = vadd.f32 %v766, %v4560
        %v4562 = vpop.f32.mrb[0].mxu0
        %4563 = vmatprep.mubr.bf16.mxu0 0
        %4564 = vmatmul.mubr.bf16.gmra.mrb[0].mxu0 %v2697
        %v4565 = vpop.f32.mrb[0].mxu0
        %v4566 = vadd.f32 %v766, %v4565
        %v4567 = vpop.f32.mrb[0].mxu0
        %v4568 = vpop.f32.mrb[0].mxu0
        %v4569 = vadd.f32 %v766, %v4568
        %v4570 = vpop.f32.mrb[0].mxu0
        %4571 = vmatprep.mubr.bf16.mxu0 0
        %4572 = vmatmul.mubr.bf16.gmra.mrb[0].mxu0 %v2700
        %v4573 = vpop.f32.mrb[0].mxu0
        %v4574 = vadd.f32 %v766, %v4573
        %v4575 = vpop.f32.mrb[0].mxu0
        %v4576 = vpop.f32.mrb[0].mxu0
        %v4577 = vadd.f32 %v766, %v4576
        %v4578 = vpop.f32.mrb[0].mxu0
        %4579 = vmatprep.mubr.bf16.mxu0 0
        %4580 = vmatmul.mubr.bf16.gmra.mrb[0].mxu0 %v2703
        %v4581 = vpop.f32.mrb[0].mxu0
        %v4582 = vadd.f32 %v766, %v4581
        %v4583 = vpop.f32.mrb[0].mxu0
        %v4584 = vpop.f32.mrb[0].mxu0
        %v4585 = vadd.f32 %v766, %v4584
        %v4586 = vpop.f32.mrb[0].mxu0
        %4587 = vmatprep.mubr.bf16.mxu0 0
        %4588 = vmatmul.mubr.bf16.gmra.mrb[0].mxu0 %v2706
        %v4589 = vpop.f32.mrb[0].mxu0
        %v4590 = vadd.f32 %v766, %v4589
        %v4591 = vpop.f32.mrb[0].mxu0
        %v4592 = vpop.f32.mrb[0].mxu0
        %v4593 = vadd.f32 %v766, %v4592
        %v4594 = vpop.f32.mrb[0].mxu0
        %4595 = vmatprep.mubr.bf16.mxu0 0
        %4596 = vmatmul.mubr.bf16.gmra.mrb[0].mxu0 %v2709
        %v4597 = vpop.f32.mrb[0].mxu0
        %v4598 = vadd.f32 %v766, %v4597
        %v4599 = vpop.f32.mrb[0].mxu0
        %v4600 = vpop.f32.mrb[0].mxu0
        %v4601 = vadd.f32 %v766, %v4600
        %v4602 = vpop.f32.mrb[0].mxu0
        %4603 = vmatprep.mubr.bf16.mxu0 0
        %4604 = vmatmul.mubr.bf16.gmra.mrb[0].mxu0 %v2712
        %v4605 = vpop.f32.mrb[0].mxu0
        %v4606 = vadd.f32 %v766, %v4605
        %v4607 = vpop.f32.mrb[0].mxu0
        %v4608 = vpop.f32.mrb[0].mxu0
        %v4609 = vadd.f32 %v766, %v4608
        %v4610 = vpop.f32.mrb[0].mxu0
        %4611 = vmatprep.mubr.bf16.mxu0 0
        %4612 = vmatmul.mubr.bf16.gmra.mrb[0].mxu0 %v2715
        %v4613 = vpop.f32.mrb[0].mxu0
        %v4614 = vadd.f32 %v766, %v4613
        %v4615 = vpop.f32.mrb[0].mxu0
        %v4616 = vpop.f32.mrb[0].mxu0
        %v4617 = vadd.f32 %v766, %v4616
        %v4618 = vpop.f32.mrb[0].mxu0
        %4619 = vmatprep.mubr.bf16.mxu0 0
        %4620 = vmatmul.mubr.bf16.gmra.mrb[0].mxu0 %v2718
        %v4621 = vpop.f32.mrb[0].mxu0
        %v4622 = vadd.f32 %v766, %v4621
        %v4623 = vpop.f32.mrb[0].mxu0
        %v4624 = vpop.f32.mrb[0].mxu0
        %v4625 = vadd.f32 %v766, %v4624
        %v4626 = vpop.f32.mrb[0].mxu0
        %4627 = vmatprep.mubr.bf16.mxu0 0
        %4628 = vmatmul.mubr.bf16.gmra.mrb[0].mxu0 %v2721
        %v4629 = vpop.f32.mrb[0].mxu0
        %v4630 = vadd.f32 %v766, %v4629
        %v4631 = vpop.f32.mrb[0].mxu0
        %v4632 = vpop.f32.mrb[0].mxu0
        %v4633 = vadd.f32 %v766, %v4632
        %v4634 = vpop.f32.mrb[0].mxu0
        %4635 = vmatprep.mubr.bf16.mxu0 0
        %4636 = vmatmul.mubr.bf16.gmra.mrb[0].mxu0 %v2724
        %v4637 = vpop.f32.mrb[0].mxu0
        %v4638 = vadd.f32 %v766, %v4637
        %v4639 = vpop.f32.mrb[0].mxu0
        %v4640 = vpop.f32.mrb[0].mxu0
        %v4641 = vadd.f32 %v766, %v4640
        %v4642 = vpop.f32.mrb[0].mxu0
        %4643 = vmatprep.mubr.bf16.mxu0 0
        %4644 = vmatmul.mubr.bf16.gmra.mrb[0].mxu0 %v2727
        %v4645 = vpop.f32.mrb[0].mxu0
        %v4646 = vadd.f32 %v766, %v4645
        %v4647 = vpop.f32.mrb[0].mxu0
        %v4648 = vpop.f32.mrb[0].mxu0
        %v4649 = vadd.f32 %v766, %v4648
        %v4650 = vpop.f32.mrb[0].mxu0
        %4651 = vmatprep.mubr.bf16.mxu0 0
        %4652 = vmatmul.mubr.bf16.gmra.mrb[0].mxu0 %v2730
        %v4653 = vpop.f32.mrb[0].mxu0
        %v4654 = vadd.f32 %v766, %v4653
        %v4655 = vpop.f32.mrb[0].mxu0
        %v4656 = vpop.f32.mrb[0].mxu0
        %v4657 = vadd.f32 %v766, %v4656
        %v4658 = vpop.f32.mrb[0].mxu0
        %4659 = vmatprep.mubr.bf16.mxu0 0
        %4660 = vmatmul.mubr.bf16.gmra.mrb[0].mxu0 %v2733
        %v4661 = vpop.f32.mrb[0].mxu0
        %v4662 = vadd.f32 %v766, %v4661
        %v4663 = vpop.f32.mrb[0].mxu0
        %v4664 = vpop.f32.mrb[0].mxu0
        %v4665 = vadd.f32 %v766, %v4664
        %v4666 = vpop.f32.mrb[0].mxu0
        %4667 = vmatprep.mubr.bf16.mxu0 0
        %4668 = vmatmul.mubr.bf16.gmra.mrb[0].mxu0 %v2736
        %v4669 = vpop.f32.mrb[0].mxu0
        %v4670 = vadd.f32 %v766, %v4669
        %v4671 = vpop.f32.mrb[0].mxu0
        %v4672 = vpop.f32.mrb[0].mxu0
        %v4673 = vadd.f32 %v766, %v4672
        %v4674 = vpop.f32.mrb[0].mxu0
        %4675 = vmatprep.mubr.bf16.mxu0 0
        %4676 = vmatmul.mubr.bf16.gmra.mrb[0].mxu0 %v2739
        %v4677 = vpop.f32.mrb[0].mxu0
        %v4678 = vadd.f32 %v766, %v4677
        %v4679 = vpop.f32.mrb[0].mxu0
        %v4680 = vpop.f32.mrb[0].mxu0
        %v4681 = vadd.f32 %v766, %v4680
        %v4682 = vpop.f32.mrb[0].mxu0
        %4683 = vmatprep.mubr.bf16.mxu0 0
        %4684 = vmatmul.mubr.bf16.gmra.mrb[0].mxu0 %v2742
        %v4685 = vpop.f32.mrb[0].mxu0
        %v4686 = vadd.f32 %v766, %v4685
        %v4687 = vpop.f32.mrb[0].mxu0
        %v4688 = vpop.f32.mrb[0].mxu0
        %v4689 = vadd.f32 %v766, %v4688
        %v4690 = vpop.f32.mrb[0].mxu0
        %4691 = vmatprep.mubr.bf16.mxu0 0
        %4692 = vmatmul.mubr.bf16.gmra.mrb[0].mxu0 %v2745
        %v4693 = vpop.f32.mrb[0].mxu0
        %v4694 = vadd.f32 %v766, %v4693
        %v4695 = vpop.f32.mrb[0].mxu0
        %v4696 = vpop.f32.mrb[0].mxu0
        %v4697 = vadd.f32 %v766, %v4696
        %v4698 = vpop.f32.mrb[0].mxu0
        %4699 = vmatprep.mubr.bf16.mxu0 0
        %4700 = vmatmul.mubr.bf16.gmra.mrb[0].mxu0 %v2748
        %v4701 = vpop.f32.mrb[0].mxu0
        %v4702 = vadd.f32 %v766, %v4701
        %v4703 = vpop.f32.mrb[0].mxu0
        %v4704 = vpop.f32.mrb[0].mxu0
        %v4705 = vadd.f32 %v766, %v4704
        %v4706 = vpop.f32.mrb[0].mxu0
        %4707 = vmatprep.mubr.bf16.mxu0 0
        %4708 = vmatmul.mubr.bf16.gmra.mrb[0].mxu0 %v2751
        %v4709 = vpop.f32.mrb[0].mxu0
        %v4710 = vadd.f32 %v766, %v4709
        %v4711 = vpop.f32.mrb[0].mxu0
        %v4712 = vpop.f32.mrb[0].mxu0
        %v4713 = vadd.f32 %v766, %v4712
        %v4714 = vpop.f32.mrb[0].mxu0
        %4715 = vmatprep.mubr.bf16.mxu0 0
        %4716 = vmatmul.mubr.bf16.gmra.mrb[0].mxu0 %v2754
        %v4717 = vpop.f32.mrb[0].mxu0
        %v4718 = vadd.f32 %v766, %v4717
        %v4719 = vpop.f32.mrb[0].mxu0
        %v4720 = vpop.f32.mrb[0].mxu0
        %v4721 = vadd.f32 %v766, %v4720
        %v4722 = vpop.f32.mrb[0].mxu0
        %4723 = vmatprep.mubr.bf16.mxu0 0
        %4724 = vmatmul.mubr.bf16.gmra.mrb[0].mxu0 %v2757
        %v4725 = vpop.f32.mrb[0].mxu0
        %v4726 = vadd.f32 %v766, %v4725
        %v4727 = vpop.f32.mrb[0].mxu0
        %v4728 = vpop.f32.mrb[0].mxu0
        %v4729 = vadd.f32 %v766, %v4728
        %v4730 = vpop.f32.mrb[0].mxu0
        %4731 = vmatprep.mubr.bf16.mxu0 0
        %4732 = vmatmul.mubr.bf16.gmra.mrb[0].mxu0 %v2760
        %v4733 = vpop.f32.mrb[0].mxu0
        %v4734 = vadd.f32 %v766, %v4733
        %v4735 = vpop.f32.mrb[0].mxu0
        %v4736 = vpop.f32.mrb[0].mxu0
        %v4737 = vadd.f32 %v766, %v4736
        %v4738 = vpop.f32.mrb[0].mxu0
        %4739 = vmatprep.mubr.bf16.mxu0 0
        %4740 = vmatmul.mubr.bf16.gmra.mrb[0].mxu0 %v2763
        %v4741 = vpop.f32.mrb[0].mxu0
        %v4742 = vadd.f32 %v766, %v4741
        %v4743 = vpop.f32.mrb[0].mxu0
        %v4744 = vpop.f32.mrb[0].mxu0
        %v4745 = vadd.f32 %v766, %v4744
        %v4746 = vpop.f32.mrb[0].mxu0
        %4747 = vmatprep.mubr.bf16.mxu0 0
        %4748 = vmatmul.mubr.bf16.gmra.mrb[0].mxu0 %v2766
        %v4749 = vpop.f32.mrb[0].mxu0
        %v4750 = vadd.f32 %v766, %v4749
        %v4751 = vpop.f32.mrb[0].mxu0
        %v4752 = vpop.f32.mrb[0].mxu0
        %v4753 = vadd.f32 %v766, %v4752
        %v4754 = vpop.f32.mrb[0].mxu0
        %4755 = vmatprep.mubr.bf16.mxu0 0
        %4756 = vmatmul.mubr.bf16.gmra.mrb[0].mxu0 %v2769
        %v4757 = vpop.f32.mrb[0].mxu0
        %v4758 = vadd.f32 %v766, %v4757
        %v4759 = vpop.f32.mrb[0].mxu0
        %v4760 = vpop.f32.mrb[0].mxu0
        %v4761 = vadd.f32 %v766, %v4760
        %v4762 = vpop.f32.mrb[0].mxu0
        %4763 = vmatprep.mubr.bf16.mxu0 0
        %4764 = vmatmul.mubr.bf16.gmra.mrb[0].mxu0 %v2772
        %v4765 = vpop.f32.mrb[0].mxu0
        %v4766 = vadd.f32 %v766, %v4765
        %v4767 = vpop.f32.mrb[0].mxu0
        %v4768 = vpop.f32.mrb[0].mxu0
        %v4769 = vadd.f32 %v766, %v4768
        %v4770 = vpop.f32.mrb[0].mxu0
        %4771 = vmatprep.mubr.bf16.mxu0 0
        %4772 = vmatmul.mubr.bf16.gmra.mrb[0].mxu0 %v2775
        %v4773 = vpop.f32.mrb[0].mxu0
        %v4774 = vadd.f32 %v766, %v4773
        %v4775 = vpop.f32.mrb[0].mxu0
        %v4776 = vpop.f32.mrb[0].mxu0
        %v4777 = vadd.f32 %v766, %v4776
        %v4778 = vpop.f32.mrb[0].mxu0
        %4779 = vmatprep.mubr.bf16.mxu0 0
        %4780 = vmatmul.mubr.bf16.gmra.mrb[0].mxu0 %v2778
        %v4781 = vpop.f32.mrb[0].mxu0
        %v4782 = vadd.f32 %v766, %v4781
        %v4783 = vpop.f32.mrb[0].mxu0
        %v4784 = vpop.f32.mrb[0].mxu0
        %v4785 = vadd.f32 %v766, %v4784
        %v4786 = vpop.f32.mrb[0].mxu0
        %4787 = vmatprep.mubr.bf16.mxu0 0
        %4788 = vmatmul.mubr.bf16.gmra.mrb[0].mxu0 %v2781
        %v4789 = vpop.f32.mrb[0].mxu0
        %v4790 = vadd.f32 %v766, %v4789
        %v4791 = vpop.f32.mrb[0].mxu0
        %v4792 = vpop.f32.mrb[0].mxu0
        %v4793 = vadd.f32 %v766, %v4792
        %v4794 = vpop.f32.mrb[0].mxu0
        %4795 = vmatprep.mubr.bf16.mxu0 0
        %4796 = vmatmul.mubr.bf16.gmra.mrb[0].mxu0 %v2784
        %v4797 = vpop.f32.mrb[0].mxu0
        %v4798 = vadd.f32 %v766, %v4797
        %v4799 = vpop.f32.mrb[0].mxu0
        %v4800 = vpop.f32.mrb[0].mxu0
        %v4801 = vadd.f32 %v766, %v4800
        %v4802 = vpop.f32.mrb[0].mxu0
        %4803 = vmatprep.mubr.bf16.mxu0 0
        %4804 = vmatmul.mubr.bf16.gmra.mrb[0].mxu0 %v2787
        %v4805 = vpop.f32.mrb[0].mxu0
        %v4806 = vadd.f32 %v766, %v4805
        %v4807 = vpop.f32.mrb[0].mxu0
        %v4808 = vpop.f32.mrb[0].mxu0
        %v4809 = vadd.f32 %v766, %v4808
        %v4810 = vpop.f32.mrb[0].mxu0
        %4811 = vmatprep.mubr.bf16.mxu0 0
        %4812 = vmatmul.mubr.bf16.gmra.mrb[0].mxu0 %v2790
        %v4813 = vpop.f32.mrb[0].mxu0
        %v4814 = vadd.f32 %v766, %v4813
        %v4815 = vpop.f32.mrb[0].mxu0
        %v4816 = vpop.f32.mrb[0].mxu0
        %v4817 = vadd.f32 %v766, %v4816
        %v4818 = vpop.f32.mrb[0].mxu0
        %4819 = vmatprep.mubr.bf16.mxu0 0
        %4820 = vmatmul.mubr.bf16.gmra.mrb[0].mxu0 %v2793
        %v4821 = vpop.f32.mrb[0].mxu0
        %v4822 = vadd.f32 %v766, %v4821
        %v4823 = vpop.f32.mrb[0].mxu0
        %v4824 = vpop.f32.mrb[0].mxu0
        %v4825 = vadd.f32 %v766, %v4824
        %v4826 = vpop.f32.mrb[0].mxu0
        %4827 = vmatprep.mubr.bf16.mxu0 0
        %4828 = vmatmul.mubr.bf16.gmra.mrb[0].mxu0 %v2796
        %v4829 = vpop.f32.mrb[0].mxu0
        %v4830 = vadd.f32 %v766, %v4829
        %v4831 = vpop.f32.mrb[0].mxu0
        %v4832 = vpop.f32.mrb[0].mxu0
        %v4833 = vadd.f32 %v766, %v4832
        %v4834 = vpop.f32.mrb[0].mxu0
        %4835 = vmatprep.mubr.bf16.mxu0 0
        %4836 = vmatmul.mubr.bf16.gmra.mrb[0].mxu0 %v2799
        %v4837 = vpop.f32.mrb[0].mxu0
        %v4838 = vadd.f32 %v766, %v4837
        %v4839 = vpop.f32.mrb[0].mxu0
        %v4840 = vpop.f32.mrb[0].mxu0
        %v4841 = vadd.f32 %v766, %v4840
        %v4842 = vpop.f32.mrb[0].mxu0
        %4843 = vmatprep.mubr.bf16.mxu0 0
        %4844 = vmatmul.mubr.bf16.gmra.mrb[0].mxu0 %v2802
        %v4845 = vpop.f32.mrb[0].mxu0
        %v4846 = vadd.f32 %v766, %v4845
        %v4847 = vpop.f32.mrb[0].mxu0
        %v4848 = vpop.f32.mrb[0].mxu0
        %v4849 = vadd.f32 %v766, %v4848
        %v4850 = vpop.f32.mrb[0].mxu0
        %4851 = vmatprep.mubr.bf16.mxu0 0
        %4852 = vmatmul.mubr.bf16.gmra.mrb[0].mxu0 %v2805
        %v4853 = vpop.f32.mrb[0].mxu0
        %v4854 = vadd.f32 %v766, %v4853
        %v4855 = vpop.f32.mrb[0].mxu0
        %v4856 = vpop.f32.mrb[0].mxu0
        %v4857 = vadd.f32 %v766, %v4856
        %v4858 = vpop.f32.mrb[0].mxu0
        %4859 = vmatprep.mubr.bf16.mxu0 0
        %4860 = vmatmul.mubr.bf16.gmra.mrb[0].mxu0 %v2808
        %v4861 = vpop.f32.mrb[0].mxu0
        %v4862 = vadd.f32 %v766, %v4861
        %v4863 = vpop.f32.mrb[0].mxu0
        %v4864 = vpop.f32.mrb[0].mxu0
        %v4865 = vadd.f32 %v766, %v4864
        %v4866 = vpop.f32.mrb[0].mxu0
        %4867 = vmatprep.mubr.bf16.mxu0 0
        %4868 = vmatmul.mubr.bf16.gmra.mrb[0].mxu0 %v2811
        %v4869 = vpop.f32.mrb[0].mxu0
        %v4870 = vadd.f32 %v766, %v4869
        %v4871 = vpop.f32.mrb[0].mxu0
        %v4872 = vpop.f32.mrb[0].mxu0
        %v4873 = vadd.f32 %v766, %v4872
        %v4874 = vpop.f32.mrb[0].mxu0
        %4875 = vmatprep.mubr.bf16.mxu0 0
        %4876 = vmatmul.mubr.bf16.gmra.mrb[0].mxu0 %v2814
        %v4877 = vpop.f32.mrb[0].mxu0
        %v4878 = vadd.f32 %v766, %v4877
        %v4879 = vpop.f32.mrb[0].mxu0
        %v4880 = vpop.f32.mrb[0].mxu0
        %v4881 = vadd.f32 %v766, %v4880
        %v4882 = vpop.f32.mrb[0].mxu0
        %4883 = vmatprep.mubr.bf16.mxu0 0
        %4884 = vmatmul.mubr.bf16.gmra.mrb[0].mxu0 %v2817
        %v4885 = vpop.f32.mrb[0].mxu0
        %v4886 = vadd.f32 %v766, %v4885
        %v4887 = vpop.f32.mrb[0].mxu0
        %v4888 = vpop.f32.mrb[0].mxu0
        %v4889 = vadd.f32 %v766, %v4888
        %v4890 = vpop.f32.mrb[0].mxu0
        %4891 = vmatprep.mubr.bf16.mxu0 0
        %4892 = vmatmul.mubr.bf16.gmra.mrb[0].mxu0 %v2820
        %v4893 = vpop.f32.mrb[0].mxu0
        %v4894 = vadd.f32 %v766, %v4893
        %v4895 = vpop.f32.mrb[0].mxu0
        %v4896 = vpop.f32.mrb[0].mxu0
        %v4897 = vadd.f32 %v766, %v4896
        %v4898 = vpop.f32.mrb[0].mxu0
        %4899 = vmatprep.mubr.bf16.mxu0 0
        %4900 = vmatmul.mubr.bf16.gmra.mrb[0].mxu0 %v2823
        %v4901 = vpop.f32.mrb[0].mxu0
        %v4902 = vadd.f32 %v766, %v4901
        %v4903 = vpop.f32.mrb[0].mxu0
        %v4904 = vpop.f32.mrb[0].mxu0
        %v4905 = vadd.f32 %v766, %v4904
        %v4906 = vpop.f32.mrb[0].mxu0
        %4907 = vmatprep.mubr.bf16.mxu0 0
        %4908 = vmatmul.mubr.bf16.gmra.mrb[0].mxu0 %v2826
        %v4909 = vpop.f32.mrb[0].mxu0
        %v4910 = vadd.f32 %v766, %v4909
        %v4911 = vpop.f32.mrb[0].mxu0
        %v4912 = vpop.f32.mrb[0].mxu0
        %v4913 = vadd.f32 %v766, %v4912
        %v4914 = vpop.f32.mrb[0].mxu0
        %4915 = vdwg.mxu0
        %v4916 = vmax.f32 %v2870, 0.0
        %v4917 = vmax.f32 %v2873, 0.0
        %v4918 = vmax.f32 %v2878, 0.0
        %v4919 = vmax.f32 %v2881, 0.0
        %v4920 = vmax.f32 %v2886, 0.0
        %v4921 = vmax.f32 %v2889, 0.0
        %v4922 = vmax.f32 %v2894, 0.0
        %v4923 = vmax.f32 %v2897, 0.0
        %v4924 = vmax.f32 %v2902, 0.0
        %v4925 = vmax.f32 %v2905, 0.0
        %v4926 = vmax.f32 %v2910, 0.0
        %v4927 = vmax.f32 %v2913, 0.0
        %v4928 = vmax.f32 %v2918, 0.0
        %v4929 = vmax.f32 %v2921, 0.0
        %v4930 = vmax.f32 %v2926, 0.0
        %v4931 = vmax.f32 %v2929, 0.0
        %v4932 = vmax.f32 %v2934, 0.0
        %v4933 = vmax.f32 %v2937, 0.0
        %v4934 = vmax.f32 %v2942, 0.0
        %v4935 = vmax.f32 %v2945, 0.0
        %v4936 = vmax.f32 %v2950, 0.0
        %v4937 = vmax.f32 %v2953, 0.0
        %v4938 = vmax.f32 %v2958, 0.0
        %v4939 = vmax.f32 %v2961, 0.0
        %v4940 = vmax.f32 %v2966, 0.0
        %v4941 = vmax.f32 %v2969, 0.0
        %v4942 = vmax.f32 %v2974, 0.0
        %v4943 = vmax.f32 %v2977, 0.0
        %v4944 = vmax.f32 %v2982, 0.0
        %v4945 = vmax.f32 %v2985, 0.0
        %v4946 = vmax.f32 %v2990, 0.0
        %v4947 = vmax.f32 %v2993, 0.0
        %v4948 = vmax.f32 %v2998, 0.0
        %v4949 = vmax.f32 %v3001, 0.0
        %v4950 = vmax.f32 %v3006, 0.0
        %v4951 = vmax.f32 %v3009, 0.0
        %v4952 = vmax.f32 %v3014, 0.0
        %v4953 = vmax.f32 %v3017, 0.0
        %v4954 = vmax.f32 %v3022, 0.0
        %v4955 = vmax.f32 %v3025, 0.0
        %v4956 = vmax.f32 %v3030, 0.0
        %v4957 = vmax.f32 %v3033, 0.0
        %v4958 = vmax.f32 %v3038, 0.0
        %v4959 = vmax.f32 %v3041, 0.0
        %v4960 = vmax.f32 %v3046, 0.0
        %v4961 = vmax.f32 %v3049, 0.0
        %v4962 = vmax.f32 %v3054, 0.0
        %v4963 = vmax.f32 %v3057, 0.0
        %v4964 = vmax.f32 %v3062, 0.0
        %v4965 = vmax.f32 %v3065, 0.0
        %v4966 = vmax.f32 %v3070, 0.0
        %v4967 = vmax.f32 %v3073, 0.0
        %v4968 = vmax.f32 %v3078, 0.0
        %v4969 = vmax.f32 %v3081, 0.0
        %v4970 = vmax.f32 %v3086, 0.0
        %v4971 = vmax.f32 %v3089, 0.0
        %v4972 = vmax.f32 %v3094, 0.0
        %v4973 = vmax.f32 %v3097, 0.0
        %v4974 = vmax.f32 %v3102, 0.0
        %v4975 = vmax.f32 %v3105, 0.0
        %v4976 = vmax.f32 %v3110, 0.0
        %v4977 = vmax.f32 %v3113, 0.0
        %v4978 = vmax.f32 %v3118, 0.0
        %v4979 = vmax.f32 %v3121, 0.0
        %v4980 = vmax.f32 %v3126, 0.0
        %v4981 = vmax.f32 %v3129, 0.0
        %v4982 = vmax.f32 %v3134, 0.0
        %v4983 = vmax.f32 %v3137, 0.0
        %v4984 = vmax.f32 %v3142, 0.0
        %v4985 = vmax.f32 %v3145, 0.0
        %v4986 = vmax.f32 %v3150, 0.0
        %v4987 = vmax.f32 %v3153, 0.0
        %v4988 = vmax.f32 %v3158, 0.0
        %v4989 = vmax.f32 %v3161, 0.0
        %v4990 = vmax.f32 %v3166, 0.0
        %v4991 = vmax.f32 %v3169, 0.0
        %v4992 = vmax.f32 %v3174, 0.0
        %v4993 = vmax.f32 %v3177, 0.0
        %v4994 = vmax.f32 %v3182, 0.0
        %v4995 = vmax.f32 %v3185, 0.0
        %v4996 = vmax.f32 %v3190, 0.0
        %v4997 = vmax.f32 %v3193, 0.0
        %v4998 = vmax.f32 %v3198, 0.0
        %v4999 = vmax.f32 %v3201, 0.0
        %v5000 = vmax.f32 %v3206, 0.0
        %v5001 = vmax.f32 %v3209, 0.0
        %v5002 = vmax.f32 %v3214, 0.0
        %v5003 = vmax.f32 %v3217, 0.0
        %v5004 = vmax.f32 %v3222, 0.0
        %v5005 = vmax.f32 %v3225, 0.0
        %v5006 = vmax.f32 %v3230, 0.0
        %v5007 = vmax.f32 %v3233, 0.0
        %v5008 = vmax.f32 %v3238, 0.0
        %v5009 = vmax.f32 %v3241, 0.0
        %v5010 = vmax.f32 %v3246, 0.0
        %v5011 = vmax.f32 %v3249, 0.0
        %v5012 = vmax.f32 %v3254, 0.0
        %v5013 = vmax.f32 %v3257, 0.0
        %v5014 = vmax.f32 %v3262, 0.0
        %v5015 = vmax.f32 %v3265, 0.0
        %v5016 = vmax.f32 %v3270, 0.0
        %v5017 = vmax.f32 %v3273, 0.0
        %v5018 = vmax.f32 %v3278, 0.0
        %v5019 = vmax.f32 %v3281, 0.0
        %v5020 = vmax.f32 %v3286, 0.0
        %v5021 = vmax.f32 %v3289, 0.0
        %v5022 = vmax.f32 %v3294, 0.0
        %v5023 = vmax.f32 %v3297, 0.0
        %v5024 = vmax.f32 %v3302, 0.0
        %v5025 = vmax.f32 %v3305, 0.0
        %v5026 = vmax.f32 %v3310, 0.0
        %v5027 = vmax.f32 %v3313, 0.0
        %v5028 = vmax.f32 %v3318, 0.0
        %v5029 = vmax.f32 %v3321, 0.0
        %v5030 = vmax.f32 %v3326, 0.0
        %v5031 = vmax.f32 %v3329, 0.0
        %v5032 = vmax.f32 %v3334, 0.0
        %v5033 = vmax.f32 %v3337, 0.0
        %v5034 = vmax.f32 %v3342, 0.0
        %v5035 = vmax.f32 %v3345, 0.0
        %v5036 = vmax.f32 %v3350, 0.0
        %v5037 = vmax.f32 %v3353, 0.0
        %v5038 = vmax.f32 %v3358, 0.0
        %v5039 = vmax.f32 %v3361, 0.0
        %v5040 = vmax.f32 %v3366, 0.0
        %v5041 = vmax.f32 %v3369, 0.0
        %v5042 = vmax.f32 %v3374, 0.0
        %v5043 = vmax.f32 %v3377, 0.0
        %v5044 = vmax.f32 %v3382, 0.0
        %v5045 = vmax.f32 %v3385, 0.0
        %v5046 = vmax.f32 %v3390, 0.0
        %v5047 = vmax.f32 %v3393, 0.0
        %v5048 = vmax.f32 %v3398, 0.0
        %v5049 = vmax.f32 %v3401, 0.0
        %v5050 = vmax.f32 %v3406, 0.0
        %v5051 = vmax.f32 %v3409, 0.0
        %v5052 = vmax.f32 %v3414, 0.0
        %v5053 = vmax.f32 %v3417, 0.0
        %v5054 = vmax.f32 %v3422, 0.0
        %v5055 = vmax.f32 %v3425, 0.0
        %v5056 = vmax.f32 %v3430, 0.0
        %v5057 = vmax.f32 %v3433, 0.0
        %v5058 = vmax.f32 %v3438, 0.0
        %v5059 = vmax.f32 %v3441, 0.0
        %v5060 = vmax.f32 %v3446, 0.0
        %v5061 = vmax.f32 %v3449, 0.0
        %v5062 = vmax.f32 %v3454, 0.0
        %v5063 = vmax.f32 %v3457, 0.0
        %v5064 = vmax.f32 %v3462, 0.0
        %v5065 = vmax.f32 %v3465, 0.0
        %v5066 = vmax.f32 %v3470, 0.0
        %v5067 = vmax.f32 %v3473, 0.0
        %v5068 = vmax.f32 %v3478, 0.0
        %v5069 = vmax.f32 %v3481, 0.0
        %v5070 = vmax.f32 %v3486, 0.0
        %v5071 = vmax.f32 %v3489, 0.0
        %v5072 = vmax.f32 %v3494, 0.0
        %v5073 = vmax.f32 %v3497, 0.0
        %v5074 = vmax.f32 %v3502, 0.0
        %v5075 = vmax.f32 %v3505, 0.0
        %v5076 = vmax.f32 %v3510, 0.0
        %v5077 = vmax.f32 %v3513, 0.0
        %v5078 = vmax.f32 %v3518, 0.0
        %v5079 = vmax.f32 %v3521, 0.0
        %v5080 = vmax.f32 %v3526, 0.0
        %v5081 = vmax.f32 %v3529, 0.0
        %v5082 = vmax.f32 %v3534, 0.0
        %v5083 = vmax.f32 %v3537, 0.0
        %v5084 = vmax.f32 %v3542, 0.0
        %v5085 = vmax.f32 %v3545, 0.0
        %v5086 = vmax.f32 %v3550, 0.0
        %v5087 = vmax.f32 %v3553, 0.0
        %v5088 = vmax.f32 %v3558, 0.0
        %v5089 = vmax.f32 %v3561, 0.0
        %v5090 = vmax.f32 %v3566, 0.0
        %v5091 = vmax.f32 %v3569, 0.0
        %v5092 = vmax.f32 %v3574, 0.0
        %v5093 = vmax.f32 %v3577, 0.0
        %v5094 = vmax.f32 %v3582, 0.0
        %v5095 = vmax.f32 %v3585, 0.0
        %v5096 = vmax.f32 %v3590, 0.0
        %v5097 = vmax.f32 %v3593, 0.0
        %v5098 = vmax.f32 %v3598, 0.0
        %v5099 = vmax.f32 %v3601, 0.0
        %v5100 = vmax.f32 %v3606, 0.0
        %v5101 = vmax.f32 %v3609, 0.0
        %v5102 = vmax.f32 %v3614, 0.0
        %v5103 = vmax.f32 %v3617, 0.0
        %v5104 = vmax.f32 %v3622, 0.0
        %v5105 = vmax.f32 %v3625, 0.0
        %v5106 = vmax.f32 %v3630, 0.0
        %v5107 = vmax.f32 %v3633, 0.0
        %v5108 = vmax.f32 %v3638, 0.0
        %v5109 = vmax.f32 %v3641, 0.0
        %v5110 = vmax.f32 %v3646, 0.0
        %v5111 = vmax.f32 %v3649, 0.0
        %v5112 = vmax.f32 %v3654, 0.0
        %v5113 = vmax.f32 %v3657, 0.0
        %v5114 = vmax.f32 %v3662, 0.0
        %v5115 = vmax.f32 %v3665, 0.0
        %v5116 = vmax.f32 %v3670, 0.0
        %v5117 = vmax.f32 %v3673, 0.0
        %v5118 = vmax.f32 %v3678, 0.0
        %v5119 = vmax.f32 %v3681, 0.0
        %v5120 = vmax.f32 %v3686, 0.0
        %v5121 = vmax.f32 %v3689, 0.0
        %v5122 = vmax.f32 %v3694, 0.0
        %v5123 = vmax.f32 %v3697, 0.0
        %v5124 = vmax.f32 %v3702, 0.0
        %v5125 = vmax.f32 %v3705, 0.0
        %v5126 = vmax.f32 %v3710, 0.0
        %v5127 = vmax.f32 %v3713, 0.0
        %v5128 = vmax.f32 %v3718, 0.0
        %v5129 = vmax.f32 %v3721, 0.0
        %v5130 = vmax.f32 %v3726, 0.0
        %v5131 = vmax.f32 %v3729, 0.0
        %v5132 = vmax.f32 %v3734, 0.0
        %v5133 = vmax.f32 %v3737, 0.0
        %v5134 = vmax.f32 %v3742, 0.0
        %v5135 = vmax.f32 %v3745, 0.0
        %v5136 = vmax.f32 %v3750, 0.0
        %v5137 = vmax.f32 %v3753, 0.0
        %v5138 = vmax.f32 %v3758, 0.0
        %v5139 = vmax.f32 %v3761, 0.0
        %v5140 = vmax.f32 %v3766, 0.0
        %v5141 = vmax.f32 %v3769, 0.0
        %v5142 = vmax.f32 %v3774, 0.0
        %v5143 = vmax.f32 %v3777, 0.0
        %v5144 = vmax.f32 %v3782, 0.0
        %v5145 = vmax.f32 %v3785, 0.0
        %v5146 = vmax.f32 %v3790, 0.0
        %v5147 = vmax.f32 %v3793, 0.0
        %v5148 = vmax.f32 %v3798, 0.0
        %v5149 = vmax.f32 %v3801, 0.0
        %v5150 = vmax.f32 %v3806, 0.0
        %v5151 = vmax.f32 %v3809, 0.0
        %v5152 = vmax.f32 %v3814, 0.0
        %v5153 = vmax.f32 %v3817, 0.0
        %v5154 = vmax.f32 %v3822, 0.0
        %v5155 = vmax.f32 %v3825, 0.0
        %v5156 = vmax.f32 %v3830, 0.0
        %v5157 = vmax.f32 %v3833, 0.0
        %v5158 = vmax.f32 %v3838, 0.0
        %v5159 = vmax.f32 %v3841, 0.0
        %v5160 = vmax.f32 %v3846, 0.0
        %v5161 = vmax.f32 %v3849, 0.0
        %v5162 = vmax.f32 %v3854, 0.0
        %v5163 = vmax.f32 %v3857, 0.0
        %v5164 = vmax.f32 %v3862, 0.0
        %v5165 = vmax.f32 %v3865, 0.0
        %v5166 = vmax.f32 %v3870, 0.0
        %v5167 = vmax.f32 %v3873, 0.0
        %v5168 = vmax.f32 %v3878, 0.0
        %v5169 = vmax.f32 %v3881, 0.0
        %v5170 = vmax.f32 %v3886, 0.0
        %v5171 = vmax.f32 %v3889, 0.0
        %v5172 = vmax.f32 %v3894, 0.0
        %v5173 = vmax.f32 %v3897, 0.0
        %v5174 = vmax.f32 %v3902, 0.0
        %v5175 = vmax.f32 %v3905, 0.0
        %v5176 = vmax.f32 %v3910, 0.0
        %v5177 = vmax.f32 %v3913, 0.0
        %v5178 = vmax.f32 %v3918, 0.0
        %v5179 = vmax.f32 %v3921, 0.0
        %v5180 = vmax.f32 %v3926, 0.0
        %v5181 = vmax.f32 %v3929, 0.0
        %v5182 = vmax.f32 %v3934, 0.0
        %v5183 = vmax.f32 %v3937, 0.0
        %v5184 = vmax.f32 %v3942, 0.0
        %v5185 = vmax.f32 %v3945, 0.0
        %v5186 = vmax.f32 %v3950, 0.0
        %v5187 = vmax.f32 %v3953, 0.0
        %v5188 = vmax.f32 %v3958, 0.0
        %v5189 = vmax.f32 %v3961, 0.0
        %v5190 = vmax.f32 %v3966, 0.0
        %v5191 = vmax.f32 %v3969, 0.0
        %v5192 = vmax.f32 %v3974, 0.0
        %v5193 = vmax.f32 %v3977, 0.0
        %v5194 = vmax.f32 %v3982, 0.0
        %v5195 = vmax.f32 %v3985, 0.0
        %v5196 = vmax.f32 %v3990, 0.0
        %v5197 = vmax.f32 %v3993, 0.0
        %v5198 = vmax.f32 %v3998, 0.0
        %v5199 = vmax.f32 %v4001, 0.0
        %v5200 = vmax.f32 %v4006, 0.0
        %v5201 = vmax.f32 %v4009, 0.0
        %v5202 = vmax.f32 %v4014, 0.0
        %v5203 = vmax.f32 %v4017, 0.0
        %v5204 = vmax.f32 %v4022, 0.0
        %v5205 = vmax.f32 %v4025, 0.0
        %v5206 = vmax.f32 %v4030, 0.0
        %v5207 = vmax.f32 %v4033, 0.0
        %v5208 = vmax.f32 %v4038, 0.0
        %v5209 = vmax.f32 %v4041, 0.0
        %v5210 = vmax.f32 %v4046, 0.0
        %v5211 = vmax.f32 %v4049, 0.0
        %v5212 = vmax.f32 %v4054, 0.0
        %v5213 = vmax.f32 %v4057, 0.0
        %v5214 = vmax.f32 %v4062, 0.0
        %v5215 = vmax.f32 %v4065, 0.0
        %v5216 = vmax.f32 %v4070, 0.0
        %v5217 = vmax.f32 %v4073, 0.0
        %v5218 = vmax.f32 %v4078, 0.0
        %v5219 = vmax.f32 %v4081, 0.0
        %v5220 = vmax.f32 %v4086, 0.0
        %v5221 = vmax.f32 %v4089, 0.0
        %v5222 = vmax.f32 %v4094, 0.0
        %v5223 = vmax.f32 %v4097, 0.0
        %v5224 = vmax.f32 %v4102, 0.0
        %v5225 = vmax.f32 %v4105, 0.0
        %v5226 = vmax.f32 %v4110, 0.0
        %v5227 = vmax.f32 %v4113, 0.0
        %v5228 = vmax.f32 %v4118, 0.0
        %v5229 = vmax.f32 %v4121, 0.0
        %v5230 = vmax.f32 %v4126, 0.0
        %v5231 = vmax.f32 %v4129, 0.0
        %v5232 = vmax.f32 %v4134, 0.0
        %v5233 = vmax.f32 %v4137, 0.0
        %v5234 = vmax.f32 %v4142, 0.0
        %v5235 = vmax.f32 %v4145, 0.0
        %v5236 = vmax.f32 %v4150, 0.0
        %v5237 = vmax.f32 %v4153, 0.0
        %v5238 = vmax.f32 %v4158, 0.0
        %v5239 = vmax.f32 %v4161, 0.0
        %v5240 = vmax.f32 %v4166, 0.0
        %v5241 = vmax.f32 %v4169, 0.0
        %v5242 = vmax.f32 %v4174, 0.0
        %v5243 = vmax.f32 %v4177, 0.0
        %v5244 = vmax.f32 %v4182, 0.0
        %v5245 = vmax.f32 %v4185, 0.0
        %v5246 = vmax.f32 %v4190, 0.0
        %v5247 = vmax.f32 %v4193, 0.0
        %v5248 = vmax.f32 %v4198, 0.0
        %v5249 = vmax.f32 %v4201, 0.0
        %v5250 = vmax.f32 %v4206, 0.0
        %v5251 = vmax.f32 %v4209, 0.0
        %v5252 = vmax.f32 %v4214, 0.0
        %v5253 = vmax.f32 %v4217, 0.0
        %v5254 = vmax.f32 %v4222, 0.0
        %v5255 = vmax.f32 %v4225, 0.0
        %v5256 = vmax.f32 %v4230, 0.0
        %v5257 = vmax.f32 %v4233, 0.0
        %v5258 = vmax.f32 %v4238, 0.0
        %v5259 = vmax.f32 %v4241, 0.0
        %v5260 = vmax.f32 %v4246, 0.0
        %v5261 = vmax.f32 %v4249, 0.0
        %v5262 = vmax.f32 %v4254, 0.0
        %v5263 = vmax.f32 %v4257, 0.0
        %v5264 = vmax.f32 %v4262, 0.0
        %v5265 = vmax.f32 %v4265, 0.0
        %v5266 = vmax.f32 %v4270, 0.0
        %v5267 = vmax.f32 %v4273, 0.0
        %v5268 = vmax.f32 %v4278, 0.0
        %v5269 = vmax.f32 %v4281, 0.0
        %v5270 = vmax.f32 %v4286, 0.0
        %v5271 = vmax.f32 %v4289, 0.0
        %v5272 = vmax.f32 %v4294, 0.0
        %v5273 = vmax.f32 %v4297, 0.0
        %v5274 = vmax.f32 %v4302, 0.0
        %v5275 = vmax.f32 %v4305, 0.0
        %v5276 = vmax.f32 %v4310, 0.0
        %v5277 = vmax.f32 %v4313, 0.0
        %v5278 = vmax.f32 %v4318, 0.0
        %v5279 = vmax.f32 %v4321, 0.0
        %v5280 = vmax.f32 %v4326, 0.0
        %v5281 = vmax.f32 %v4329, 0.0
        %v5282 = vmax.f32 %v4334, 0.0
        %v5283 = vmax.f32 %v4337, 0.0
        %v5284 = vmax.f32 %v4342, 0.0
        %v5285 = vmax.f32 %v4345, 0.0
        %v5286 = vmax.f32 %v4350, 0.0
        %v5287 = vmax.f32 %v4353, 0.0
        %v5288 = vmax.f32 %v4358, 0.0
        %v5289 = vmax.f32 %v4361, 0.0
        %v5290 = vmax.f32 %v4366, 0.0
        %v5291 = vmax.f32 %v4369, 0.0
        %v5292 = vmax.f32 %v4374, 0.0
        %v5293 = vmax.f32 %v4377, 0.0
        %v5294 = vmax.f32 %v4382, 0.0
        %v5295 = vmax.f32 %v4385, 0.0
        %v5296 = vmax.f32 %v4390, 0.0
        %v5297 = vmax.f32 %v4393, 0.0
        %v5298 = vmax.f32 %v4398, 0.0
        %v5299 = vmax.f32 %v4401, 0.0
        %v5300 = vmax.f32 %v4406, 0.0
        %v5301 = vmax.f32 %v4409, 0.0
        %v5302 = vmax.f32 %v4414, 0.0
        %v5303 = vmax.f32 %v4417, 0.0
        %v5304 = vmax.f32 %v4422, 0.0
        %v5305 = vmax.f32 %v4425, 0.0
        %v5306 = vmax.f32 %v4430, 0.0
        %v5307 = vmax.f32 %v4433, 0.0
        %v5308 = vmax.f32 %v4438, 0.0
        %v5309 = vmax.f32 %v4441, 0.0
        %v5310 = vmax.f32 %v4446, 0.0
        %v5311 = vmax.f32 %v4449, 0.0
        %v5312 = vmax.f32 %v4454, 0.0
        %v5313 = vmax.f32 %v4457, 0.0
        %v5314 = vmax.f32 %v4462, 0.0
        %v5315 = vmax.f32 %v4465, 0.0
        %v5316 = vmax.f32 %v4470, 0.0
        %v5317 = vmax.f32 %v4473, 0.0
        %v5318 = vmax.f32 %v4478, 0.0
        %v5319 = vmax.f32 %v4481, 0.0
        %v5320 = vmax.f32 %v4486, 0.0
        %v5321 = vmax.f32 %v4489, 0.0
        %v5322 = vmax.f32 %v4494, 0.0
        %v5323 = vmax.f32 %v4497, 0.0
        %v5324 = vmax.f32 %v4502, 0.0
        %v5325 = vmax.f32 %v4505, 0.0
        %v5326 = vmax.f32 %v4510, 0.0
        %v5327 = vmax.f32 %v4513, 0.0
        %v5328 = vmax.f32 %v4518, 0.0
        %v5329 = vmax.f32 %v4521, 0.0
        %v5330 = vmax.f32 %v4526, 0.0
        %v5331 = vmax.f32 %v4529, 0.0
        %v5332 = vmax.f32 %v4534, 0.0
        %v5333 = vmax.f32 %v4537, 0.0
        %v5334 = vmax.f32 %v4542, 0.0
        %v5335 = vmax.f32 %v4545, 0.0
        %v5336 = vmax.f32 %v4550, 0.0
        %v5337 = vmax.f32 %v4553, 0.0
        %v5338 = vmax.f32 %v4558, 0.0
        %v5339 = vmax.f32 %v4561, 0.0
        %v5340 = vmax.f32 %v4566, 0.0
        %v5341 = vmax.f32 %v4569, 0.0
        %v5342 = vmax.f32 %v4574, 0.0
        %v5343 = vmax.f32 %v4577, 0.0
        %v5344 = vmax.f32 %v4582, 0.0
        %v5345 = vmax.f32 %v4585, 0.0
        %v5346 = vmax.f32 %v4590, 0.0
        %v5347 = vmax.f32 %v4593, 0.0
        %v5348 = vmax.f32 %v4598, 0.0
        %v5349 = vmax.f32 %v4601, 0.0
        %v5350 = vmax.f32 %v4606, 0.0
        %v5351 = vmax.f32 %v4609, 0.0
        %v5352 = vmax.f32 %v4614, 0.0
        %v5353 = vmax.f32 %v4617, 0.0
        %v5354 = vmax.f32 %v4622, 0.0
        %v5355 = vmax.f32 %v4625, 0.0
        %v5356 = vmax.f32 %v4630, 0.0
        %v5357 = vmax.f32 %v4633, 0.0
        %v5358 = vmax.f32 %v4638, 0.0
        %v5359 = vmax.f32 %v4641, 0.0
        %v5360 = vmax.f32 %v4646, 0.0
        %v5361 = vmax.f32 %v4649, 0.0
        %v5362 = vmax.f32 %v4654, 0.0
        %v5363 = vmax.f32 %v4657, 0.0
        %v5364 = vmax.f32 %v4662, 0.0
        %v5365 = vmax.f32 %v4665, 0.0
        %v5366 = vmax.f32 %v4670, 0.0
        %v5367 = vmax.f32 %v4673, 0.0
        %v5368 = vmax.f32 %v4678, 0.0
        %v5369 = vmax.f32 %v4681, 0.0
        %v5370 = vmax.f32 %v4686, 0.0
        %v5371 = vmax.f32 %v4689, 0.0
        %v5372 = vmax.f32 %v4694, 0.0
        %v5373 = vmax.f32 %v4697, 0.0
        %v5374 = vmax.f32 %v4702, 0.0
        %v5375 = vmax.f32 %v4705, 0.0
        %v5376 = vmax.f32 %v4710, 0.0
        %v5377 = vmax.f32 %v4713, 0.0
        %v5378 = vmax.f32 %v4718, 0.0
        %v5379 = vmax.f32 %v4721, 0.0
        %v5380 = vmax.f32 %v4726, 0.0
        %v5381 = vmax.f32 %v4729, 0.0
        %v5382 = vmax.f32 %v4734, 0.0
        %v5383 = vmax.f32 %v4737, 0.0
        %v5384 = vmax.f32 %v4742, 0.0
        %v5385 = vmax.f32 %v4745, 0.0
        %v5386 = vmax.f32 %v4750, 0.0
        %v5387 = vmax.f32 %v4753, 0.0
        %v5388 = vmax.f32 %v4758, 0.0
        %v5389 = vmax.f32 %v4761, 0.0
        %v5390 = vmax.f32 %v4766, 0.0
        %v5391 = vmax.f32 %v4769, 0.0
        %v5392 = vmax.f32 %v4774, 0.0
        %v5393 = vmax.f32 %v4777, 0.0
        %v5394 = vmax.f32 %v4782, 0.0
        %v5395 = vmax.f32 %v4785, 0.0
        %v5396 = vmax.f32 %v4790, 0.0
        %v5397 = vmax.f32 %v4793, 0.0
        %v5398 = vmax.f32 %v4798, 0.0
        %v5399 = vmax.f32 %v4801, 0.0
        %v5400 = vmax.f32 %v4806, 0.0
        %v5401 = vmax.f32 %v4809, 0.0
        %v5402 = vmax.f32 %v4814, 0.0
        %v5403 = vmax.f32 %v4817, 0.0
        %v5404 = vmax.f32 %v4822, 0.0
        %v5405 = vmax.f32 %v4825, 0.0
        %v5406 = vmax.f32 %v4830, 0.0
        %v5407 = vmax.f32 %v4833, 0.0
        %v5408 = vmax.f32 %v4838, 0.0
        %v5409 = vmax.f32 %v4841, 0.0
        %v5410 = vmax.f32 %v4846, 0.0
        %v5411 = vmax.f32 %v4849, 0.0
        %v5412 = vmax.f32 %v4854, 0.0
        %v5413 = vmax.f32 %v4857, 0.0
        %v5414 = vmax.f32 %v4862, 0.0
        %v5415 = vmax.f32 %v4865, 0.0
        %v5416 = vmax.f32 %v4870, 0.0
        %v5417 = vmax.f32 %v4873, 0.0
        %v5418 = vmax.f32 %v4878, 0.0
        %v5419 = vmax.f32 %v4881, 0.0
        %v5420 = vmax.f32 %v4886, 0.0
        %v5421 = vmax.f32 %v4889, 0.0
        %v5422 = vmax.f32 %v4894, 0.0
        %v5423 = vmax.f32 %v4897, 0.0
        %v5424 = vmax.f32 %v4902, 0.0
        %v5425 = vmax.f32 %v4905, 0.0
        %v5426 = vmax.f32 %v4910, 0.0
        %v5427 = vmax.f32 %v4913, 0.0
        %v5428 = vpack.c.bf16 %v4917, %v4916
        %v5429 = vpack.c.bf16 %v4919, %v4918
        %v5430 = vpack.c.bf16 %v4921, %v4920
        %v5431 = vpack.c.bf16 %v4923, %v4922
        %v5432 = vpack.c.bf16 %v4925, %v4924
        %v5433 = vpack.c.bf16 %v4927, %v4926
        %v5434 = vpack.c.bf16 %v4929, %v4928
        %v5435 = vpack.c.bf16 %v4931, %v4930
        %v5436 = vpack.c.bf16 %v4933, %v4932
        %v5437 = vpack.c.bf16 %v4935, %v4934
        %v5438 = vpack.c.bf16 %v4937, %v4936
        %v5439 = vpack.c.bf16 %v4939, %v4938
        %v5440 = vpack.c.bf16 %v4941, %v4940
        %v5441 = vpack.c.bf16 %v4943, %v4942
        %v5442 = vpack.c.bf16 %v4945, %v4944
        %v5443 = vpack.c.bf16 %v4947, %v4946
        %v5444 = vpack.c.bf16 %v4949, %v4948
        %v5445 = vpack.c.bf16 %v4951, %v4950
        %v5446 = vpack.c.bf16 %v4953, %v4952
        %v5447 = vpack.c.bf16 %v4955, %v4954
        %v5448 = vpack.c.bf16 %v4957, %v4956
        %v5449 = vpack.c.bf16 %v4959, %v4958
        %v5450 = vpack.c.bf16 %v4961, %v4960
        %v5451 = vpack.c.bf16 %v4963, %v4962
        %v5452 = vpack.c.bf16 %v4965, %v4964
        %v5453 = vpack.c.bf16 %v4967, %v4966
        %v5454 = vpack.c.bf16 %v4969, %v4968
        %v5455 = vpack.c.bf16 %v4971, %v4970
        %v5456 = vpack.c.bf16 %v4973, %v4972
        %v5457 = vpack.c.bf16 %v4975, %v4974
        %v5458 = vpack.c.bf16 %v4977, %v4976
        %v5459 = vpack.c.bf16 %v4979, %v4978
        %v5460 = vpack.c.bf16 %v4981, %v4980
        %v5461 = vpack.c.bf16 %v4983, %v4982
        %v5462 = vpack.c.bf16 %v4985, %v4984
        %v5463 = vpack.c.bf16 %v4987, %v4986
        %v5464 = vpack.c.bf16 %v4989, %v4988
        %v5465 = vpack.c.bf16 %v4991, %v4990
        %v5466 = vpack.c.bf16 %v4993, %v4992
        %v5467 = vpack.c.bf16 %v4995, %v4994
        %v5468 = vpack.c.bf16 %v4997, %v4996
        %v5469 = vpack.c.bf16 %v4999, %v4998
        %v5470 = vpack.c.bf16 %v5001, %v5000
        %v5471 = vpack.c.bf16 %v5003, %v5002
        %v5472 = vpack.c.bf16 %v5005, %v5004
        %v5473 = vpack.c.bf16 %v5007, %v5006
        %v5474 = vpack.c.bf16 %v5009, %v5008
        %v5475 = vpack.c.bf16 %v5011, %v5010
        %v5476 = vpack.c.bf16 %v5013, %v5012
        %v5477 = vpack.c.bf16 %v5015, %v5014
        %v5478 = vpack.c.bf16 %v5017, %v5016
        %v5479 = vpack.c.bf16 %v5019, %v5018
        %v5480 = vpack.c.bf16 %v5021, %v5020
        %v5481 = vpack.c.bf16 %v5023, %v5022
        %v5482 = vpack.c.bf16 %v5025, %v5024
        %v5483 = vpack.c.bf16 %v5027, %v5026
        %v5484 = vpack.c.bf16 %v5029, %v5028
        %v5485 = vpack.c.bf16 %v5031, %v5030
        %v5486 = vpack.c.bf16 %v5033, %v5032
        %v5487 = vpack.c.bf16 %v5035, %v5034
        %v5488 = vpack.c.bf16 %v5037, %v5036
        %v5489 = vpack.c.bf16 %v5039, %v5038
        %v5490 = vpack.c.bf16 %v5041, %v5040
        %v5491 = vpack.c.bf16 %v5043, %v5042
        %v5492 = vpack.c.bf16 %v5045, %v5044
        %v5493 = vpack.c.bf16 %v5047, %v5046
        %v5494 = vpack.c.bf16 %v5049, %v5048
        %v5495 = vpack.c.bf16 %v5051, %v5050
        %v5496 = vpack.c.bf16 %v5053, %v5052
        %v5497 = vpack.c.bf16 %v5055, %v5054
        %v5498 = vpack.c.bf16 %v5057, %v5056
        %v5499 = vpack.c.bf16 %v5059, %v5058
        %v5500 = vpack.c.bf16 %v5061, %v5060
        %v5501 = vpack.c.bf16 %v5063, %v5062
        %v5502 = vpack.c.bf16 %v5065, %v5064
        %v5503 = vpack.c.bf16 %v5067, %v5066
        %v5504 = vpack.c.bf16 %v5069, %v5068
        %v5505 = vpack.c.bf16 %v5071, %v5070
        %v5506 = vpack.c.bf16 %v5073, %v5072
        %v5507 = vpack.c.bf16 %v5075, %v5074
        %v5508 = vpack.c.bf16 %v5077, %v5076
        %v5509 = vpack.c.bf16 %v5079, %v5078
        %v5510 = vpack.c.bf16 %v5081, %v5080
        %v5511 = vpack.c.bf16 %v5083, %v5082
        %v5512 = vpack.c.bf16 %v5085, %v5084
        %v5513 = vpack.c.bf16 %v5087, %v5086
        %v5514 = vpack.c.bf16 %v5089, %v5088
        %v5515 = vpack.c.bf16 %v5091, %v5090
        %v5516 = vpack.c.bf16 %v5093, %v5092
        %v5517 = vpack.c.bf16 %v5095, %v5094
        %v5518 = vpack.c.bf16 %v5097, %v5096
        %v5519 = vpack.c.bf16 %v5099, %v5098
        %v5520 = vpack.c.bf16 %v5101, %v5100
        %v5521 = vpack.c.bf16 %v5103, %v5102
        %v5522 = vpack.c.bf16 %v5105, %v5104
        %v5523 = vpack.c.bf16 %v5107, %v5106
        %v5524 = vpack.c.bf16 %v5109, %v5108
        %v5525 = vpack.c.bf16 %v5111, %v5110
        %v5526 = vpack.c.bf16 %v5113, %v5112
        %v5527 = vpack.c.bf16 %v5115, %v5114
        %v5528 = vpack.c.bf16 %v5117, %v5116
        %v5529 = vpack.c.bf16 %v5119, %v5118
        %v5530 = vpack.c.bf16 %v5121, %v5120
        %v5531 = vpack.c.bf16 %v5123, %v5122
        %v5532 = vpack.c.bf16 %v5125, %v5124
        %v5533 = vpack.c.bf16 %v5127, %v5126
        %v5534 = vpack.c.bf16 %v5129, %v5128
        %v5535 = vpack.c.bf16 %v5131, %v5130
        %v5536 = vpack.c.bf16 %v5133, %v5132
        %v5537 = vpack.c.bf16 %v5135, %v5134
        %v5538 = vpack.c.bf16 %v5137, %v5136
        %v5539 = vpack.c.bf16 %v5139, %v5138
        %v5540 = vpack.c.bf16 %v5141, %v5140
        %v5541 = vpack.c.bf16 %v5143, %v5142
        %v5542 = vpack.c.bf16 %v5145, %v5144
        %v5543 = vpack.c.bf16 %v5147, %v5146
        %v5544 = vpack.c.bf16 %v5149, %v5148
        %v5545 = vpack.c.bf16 %v5151, %v5150
        %v5546 = vpack.c.bf16 %v5153, %v5152
        %v5547 = vpack.c.bf16 %v5155, %v5154
        %v5548 = vpack.c.bf16 %v5157, %v5156
        %v5549 = vpack.c.bf16 %v5159, %v5158
        %v5550 = vpack.c.bf16 %v5161, %v5160
        %v5551 = vpack.c.bf16 %v5163, %v5162
        %v5552 = vpack.c.bf16 %v5165, %v5164
        %v5553 = vpack.c.bf16 %v5167, %v5166
        %v5554 = vpack.c.bf16 %v5169, %v5168
        %v5555 = vpack.c.bf16 %v5171, %v5170
        %v5556 = vpack.c.bf16 %v5173, %v5172
        %v5557 = vpack.c.bf16 %v5175, %v5174
        %v5558 = vpack.c.bf16 %v5177, %v5176
        %v5559 = vpack.c.bf16 %v5179, %v5178
        %v5560 = vpack.c.bf16 %v5181, %v5180
        %v5561 = vpack.c.bf16 %v5183, %v5182
        %v5562 = vpack.c.bf16 %v5185, %v5184
        %v5563 = vpack.c.bf16 %v5187, %v5186
        %v5564 = vpack.c.bf16 %v5189, %v5188
        %v5565 = vpack.c.bf16 %v5191, %v5190
        %v5566 = vpack.c.bf16 %v5193, %v5192
        %v5567 = vpack.c.bf16 %v5195, %v5194
        %v5568 = vpack.c.bf16 %v5197, %v5196
        %v5569 = vpack.c.bf16 %v5199, %v5198
        %v5570 = vpack.c.bf16 %v5201, %v5200
        %v5571 = vpack.c.bf16 %v5203, %v5202
        %v5572 = vpack.c.bf16 %v5205, %v5204
        %v5573 = vpack.c.bf16 %v5207, %v5206
        %v5574 = vpack.c.bf16 %v5209, %v5208
        %v5575 = vpack.c.bf16 %v5211, %v5210
        %v5576 = vpack.c.bf16 %v5213, %v5212
        %v5577 = vpack.c.bf16 %v5215, %v5214
        %v5578 = vpack.c.bf16 %v5217, %v5216
        %v5579 = vpack.c.bf16 %v5219, %v5218
        %v5580 = vpack.c.bf16 %v5221, %v5220
        %v5581 = vpack.c.bf16 %v5223, %v5222
        %v5582 = vpack.c.bf16 %v5225, %v5224
        %v5583 = vpack.c.bf16 %v5227, %v5226
        %v5584 = vpack.c.bf16 %v5229, %v5228
        %v5585 = vpack.c.bf16 %v5231, %v5230
        %v5586 = vpack.c.bf16 %v5233, %v5232
        %v5587 = vpack.c.bf16 %v5235, %v5234
        %v5588 = vpack.c.bf16 %v5237, %v5236
        %v5589 = vpack.c.bf16 %v5239, %v5238
        %v5590 = vpack.c.bf16 %v5241, %v5240
        %v5591 = vpack.c.bf16 %v5243, %v5242
        %v5592 = vpack.c.bf16 %v5245, %v5244
        %v5593 = vpack.c.bf16 %v5247, %v5246
        %v5594 = vpack.c.bf16 %v5249, %v5248
        %v5595 = vpack.c.bf16 %v5251, %v5250
        %v5596 = vpack.c.bf16 %v5253, %v5252
        %v5597 = vpack.c.bf16 %v5255, %v5254
        %v5598 = vpack.c.bf16 %v5257, %v5256
        %v5599 = vpack.c.bf16 %v5259, %v5258
        %v5600 = vpack.c.bf16 %v5261, %v5260
        %v5601 = vpack.c.bf16 %v5263, %v5262
        %v5602 = vpack.c.bf16 %v5265, %v5264
        %v5603 = vpack.c.bf16 %v5267, %v5266
        %v5604 = vpack.c.bf16 %v5269, %v5268
        %v5605 = vpack.c.bf16 %v5271, %v5270
        %v5606 = vpack.c.bf16 %v5273, %v5272
        %v5607 = vpack.c.bf16 %v5275, %v5274
        %v5608 = vpack.c.bf16 %v5277, %v5276
        %v5609 = vpack.c.bf16 %v5279, %v5278
        %v5610 = vpack.c.bf16 %v5281, %v5280
        %v5611 = vpack.c.bf16 %v5283, %v5282
        %v5612 = vpack.c.bf16 %v5285, %v5284
        %v5613 = vpack.c.bf16 %v5287, %v5286
        %v5614 = vpack.c.bf16 %v5289, %v5288
        %v5615 = vpack.c.bf16 %v5291, %v5290
        %v5616 = vpack.c.bf16 %v5293, %v5292
        %v5617 = vpack.c.bf16 %v5295, %v5294
        %v5618 = vpack.c.bf16 %v5297, %v5296
        %v5619 = vpack.c.bf16 %v5299, %v5298
        %v5620 = vpack.c.bf16 %v5301, %v5300
        %v5621 = vpack.c.bf16 %v5303, %v5302
        %v5622 = vpack.c.bf16 %v5305, %v5304
        %v5623 = vpack.c.bf16 %v5307, %v5306
        %v5624 = vpack.c.bf16 %v5309, %v5308
        %v5625 = vpack.c.bf16 %v5311, %v5310
        %v5626 = vpack.c.bf16 %v5313, %v5312
        %v5627 = vpack.c.bf16 %v5315, %v5314
        %v5628 = vpack.c.bf16 %v5317, %v5316
        %v5629 = vpack.c.bf16 %v5319, %v5318
        %v5630 = vpack.c.bf16 %v5321, %v5320
        %v5631 = vpack.c.bf16 %v5323, %v5322
        %v5632 = vpack.c.bf16 %v5325, %v5324
        %v5633 = vpack.c.bf16 %v5327, %v5326
        %v5634 = vpack.c.bf16 %v5329, %v5328
        %v5635 = vpack.c.bf16 %v5331, %v5330
        %v5636 = vpack.c.bf16 %v5333, %v5332
        %v5637 = vpack.c.bf16 %v5335, %v5334
        %v5638 = vpack.c.bf16 %v5337, %v5336
        %v5639 = vpack.c.bf16 %v5339, %v5338
        %v5640 = vpack.c.bf16 %v5341, %v5340
        %v5641 = vpack.c.bf16 %v5343, %v5342
        %v5642 = vpack.c.bf16 %v5345, %v5344
        %v5643 = vpack.c.bf16 %v5347, %v5346
        %v5644 = vpack.c.bf16 %v5349, %v5348
        %v5645 = vpack.c.bf16 %v5351, %v5350
        %v5646 = vpack.c.bf16 %v5353, %v5352
        %v5647 = vpack.c.bf16 %v5355, %v5354
        %v5648 = vpack.c.bf16 %v5357, %v5356
        %v5649 = vpack.c.bf16 %v5359, %v5358
        %v5650 = vpack.c.bf16 %v5361, %v5360
        %v5651 = vpack.c.bf16 %v5363, %v5362
        %v5652 = vpack.c.bf16 %v5365, %v5364
        %v5653 = vpack.c.bf16 %v5367, %v5366
        %v5654 = vpack.c.bf16 %v5369, %v5368
        %v5655 = vpack.c.bf16 %v5371, %v5370
        %v5656 = vpack.c.bf16 %v5373, %v5372
        %v5657 = vpack.c.bf16 %v5375, %v5374
        %v5658 = vpack.c.bf16 %v5377, %v5376
        %v5659 = vpack.c.bf16 %v5379, %v5378
        %v5660 = vpack.c.bf16 %v5381, %v5380
        %v5661 = vpack.c.bf16 %v5383, %v5382
        %v5662 = vpack.c.bf16 %v5385, %v5384
        %v5663 = vpack.c.bf16 %v5387, %v5386
        %v5664 = vpack.c.bf16 %v5389, %v5388
        %v5665 = vpack.c.bf16 %v5391, %v5390
        %v5666 = vpack.c.bf16 %v5393, %v5392
        %v5667 = vpack.c.bf16 %v5395, %v5394
        %v5668 = vpack.c.bf16 %v5397, %v5396
        %v5669 = vpack.c.bf16 %v5399, %v5398
        %v5670 = vpack.c.bf16 %v5401, %v5400
        %v5671 = vpack.c.bf16 %v5403, %v5402
        %v5672 = vpack.c.bf16 %v5405, %v5404
        %v5673 = vpack.c.bf16 %v5407, %v5406
        %v5674 = vpack.c.bf16 %v5409, %v5408
        %v5675 = vpack.c.bf16 %v5411, %v5410
        %v5676 = vpack.c.bf16 %v5413, %v5412
        %v5677 = vpack.c.bf16 %v5415, %v5414
        %v5678 = vpack.c.bf16 %v5417, %v5416
        %v5679 = vpack.c.bf16 %v5419, %v5418
        %v5680 = vpack.c.bf16 %v5421, %v5420
        %v5681 = vpack.c.bf16 %v5423, %v5422
        %v5682 = vpack.c.bf16 %v5425, %v5424
        %v5683 = vpack.c.bf16 %v5427, %v5426
        %v5940 = vunpack.c.l.b16 %v5428
        %v5941 = vunpack.c.h.b16 %v5428
        %v5942 = vunpack.c.l.b16 %v5429
        %v5943 = vunpack.c.h.b16 %v5429
        %v5944 = vunpack.c.l.b16 %v5430
        %v5945 = vunpack.c.h.b16 %v5430
        %v5946 = vunpack.c.l.b16 %v5431
        %v5947 = vunpack.c.h.b16 %v5431
        %v5948 = vunpack.c.l.b16 %v5432
        %v5949 = vunpack.c.h.b16 %v5432
        %v5950 = vunpack.c.l.b16 %v5433
        %v5951 = vunpack.c.h.b16 %v5433
        %v5952 = vunpack.c.l.b16 %v5434
        %v5953 = vunpack.c.h.b16 %v5434
        %v5954 = vunpack.c.l.b16 %v5435
        %v5955 = vunpack.c.h.b16 %v5435
        %v5956 = vunpack.c.l.b16 %v5436
        %v5957 = vunpack.c.h.b16 %v5436
        %v5958 = vunpack.c.l.b16 %v5437
        %v5959 = vunpack.c.h.b16 %v5437
        %v5960 = vunpack.c.l.b16 %v5438
        %v5961 = vunpack.c.h.b16 %v5438
        %v5962 = vunpack.c.l.b16 %v5439
        %v5963 = vunpack.c.h.b16 %v5439
        %v5964 = vunpack.c.l.b16 %v5440
        %v5965 = vunpack.c.h.b16 %v5440
        %v5966 = vunpack.c.l.b16 %v5441
        %v5967 = vunpack.c.h.b16 %v5441
        %v5968 = vunpack.c.l.b16 %v5442
        %v5969 = vunpack.c.h.b16 %v5442
        %v5970 = vunpack.c.l.b16 %v5443
        %v5971 = vunpack.c.h.b16 %v5443
        %v5972 = vunpack.c.l.b16 %v5444
        %v5973 = vunpack.c.h.b16 %v5444
        %v5974 = vunpack.c.l.b16 %v5445
        %v5975 = vunpack.c.h.b16 %v5445
        %v5976 = vunpack.c.l.b16 %v5446
        %v5977 = vunpack.c.h.b16 %v5446
        %v5978 = vunpack.c.l.b16 %v5447
        %v5979 = vunpack.c.h.b16 %v5447
        %v5980 = vunpack.c.l.b16 %v5448
        %v5981 = vunpack.c.h.b16 %v5448
        %v5982 = vunpack.c.l.b16 %v5449
        %v5983 = vunpack.c.h.b16 %v5449
        %v5984 = vunpack.c.l.b16 %v5450
        %v5985 = vunpack.c.h.b16 %v5450
        %v5986 = vunpack.c.l.b16 %v5451
        %v5987 = vunpack.c.h.b16 %v5451
        %v5988 = vunpack.c.l.b16 %v5452
        %v5989 = vunpack.c.h.b16 %v5452
        %v5990 = vunpack.c.l.b16 %v5453
        %v5991 = vunpack.c.h.b16 %v5453
        %v5992 = vunpack.c.l.b16 %v5454
        %v5993 = vunpack.c.h.b16 %v5454
        %v5994 = vunpack.c.l.b16 %v5455
        %v5995 = vunpack.c.h.b16 %v5455
        %v5996 = vunpack.c.l.b16 %v5456
        %v5997 = vunpack.c.h.b16 %v5456
        %v5998 = vunpack.c.l.b16 %v5457
        %v5999 = vunpack.c.h.b16 %v5457
        %v6000 = vunpack.c.l.b16 %v5458
        %v6001 = vunpack.c.h.b16 %v5458
        %v6002 = vunpack.c.l.b16 %v5459
        %v6003 = vunpack.c.h.b16 %v5459
        %v6004 = vunpack.c.l.b16 %v5460
        %v6005 = vunpack.c.h.b16 %v5460
        %v6006 = vunpack.c.l.b16 %v5461
        %v6007 = vunpack.c.h.b16 %v5461
        %v6008 = vunpack.c.l.b16 %v5462
        %v6009 = vunpack.c.h.b16 %v5462
        %v6010 = vunpack.c.l.b16 %v5463
        %v6011 = vunpack.c.h.b16 %v5463
        %v6012 = vunpack.c.l.b16 %v5464
        %v6013 = vunpack.c.h.b16 %v5464
        %v6014 = vunpack.c.l.b16 %v5465
        %v6015 = vunpack.c.h.b16 %v5465
        %v6016 = vunpack.c.l.b16 %v5466
        %v6017 = vunpack.c.h.b16 %v5466
        %v6018 = vunpack.c.l.b16 %v5467
        %v6019 = vunpack.c.h.b16 %v5467
        %v6020 = vunpack.c.l.b16 %v5468
        %v6021 = vunpack.c.h.b16 %v5468
        %v6022 = vunpack.c.l.b16 %v5469
        %v6023 = vunpack.c.h.b16 %v5469
        %v6024 = vunpack.c.l.b16 %v5470
        %v6025 = vunpack.c.h.b16 %v5470
        %v6026 = vunpack.c.l.b16 %v5471
        %v6027 = vunpack.c.h.b16 %v5471
        %v6028 = vunpack.c.l.b16 %v5472
        %v6029 = vunpack.c.h.b16 %v5472
        %v6030 = vunpack.c.l.b16 %v5473
        %v6031 = vunpack.c.h.b16 %v5473
        %v6032 = vunpack.c.l.b16 %v5474
        %v6033 = vunpack.c.h.b16 %v5474
        %v6034 = vunpack.c.l.b16 %v5475
        %v6035 = vunpack.c.h.b16 %v5475
        %v6036 = vunpack.c.l.b16 %v5476
        %v6037 = vunpack.c.h.b16 %v5476
        %v6038 = vunpack.c.l.b16 %v5477
        %v6039 = vunpack.c.h.b16 %v5477
        %v6040 = vunpack.c.l.b16 %v5478
        %v6041 = vunpack.c.h.b16 %v5478
        %v6042 = vunpack.c.l.b16 %v5479
        %v6043 = vunpack.c.h.b16 %v5479
        %v6044 = vunpack.c.l.b16 %v5480
        %v6045 = vunpack.c.h.b16 %v5480
        %v6046 = vunpack.c.l.b16 %v5481
        %v6047 = vunpack.c.h.b16 %v5481
        %v6048 = vunpack.c.l.b16 %v5482
        %v6049 = vunpack.c.h.b16 %v5482
        %v6050 = vunpack.c.l.b16 %v5483
        %v6051 = vunpack.c.h.b16 %v5483
        %v6052 = vunpack.c.l.b16 %v5484
        %v6053 = vunpack.c.h.b16 %v5484
        %v6054 = vunpack.c.l.b16 %v5485
        %v6055 = vunpack.c.h.b16 %v5485
        %v6056 = vunpack.c.l.b16 %v5486
        %v6057 = vunpack.c.h.b16 %v5486
        %v6058 = vunpack.c.l.b16 %v5487
        %v6059 = vunpack.c.h.b16 %v5487
        %v6060 = vunpack.c.l.b16 %v5488
        %v6061 = vunpack.c.h.b16 %v5488
        %v6062 = vunpack.c.l.b16 %v5489
        %v6063 = vunpack.c.h.b16 %v5489
        %v6064 = vunpack.c.l.b16 %v5490
        %v6065 = vunpack.c.h.b16 %v5490
        %v6066 = vunpack.c.l.b16 %v5491
        %v6067 = vunpack.c.h.b16 %v5491
        %v6068 = vunpack.c.l.b16 %v5492
        %v6069 = vunpack.c.h.b16 %v5492
        %v6070 = vunpack.c.l.b16 %v5493
        %v6071 = vunpack.c.h.b16 %v5493
        %v6072 = vunpack.c.l.b16 %v5494
        %v6073 = vunpack.c.h.b16 %v5494
        %v6074 = vunpack.c.l.b16 %v5495
        %v6075 = vunpack.c.h.b16 %v5495
        %v6076 = vunpack.c.l.b16 %v5496
        %v6077 = vunpack.c.h.b16 %v5496
        %v6078 = vunpack.c.l.b16 %v5497
        %v6079 = vunpack.c.h.b16 %v5497
        %v6080 = vunpack.c.l.b16 %v5498
        %v6081 = vunpack.c.h.b16 %v5498
        %v6082 = vunpack.c.l.b16 %v5499
        %v6083 = vunpack.c.h.b16 %v5499
        %v6084 = vunpack.c.l.b16 %v5500
        %v6085 = vunpack.c.h.b16 %v5500
        %v6086 = vunpack.c.l.b16 %v5501
        %v6087 = vunpack.c.h.b16 %v5501
        %v6088 = vunpack.c.l.b16 %v5502
        %v6089 = vunpack.c.h.b16 %v5502
        %v6090 = vunpack.c.l.b16 %v5503
        %v6091 = vunpack.c.h.b16 %v5503
        %v6092 = vunpack.c.l.b16 %v5504
        %v6093 = vunpack.c.h.b16 %v5504
        %v6094 = vunpack.c.l.b16 %v5505
        %v6095 = vunpack.c.h.b16 %v5505
        %v6096 = vunpack.c.l.b16 %v5506
        %v6097 = vunpack.c.h.b16 %v5506
        %v6098 = vunpack.c.l.b16 %v5507
        %v6099 = vunpack.c.h.b16 %v5507
        %v6100 = vunpack.c.l.b16 %v5508
        %v6101 = vunpack.c.h.b16 %v5508
        %v6102 = vunpack.c.l.b16 %v5509
        %v6103 = vunpack.c.h.b16 %v5509
        %v6104 = vunpack.c.l.b16 %v5510
        %v6105 = vunpack.c.h.b16 %v5510
        %v6106 = vunpack.c.l.b16 %v5511
        %v6107 = vunpack.c.h.b16 %v5511
        %v6108 = vunpack.c.l.b16 %v5512
        %v6109 = vunpack.c.h.b16 %v5512
        %v6110 = vunpack.c.l.b16 %v5513
        %v6111 = vunpack.c.h.b16 %v5513
        %v6112 = vunpack.c.l.b16 %v5514
        %v6113 = vunpack.c.h.b16 %v5514
        %v6114 = vunpack.c.l.b16 %v5515
        %v6115 = vunpack.c.h.b16 %v5515
        %v6116 = vunpack.c.l.b16 %v5516
        %v6117 = vunpack.c.h.b16 %v5516
        %v6118 = vunpack.c.l.b16 %v5517
        %v6119 = vunpack.c.h.b16 %v5517
        %v6120 = vunpack.c.l.b16 %v5518
        %v6121 = vunpack.c.h.b16 %v5518
        %v6122 = vunpack.c.l.b16 %v5519
        %v6123 = vunpack.c.h.b16 %v5519
        %v6124 = vunpack.c.l.b16 %v5520
        %v6125 = vunpack.c.h.b16 %v5520
        %v6126 = vunpack.c.l.b16 %v5521
        %v6127 = vunpack.c.h.b16 %v5521
        %v6128 = vunpack.c.l.b16 %v5522
        %v6129 = vunpack.c.h.b16 %v5522
        %v6130 = vunpack.c.l.b16 %v5523
        %v6131 = vunpack.c.h.b16 %v5523
        %v6132 = vunpack.c.l.b16 %v5524
        %v6133 = vunpack.c.h.b16 %v5524
        %v6134 = vunpack.c.l.b16 %v5525
        %v6135 = vunpack.c.h.b16 %v5525
        %v6136 = vunpack.c.l.b16 %v5526
        %v6137 = vunpack.c.h.b16 %v5526
        %v6138 = vunpack.c.l.b16 %v5527
        %v6139 = vunpack.c.h.b16 %v5527
        %v6140 = vunpack.c.l.b16 %v5528
        %v6141 = vunpack.c.h.b16 %v5528
        %v6142 = vunpack.c.l.b16 %v5529
        %v6143 = vunpack.c.h.b16 %v5529
        %v6144 = vunpack.c.l.b16 %v5530
        %v6145 = vunpack.c.h.b16 %v5530
        %v6146 = vunpack.c.l.b16 %v5531
        %v6147 = vunpack.c.h.b16 %v5531
        %v6148 = vunpack.c.l.b16 %v5532
        %v6149 = vunpack.c.h.b16 %v5532
        %v6150 = vunpack.c.l.b16 %v5533
        %v6151 = vunpack.c.h.b16 %v5533
        %v6152 = vunpack.c.l.b16 %v5534
        %v6153 = vunpack.c.h.b16 %v5534
        %v6154 = vunpack.c.l.b16 %v5535
        %v6155 = vunpack.c.h.b16 %v5535
        %v6156 = vunpack.c.l.b16 %v5536
        %v6157 = vunpack.c.h.b16 %v5536
        %v6158 = vunpack.c.l.b16 %v5537
        %v6159 = vunpack.c.h.b16 %v5537
        %v6160 = vunpack.c.l.b16 %v5538
        %v6161 = vunpack.c.h.b16 %v5538
        %v6162 = vunpack.c.l.b16 %v5539
        %v6163 = vunpack.c.h.b16 %v5539
        %v6164 = vunpack.c.l.b16 %v5540
        %v6165 = vunpack.c.h.b16 %v5540
        %v6166 = vunpack.c.l.b16 %v5541
        %v6167 = vunpack.c.h.b16 %v5541
        %v6168 = vunpack.c.l.b16 %v5542
        %v6169 = vunpack.c.h.b16 %v5542
        %v6170 = vunpack.c.l.b16 %v5543
        %v6171 = vunpack.c.h.b16 %v5543
        %v6172 = vunpack.c.l.b16 %v5544
        %v6173 = vunpack.c.h.b16 %v5544
        %v6174 = vunpack.c.l.b16 %v5545
        %v6175 = vunpack.c.h.b16 %v5545
        %v6176 = vunpack.c.l.b16 %v5546
        %v6177 = vunpack.c.h.b16 %v5546
        %v6178 = vunpack.c.l.b16 %v5547
        %v6179 = vunpack.c.h.b16 %v5547
        %v6180 = vunpack.c.l.b16 %v5548
        %v6181 = vunpack.c.h.b16 %v5548
        %v6182 = vunpack.c.l.b16 %v5549
        %v6183 = vunpack.c.h.b16 %v5549
        %v6184 = vunpack.c.l.b16 %v5550
        %v6185 = vunpack.c.h.b16 %v5550
        %v6186 = vunpack.c.l.b16 %v5551
        %v6187 = vunpack.c.h.b16 %v5551
        %v6188 = vunpack.c.l.b16 %v5552
        %v6189 = vunpack.c.h.b16 %v5552
        %v6190 = vunpack.c.l.b16 %v5553
        %v6191 = vunpack.c.h.b16 %v5553
        %v6192 = vunpack.c.l.b16 %v5554
        %v6193 = vunpack.c.h.b16 %v5554
        %v6194 = vunpack.c.l.b16 %v5555
        %v6195 = vunpack.c.h.b16 %v5555
        %v6196 = vunpack.c.l.b16 %v5556
        %v6197 = vunpack.c.h.b16 %v5556
        %v6198 = vunpack.c.l.b16 %v5557
        %v6199 = vunpack.c.h.b16 %v5557
        %v6200 = vunpack.c.l.b16 %v5558
        %v6201 = vunpack.c.h.b16 %v5558
        %v6202 = vunpack.c.l.b16 %v5559
        %v6203 = vunpack.c.h.b16 %v5559
        %v6204 = vunpack.c.l.b16 %v5560
        %v6205 = vunpack.c.h.b16 %v5560
        %v6206 = vunpack.c.l.b16 %v5561
        %v6207 = vunpack.c.h.b16 %v5561
        %v6208 = vunpack.c.l.b16 %v5562
        %v6209 = vunpack.c.h.b16 %v5562
        %v6210 = vunpack.c.l.b16 %v5563
        %v6211 = vunpack.c.h.b16 %v5563
        %v6212 = vunpack.c.l.b16 %v5564
        %v6213 = vunpack.c.h.b16 %v5564
        %v6214 = vunpack.c.l.b16 %v5565
        %v6215 = vunpack.c.h.b16 %v5565
        %v6216 = vunpack.c.l.b16 %v5566
        %v6217 = vunpack.c.h.b16 %v5566
        %v6218 = vunpack.c.l.b16 %v5567
        %v6219 = vunpack.c.h.b16 %v5567
        %v6220 = vunpack.c.l.b16 %v5568
        %v6221 = vunpack.c.h.b16 %v5568
        %v6222 = vunpack.c.l.b16 %v5569
        %v6223 = vunpack.c.h.b16 %v5569
        %v6224 = vunpack.c.l.b16 %v5570
        %v6225 = vunpack.c.h.b16 %v5570
        %v6226 = vunpack.c.l.b16 %v5571
        %v6227 = vunpack.c.h.b16 %v5571
        %v6228 = vunpack.c.l.b16 %v5572
        %v6229 = vunpack.c.h.b16 %v5572
        %v6230 = vunpack.c.l.b16 %v5573
        %v6231 = vunpack.c.h.b16 %v5573
        %v6232 = vunpack.c.l.b16 %v5574
        %v6233 = vunpack.c.h.b16 %v5574
        %v6234 = vunpack.c.l.b16 %v5575
        %v6235 = vunpack.c.h.b16 %v5575
        %v6236 = vunpack.c.l.b16 %v5576
        %v6237 = vunpack.c.h.b16 %v5576
        %v6238 = vunpack.c.l.b16 %v5577
        %v6239 = vunpack.c.h.b16 %v5577
        %v6240 = vunpack.c.l.b16 %v5578
        %v6241 = vunpack.c.h.b16 %v5578
        %v6242 = vunpack.c.l.b16 %v5579
        %v6243 = vunpack.c.h.b16 %v5579
        %v6244 = vunpack.c.l.b16 %v5580
        %v6245 = vunpack.c.h.b16 %v5580
        %v6246 = vunpack.c.l.b16 %v5581
        %v6247 = vunpack.c.h.b16 %v5581
        %v6248 = vunpack.c.l.b16 %v5582
        %v6249 = vunpack.c.h.b16 %v5582
        %v6250 = vunpack.c.l.b16 %v5583
        %v6251 = vunpack.c.h.b16 %v5583
        %v6252 = vunpack.c.l.b16 %v5584
        %v6253 = vunpack.c.h.b16 %v5584
        %v6254 = vunpack.c.l.b16 %v5585
        %v6255 = vunpack.c.h.b16 %v5585
        %v6256 = vunpack.c.l.b16 %v5586
        %v6257 = vunpack.c.h.b16 %v5586
        %v6258 = vunpack.c.l.b16 %v5587
        %v6259 = vunpack.c.h.b16 %v5587
        %v6260 = vunpack.c.l.b16 %v5588
        %v6261 = vunpack.c.h.b16 %v5588
        %v6262 = vunpack.c.l.b16 %v5589
        %v6263 = vunpack.c.h.b16 %v5589
        %v6264 = vunpack.c.l.b16 %v5590
        %v6265 = vunpack.c.h.b16 %v5590
        %v6266 = vunpack.c.l.b16 %v5591
        %v6267 = vunpack.c.h.b16 %v5591
        %v6268 = vunpack.c.l.b16 %v5592
        %v6269 = vunpack.c.h.b16 %v5592
        %v6270 = vunpack.c.l.b16 %v5593
        %v6271 = vunpack.c.h.b16 %v5593
        %v6272 = vunpack.c.l.b16 %v5594
        %v6273 = vunpack.c.h.b16 %v5594
        %v6274 = vunpack.c.l.b16 %v5595
        %v6275 = vunpack.c.h.b16 %v5595
        %v6276 = vunpack.c.l.b16 %v5596
        %v6277 = vunpack.c.h.b16 %v5596
        %v6278 = vunpack.c.l.b16 %v5597
        %v6279 = vunpack.c.h.b16 %v5597
        %v6280 = vunpack.c.l.b16 %v5598
        %v6281 = vunpack.c.h.b16 %v5598
        %v6282 = vunpack.c.l.b16 %v5599
        %v6283 = vunpack.c.h.b16 %v5599
        %v6284 = vunpack.c.l.b16 %v5600
        %v6285 = vunpack.c.h.b16 %v5600
        %v6286 = vunpack.c.l.b16 %v5601
        %v6287 = vunpack.c.h.b16 %v5601
        %v6288 = vunpack.c.l.b16 %v5602
        %v6289 = vunpack.c.h.b16 %v5602
        %v6290 = vunpack.c.l.b16 %v5603
        %v6291 = vunpack.c.h.b16 %v5603
        %v6292 = vunpack.c.l.b16 %v5604
        %v6293 = vunpack.c.h.b16 %v5604
        %v6294 = vunpack.c.l.b16 %v5605
        %v6295 = vunpack.c.h.b16 %v5605
        %v6296 = vunpack.c.l.b16 %v5606
        %v6297 = vunpack.c.h.b16 %v5606
        %v6298 = vunpack.c.l.b16 %v5607
        %v6299 = vunpack.c.h.b16 %v5607
        %v6300 = vunpack.c.l.b16 %v5608
        %v6301 = vunpack.c.h.b16 %v5608
        %v6302 = vunpack.c.l.b16 %v5609
        %v6303 = vunpack.c.h.b16 %v5609
        %v6304 = vunpack.c.l.b16 %v5610
        %v6305 = vunpack.c.h.b16 %v5610
        %v6306 = vunpack.c.l.b16 %v5611
        %v6307 = vunpack.c.h.b16 %v5611
        %v6308 = vunpack.c.l.b16 %v5612
        %v6309 = vunpack.c.h.b16 %v5612
        %v6310 = vunpack.c.l.b16 %v5613
        %v6311 = vunpack.c.h.b16 %v5613
        %v6312 = vunpack.c.l.b16 %v5614
        %v6313 = vunpack.c.h.b16 %v5614
        %v6314 = vunpack.c.l.b16 %v5615
        %v6315 = vunpack.c.h.b16 %v5615
        %v6316 = vunpack.c.l.b16 %v5616
        %v6317 = vunpack.c.h.b16 %v5616
        %v6318 = vunpack.c.l.b16 %v5617
        %v6319 = vunpack.c.h.b16 %v5617
        %v6320 = vunpack.c.l.b16 %v5618
        %v6321 = vunpack.c.h.b16 %v5618
        %v6322 = vunpack.c.l.b16 %v5619
        %v6323 = vunpack.c.h.b16 %v5619
        %v6324 = vunpack.c.l.b16 %v5620
        %v6325 = vunpack.c.h.b16 %v5620
        %v6326 = vunpack.c.l.b16 %v5621
        %v6327 = vunpack.c.h.b16 %v5621
        %v6328 = vunpack.c.l.b16 %v5622
        %v6329 = vunpack.c.h.b16 %v5622
        %v6330 = vunpack.c.l.b16 %v5623
        %v6331 = vunpack.c.h.b16 %v5623
        %v6332 = vunpack.c.l.b16 %v5624
        %v6333 = vunpack.c.h.b16 %v5624
        %v6334 = vunpack.c.l.b16 %v5625
        %v6335 = vunpack.c.h.b16 %v5625
        %v6336 = vunpack.c.l.b16 %v5626
        %v6337 = vunpack.c.h.b16 %v5626
        %v6338 = vunpack.c.l.b16 %v5627
        %v6339 = vunpack.c.h.b16 %v5627
        %v6340 = vunpack.c.l.b16 %v5628
        %v6341 = vunpack.c.h.b16 %v5628
        %v6342 = vunpack.c.l.b16 %v5629
        %v6343 = vunpack.c.h.b16 %v5629
        %v6344 = vunpack.c.l.b16 %v5630
        %v6345 = vunpack.c.h.b16 %v5630
        %v6346 = vunpack.c.l.b16 %v5631
        %v6347 = vunpack.c.h.b16 %v5631
        %v6348 = vunpack.c.l.b16 %v5632
        %v6349 = vunpack.c.h.b16 %v5632
        %v6350 = vunpack.c.l.b16 %v5633
        %v6351 = vunpack.c.h.b16 %v5633
        %v6352 = vunpack.c.l.b16 %v5634
        %v6353 = vunpack.c.h.b16 %v5634
        %v6354 = vunpack.c.l.b16 %v5635
        %v6355 = vunpack.c.h.b16 %v5635
        %v6356 = vunpack.c.l.b16 %v5636
        %v6357 = vunpack.c.h.b16 %v5636
        %v6358 = vunpack.c.l.b16 %v5637
        %v6359 = vunpack.c.h.b16 %v5637
        %v6360 = vunpack.c.l.b16 %v5638
        %v6361 = vunpack.c.h.b16 %v5638
        %v6362 = vunpack.c.l.b16 %v5639
        %v6363 = vunpack.c.h.b16 %v5639
        %v6364 = vunpack.c.l.b16 %v5640
        %v6365 = vunpack.c.h.b16 %v5640
        %v6366 = vunpack.c.l.b16 %v5641
        %v6367 = vunpack.c.h.b16 %v5641
        %v6368 = vunpack.c.l.b16 %v5642
        %v6369 = vunpack.c.h.b16 %v5642
        %v6370 = vunpack.c.l.b16 %v5643
        %v6371 = vunpack.c.h.b16 %v5643
        %v6372 = vunpack.c.l.b16 %v5644
        %v6373 = vunpack.c.h.b16 %v5644
        %v6374 = vunpack.c.l.b16 %v5645
        %v6375 = vunpack.c.h.b16 %v5645
        %v6376 = vunpack.c.l.b16 %v5646
        %v6377 = vunpack.c.h.b16 %v5646
        %v6378 = vunpack.c.l.b16 %v5647
        %v6379 = vunpack.c.h.b16 %v5647
        %v6380 = vunpack.c.l.b16 %v5648
        %v6381 = vunpack.c.h.b16 %v5648
        %v6382 = vunpack.c.l.b16 %v5649
        %v6383 = vunpack.c.h.b16 %v5649
        %v6384 = vunpack.c.l.b16 %v5650
        %v6385 = vunpack.c.h.b16 %v5650
        %v6386 = vunpack.c.l.b16 %v5651
        %v6387 = vunpack.c.h.b16 %v5651
        %v6388 = vunpack.c.l.b16 %v5652
        %v6389 = vunpack.c.h.b16 %v5652
        %v6390 = vunpack.c.l.b16 %v5653
        %v6391 = vunpack.c.h.b16 %v5653
        %v6392 = vunpack.c.l.b16 %v5654
        %v6393 = vunpack.c.h.b16 %v5654
        %v6394 = vunpack.c.l.b16 %v5655
        %v6395 = vunpack.c.h.b16 %v5655
        %v6396 = vunpack.c.l.b16 %v5656
        %v6397 = vunpack.c.h.b16 %v5656
        %v6398 = vunpack.c.l.b16 %v5657
        %v6399 = vunpack.c.h.b16 %v5657
        %v6400 = vunpack.c.l.b16 %v5658
        %v6401 = vunpack.c.h.b16 %v5658
        %v6402 = vunpack.c.l.b16 %v5659
        %v6403 = vunpack.c.h.b16 %v5659
        %v6404 = vunpack.c.l.b16 %v5660
        %v6405 = vunpack.c.h.b16 %v5660
        %v6406 = vunpack.c.l.b16 %v5661
        %v6407 = vunpack.c.h.b16 %v5661
        %v6408 = vunpack.c.l.b16 %v5662
        %v6409 = vunpack.c.h.b16 %v5662
        %v6410 = vunpack.c.l.b16 %v5663
        %v6411 = vunpack.c.h.b16 %v5663
        %v6412 = vunpack.c.l.b16 %v5664
        %v6413 = vunpack.c.h.b16 %v5664
        %v6414 = vunpack.c.l.b16 %v5665
        %v6415 = vunpack.c.h.b16 %v5665
        %v6416 = vunpack.c.l.b16 %v5666
        %v6417 = vunpack.c.h.b16 %v5666
        %v6418 = vunpack.c.l.b16 %v5667
        %v6419 = vunpack.c.h.b16 %v5667
        %v6420 = vunpack.c.l.b16 %v5668
        %v6421 = vunpack.c.h.b16 %v5668
        %v6422 = vunpack.c.l.b16 %v5669
        %v6423 = vunpack.c.h.b16 %v5669
        %v6424 = vunpack.c.l.b16 %v5670
        %v6425 = vunpack.c.h.b16 %v5670
        %v6426 = vunpack.c.l.b16 %v5671
        %v6427 = vunpack.c.h.b16 %v5671
        %v6428 = vunpack.c.l.b16 %v5672
        %v6429 = vunpack.c.h.b16 %v5672
        %v6430 = vunpack.c.l.b16 %v5673
        %v6431 = vunpack.c.h.b16 %v5673
        %v6432 = vunpack.c.l.b16 %v5674
        %v6433 = vunpack.c.h.b16 %v5674
        %v6434 = vunpack.c.l.b16 %v5675
        %v6435 = vunpack.c.h.b16 %v5675
        %v6436 = vunpack.c.l.b16 %v5676
        %v6437 = vunpack.c.h.b16 %v5676
        %v6438 = vunpack.c.l.b16 %v5677
        %v6439 = vunpack.c.h.b16 %v5677
        %v6440 = vunpack.c.l.b16 %v5678
        %v6441 = vunpack.c.h.b16 %v5678
        %v6442 = vunpack.c.l.b16 %v5679
        %v6443 = vunpack.c.h.b16 %v5679
        %v6444 = vunpack.c.l.b16 %v5680
        %v6445 = vunpack.c.h.b16 %v5680
        %v6446 = vunpack.c.l.b16 %v5681
        %v6447 = vunpack.c.h.b16 %v5681
        %v6448 = vunpack.c.l.b16 %v5682
        %v6449 = vunpack.c.h.b16 %v5682
        %v6450 = vunpack.c.l.b16 %v5683
        %v6451 = vunpack.c.h.b16 %v5683
        %v6452 = vpack.c.b16 %v5940, %v5940
        %v6453 = vpack.c.b16 %v5941, %v5941
        %v6454 = vpack.c.b16 %v5942, %v5942
        %v6455 = vpack.c.b16 %v5943, %v5943
        %v6456 = vpack.c.b16 %v5944, %v5944
        %v6457 = vpack.c.b16 %v5945, %v5945
        %v6458 = vpack.c.b16 %v5946, %v5946
        %v6459 = vpack.c.b16 %v5947, %v5947
        %v6460 = vpack.c.b16 %v5948, %v5948
        %v6461 = vpack.c.b16 %v5949, %v5949
        %v6462 = vpack.c.b16 %v5950, %v5950
        %v6463 = vpack.c.b16 %v5951, %v5951
        %v6464 = vpack.c.b16 %v5952, %v5952
        %v6465 = vpack.c.b16 %v5953, %v5953
        %v6466 = vpack.c.b16 %v5954, %v5954
        %v6467 = vpack.c.b16 %v5955, %v5955
        %v6468 = vpack.c.b16 %v5956, %v5956
        %v6469 = vpack.c.b16 %v5957, %v5957
        %v6470 = vpack.c.b16 %v5958, %v5958
        %v6471 = vpack.c.b16 %v5959, %v5959
        %v6472 = vpack.c.b16 %v5960, %v5960
        %v6473 = vpack.c.b16 %v5961, %v5961
        %v6474 = vpack.c.b16 %v5962, %v5962
        %v6475 = vpack.c.b16 %v5963, %v5963
        %v6476 = vpack.c.b16 %v5964, %v5964
        %v6477 = vpack.c.b16 %v5965, %v5965
        %v6478 = vpack.c.b16 %v5966, %v5966
        %v6479 = vpack.c.b16 %v5967, %v5967
        %v6480 = vpack.c.b16 %v5968, %v5968
        %v6481 = vpack.c.b16 %v5969, %v5969
        %v6482 = vpack.c.b16 %v5970, %v5970
        %v6483 = vpack.c.b16 %v5971, %v5971
        %v6484 = vpack.c.b16 %v5972, %v5972
        %v6485 = vpack.c.b16 %v5973, %v5973
        %v6486 = vpack.c.b16 %v5974, %v5974
        %v6487 = vpack.c.b16 %v5975, %v5975
        %v6488 = vpack.c.b16 %v5976, %v5976
        %v6489 = vpack.c.b16 %v5977, %v5977
        %v6490 = vpack.c.b16 %v5978, %v5978
        %v6491 = vpack.c.b16 %v5979, %v5979
        %v6492 = vpack.c.b16 %v5980, %v5980
        %v6493 = vpack.c.b16 %v5981, %v5981
        %v6494 = vpack.c.b16 %v5982, %v5982
        %v6495 = vpack.c.b16 %v5983, %v5983
        %v6496 = vpack.c.b16 %v5984, %v5984
        %v6497 = vpack.c.b16 %v5985, %v5985
        %v6498 = vpack.c.b16 %v5986, %v5986
        %v6499 = vpack.c.b16 %v5987, %v5987
        %v6500 = vpack.c.b16 %v5988, %v5988
        %v6501 = vpack.c.b16 %v5989, %v5989
        %v6502 = vpack.c.b16 %v5990, %v5990
        %v6503 = vpack.c.b16 %v5991, %v5991
        %v6504 = vpack.c.b16 %v5992, %v5992
        %v6505 = vpack.c.b16 %v5993, %v5993
        %v6506 = vpack.c.b16 %v5994, %v5994
        %v6507 = vpack.c.b16 %v5995, %v5995
        %v6508 = vpack.c.b16 %v5996, %v5996
        %v6509 = vpack.c.b16 %v5997, %v5997
        %v6510 = vpack.c.b16 %v5998, %v5998
        %v6511 = vpack.c.b16 %v5999, %v5999
        %v6512 = vpack.c.b16 %v6000, %v6000
        %v6513 = vpack.c.b16 %v6001, %v6001
        %v6514 = vpack.c.b16 %v6002, %v6002
        %v6515 = vpack.c.b16 %v6003, %v6003
        %v6516 = vpack.c.b16 %v6004, %v6004
        %v6517 = vpack.c.b16 %v6005, %v6005
        %v6518 = vpack.c.b16 %v6006, %v6006
        %v6519 = vpack.c.b16 %v6007, %v6007
        %v6520 = vpack.c.b16 %v6008, %v6008
        %v6521 = vpack.c.b16 %v6009, %v6009
        %v6522 = vpack.c.b16 %v6010, %v6010
        %v6523 = vpack.c.b16 %v6011, %v6011
        %v6524 = vpack.c.b16 %v6012, %v6012
        %v6525 = vpack.c.b16 %v6013, %v6013
        %v6526 = vpack.c.b16 %v6014, %v6014
        %v6527 = vpack.c.b16 %v6015, %v6015
        %v6528 = vpack.c.b16 %v6016, %v6016
        %v6529 = vpack.c.b16 %v6017, %v6017
        %v6530 = vpack.c.b16 %v6018, %v6018
        %v6531 = vpack.c.b16 %v6019, %v6019
        %v6532 = vpack.c.b16 %v6020, %v6020
        %v6533 = vpack.c.b16 %v6021, %v6021
        %v6534 = vpack.c.b16 %v6022, %v6022
        %v6535 = vpack.c.b16 %v6023, %v6023
        %v6536 = vpack.c.b16 %v6024, %v6024
        %v6537 = vpack.c.b16 %v6025, %v6025
        %v6538 = vpack.c.b16 %v6026, %v6026
        %v6539 = vpack.c.b16 %v6027, %v6027
        %v6540 = vpack.c.b16 %v6028, %v6028
        %v6541 = vpack.c.b16 %v6029, %v6029
        %v6542 = vpack.c.b16 %v6030, %v6030
        %v6543 = vpack.c.b16 %v6031, %v6031
        %v6544 = vpack.c.b16 %v6032, %v6032
        %v6545 = vpack.c.b16 %v6033, %v6033
        %v6546 = vpack.c.b16 %v6034, %v6034
        %v6547 = vpack.c.b16 %v6035, %v6035
        %v6548 = vpack.c.b16 %v6036, %v6036
        %v6549 = vpack.c.b16 %v6037, %v6037
        %v6550 = vpack.c.b16 %v6038, %v6038
        %v6551 = vpack.c.b16 %v6039, %v6039
        %v6552 = vpack.c.b16 %v6040, %v6040
        %v6553 = vpack.c.b16 %v6041, %v6041
        %v6554 = vpack.c.b16 %v6042, %v6042
        %v6555 = vpack.c.b16 %v6043, %v6043
        %v6556 = vpack.c.b16 %v6044, %v6044
        %v6557 = vpack.c.b16 %v6045, %v6045
        %v6558 = vpack.c.b16 %v6046, %v6046
        %v6559 = vpack.c.b16 %v6047, %v6047
        %v6560 = vpack.c.b16 %v6048, %v6048
        %v6561 = vpack.c.b16 %v6049, %v6049
        %v6562 = vpack.c.b16 %v6050, %v6050
        %v6563 = vpack.c.b16 %v6051, %v6051
        %v6564 = vpack.c.b16 %v6052, %v6052
        %v6565 = vpack.c.b16 %v6053, %v6053
        %v6566 = vpack.c.b16 %v6054, %v6054
        %v6567 = vpack.c.b16 %v6055, %v6055
        %v6568 = vpack.c.b16 %v6056, %v6056
        %v6569 = vpack.c.b16 %v6057, %v6057
        %v6570 = vpack.c.b16 %v6058, %v6058
        %v6571 = vpack.c.b16 %v6059, %v6059
        %v6572 = vpack.c.b16 %v6060, %v6060
        %v6573 = vpack.c.b16 %v6061, %v6061
        %v6574 = vpack.c.b16 %v6062, %v6062
        %v6575 = vpack.c.b16 %v6063, %v6063
        %v6576 = vpack.c.b16 %v6064, %v6064
        %v6577 = vpack.c.b16 %v6065, %v6065
        %v6578 = vpack.c.b16 %v6066, %v6066
        %v6579 = vpack.c.b16 %v6067, %v6067
        %v6580 = vpack.c.b16 %v6068, %v6068
        %v6581 = vpack.c.b16 %v6069, %v6069
        %v6582 = vpack.c.b16 %v6070, %v6070
        %v6583 = vpack.c.b16 %v6071, %v6071
        %v6584 = vpack.c.b16 %v6072, %v6072
        %v6585 = vpack.c.b16 %v6073, %v6073
        %v6586 = vpack.c.b16 %v6074, %v6074
        %v6587 = vpack.c.b16 %v6075, %v6075
        %v6588 = vpack.c.b16 %v6076, %v6076
        %v6589 = vpack.c.b16 %v6077, %v6077
        %v6590 = vpack.c.b16 %v6078, %v6078
        %v6591 = vpack.c.b16 %v6079, %v6079
        %v6592 = vpack.c.b16 %v6080, %v6080
        %v6593 = vpack.c.b16 %v6081, %v6081
        %v6594 = vpack.c.b16 %v6082, %v6082
        %v6595 = vpack.c.b16 %v6083, %v6083
        %v6596 = vpack.c.b16 %v6084, %v6084
        %v6597 = vpack.c.b16 %v6085, %v6085
        %v6598 = vpack.c.b16 %v6086, %v6086
        %v6599 = vpack.c.b16 %v6087, %v6087
        %v6600 = vpack.c.b16 %v6088, %v6088
        %v6601 = vpack.c.b16 %v6089, %v6089
        %v6602 = vpack.c.b16 %v6090, %v6090
        %v6603 = vpack.c.b16 %v6091, %v6091
        %v6604 = vpack.c.b16 %v6092, %v6092
        %v6605 = vpack.c.b16 %v6093, %v6093
        %v6606 = vpack.c.b16 %v6094, %v6094
        %v6607 = vpack.c.b16 %v6095, %v6095
        %v6608 = vpack.c.b16 %v6096, %v6096
        %v6609 = vpack.c.b16 %v6097, %v6097
        %v6610 = vpack.c.b16 %v6098, %v6098
        %v6611 = vpack.c.b16 %v6099, %v6099
        %v6612 = vpack.c.b16 %v6100, %v6100
        %v6613 = vpack.c.b16 %v6101, %v6101
        %v6614 = vpack.c.b16 %v6102, %v6102
        %v6615 = vpack.c.b16 %v6103, %v6103
        %v6616 = vpack.c.b16 %v6104, %v6104
        %v6617 = vpack.c.b16 %v6105, %v6105
        %v6618 = vpack.c.b16 %v6106, %v6106
        %v6619 = vpack.c.b16 %v6107, %v6107
        %v6620 = vpack.c.b16 %v6108, %v6108
        %v6621 = vpack.c.b16 %v6109, %v6109
        %v6622 = vpack.c.b16 %v6110, %v6110
        %v6623 = vpack.c.b16 %v6111, %v6111
        %v6624 = vpack.c.b16 %v6112, %v6112
        %v6625 = vpack.c.b16 %v6113, %v6113
        %v6626 = vpack.c.b16 %v6114, %v6114
        %v6627 = vpack.c.b16 %v6115, %v6115
        %v6628 = vpack.c.b16 %v6116, %v6116
        %v6629 = vpack.c.b16 %v6117, %v6117
        %v6630 = vpack.c.b16 %v6118, %v6118
        %v6631 = vpack.c.b16 %v6119, %v6119
        %v6632 = vpack.c.b16 %v6120, %v6120
        %v6633 = vpack.c.b16 %v6121, %v6121
        %v6634 = vpack.c.b16 %v6122, %v6122
        %v6635 = vpack.c.b16 %v6123, %v6123
        %v6636 = vpack.c.b16 %v6124, %v6124
        %v6637 = vpack.c.b16 %v6125, %v6125
        %v6638 = vpack.c.b16 %v6126, %v6126
        %v6639 = vpack.c.b16 %v6127, %v6127
        %v6640 = vpack.c.b16 %v6128, %v6128
        %v6641 = vpack.c.b16 %v6129, %v6129
        %v6642 = vpack.c.b16 %v6130, %v6130
        %v6643 = vpack.c.b16 %v6131, %v6131
        %v6644 = vpack.c.b16 %v6132, %v6132
        %v6645 = vpack.c.b16 %v6133, %v6133
        %v6646 = vpack.c.b16 %v6134, %v6134
        %v6647 = vpack.c.b16 %v6135, %v6135
        %v6648 = vpack.c.b16 %v6136, %v6136
        %v6649 = vpack.c.b16 %v6137, %v6137
        %v6650 = vpack.c.b16 %v6138, %v6138
        %v6651 = vpack.c.b16 %v6139, %v6139
        %v6652 = vpack.c.b16 %v6140, %v6140
        %v6653 = vpack.c.b16 %v6141, %v6141
        %v6654 = vpack.c.b16 %v6142, %v6142
        %v6655 = vpack.c.b16 %v6143, %v6143
        %v6656 = vpack.c.b16 %v6144, %v6144
        %v6657 = vpack.c.b16 %v6145, %v6145
        %v6658 = vpack.c.b16 %v6146, %v6146
        %v6659 = vpack.c.b16 %v6147, %v6147
        %v6660 = vpack.c.b16 %v6148, %v6148
        %v6661 = vpack.c.b16 %v6149, %v6149
        %v6662 = vpack.c.b16 %v6150, %v6150
        %v6663 = vpack.c.b16 %v6151, %v6151
        %v6664 = vpack.c.b16 %v6152, %v6152
        %v6665 = vpack.c.b16 %v6153, %v6153
        %v6666 = vpack.c.b16 %v6154, %v6154
        %v6667 = vpack.c.b16 %v6155, %v6155
        %v6668 = vpack.c.b16 %v6156, %v6156
        %v6669 = vpack.c.b16 %v6157, %v6157
        %v6670 = vpack.c.b16 %v6158, %v6158
        %v6671 = vpack.c.b16 %v6159, %v6159
        %v6672 = vpack.c.b16 %v6160, %v6160
        %v6673 = vpack.c.b16 %v6161, %v6161
        %v6674 = vpack.c.b16 %v6162, %v6162
        %v6675 = vpack.c.b16 %v6163, %v6163
        %v6676 = vpack.c.b16 %v6164, %v6164
        %v6677 = vpack.c.b16 %v6165, %v6165
        %v6678 = vpack.c.b16 %v6166, %v6166
        %v6679 = vpack.c.b16 %v6167, %v6167
        %v6680 = vpack.c.b16 %v6168, %v6168
        %v6681 = vpack.c.b16 %v6169, %v6169
        %v6682 = vpack.c.b16 %v6170, %v6170
        %v6683 = vpack.c.b16 %v6171, %v6171
        %v6684 = vpack.c.b16 %v6172, %v6172
        %v6685 = vpack.c.b16 %v6173, %v6173
        %v6686 = vpack.c.b16 %v6174, %v6174
        %v6687 = vpack.c.b16 %v6175, %v6175
        %v6688 = vpack.c.b16 %v6176, %v6176
        %v6689 = vpack.c.b16 %v6177, %v6177
        %v6690 = vpack.c.b16 %v6178, %v6178
        %v6691 = vpack.c.b16 %v6179, %v6179
        %v6692 = vpack.c.b16 %v6180, %v6180
        %v6693 = vpack.c.b16 %v6181, %v6181
        %v6694 = vpack.c.b16 %v6182, %v6182
        %v6695 = vpack.c.b16 %v6183, %v6183
        %v6696 = vpack.c.b16 %v6184, %v6184
        %v6697 = vpack.c.b16 %v6185, %v6185
        %v6698 = vpack.c.b16 %v6186, %v6186
        %v6699 = vpack.c.b16 %v6187, %v6187
        %v6700 = vpack.c.b16 %v6188, %v6188
        %v6701 = vpack.c.b16 %v6189, %v6189
        %v6702 = vpack.c.b16 %v6190, %v6190
        %v6703 = vpack.c.b16 %v6191, %v6191
        %v6704 = vpack.c.b16 %v6192, %v6192
        %v6705 = vpack.c.b16 %v6193, %v6193
        %v6706 = vpack.c.b16 %v6194, %v6194
        %v6707 = vpack.c.b16 %v6195, %v6195
        %v6708 = vpack.c.b16 %v6196, %v6196
        %v6709 = vpack.c.b16 %v6197, %v6197
        %v6710 = vpack.c.b16 %v6198, %v6198
        %v6711 = vpack.c.b16 %v6199, %v6199
        %v6712 = vpack.c.b16 %v6200, %v6200
        %v6713 = vpack.c.b16 %v6201, %v6201
        %v6714 = vpack.c.b16 %v6202, %v6202
        %v6715 = vpack.c.b16 %v6203, %v6203
        %v6716 = vpack.c.b16 %v6204, %v6204
        %v6717 = vpack.c.b16 %v6205, %v6205
        %v6718 = vpack.c.b16 %v6206, %v6206
        %v6719 = vpack.c.b16 %v6207, %v6207
        %v6720 = vpack.c.b16 %v6208, %v6208
        %v6721 = vpack.c.b16 %v6209, %v6209
        %v6722 = vpack.c.b16 %v6210, %v6210
        %v6723 = vpack.c.b16 %v6211, %v6211
        %v6724 = vpack.c.b16 %v6212, %v6212
        %v6725 = vpack.c.b16 %v6213, %v6213
        %v6726 = vpack.c.b16 %v6214, %v6214
        %v6727 = vpack.c.b16 %v6215, %v6215
        %v6728 = vpack.c.b16 %v6216, %v6216
        %v6729 = vpack.c.b16 %v6217, %v6217
        %v6730 = vpack.c.b16 %v6218, %v6218
        %v6731 = vpack.c.b16 %v6219, %v6219
        %v6732 = vpack.c.b16 %v6220, %v6220
        %v6733 = vpack.c.b16 %v6221, %v6221
        %v6734 = vpack.c.b16 %v6222, %v6222
        %v6735 = vpack.c.b16 %v6223, %v6223
        %v6736 = vpack.c.b16 %v6224, %v6224
        %v6737 = vpack.c.b16 %v6225, %v6225
        %v6738 = vpack.c.b16 %v6226, %v6226
        %v6739 = vpack.c.b16 %v6227, %v6227
        %v6740 = vpack.c.b16 %v6228, %v6228
        %v6741 = vpack.c.b16 %v6229, %v6229
        %v6742 = vpack.c.b16 %v6230, %v6230
        %v6743 = vpack.c.b16 %v6231, %v6231
        %v6744 = vpack.c.b16 %v6232, %v6232
        %v6745 = vpack.c.b16 %v6233, %v6233
        %v6746 = vpack.c.b16 %v6234, %v6234
        %v6747 = vpack.c.b16 %v6235, %v6235
        %v6748 = vpack.c.b16 %v6236, %v6236
        %v6749 = vpack.c.b16 %v6237, %v6237
        %v6750 = vpack.c.b16 %v6238, %v6238
        %v6751 = vpack.c.b16 %v6239, %v6239
        %v6752 = vpack.c.b16 %v6240, %v6240
        %v6753 = vpack.c.b16 %v6241, %v6241
        %v6754 = vpack.c.b16 %v6242, %v6242
        %v6755 = vpack.c.b16 %v6243, %v6243
        %v6756 = vpack.c.b16 %v6244, %v6244
        %v6757 = vpack.c.b16 %v6245, %v6245
        %v6758 = vpack.c.b16 %v6246, %v6246
        %v6759 = vpack.c.b16 %v6247, %v6247
        %v6760 = vpack.c.b16 %v6248, %v6248
        %v6761 = vpack.c.b16 %v6249, %v6249
        %v6762 = vpack.c.b16 %v6250, %v6250
        %v6763 = vpack.c.b16 %v6251, %v6251
        %v6764 = vpack.c.b16 %v6252, %v6252
        %v6765 = vpack.c.b16 %v6253, %v6253
        %v6766 = vpack.c.b16 %v6254, %v6254
        %v6767 = vpack.c.b16 %v6255, %v6255
        %v6768 = vpack.c.b16 %v6256, %v6256
        %v6769 = vpack.c.b16 %v6257, %v6257
        %v6770 = vpack.c.b16 %v6258, %v6258
        %v6771 = vpack.c.b16 %v6259, %v6259
        %v6772 = vpack.c.b16 %v6260, %v6260
        %v6773 = vpack.c.b16 %v6261, %v6261
        %v6774 = vpack.c.b16 %v6262, %v6262
        %v6775 = vpack.c.b16 %v6263, %v6263
        %v6776 = vpack.c.b16 %v6264, %v6264
        %v6777 = vpack.c.b16 %v6265, %v6265
        %v6778 = vpack.c.b16 %v6266, %v6266
        %v6779 = vpack.c.b16 %v6267, %v6267
        %v6780 = vpack.c.b16 %v6268, %v6268
        %v6781 = vpack.c.b16 %v6269, %v6269
        %v6782 = vpack.c.b16 %v6270, %v6270
        %v6783 = vpack.c.b16 %v6271, %v6271
        %v6784 = vpack.c.b16 %v6272, %v6272
        %v6785 = vpack.c.b16 %v6273, %v6273
        %v6786 = vpack.c.b16 %v6274, %v6274
        %v6787 = vpack.c.b16 %v6275, %v6275
        %v6788 = vpack.c.b16 %v6276, %v6276
        %v6789 = vpack.c.b16 %v6277, %v6277
        %v6790 = vpack.c.b16 %v6278, %v6278
        %v6791 = vpack.c.b16 %v6279, %v6279
        %v6792 = vpack.c.b16 %v6280, %v6280
        %v6793 = vpack.c.b16 %v6281, %v6281
        %v6794 = vpack.c.b16 %v6282, %v6282
        %v6795 = vpack.c.b16 %v6283, %v6283
        %v6796 = vpack.c.b16 %v6284, %v6284
        %v6797 = vpack.c.b16 %v6285, %v6285
        %v6798 = vpack.c.b16 %v6286, %v6286
        %v6799 = vpack.c.b16 %v6287, %v6287
        %v6800 = vpack.c.b16 %v6288, %v6288
        %v6801 = vpack.c.b16 %v6289, %v6289
        %v6802 = vpack.c.b16 %v6290, %v6290
        %v6803 = vpack.c.b16 %v6291, %v6291
        %v6804 = vpack.c.b16 %v6292, %v6292
        %v6805 = vpack.c.b16 %v6293, %v6293
        %v6806 = vpack.c.b16 %v6294, %v6294
        %v6807 = vpack.c.b16 %v6295, %v6295
        %v6808 = vpack.c.b16 %v6296, %v6296
        %v6809 = vpack.c.b16 %v6297, %v6297
        %v6810 = vpack.c.b16 %v6298, %v6298
        %v6811 = vpack.c.b16 %v6299, %v6299
        %v6812 = vpack.c.b16 %v6300, %v6300
        %v6813 = vpack.c.b16 %v6301, %v6301
        %v6814 = vpack.c.b16 %v6302, %v6302
        %v6815 = vpack.c.b16 %v6303, %v6303
        %v6816 = vpack.c.b16 %v6304, %v6304
        %v6817 = vpack.c.b16 %v6305, %v6305
        %v6818 = vpack.c.b16 %v6306, %v6306
        %v6819 = vpack.c.b16 %v6307, %v6307
        %v6820 = vpack.c.b16 %v6308, %v6308
        %v6821 = vpack.c.b16 %v6309, %v6309
        %v6822 = vpack.c.b16 %v6310, %v6310
        %v6823 = vpack.c.b16 %v6311, %v6311
        %v6824 = vpack.c.b16 %v6312, %v6312
        %v6825 = vpack.c.b16 %v6313, %v6313
        %v6826 = vpack.c.b16 %v6314, %v6314
        %v6827 = vpack.c.b16 %v6315, %v6315
        %v6828 = vpack.c.b16 %v6316, %v6316
        %v6829 = vpack.c.b16 %v6317, %v6317
        %v6830 = vpack.c.b16 %v6318, %v6318
        %v6831 = vpack.c.b16 %v6319, %v6319
        %v6832 = vpack.c.b16 %v6320, %v6320
        %v6833 = vpack.c.b16 %v6321, %v6321
        %v6834 = vpack.c.b16 %v6322, %v6322
        %v6835 = vpack.c.b16 %v6323, %v6323
        %v6836 = vpack.c.b16 %v6324, %v6324
        %v6837 = vpack.c.b16 %v6325, %v6325
        %v6838 = vpack.c.b16 %v6326, %v6326
        %v6839 = vpack.c.b16 %v6327, %v6327
        %v6840 = vpack.c.b16 %v6328, %v6328
        %v6841 = vpack.c.b16 %v6329, %v6329
        %v6842 = vpack.c.b16 %v6330, %v6330
        %v6843 = vpack.c.b16 %v6331, %v6331
        %v6844 = vpack.c.b16 %v6332, %v6332
        %v6845 = vpack.c.b16 %v6333, %v6333
        %v6846 = vpack.c.b16 %v6334, %v6334
        %v6847 = vpack.c.b16 %v6335, %v6335
        %v6848 = vpack.c.b16 %v6336, %v6336
        %v6849 = vpack.c.b16 %v6337, %v6337
        %v6850 = vpack.c.b16 %v6338, %v6338
        %v6851 = vpack.c.b16 %v6339, %v6339
        %v6852 = vpack.c.b16 %v6340, %v6340
        %v6853 = vpack.c.b16 %v6341, %v6341
        %v6854 = vpack.c.b16 %v6342, %v6342
        %v6855 = vpack.c.b16 %v6343, %v6343
        %v6856 = vpack.c.b16 %v6344, %v6344
        %v6857 = vpack.c.b16 %v6345, %v6345
        %v6858 = vpack.c.b16 %v6346, %v6346
        %v6859 = vpack.c.b16 %v6347, %v6347
        %v6860 = vpack.c.b16 %v6348, %v6348
        %v6861 = vpack.c.b16 %v6349, %v6349
        %v6862 = vpack.c.b16 %v6350, %v6350
        %v6863 = vpack.c.b16 %v6351, %v6351
        %v6864 = vpack.c.b16 %v6352, %v6352
        %v6865 = vpack.c.b16 %v6353, %v6353
        %v6866 = vpack.c.b16 %v6354, %v6354
        %v6867 = vpack.c.b16 %v6355, %v6355
        %v6868 = vpack.c.b16 %v6356, %v6356
        %v6869 = vpack.c.b16 %v6357, %v6357
        %v6870 = vpack.c.b16 %v6358, %v6358
        %v6871 = vpack.c.b16 %v6359, %v6359
        %v6872 = vpack.c.b16 %v6360, %v6360
        %v6873 = vpack.c.b16 %v6361, %v6361
        %v6874 = vpack.c.b16 %v6362, %v6362
        %v6875 = vpack.c.b16 %v6363, %v6363
        %v6876 = vpack.c.b16 %v6364, %v6364
        %v6877 = vpack.c.b16 %v6365, %v6365
        %v6878 = vpack.c.b16 %v6366, %v6366
        %v6879 = vpack.c.b16 %v6367, %v6367
        %v6880 = vpack.c.b16 %v6368, %v6368
        %v6881 = vpack.c.b16 %v6369, %v6369
        %v6882 = vpack.c.b16 %v6370, %v6370
        %v6883 = vpack.c.b16 %v6371, %v6371
        %v6884 = vpack.c.b16 %v6372, %v6372
        %v6885 = vpack.c.b16 %v6373, %v6373
        %v6886 = vpack.c.b16 %v6374, %v6374
        %v6887 = vpack.c.b16 %v6375, %v6375
        %v6888 = vpack.c.b16 %v6376, %v6376
        %v6889 = vpack.c.b16 %v6377, %v6377
        %v6890 = vpack.c.b16 %v6378, %v6378
        %v6891 = vpack.c.b16 %v6379, %v6379
        %v6892 = vpack.c.b16 %v6380, %v6380
        %v6893 = vpack.c.b16 %v6381, %v6381
        %v6894 = vpack.c.b16 %v6382, %v6382
        %v6895 = vpack.c.b16 %v6383, %v6383
        %v6896 = vpack.c.b16 %v6384, %v6384
        %v6897 = vpack.c.b16 %v6385, %v6385
        %v6898 = vpack.c.b16 %v6386, %v6386
        %v6899 = vpack.c.b16 %v6387, %v6387
        %v6900 = vpack.c.b16 %v6388, %v6388
        %v6901 = vpack.c.b16 %v6389, %v6389
        %v6902 = vpack.c.b16 %v6390, %v6390
        %v6903 = vpack.c.b16 %v6391, %v6391
        %v6904 = vpack.c.b16 %v6392, %v6392
        %v6905 = vpack.c.b16 %v6393, %v6393
        %v6906 = vpack.c.b16 %v6394, %v6394
        %v6907 = vpack.c.b16 %v6395, %v6395
        %v6908 = vpack.c.b16 %v6396, %v6396
        %v6909 = vpack.c.b16 %v6397, %v6397
        %v6910 = vpack.c.b16 %v6398, %v6398
        %v6911 = vpack.c.b16 %v6399, %v6399
        %v6912 = vpack.c.b16 %v6400, %v6400
        %v6913 = vpack.c.b16 %v6401, %v6401
        %v6914 = vpack.c.b16 %v6402, %v6402
        %v6915 = vpack.c.b16 %v6403, %v6403
        %v6916 = vpack.c.b16 %v6404, %v6404
        %v6917 = vpack.c.b16 %v6405, %v6405
        %v6918 = vpack.c.b16 %v6406, %v6406
        %v6919 = vpack.c.b16 %v6407, %v6407
        %v6920 = vpack.c.b16 %v6408, %v6408
        %v6921 = vpack.c.b16 %v6409, %v6409
        %v6922 = vpack.c.b16 %v6410, %v6410
        %v6923 = vpack.c.b16 %v6411, %v6411
        %v6924 = vpack.c.b16 %v6412, %v6412
        %v6925 = vpack.c.b16 %v6413, %v6413
        %v6926 = vpack.c.b16 %v6414, %v6414
        %v6927 = vpack.c.b16 %v6415, %v6415
        %v6928 = vpack.c.b16 %v6416, %v6416
        %v6929 = vpack.c.b16 %v6417, %v6417
        %v6930 = vpack.c.b16 %v6418, %v6418
        %v6931 = vpack.c.b16 %v6419, %v6419
        %v6932 = vpack.c.b16 %v6420, %v6420
        %v6933 = vpack.c.b16 %v6421, %v6421
        %v6934 = vpack.c.b16 %v6422, %v6422
        %v6935 = vpack.c.b16 %v6423, %v6423
        %v6936 = vpack.c.b16 %v6424, %v6424
        %v6937 = vpack.c.b16 %v6425, %v6425
        %v6938 = vpack.c.b16 %v6426, %v6426
        %v6939 = vpack.c.b16 %v6427, %v6427
        %v6940 = vpack.c.b16 %v6428, %v6428
        %v6941 = vpack.c.b16 %v6429, %v6429
        %v6942 = vpack.c.b16 %v6430, %v6430
        %v6943 = vpack.c.b16 %v6431, %v6431
        %v6944 = vpack.c.b16 %v6432, %v6432
        %v6945 = vpack.c.b16 %v6433, %v6433
        %v6946 = vpack.c.b16 %v6434, %v6434
        %v6947 = vpack.c.b16 %v6435, %v6435
        %v6948 = vpack.c.b16 %v6436, %v6436
        %v6949 = vpack.c.b16 %v6437, %v6437
        %v6950 = vpack.c.b16 %v6438, %v6438
        %v6951 = vpack.c.b16 %v6439, %v6439
        %v6952 = vpack.c.b16 %v6440, %v6440
        %v6953 = vpack.c.b16 %v6441, %v6441
        %v6954 = vpack.c.b16 %v6442, %v6442
        %v6955 = vpack.c.b16 %v6443, %v6443
        %v6956 = vpack.c.b16 %v6444, %v6444
        %v6957 = vpack.c.b16 %v6445, %v6445
        %v6958 = vpack.c.b16 %v6446, %v6446
        %v6959 = vpack.c.b16 %v6447, %v6447
        %v6960 = vpack.c.b16 %v6448, %v6448
        %v6961 = vpack.c.b16 %v6449, %v6449
        %v6962 = vpack.c.b16 %v6450, %v6450
        %v6963 = vpack.c.b16 %v6451, %v6451
        %vm7476 = vcmask 519168
        %7477 = vst.msk [vmem:[%s243] sm:$0xf] %vm7476, %v6452
        %7478 = vst.msk [vmem:[%s243 + $0x4] sm:$0xf] %vm7476, %v6453
        %7479 = vst.msk [vmem:[%s243 + $0x8] sm:$0xf] %vm7476, %v6454
        %7480 = vst.msk [vmem:[%s243 + $0xc] sm:$0xf] %vm7476, %v6455
        %7481 = vst.msk [vmem:[%s243 + $0x10] sm:$0xf] %vm7476, %v6456
        %7482 = vst.msk [vmem:[%s243 + $0x14] sm:$0xf] %vm7476, %v6457
        %7483 = vst.msk [vmem:[%s243 + $0x18] sm:$0xf] %vm7476, %v6458
        %7484 = vst.msk [vmem:[%s243 + $0x1c] sm:$0xf] %vm7476, %v6459
        %7485 = vst.msk [vmem:[%s243 + $0x20] sm:$0xf] %vm7476, %v6460
        %7486 = vst.msk [vmem:[%s243 + $0x24] sm:$0xf] %vm7476, %v6461
        %7487 = vst.msk [vmem:[%s243 + $0x28] sm:$0xf] %vm7476, %v6462
        %7488 = vst.msk [vmem:[%s243 + $0x2c] sm:$0xf] %vm7476, %v6463
        %7489 = vst.msk [vmem:[%s243 + $0x30] sm:$0xf] %vm7476, %v6464
        %7490 = vst.msk [vmem:[%s243 + $0x34] sm:$0xf] %vm7476, %v6465
        %7491 = vst.msk [vmem:[%s243 + $0x38] sm:$0xf] %vm7476, %v6466
        %7492 = vst.msk [vmem:[%s243 + $0x3c] sm:$0xf] %vm7476, %v6467
        %7493 = vst.msk [vmem:[%s243 + $0x40] sm:$0xf] %vm7476, %v6468
        %7494 = vst.msk [vmem:[%s243 + $0x44] sm:$0xf] %vm7476, %v6469
        %7495 = vst.msk [vmem:[%s243 + $0x48] sm:$0xf] %vm7476, %v6470
        %7496 = vst.msk [vmem:[%s243 + $0x4c] sm:$0xf] %vm7476, %v6471
        %7497 = vst.msk [vmem:[%s243 + $0x50] sm:$0xf] %vm7476, %v6472
        %7498 = vst.msk [vmem:[%s243 + $0x54] sm:$0xf] %vm7476, %v6473
        %7499 = vst.msk [vmem:[%s243 + $0x58] sm:$0xf] %vm7476, %v6474
        %7500 = vst.msk [vmem:[%s243 + $0x5c] sm:$0xf] %vm7476, %v6475
        %7501 = vst.msk [vmem:[%s243 + $0x60] sm:$0xf] %vm7476, %v6476
        %7502 = vst.msk [vmem:[%s243 + $0x64] sm:$0xf] %vm7476, %v6477
        %7503 = vst.msk [vmem:[%s243 + $0x68] sm:$0xf] %vm7476, %v6478
        %7504 = vst.msk [vmem:[%s243 + $0x6c] sm:$0xf] %vm7476, %v6479
        %7505 = vst.msk [vmem:[%s243 + $0x70] sm:$0xf] %vm7476, %v6480
        %7506 = vst.msk [vmem:[%s243 + $0x74] sm:$0xf] %vm7476, %v6481
        %7507 = vst.msk [vmem:[%s243 + $0x78] sm:$0xf] %vm7476, %v6482
        %7508 = vst.msk [vmem:[%s243 + $0x7c] sm:$0xf] %vm7476, %v6483
        %7509 = vst.msk [vmem:[%s243 + $0x80] sm:$0xf] %vm7476, %v6484
        %7510 = vst.msk [vmem:[%s243 + $0x84] sm:$0xf] %vm7476, %v6485
        %7511 = vst.msk [vmem:[%s243 + $0x88] sm:$0xf] %vm7476, %v6486
        %7512 = vst.msk [vmem:[%s243 + $0x8c] sm:$0xf] %vm7476, %v6487
        %7513 = vst.msk [vmem:[%s243 + $0x90] sm:$0xf] %vm7476, %v6488
        %7514 = vst.msk [vmem:[%s243 + $0x94] sm:$0xf] %vm7476, %v6489
        %7515 = vst.msk [vmem:[%s243 + $0x98] sm:$0xf] %vm7476, %v6490
        %7516 = vst.msk [vmem:[%s243 + $0x9c] sm:$0xf] %vm7476, %v6491
        %7517 = vst.msk [vmem:[%s243 + $0xa0] sm:$0xf] %vm7476, %v6492
        %7518 = vst.msk [vmem:[%s243 + $0xa4] sm:$0xf] %vm7476, %v6493
        %7519 = vst.msk [vmem:[%s243 + $0xa8] sm:$0xf] %vm7476, %v6494
        %7520 = vst.msk [vmem:[%s243 + $0xac] sm:$0xf] %vm7476, %v6495
        %7521 = vst.msk [vmem:[%s243 + $0xb0] sm:$0xf] %vm7476, %v6496
        %7522 = vst.msk [vmem:[%s243 + $0xb4] sm:$0xf] %vm7476, %v6497
        %7523 = vst.msk [vmem:[%s243 + $0xb8] sm:$0xf] %vm7476, %v6498
        %7524 = vst.msk [vmem:[%s243 + $0xbc] sm:$0xf] %vm7476, %v6499
        %7525 = vst.msk [vmem:[%s243 + $0xc0] sm:$0xf] %vm7476, %v6500
        %7526 = vst.msk [vmem:[%s243 + $0xc4] sm:$0xf] %vm7476, %v6501
        %7527 = vst.msk [vmem:[%s243 + $0xc8] sm:$0xf] %vm7476, %v6502
        %7528 = vst.msk [vmem:[%s243 + $0xcc] sm:$0xf] %vm7476, %v6503
        %7529 = vst.msk [vmem:[%s243 + $0xd0] sm:$0xf] %vm7476, %v6504
        %7530 = vst.msk [vmem:[%s243 + $0xd4] sm:$0xf] %vm7476, %v6505
        %7531 = vst.msk [vmem:[%s243 + $0xd8] sm:$0xf] %vm7476, %v6506
        %7532 = vst.msk [vmem:[%s243 + $0xdc] sm:$0xf] %vm7476, %v6507
        %7533 = vst.msk [vmem:[%s243 + $0xe0] sm:$0xf] %vm7476, %v6508
        %7534 = vst.msk [vmem:[%s243 + $0xe4] sm:$0xf] %vm7476, %v6509
        %7535 = vst.msk [vmem:[%s243 + $0xe8] sm:$0xf] %vm7476, %v6510
        %7536 = vst.msk [vmem:[%s243 + $0xec] sm:$0xf] %vm7476, %v6511
        %7537 = vst.msk [vmem:[%s243 + $0xf0] sm:$0xf] %vm7476, %v6512
        %7538 = vst.msk [vmem:[%s243 + $0xf4] sm:$0xf] %vm7476, %v6513
        %7539 = vst.msk [vmem:[%s243 + $0xf8] sm:$0xf] %vm7476, %v6514
        %7540 = vst.msk [vmem:[%s243 + $0xfc] sm:$0xf] %vm7476, %v6515
        %7541 = vst.msk [vmem:[%s243 + $0x100] sm:$0xf] %vm7476, %v6516
        %7542 = vst.msk [vmem:[%s243 + $0x104] sm:$0xf] %vm7476, %v6517
        %7543 = vst.msk [vmem:[%s243 + $0x108] sm:$0xf] %vm7476, %v6518
        %7544 = vst.msk [vmem:[%s243 + $0x10c] sm:$0xf] %vm7476, %v6519
        %7545 = vst.msk [vmem:[%s243 + $0x110] sm:$0xf] %vm7476, %v6520
        %7546 = vst.msk [vmem:[%s243 + $0x114] sm:$0xf] %vm7476, %v6521
        %7547 = vst.msk [vmem:[%s243 + $0x118] sm:$0xf] %vm7476, %v6522
        %7548 = vst.msk [vmem:[%s243 + $0x11c] sm:$0xf] %vm7476, %v6523
        %7549 = vst.msk [vmem:[%s243 + $0x120] sm:$0xf] %vm7476, %v6524
        %7550 = vst.msk [vmem:[%s243 + $0x124] sm:$0xf] %vm7476, %v6525
        %7551 = vst.msk [vmem:[%s243 + $0x128] sm:$0xf] %vm7476, %v6526
        %7552 = vst.msk [vmem:[%s243 + $0x12c] sm:$0xf] %vm7476, %v6527
        %7553 = vst.msk [vmem:[%s243 + $0x130] sm:$0xf] %vm7476, %v6528
        %7554 = vst.msk [vmem:[%s243 + $0x134] sm:$0xf] %vm7476, %v6529
        %7555 = vst.msk [vmem:[%s243 + $0x138] sm:$0xf] %vm7476, %v6530
        %7556 = vst.msk [vmem:[%s243 + $0x13c] sm:$0xf] %vm7476, %v6531
        %7557 = vst.msk [vmem:[%s243 + $0x140] sm:$0xf] %vm7476, %v6532
        %7558 = vst.msk [vmem:[%s243 + $0x144] sm:$0xf] %vm7476, %v6533
        %7559 = vst.msk [vmem:[%s243 + $0x148] sm:$0xf] %vm7476, %v6534
        %7560 = vst.msk [vmem:[%s243 + $0x14c] sm:$0xf] %vm7476, %v6535
        %7561 = vst.msk [vmem:[%s243 + $0x150] sm:$0xf] %vm7476, %v6536
        %7562 = vst.msk [vmem:[%s243 + $0x154] sm:$0xf] %vm7476, %v6537
        %7563 = vst.msk [vmem:[%s243 + $0x158] sm:$0xf] %vm7476, %v6538
        %7564 = vst.msk [vmem:[%s243 + $0x15c] sm:$0xf] %vm7476, %v6539
        %7565 = vst.msk [vmem:[%s243 + $0x160] sm:$0xf] %vm7476, %v6540
        %7566 = vst.msk [vmem:[%s243 + $0x164] sm:$0xf] %vm7476, %v6541
        %7567 = vst.msk [vmem:[%s243 + $0x168] sm:$0xf] %vm7476, %v6542
        %7568 = vst.msk [vmem:[%s243 + $0x16c] sm:$0xf] %vm7476, %v6543
        %7569 = vst.msk [vmem:[%s243 + $0x170] sm:$0xf] %vm7476, %v6544
        %7570 = vst.msk [vmem:[%s243 + $0x174] sm:$0xf] %vm7476, %v6545
        %7571 = vst.msk [vmem:[%s243 + $0x178] sm:$0xf] %vm7476, %v6546
        %7572 = vst.msk [vmem:[%s243 + $0x17c] sm:$0xf] %vm7476, %v6547
        %7573 = vst.msk [vmem:[%s243 + $0x180] sm:$0xf] %vm7476, %v6548
        %7574 = vst.msk [vmem:[%s243 + $0x184] sm:$0xf] %vm7476, %v6549
        %7575 = vst.msk [vmem:[%s243 + $0x188] sm:$0xf] %vm7476, %v6550
        %7576 = vst.msk [vmem:[%s243 + $0x18c] sm:$0xf] %vm7476, %v6551
        %7577 = vst.msk [vmem:[%s243 + $0x190] sm:$0xf] %vm7476, %v6552
        %7578 = vst.msk [vmem:[%s243 + $0x194] sm:$0xf] %vm7476, %v6553
        %7579 = vst.msk [vmem:[%s243 + $0x198] sm:$0xf] %vm7476, %v6554
        %7580 = vst.msk [vmem:[%s243 + $0x19c] sm:$0xf] %vm7476, %v6555
        %7581 = vst.msk [vmem:[%s243 + $0x1a0] sm:$0xf] %vm7476, %v6556
        %7582 = vst.msk [vmem:[%s243 + $0x1a4] sm:$0xf] %vm7476, %v6557
        %7583 = vst.msk [vmem:[%s243 + $0x1a8] sm:$0xf] %vm7476, %v6558
        %7584 = vst.msk [vmem:[%s243 + $0x1ac] sm:$0xf] %vm7476, %v6559
        %7585 = vst.msk [vmem:[%s243 + $0x1b0] sm:$0xf] %vm7476, %v6560
        %7586 = vst.msk [vmem:[%s243 + $0x1b4] sm:$0xf] %vm7476, %v6561
        %7587 = vst.msk [vmem:[%s243 + $0x1b8] sm:$0xf] %vm7476, %v6562
        %7588 = vst.msk [vmem:[%s243 + $0x1bc] sm:$0xf] %vm7476, %v6563
        %7589 = vst.msk [vmem:[%s243 + $0x1c0] sm:$0xf] %vm7476, %v6564
        %7590 = vst.msk [vmem:[%s243 + $0x1c4] sm:$0xf] %vm7476, %v6565
        %7591 = vst.msk [vmem:[%s243 + $0x1c8] sm:$0xf] %vm7476, %v6566
        %7592 = vst.msk [vmem:[%s243 + $0x1cc] sm:$0xf] %vm7476, %v6567
        %7593 = vst.msk [vmem:[%s243 + $0x1d0] sm:$0xf] %vm7476, %v6568
        %7594 = vst.msk [vmem:[%s243 + $0x1d4] sm:$0xf] %vm7476, %v6569
        %7595 = vst.msk [vmem:[%s243 + $0x1d8] sm:$0xf] %vm7476, %v6570
        %7596 = vst.msk [vmem:[%s243 + $0x1dc] sm:$0xf] %vm7476, %v6571
        %7597 = vst.msk [vmem:[%s243 + $0x1e0] sm:$0xf] %vm7476, %v6572
        %7598 = vst.msk [vmem:[%s243 + $0x1e4] sm:$0xf] %vm7476, %v6573
        %7599 = vst.msk [vmem:[%s243 + $0x1e8] sm:$0xf] %vm7476, %v6574
        %7600 = vst.msk [vmem:[%s243 + $0x1ec] sm:$0xf] %vm7476, %v6575
        %7601 = vst.msk [vmem:[%s243 + $0x1f0] sm:$0xf] %vm7476, %v6576
        %7602 = vst.msk [vmem:[%s243 + $0x1f4] sm:$0xf] %vm7476, %v6577
        %7603 = vst.msk [vmem:[%s243 + $0x1f8] sm:$0xf] %vm7476, %v6578
        %7604 = vst.msk [vmem:[%s243 + $0x1fc] sm:$0xf] %vm7476, %v6579
        %7605 = vst.msk [vmem:[%s243 + $0x200] sm:$0xf] %vm7476, %v6580
        %7606 = vst.msk [vmem:[%s243 + $0x204] sm:$0xf] %vm7476, %v6581
        %7607 = vst.msk [vmem:[%s243 + $0x208] sm:$0xf] %vm7476, %v6582
        %7608 = vst.msk [vmem:[%s243 + $0x20c] sm:$0xf] %vm7476, %v6583
        %7609 = vst.msk [vmem:[%s243 + $0x210] sm:$0xf] %vm7476, %v6584
        %7610 = vst.msk [vmem:[%s243 + $0x214] sm:$0xf] %vm7476, %v6585
        %7611 = vst.msk [vmem:[%s243 + $0x218] sm:$0xf] %vm7476, %v6586
        %7612 = vst.msk [vmem:[%s243 + $0x21c] sm:$0xf] %vm7476, %v6587
        %7613 = vst.msk [vmem:[%s243 + $0x220] sm:$0xf] %vm7476, %v6588
        %7614 = vst.msk [vmem:[%s243 + $0x224] sm:$0xf] %vm7476, %v6589
        %7615 = vst.msk [vmem:[%s243 + $0x228] sm:$0xf] %vm7476, %v6590
        %7616 = vst.msk [vmem:[%s243 + $0x22c] sm:$0xf] %vm7476, %v6591
        %7617 = vst.msk [vmem:[%s243 + $0x230] sm:$0xf] %vm7476, %v6592
        %7618 = vst.msk [vmem:[%s243 + $0x234] sm:$0xf] %vm7476, %v6593
        %7619 = vst.msk [vmem:[%s243 + $0x238] sm:$0xf] %vm7476, %v6594
        %7620 = vst.msk [vmem:[%s243 + $0x23c] sm:$0xf] %vm7476, %v6595
        %7621 = vst.msk [vmem:[%s243 + $0x240] sm:$0xf] %vm7476, %v6596
        %7622 = vst.msk [vmem:[%s243 + $0x244] sm:$0xf] %vm7476, %v6597
        %7623 = vst.msk [vmem:[%s243 + $0x248] sm:$0xf] %vm7476, %v6598
        %7624 = vst.msk [vmem:[%s243 + $0x24c] sm:$0xf] %vm7476, %v6599
        %7625 = vst.msk [vmem:[%s243 + $0x250] sm:$0xf] %vm7476, %v6600
        %7626 = vst.msk [vmem:[%s243 + $0x254] sm:$0xf] %vm7476, %v6601
        %7627 = vst.msk [vmem:[%s243 + $0x258] sm:$0xf] %vm7476, %v6602
        %7628 = vst.msk [vmem:[%s243 + $0x25c] sm:$0xf] %vm7476, %v6603
        %7629 = vst.msk [vmem:[%s243 + $0x260] sm:$0xf] %vm7476, %v6604
        %7630 = vst.msk [vmem:[%s243 + $0x264] sm:$0xf] %vm7476, %v6605
        %7631 = vst.msk [vmem:[%s243 + $0x268] sm:$0xf] %vm7476, %v6606
        %7632 = vst.msk [vmem:[%s243 + $0x26c] sm:$0xf] %vm7476, %v6607
        %7633 = vst.msk [vmem:[%s243 + $0x270] sm:$0xf] %vm7476, %v6608
        %7634 = vst.msk [vmem:[%s243 + $0x274] sm:$0xf] %vm7476, %v6609
        %7635 = vst.msk [vmem:[%s243 + $0x278] sm:$0xf] %vm7476, %v6610
        %7636 = vst.msk [vmem:[%s243 + $0x27c] sm:$0xf] %vm7476, %v6611
        %7637 = vst.msk [vmem:[%s243 + $0x280] sm:$0xf] %vm7476, %v6612
        %7638 = vst.msk [vmem:[%s243 + $0x284] sm:$0xf] %vm7476, %v6613
        %7639 = vst.msk [vmem:[%s243 + $0x288] sm:$0xf] %vm7476, %v6614
        %7640 = vst.msk [vmem:[%s243 + $0x28c] sm:$0xf] %vm7476, %v6615
        %7641 = vst.msk [vmem:[%s243 + $0x290] sm:$0xf] %vm7476, %v6616
        %7642 = vst.msk [vmem:[%s243 + $0x294] sm:$0xf] %vm7476, %v6617
        %7643 = vst.msk [vmem:[%s243 + $0x298] sm:$0xf] %vm7476, %v6618
        %7644 = vst.msk [vmem:[%s243 + $0x29c] sm:$0xf] %vm7476, %v6619
        %7645 = vst.msk [vmem:[%s243 + $0x2a0] sm:$0xf] %vm7476, %v6620
        %7646 = vst.msk [vmem:[%s243 + $0x2a4] sm:$0xf] %vm7476, %v6621
        %7647 = vst.msk [vmem:[%s243 + $0x2a8] sm:$0xf] %vm7476, %v6622
        %7648 = vst.msk [vmem:[%s243 + $0x2ac] sm:$0xf] %vm7476, %v6623
        %7649 = vst.msk [vmem:[%s243 + $0x2b0] sm:$0xf] %vm7476, %v6624
        %7650 = vst.msk [vmem:[%s243 + $0x2b4] sm:$0xf] %vm7476, %v6625
        %7651 = vst.msk [vmem:[%s243 + $0x2b8] sm:$0xf] %vm7476, %v6626
        %7652 = vst.msk [vmem:[%s243 + $0x2bc] sm:$0xf] %vm7476, %v6627
        %7653 = vst.msk [vmem:[%s243 + $0x2c0] sm:$0xf] %vm7476, %v6628
        %7654 = vst.msk [vmem:[%s243 + $0x2c4] sm:$0xf] %vm7476, %v6629
        %7655 = vst.msk [vmem:[%s243 + $0x2c8] sm:$0xf] %vm7476, %v6630
        %7656 = vst.msk [vmem:[%s243 + $0x2cc] sm:$0xf] %vm7476, %v6631
        %7657 = vst.msk [vmem:[%s243 + $0x2d0] sm:$0xf] %vm7476, %v6632
        %7658 = vst.msk [vmem:[%s243 + $0x2d4] sm:$0xf] %vm7476, %v6633
        %7659 = vst.msk [vmem:[%s243 + $0x2d8] sm:$0xf] %vm7476, %v6634
        %7660 = vst.msk [vmem:[%s243 + $0x2dc] sm:$0xf] %vm7476, %v6635
        %7661 = vst.msk [vmem:[%s243 + $0x2e0] sm:$0xf] %vm7476, %v6636
        %7662 = vst.msk [vmem:[%s243 + $0x2e4] sm:$0xf] %vm7476, %v6637
        %7663 = vst.msk [vmem:[%s243 + $0x2e8] sm:$0xf] %vm7476, %v6638
        %7664 = vst.msk [vmem:[%s243 + $0x2ec] sm:$0xf] %vm7476, %v6639
        %7665 = vst.msk [vmem:[%s243 + $0x2f0] sm:$0xf] %vm7476, %v6640
        %7666 = vst.msk [vmem:[%s243 + $0x2f4] sm:$0xf] %vm7476, %v6641
        %7667 = vst.msk [vmem:[%s243 + $0x2f8] sm:$0xf] %vm7476, %v6642
        %7668 = vst.msk [vmem:[%s243 + $0x2fc] sm:$0xf] %vm7476, %v6643
        %7669 = vst.msk [vmem:[%s243 + $0x300] sm:$0xf] %vm7476, %v6644
        %7670 = vst.msk [vmem:[%s243 + $0x304] sm:$0xf] %vm7476, %v6645
        %7671 = vst.msk [vmem:[%s243 + $0x308] sm:$0xf] %vm7476, %v6646
        %7672 = vst.msk [vmem:[%s243 + $0x30c] sm:$0xf] %vm7476, %v6647
        %7673 = vst.msk [vmem:[%s243 + $0x310] sm:$0xf] %vm7476, %v6648
        %7674 = vst.msk [vmem:[%s243 + $0x314] sm:$0xf] %vm7476, %v6649
        %7675 = vst.msk [vmem:[%s243 + $0x318] sm:$0xf] %vm7476, %v6650
        %7676 = vst.msk [vmem:[%s243 + $0x31c] sm:$0xf] %vm7476, %v6651
        %7677 = vst.msk [vmem:[%s243 + $0x320] sm:$0xf] %vm7476, %v6652
        %7678 = vst.msk [vmem:[%s243 + $0x324] sm:$0xf] %vm7476, %v6653
        %7679 = vst.msk [vmem:[%s243 + $0x328] sm:$0xf] %vm7476, %v6654
        %7680 = vst.msk [vmem:[%s243 + $0x32c] sm:$0xf] %vm7476, %v6655
        %7681 = vst.msk [vmem:[%s243 + $0x330] sm:$0xf] %vm7476, %v6656
        %7682 = vst.msk [vmem:[%s243 + $0x334] sm:$0xf] %vm7476, %v6657
        %7683 = vst.msk [vmem:[%s243 + $0x338] sm:$0xf] %vm7476, %v6658
        %7684 = vst.msk [vmem:[%s243 + $0x33c] sm:$0xf] %vm7476, %v6659
        %7685 = vst.msk [vmem:[%s243 + $0x340] sm:$0xf] %vm7476, %v6660
        %7686 = vst.msk [vmem:[%s243 + $0x344] sm:$0xf] %vm7476, %v6661
        %7687 = vst.msk [vmem:[%s243 + $0x348] sm:$0xf] %vm7476, %v6662
        %7688 = vst.msk [vmem:[%s243 + $0x34c] sm:$0xf] %vm7476, %v6663
        %7689 = vst.msk [vmem:[%s243 + $0x350] sm:$0xf] %vm7476, %v6664
        %7690 = vst.msk [vmem:[%s243 + $0x354] sm:$0xf] %vm7476, %v6665
        %7691 = vst.msk [vmem:[%s243 + $0x358] sm:$0xf] %vm7476, %v6666
        %7692 = vst.msk [vmem:[%s243 + $0x35c] sm:$0xf] %vm7476, %v6667
        %7693 = vst.msk [vmem:[%s243 + $0x360] sm:$0xf] %vm7476, %v6668
        %7694 = vst.msk [vmem:[%s243 + $0x364] sm:$0xf] %vm7476, %v6669
        %7695 = vst.msk [vmem:[%s243 + $0x368] sm:$0xf] %vm7476, %v6670
        %7696 = vst.msk [vmem:[%s243 + $0x36c] sm:$0xf] %vm7476, %v6671
        %7697 = vst.msk [vmem:[%s243 + $0x370] sm:$0xf] %vm7476, %v6672
        %7698 = vst.msk [vmem:[%s243 + $0x374] sm:$0xf] %vm7476, %v6673
        %7699 = vst.msk [vmem:[%s243 + $0x378] sm:$0xf] %vm7476, %v6674
        %7700 = vst.msk [vmem:[%s243 + $0x37c] sm:$0xf] %vm7476, %v6675
        %7701 = vst.msk [vmem:[%s243 + $0x380] sm:$0xf] %vm7476, %v6676
        %7702 = vst.msk [vmem:[%s243 + $0x384] sm:$0xf] %vm7476, %v6677
        %7703 = vst.msk [vmem:[%s243 + $0x388] sm:$0xf] %vm7476, %v6678
        %7704 = vst.msk [vmem:[%s243 + $0x38c] sm:$0xf] %vm7476, %v6679
        %7705 = vst.msk [vmem:[%s243 + $0x390] sm:$0xf] %vm7476, %v6680
        %7706 = vst.msk [vmem:[%s243 + $0x394] sm:$0xf] %vm7476, %v6681
        %7707 = vst.msk [vmem:[%s243 + $0x398] sm:$0xf] %vm7476, %v6682
        %7708 = vst.msk [vmem:[%s243 + $0x39c] sm:$0xf] %vm7476, %v6683
        %7709 = vst.msk [vmem:[%s243 + $0x3a0] sm:$0xf] %vm7476, %v6684
        %7710 = vst.msk [vmem:[%s243 + $0x3a4] sm:$0xf] %vm7476, %v6685
        %7711 = vst.msk [vmem:[%s243 + $0x3a8] sm:$0xf] %vm7476, %v6686
        %7712 = vst.msk [vmem:[%s243 + $0x3ac] sm:$0xf] %vm7476, %v6687
        %7713 = vst.msk [vmem:[%s243 + $0x3b0] sm:$0xf] %vm7476, %v6688
        %7714 = vst.msk [vmem:[%s243 + $0x3b4] sm:$0xf] %vm7476, %v6689
        %7715 = vst.msk [vmem:[%s243 + $0x3b8] sm:$0xf] %vm7476, %v6690
        %7716 = vst.msk [vmem:[%s243 + $0x3bc] sm:$0xf] %vm7476, %v6691
        %7717 = vst.msk [vmem:[%s243 + $0x3c0] sm:$0xf] %vm7476, %v6692
        %7718 = vst.msk [vmem:[%s243 + $0x3c4] sm:$0xf] %vm7476, %v6693
        %7719 = vst.msk [vmem:[%s243 + $0x3c8] sm:$0xf] %vm7476, %v6694
        %7720 = vst.msk [vmem:[%s243 + $0x3cc] sm:$0xf] %vm7476, %v6695
        %7721 = vst.msk [vmem:[%s243 + $0x3d0] sm:$0xf] %vm7476, %v6696
        %7722 = vst.msk [vmem:[%s243 + $0x3d4] sm:$0xf] %vm7476, %v6697
        %7723 = vst.msk [vmem:[%s243 + $0x3d8] sm:$0xf] %vm7476, %v6698
        %7724 = vst.msk [vmem:[%s243 + $0x3dc] sm:$0xf] %vm7476, %v6699
        %7725 = vst.msk [vmem:[%s243 + $0x3e0] sm:$0xf] %vm7476, %v6700
        %7726 = vst.msk [vmem:[%s243 + $0x3e4] sm:$0xf] %vm7476, %v6701
        %7727 = vst.msk [vmem:[%s243 + $0x3e8] sm:$0xf] %vm7476, %v6702
        %7728 = vst.msk [vmem:[%s243 + $0x3ec] sm:$0xf] %vm7476, %v6703
        %7729 = vst.msk [vmem:[%s243 + $0x3f0] sm:$0xf] %vm7476, %v6704
        %7730 = vst.msk [vmem:[%s243 + $0x3f4] sm:$0xf] %vm7476, %v6705
        %7731 = vst.msk [vmem:[%s243 + $0x3f8] sm:$0xf] %vm7476, %v6706
        %7732 = vst.msk [vmem:[%s243 + $0x3fc] sm:$0xf] %vm7476, %v6707
        %7733 = vst.msk [vmem:[%s243 + $0x400] sm:$0xf] %vm7476, %v6708
        %7734 = vst.msk [vmem:[%s243 + $0x404] sm:$0xf] %vm7476, %v6709
        %7735 = vst.msk [vmem:[%s243 + $0x408] sm:$0xf] %vm7476, %v6710
        %7736 = vst.msk [vmem:[%s243 + $0x40c] sm:$0xf] %vm7476, %v6711
        %7737 = vst.msk [vmem:[%s243 + $0x410] sm:$0xf] %vm7476, %v6712
        %7738 = vst.msk [vmem:[%s243 + $0x414] sm:$0xf] %vm7476, %v6713
        %7739 = vst.msk [vmem:[%s243 + $0x418] sm:$0xf] %vm7476, %v6714
        %7740 = vst.msk [vmem:[%s243 + $0x41c] sm:$0xf] %vm7476, %v6715
        %7741 = vst.msk [vmem:[%s243 + $0x420] sm:$0xf] %vm7476, %v6716
        %7742 = vst.msk [vmem:[%s243 + $0x424] sm:$0xf] %vm7476, %v6717
        %7743 = vst.msk [vmem:[%s243 + $0x428] sm:$0xf] %vm7476, %v6718
        %7744 = vst.msk [vmem:[%s243 + $0x42c] sm:$0xf] %vm7476, %v6719
        %7745 = vst.msk [vmem:[%s243 + $0x430] sm:$0xf] %vm7476, %v6720
        %7746 = vst.msk [vmem:[%s243 + $0x434] sm:$0xf] %vm7476, %v6721
        %7747 = vst.msk [vmem:[%s243 + $0x438] sm:$0xf] %vm7476, %v6722
        %7748 = vst.msk [vmem:[%s243 + $0x43c] sm:$0xf] %vm7476, %v6723
        %7749 = vst.msk [vmem:[%s243 + $0x440] sm:$0xf] %vm7476, %v6724
        %7750 = vst.msk [vmem:[%s243 + $0x444] sm:$0xf] %vm7476, %v6725
        %7751 = vst.msk [vmem:[%s243 + $0x448] sm:$0xf] %vm7476, %v6726
        %7752 = vst.msk [vmem:[%s243 + $0x44c] sm:$0xf] %vm7476, %v6727
        %7753 = vst.msk [vmem:[%s243 + $0x450] sm:$0xf] %vm7476, %v6728
        %7754 = vst.msk [vmem:[%s243 + $0x454] sm:$0xf] %vm7476, %v6729
        %7755 = vst.msk [vmem:[%s243 + $0x458] sm:$0xf] %vm7476, %v6730
        %7756 = vst.msk [vmem:[%s243 + $0x45c] sm:$0xf] %vm7476, %v6731
        %7757 = vst.msk [vmem:[%s243 + $0x460] sm:$0xf] %vm7476, %v6732
        %7758 = vst.msk [vmem:[%s243 + $0x464] sm:$0xf] %vm7476, %v6733
        %7759 = vst.msk [vmem:[%s243 + $0x468] sm:$0xf] %vm7476, %v6734
        %7760 = vst.msk [vmem:[%s243 + $0x46c] sm:$0xf] %vm7476, %v6735
        %7761 = vst.msk [vmem:[%s243 + $0x470] sm:$0xf] %vm7476, %v6736
        %7762 = vst.msk [vmem:[%s243 + $0x474] sm:$0xf] %vm7476, %v6737
        %7763 = vst.msk [vmem:[%s243 + $0x478] sm:$0xf] %vm7476, %v6738
        %7764 = vst.msk [vmem:[%s243 + $0x47c] sm:$0xf] %vm7476, %v6739
        %7765 = vst.msk [vmem:[%s243 + $0x480] sm:$0xf] %vm7476, %v6740
        %7766 = vst.msk [vmem:[%s243 + $0x484] sm:$0xf] %vm7476, %v6741
        %7767 = vst.msk [vmem:[%s243 + $0x488] sm:$0xf] %vm7476, %v6742
        %7768 = vst.msk [vmem:[%s243 + $0x48c] sm:$0xf] %vm7476, %v6743
        %7769 = vst.msk [vmem:[%s243 + $0x490] sm:$0xf] %vm7476, %v6744
        %7770 = vst.msk [vmem:[%s243 + $0x494] sm:$0xf] %vm7476, %v6745
        %7771 = vst.msk [vmem:[%s243 + $0x498] sm:$0xf] %vm7476, %v6746
        %7772 = vst.msk [vmem:[%s243 + $0x49c] sm:$0xf] %vm7476, %v6747
        %7773 = vst.msk [vmem:[%s243 + $0x4a0] sm:$0xf] %vm7476, %v6748
        %7774 = vst.msk [vmem:[%s243 + $0x4a4] sm:$0xf] %vm7476, %v6749
        %7775 = vst.msk [vmem:[%s243 + $0x4a8] sm:$0xf] %vm7476, %v6750
        %7776 = vst.msk [vmem:[%s243 + $0x4ac] sm:$0xf] %vm7476, %v6751
        %7777 = vst.msk [vmem:[%s243 + $0x4b0] sm:$0xf] %vm7476, %v6752
        %7778 = vst.msk [vmem:[%s243 + $0x4b4] sm:$0xf] %vm7476, %v6753
        %7779 = vst.msk [vmem:[%s243 + $0x4b8] sm:$0xf] %vm7476, %v6754
        %7780 = vst.msk [vmem:[%s243 + $0x4bc] sm:$0xf] %vm7476, %v6755
        %7781 = vst.msk [vmem:[%s243 + $0x4c0] sm:$0xf] %vm7476, %v6756
        %7782 = vst.msk [vmem:[%s243 + $0x4c4] sm:$0xf] %vm7476, %v6757
        %7783 = vst.msk [vmem:[%s243 + $0x4c8] sm:$0xf] %vm7476, %v6758
        %7784 = vst.msk [vmem:[%s243 + $0x4cc] sm:$0xf] %vm7476, %v6759
        %7785 = vst.msk [vmem:[%s243 + $0x4d0] sm:$0xf] %vm7476, %v6760
        %7786 = vst.msk [vmem:[%s243 + $0x4d4] sm:$0xf] %vm7476, %v6761
        %7787 = vst.msk [vmem:[%s243 + $0x4d8] sm:$0xf] %vm7476, %v6762
        %7788 = vst.msk [vmem:[%s243 + $0x4dc] sm:$0xf] %vm7476, %v6763
        %7789 = vst.msk [vmem:[%s243 + $0x4e0] sm:$0xf] %vm7476, %v6764
        %7790 = vst.msk [vmem:[%s243 + $0x4e4] sm:$0xf] %vm7476, %v6765
        %7791 = vst.msk [vmem:[%s243 + $0x4e8] sm:$0xf] %vm7476, %v6766
        %7792 = vst.msk [vmem:[%s243 + $0x4ec] sm:$0xf] %vm7476, %v6767
        %7793 = vst.msk [vmem:[%s243 + $0x4f0] sm:$0xf] %vm7476, %v6768
        %7794 = vst.msk [vmem:[%s243 + $0x4f4] sm:$0xf] %vm7476, %v6769
        %7795 = vst.msk [vmem:[%s243 + $0x4f8] sm:$0xf] %vm7476, %v6770
        %7796 = vst.msk [vmem:[%s243 + $0x4fc] sm:$0xf] %vm7476, %v6771
        %7797 = vst.msk [vmem:[%s243 + $0x500] sm:$0xf] %vm7476, %v6772
        %7798 = vst.msk [vmem:[%s243 + $0x504] sm:$0xf] %vm7476, %v6773
        %7799 = vst.msk [vmem:[%s243 + $0x508] sm:$0xf] %vm7476, %v6774
        %7800 = vst.msk [vmem:[%s243 + $0x50c] sm:$0xf] %vm7476, %v6775
        %7801 = vst.msk [vmem:[%s243 + $0x510] sm:$0xf] %vm7476, %v6776
        %7802 = vst.msk [vmem:[%s243 + $0x514] sm:$0xf] %vm7476, %v6777
        %7803 = vst.msk [vmem:[%s243 + $0x518] sm:$0xf] %vm7476, %v6778
        %7804 = vst.msk [vmem:[%s243 + $0x51c] sm:$0xf] %vm7476, %v6779
        %7805 = vst.msk [vmem:[%s243 + $0x520] sm:$0xf] %vm7476, %v6780
        %7806 = vst.msk [vmem:[%s243 + $0x524] sm:$0xf] %vm7476, %v6781
        %7807 = vst.msk [vmem:[%s243 + $0x528] sm:$0xf] %vm7476, %v6782
        %7808 = vst.msk [vmem:[%s243 + $0x52c] sm:$0xf] %vm7476, %v6783
        %7809 = vst.msk [vmem:[%s243 + $0x530] sm:$0xf] %vm7476, %v6784
        %7810 = vst.msk [vmem:[%s243 + $0x534] sm:$0xf] %vm7476, %v6785
        %7811 = vst.msk [vmem:[%s243 + $0x538] sm:$0xf] %vm7476, %v6786
        %7812 = vst.msk [vmem:[%s243 + $0x53c] sm:$0xf] %vm7476, %v6787
        %7813 = vst.msk [vmem:[%s243 + $0x540] sm:$0xf] %vm7476, %v6788
        %7814 = vst.msk [vmem:[%s243 + $0x544] sm:$0xf] %vm7476, %v6789
        %7815 = vst.msk [vmem:[%s243 + $0x548] sm:$0xf] %vm7476, %v6790
        %7816 = vst.msk [vmem:[%s243 + $0x54c] sm:$0xf] %vm7476, %v6791
        %7817 = vst.msk [vmem:[%s243 + $0x550] sm:$0xf] %vm7476, %v6792
        %7818 = vst.msk [vmem:[%s243 + $0x554] sm:$0xf] %vm7476, %v6793
        %7819 = vst.msk [vmem:[%s243 + $0x558] sm:$0xf] %vm7476, %v6794
        %7820 = vst.msk [vmem:[%s243 + $0x55c] sm:$0xf] %vm7476, %v6795
        %7821 = vst.msk [vmem:[%s243 + $0x560] sm:$0xf] %vm7476, %v6796
        %7822 = vst.msk [vmem:[%s243 + $0x564] sm:$0xf] %vm7476, %v6797
        %7823 = vst.msk [vmem:[%s243 + $0x568] sm:$0xf] %vm7476, %v6798
        %7824 = vst.msk [vmem:[%s243 + $0x56c] sm:$0xf] %vm7476, %v6799
        %7825 = vst.msk [vmem:[%s243 + $0x570] sm:$0xf] %vm7476, %v6800
        %7826 = vst.msk [vmem:[%s243 + $0x574] sm:$0xf] %vm7476, %v6801
        %7827 = vst.msk [vmem:[%s243 + $0x578] sm:$0xf] %vm7476, %v6802
        %7828 = vst.msk [vmem:[%s243 + $0x57c] sm:$0xf] %vm7476, %v6803
        %7829 = vst.msk [vmem:[%s243 + $0x580] sm:$0xf] %vm7476, %v6804
        %7830 = vst.msk [vmem:[%s243 + $0x584] sm:$0xf] %vm7476, %v6805
        %7831 = vst.msk [vmem:[%s243 + $0x588] sm:$0xf] %vm7476, %v6806
        %7832 = vst.msk [vmem:[%s243 + $0x58c] sm:$0xf] %vm7476, %v6807
        %7833 = vst.msk [vmem:[%s243 + $0x590] sm:$0xf] %vm7476, %v6808
        %7834 = vst.msk [vmem:[%s243 + $0x594] sm:$0xf] %vm7476, %v6809
        %7835 = vst.msk [vmem:[%s243 + $0x598] sm:$0xf] %vm7476, %v6810
        %7836 = vst.msk [vmem:[%s243 + $0x59c] sm:$0xf] %vm7476, %v6811
        %7837 = vst.msk [vmem:[%s243 + $0x5a0] sm:$0xf] %vm7476, %v6812
        %7838 = vst.msk [vmem:[%s243 + $0x5a4] sm:$0xf] %vm7476, %v6813
        %7839 = vst.msk [vmem:[%s243 + $0x5a8] sm:$0xf] %vm7476, %v6814
        %7840 = vst.msk [vmem:[%s243 + $0x5ac] sm:$0xf] %vm7476, %v6815
        %7841 = vst.msk [vmem:[%s243 + $0x5b0] sm:$0xf] %vm7476, %v6816
        %7842 = vst.msk [vmem:[%s243 + $0x5b4] sm:$0xf] %vm7476, %v6817
        %7843 = vst.msk [vmem:[%s243 + $0x5b8] sm:$0xf] %vm7476, %v6818
        %7844 = vst.msk [vmem:[%s243 + $0x5bc] sm:$0xf] %vm7476, %v6819
        %7845 = vst.msk [vmem:[%s243 + $0x5c0] sm:$0xf] %vm7476, %v6820
        %7846 = vst.msk [vmem:[%s243 + $0x5c4] sm:$0xf] %vm7476, %v6821
        %7847 = vst.msk [vmem:[%s243 + $0x5c8] sm:$0xf] %vm7476, %v6822
        %7848 = vst.msk [vmem:[%s243 + $0x5cc] sm:$0xf] %vm7476, %v6823
        %7849 = vst.msk [vmem:[%s243 + $0x5d0] sm:$0xf] %vm7476, %v6824
        %7850 = vst.msk [vmem:[%s243 + $0x5d4] sm:$0xf] %vm7476, %v6825
        %7851 = vst.msk [vmem:[%s243 + $0x5d8] sm:$0xf] %vm7476, %v6826
        %7852 = vst.msk [vmem:[%s243 + $0x5dc] sm:$0xf] %vm7476, %v6827
        %7853 = vst.msk [vmem:[%s243 + $0x5e0] sm:$0xf] %vm7476, %v6828
        %7854 = vst.msk [vmem:[%s243 + $0x5e4] sm:$0xf] %vm7476, %v6829
        %7855 = vst.msk [vmem:[%s243 + $0x5e8] sm:$0xf] %vm7476, %v6830
        %7856 = vst.msk [vmem:[%s243 + $0x5ec] sm:$0xf] %vm7476, %v6831
        %7857 = vst.msk [vmem:[%s243 + $0x5f0] sm:$0xf] %vm7476, %v6832
        %7858 = vst.msk [vmem:[%s243 + $0x5f4] sm:$0xf] %vm7476, %v6833
        %7859 = vst.msk [vmem:[%s243 + $0x5f8] sm:$0xf] %vm7476, %v6834
        %7860 = vst.msk [vmem:[%s243 + $0x5fc] sm:$0xf] %vm7476, %v6835
        %7861 = vst.msk [vmem:[%s243 + $0x600] sm:$0xf] %vm7476, %v6836
        %7862 = vst.msk [vmem:[%s243 + $0x604] sm:$0xf] %vm7476, %v6837
        %7863 = vst.msk [vmem:[%s243 + $0x608] sm:$0xf] %vm7476, %v6838
        %7864 = vst.msk [vmem:[%s243 + $0x60c] sm:$0xf] %vm7476, %v6839
        %7865 = vst.msk [vmem:[%s243 + $0x610] sm:$0xf] %vm7476, %v6840
        %7866 = vst.msk [vmem:[%s243 + $0x614] sm:$0xf] %vm7476, %v6841
        %7867 = vst.msk [vmem:[%s243 + $0x618] sm:$0xf] %vm7476, %v6842
        %7868 = vst.msk [vmem:[%s243 + $0x61c] sm:$0xf] %vm7476, %v6843
        %7869 = vst.msk [vmem:[%s243 + $0x620] sm:$0xf] %vm7476, %v6844
        %7870 = vst.msk [vmem:[%s243 + $0x624] sm:$0xf] %vm7476, %v6845
        %7871 = vst.msk [vmem:[%s243 + $0x628] sm:$0xf] %vm7476, %v6846
        %7872 = vst.msk [vmem:[%s243 + $0x62c] sm:$0xf] %vm7476, %v6847
        %7873 = vst.msk [vmem:[%s243 + $0x630] sm:$0xf] %vm7476, %v6848
        %7874 = vst.msk [vmem:[%s243 + $0x634] sm:$0xf] %vm7476, %v6849
        %7875 = vst.msk [vmem:[%s243 + $0x638] sm:$0xf] %vm7476, %v6850
        %7876 = vst.msk [vmem:[%s243 + $0x63c] sm:$0xf] %vm7476, %v6851
        %7877 = vst.msk [vmem:[%s243 + $0x640] sm:$0xf] %vm7476, %v6852
        %7878 = vst.msk [vmem:[%s243 + $0x644] sm:$0xf] %vm7476, %v6853
        %7879 = vst.msk [vmem:[%s243 + $0x648] sm:$0xf] %vm7476, %v6854
        %7880 = vst.msk [vmem:[%s243 + $0x64c] sm:$0xf] %vm7476, %v6855
        %7881 = vst.msk [vmem:[%s243 + $0x650] sm:$0xf] %vm7476, %v6856
        %7882 = vst.msk [vmem:[%s243 + $0x654] sm:$0xf] %vm7476, %v6857
        %7883 = vst.msk [vmem:[%s243 + $0x658] sm:$0xf] %vm7476, %v6858
        %7884 = vst.msk [vmem:[%s243 + $0x65c] sm:$0xf] %vm7476, %v6859
        %7885 = vst.msk [vmem:[%s243 + $0x660] sm:$0xf] %vm7476, %v6860
        %7886 = vst.msk [vmem:[%s243 + $0x664] sm:$0xf] %vm7476, %v6861
        %7887 = vst.msk [vmem:[%s243 + $0x668] sm:$0xf] %vm7476, %v6862
        %7888 = vst.msk [vmem:[%s243 + $0x66c] sm:$0xf] %vm7476, %v6863
        %7889 = vst.msk [vmem:[%s243 + $0x670] sm:$0xf] %vm7476, %v6864
        %7890 = vst.msk [vmem:[%s243 + $0x674] sm:$0xf] %vm7476, %v6865
        %7891 = vst.msk [vmem:[%s243 + $0x678] sm:$0xf] %vm7476, %v6866
        %7892 = vst.msk [vmem:[%s243 + $0x67c] sm:$0xf] %vm7476, %v6867
        %7893 = vst.msk [vmem:[%s243 + $0x680] sm:$0xf] %vm7476, %v6868
        %7894 = vst.msk [vmem:[%s243 + $0x684] sm:$0xf] %vm7476, %v6869
        %7895 = vst.msk [vmem:[%s243 + $0x688] sm:$0xf] %vm7476, %v6870
        %7896 = vst.msk [vmem:[%s243 + $0x68c] sm:$0xf] %vm7476, %v6871
        %7897 = vst.msk [vmem:[%s243 + $0x690] sm:$0xf] %vm7476, %v6872
        %7898 = vst.msk [vmem:[%s243 + $0x694] sm:$0xf] %vm7476, %v6873
        %7899 = vst.msk [vmem:[%s243 + $0x698] sm:$0xf] %vm7476, %v6874
        %7900 = vst.msk [vmem:[%s243 + $0x69c] sm:$0xf] %vm7476, %v6875
        %7901 = vst.msk [vmem:[%s243 + $0x6a0] sm:$0xf] %vm7476, %v6876
        %7902 = vst.msk [vmem:[%s243 + $0x6a4] sm:$0xf] %vm7476, %v6877
        %7903 = vst.msk [vmem:[%s243 + $0x6a8] sm:$0xf] %vm7476, %v6878
        %7904 = vst.msk [vmem:[%s243 + $0x6ac] sm:$0xf] %vm7476, %v6879
        %7905 = vst.msk [vmem:[%s243 + $0x6b0] sm:$0xf] %vm7476, %v6880
        %7906 = vst.msk [vmem:[%s243 + $0x6b4] sm:$0xf] %vm7476, %v6881
        %7907 = vst.msk [vmem:[%s243 + $0x6b8] sm:$0xf] %vm7476, %v6882
        %7908 = vst.msk [vmem:[%s243 + $0x6bc] sm:$0xf] %vm7476, %v6883
        %7909 = vst.msk [vmem:[%s243 + $0x6c0] sm:$0xf] %vm7476, %v6884
        %7910 = vst.msk [vmem:[%s243 + $0x6c4] sm:$0xf] %vm7476, %v6885
        %7911 = vst.msk [vmem:[%s243 + $0x6c8] sm:$0xf] %vm7476, %v6886
        %7912 = vst.msk [vmem:[%s243 + $0x6cc] sm:$0xf] %vm7476, %v6887
        %7913 = vst.msk [vmem:[%s243 + $0x6d0] sm:$0xf] %vm7476, %v6888
        %7914 = vst.msk [vmem:[%s243 + $0x6d4] sm:$0xf] %vm7476, %v6889
        %7915 = vst.msk [vmem:[%s243 + $0x6d8] sm:$0xf] %vm7476, %v6890
        %7916 = vst.msk [vmem:[%s243 + $0x6dc] sm:$0xf] %vm7476, %v6891
        %7917 = vst.msk [vmem:[%s243 + $0x6e0] sm:$0xf] %vm7476, %v6892
        %7918 = vst.msk [vmem:[%s243 + $0x6e4] sm:$0xf] %vm7476, %v6893
        %7919 = vst.msk [vmem:[%s243 + $0x6e8] sm:$0xf] %vm7476, %v6894
        %7920 = vst.msk [vmem:[%s243 + $0x6ec] sm:$0xf] %vm7476, %v6895
        %7921 = vst.msk [vmem:[%s243 + $0x6f0] sm:$0xf] %vm7476, %v6896
        %7922 = vst.msk [vmem:[%s243 + $0x6f4] sm:$0xf] %vm7476, %v6897
        %7923 = vst.msk [vmem:[%s243 + $0x6f8] sm:$0xf] %vm7476, %v6898
        %7924 = vst.msk [vmem:[%s243 + $0x6fc] sm:$0xf] %vm7476, %v6899
        %7925 = vst.msk [vmem:[%s243 + $0x700] sm:$0xf] %vm7476, %v6900
        %7926 = vst.msk [vmem:[%s243 + $0x704] sm:$0xf] %vm7476, %v6901
        %7927 = vst.msk [vmem:[%s243 + $0x708] sm:$0xf] %vm7476, %v6902
        %7928 = vst.msk [vmem:[%s243 + $0x70c] sm:$0xf] %vm7476, %v6903
        %7929 = vst.msk [vmem:[%s243 + $0x710] sm:$0xf] %vm7476, %v6904
        %7930 = vst.msk [vmem:[%s243 + $0x714] sm:$0xf] %vm7476, %v6905
        %7931 = vst.msk [vmem:[%s243 + $0x718] sm:$0xf] %vm7476, %v6906
        %7932 = vst.msk [vmem:[%s243 + $0x71c] sm:$0xf] %vm7476, %v6907
        %7933 = vst.msk [vmem:[%s243 + $0x720] sm:$0xf] %vm7476, %v6908
        %7934 = vst.msk [vmem:[%s243 + $0x724] sm:$0xf] %vm7476, %v6909
        %7935 = vst.msk [vmem:[%s243 + $0x728] sm:$0xf] %vm7476, %v6910
        %7936 = vst.msk [vmem:[%s243 + $0x72c] sm:$0xf] %vm7476, %v6911
        %7937 = vst.msk [vmem:[%s243 + $0x730] sm:$0xf] %vm7476, %v6912
        %7938 = vst.msk [vmem:[%s243 + $0x734] sm:$0xf] %vm7476, %v6913
        %7939 = vst.msk [vmem:[%s243 + $0x738] sm:$0xf] %vm7476, %v6914
        %7940 = vst.msk [vmem:[%s243 + $0x73c] sm:$0xf] %vm7476, %v6915
        %7941 = vst.msk [vmem:[%s243 + $0x740] sm:$0xf] %vm7476, %v6916
        %7942 = vst.msk [vmem:[%s243 + $0x744] sm:$0xf] %vm7476, %v6917
        %7943 = vst.msk [vmem:[%s243 + $0x748] sm:$0xf] %vm7476, %v6918
        %7944 = vst.msk [vmem:[%s243 + $0x74c] sm:$0xf] %vm7476, %v6919
        %7945 = vst.msk [vmem:[%s243 + $0x750] sm:$0xf] %vm7476, %v6920
        %7946 = vst.msk [vmem:[%s243 + $0x754] sm:$0xf] %vm7476, %v6921
        %7947 = vst.msk [vmem:[%s243 + $0x758] sm:$0xf] %vm7476, %v6922
        %7948 = vst.msk [vmem:[%s243 + $0x75c] sm:$0xf] %vm7476, %v6923
        %7949 = vst.msk [vmem:[%s243 + $0x760] sm:$0xf] %vm7476, %v6924
        %7950 = vst.msk [vmem:[%s243 + $0x764] sm:$0xf] %vm7476, %v6925
        %7951 = vst.msk [vmem:[%s243 + $0x768] sm:$0xf] %vm7476, %v6926
        %7952 = vst.msk [vmem:[%s243 + $0x76c] sm:$0xf] %vm7476, %v6927
        %7953 = vst.msk [vmem:[%s243 + $0x770] sm:$0xf] %vm7476, %v6928
        %7954 = vst.msk [vmem:[%s243 + $0x774] sm:$0xf] %vm7476, %v6929
        %7955 = vst.msk [vmem:[%s243 + $0x778] sm:$0xf] %vm7476, %v6930
        %7956 = vst.msk [vmem:[%s243 + $0x77c] sm:$0xf] %vm7476, %v6931
        %7957 = vst.msk [vmem:[%s243 + $0x780] sm:$0xf] %vm7476, %v6932
        %7958 = vst.msk [vmem:[%s243 + $0x784] sm:$0xf] %vm7476, %v6933
        %7959 = vst.msk [vmem:[%s243 + $0x788] sm:$0xf] %vm7476, %v6934
        %7960 = vst.msk [vmem:[%s243 + $0x78c] sm:$0xf] %vm7476, %v6935
        %7961 = vst.msk [vmem:[%s243 + $0x790] sm:$0xf] %vm7476, %v6936
        %7962 = vst.msk [vmem:[%s243 + $0x794] sm:$0xf] %vm7476, %v6937
        %7963 = vst.msk [vmem:[%s243 + $0x798] sm:$0xf] %vm7476, %v6938
        %7964 = vst.msk [vmem:[%s243 + $0x79c] sm:$0xf] %vm7476, %v6939
        %7965 = vst.msk [vmem:[%s243 + $0x7a0] sm:$0xf] %vm7476, %v6940
        %7966 = vst.msk [vmem:[%s243 + $0x7a4] sm:$0xf] %vm7476, %v6941
        %7967 = vst.msk [vmem:[%s243 + $0x7a8] sm:$0xf] %vm7476, %v6942
        %7968 = vst.msk [vmem:[%s243 + $0x7ac] sm:$0xf] %vm7476, %v6943
        %7969 = vst.msk [vmem:[%s243 + $0x7b0] sm:$0xf] %vm7476, %v6944
        %7970 = vst.msk [vmem:[%s243 + $0x7b4] sm:$0xf] %vm7476, %v6945
        %7971 = vst.msk [vmem:[%s243 + $0x7b8] sm:$0xf] %vm7476, %v6946
        %7972 = vst.msk [vmem:[%s243 + $0x7bc] sm:$0xf] %vm7476, %v6947
        %7973 = vst.msk [vmem:[%s243 + $0x7c0] sm:$0xf] %vm7476, %v6948
        %7974 = vst.msk [vmem:[%s243 + $0x7c4] sm:$0xf] %vm7476, %v6949
        %7975 = vst.msk [vmem:[%s243 + $0x7c8] sm:$0xf] %vm7476, %v6950
        %7976 = vst.msk [vmem:[%s243 + $0x7cc] sm:$0xf] %vm7476, %v6951
        %7977 = vst.msk [vmem:[%s243 + $0x7d0] sm:$0xf] %vm7476, %v6952
        %7978 = vst.msk [vmem:[%s243 + $0x7d4] sm:$0xf] %vm7476, %v6953
        %7979 = vst.msk [vmem:[%s243 + $0x7d8] sm:$0xf] %vm7476, %v6954
        %7980 = vst.msk [vmem:[%s243 + $0x7dc] sm:$0xf] %vm7476, %v6955
        %7981 = vst.msk [vmem:[%s243 + $0x7e0] sm:$0xf] %vm7476, %v6956
        %7982 = vst.msk [vmem:[%s243 + $0x7e4] sm:$0xf] %vm7476, %v6957
        %7983 = vst.msk [vmem:[%s243 + $0x7e8] sm:$0xf] %vm7476, %v6958
        %7984 = vst.msk [vmem:[%s243 + $0x7ec] sm:$0xf] %vm7476, %v6959
        %7985 = vst.msk [vmem:[%s243 + $0x7f0] sm:$0xf] %vm7476, %v6960
        %7986 = vst.msk [vmem:[%s243 + $0x7f4] sm:$0xf] %vm7476, %v6961
        %7987 = vst.msk [vmem:[%s243 + $0x7f8] sm:$0xf] %vm7476, %v6962
        %7988 = vst.msk [vmem:[%s243 + $0x7fc] sm:$0xf] %vm7476, %v6963
        %s7989 = sand.u32 %s121, 1
        %s7990 = scalar_lea.sflag [#allocation4], %s7989
        %s7991 = sand.u32 %s121, 1
        %s7992 = smul.addr %s7991, 2048
        %s7993 = scalar_lea.vmem [#allocation8], %s7992
        // Predicated region
        $region45: #{tpu_custom_call.1} parent=31 // pred_check
          %p7994 = pneg %p131
        $region46: #{tpu_custom_call.1} parent=31 // pred_check_branch
          %7996 = sbr.rel (%p7994) target = $region48
        $region47: #{tpu_custom_call.1} parent=31 // pred_region
          %s7998 = ssub.s32 32768, 32768
          %7999 = vsyncadd %s7990, %s7998
          %s8000 = smul.addr %s25, 512
          %s8001 = sadd.s32 %s26, %s8000
          %s8002 = smul.addr %s8001, 64
          %s8003 = scalar_lea.hbm %s3, %s8002
          %s8004 = sshll.u32 %s7993, 4
          %s8005 = int_to_ptr.vmem [resolvable:$true] %s8004
          %8010 = dma.vmem_to_hbm [thread:$0]  %s8005, 32768, %s8003, %s7990, 64, 64, 4
        $region48: #{tpu_custom_call.1} parent=31 // pred_fallthru
          _
      $region32: #{tpu_custom_call.1} parent=5 // pred_fallthru
        _
      %p8011 = scmp.le.s32.totalorder 2, %s16
      // Predicated region
      $region49: #{tpu_custom_call.1} parent=5 // pred_check
        %p8012 = pneg %p8011
      $region50: #{tpu_custom_call.1} parent=5 // pred_check_branch
        %8014 = sbr.rel (%p8012) target = $region52
      $region51: #{tpu_custom_call.1} parent=5 // pred_region
        %s8015 = ssub.s32 %s16, 2
        // Predicated region
        $region53: #{tpu_custom_call.1} parent=51 // pred_check
          %p8016 = pneg %p137
        $region54: #{tpu_custom_call.1} parent=51 // pred_check_branch
          %8018 = sbr.rel (%p8016) target = $region56
        $region55: #{tpu_custom_call.1} parent=51 // pred_region
          %s8019 = sand.u32 %s122, 1
          %s8020 = scalar_lea.sflag [#allocation4], %s8019
          %s8021 = sand.u32 %s122, 1
          %s8022 = smul.addr %s8021, 2048
          %s8023 = scalar_lea.vmem [#allocation8], %s8022
          %8024 = dma.done %s8020, 32768
        $region56: #{tpu_custom_call.1} parent=51 // pred_fallthru
          _
      $region52: #{tpu_custom_call.1} parent=5 // pred_fallthru
        _
    $region6: #{tpu_custom_call.1} parent=1 // loop_footer
      %s20 = sadd.s32 1, %s16
    $region7: #{tpu_custom_call.1} parent=1 // loop_footer_branch
      %15 = sbr.rel target = $region3
    $region8: #{tpu_custom_call.1} parent=1 // loop_exit
      _
    %8025 = vsyncpa [#allocation3], 1
    %s8026 = scalar_lea.sflag [#allocation3], 1
    %8027 = vsyncpa %s8026, 1
    %8028 = vsyncpa [#allocation6], 1
    %8029 = vsyncpa [#allocation4], 1
    %s8030 = scalar_lea.sflag [#allocation4], 1
    %8031 = vsyncpa %s8030, 1

</llo_original>
